<compile_context>
chip_gen: v6e
topology: v6e:2x2x1
jax: 0.10.0
libtpu: 0.0.40
codegen_flags: <defaults>
</compile_context>

<pallas_src>
import jax
import jax.numpy as jnp
from jax.experimental import pallas as pl
from jax.experimental.pallas import tpu as pltpu

d_model = 96
char_emb_size = 200
word_emb_size = 300
K = 5            # conv kernel size
PAD = K // 2
DP = 128         # d_model padded to a full lane tile


# ----------------------------------------------------------------------------
# Fused kernel: char conv -> word conv -> highway, B_t batch elements per step
# ----------------------------------------------------------------------------
def _embedding_kernel(ch_ref, wd_ref,
                      cdw_ref, cdb_ref, cpw_ref, cpb_ref,
                      wdw_ch_ref, wdb_ch_ref, wdw_wd_ref, wdb_wd_ref,
                      wpw_ch_ref, wpw_wd_ref, wpb_ref,
                      hw_w0_ref, hw_b0_ref, hw_w1_ref, hw_b1_ref,
                      o_ref,
                      xp2d_ref, xp_ch_ref, xp_wd_ref):
    Bt, L, cn, C1 = ch_ref.shape          # (B_t, L, cn, char_emb_size) bf16
    Wd = wd_ref.shape[2]                  # word_emb_size
    Dp = xp_ch_ref.shape[2]               # padded d_model (128)
    Lp = L + 2 * PAD
    cnp = cn + 2 * PAD
    f32 = jnp.float32
    bf16 = jnp.bfloat16

    # ---- Stage 1: char depthwise 5x5 conv (zero padding built in VMEM) ----
    # Zero only the borders each step (cheap, correct for every grid step even
    # when the batch axis is sharded across TensorCores), then write the data.
    xp2d_ref[:, 0:PAD, :, :] = jnp.zeros((Bt, PAD, cnp, C1), f32)
    xp2d_ref[:, PAD + L:Lp, :, :] = jnp.zeros((Bt, PAD, cnp, C1), f32)
    xp2d_ref[:, :, 0:PAD, :] = jnp.zeros((Bt, Lp, PAD, C1), f32)
    xp2d_ref[:, :, PAD + cn:cnp, :] = jnp.zeros((Bt, Lp, PAD, C1), f32)
    xp2d_ref[:, PAD:PAD + L, PAD:PAD + cn, :] = ch_ref[...].astype(f32)

    cdw = cdw_ref[...]                                   # (25, C1) f32
    acc = jnp.zeros((Bt, L, cn, C1), f32)
    # dj outer (sublane/char shift): only K mis-aligned slices of the big
    # block are materialized; the L-axis (major dim) slices are free.
    # TODO(synk): produce the dj shifts with pltpu.roll (XLU) to free vld/vst.
    for dj in range(K):
        x_dj = xp2d_ref[:, :, dj:dj + cn, :]             # (Bt, Lp, cn, C1)
        for di in range(K):
            tap = cdw[di * K + dj].reshape(1, 1, 1, C1)
            acc = acc + x_dj[:, di:di + L] * tap
    acc = acc + cdb_ref[...].reshape(1, 1, 1, C1)

    # pointwise 1x1 conv == (Bt*L*cn, C1) @ (C1, Dp) on the MXU (bf16 operands,
    # f32 accumulation), ReLU, max over chars
    flat = acc.reshape(Bt * L * cn, C1).astype(bf16)
    pw = jnp.dot(flat, cpw_ref[...], preferred_element_type=f32) + cpb_ref[...]
    pw = jnp.maximum(pw, 0.0).reshape(Bt, L, cn, Dp)
    ch = jnp.max(pw, axis=2)                             # (Bt, L, Dp) f32

    # ---- Stage 2: word depthwise k=5 conv1d + pointwise (split weights ==
    #      implicit concat([ch, wd_emb]) without ever materializing it) ----
    xp_ch_ref[:, 0:PAD, :] = jnp.zeros((Bt, PAD, Dp), f32)
    xp_ch_ref[:, PAD + L:Lp, :] = jnp.zeros((Bt, PAD, Dp), f32)
    xp_ch_ref[:, PAD:PAD + L, :] = ch
    xp_wd_ref[:, 0:PAD, :] = jnp.zeros((Bt, PAD, Wd), f32)
    xp_wd_ref[:, PAD + L:Lp, :] = jnp.zeros((Bt, PAD, Wd), f32)
    xp_wd_ref[:, PAD:PAD + L, :] = wd_ref[...].astype(f32)

    wdw_ch = wdw_ch_ref[...]                             # (K, Dp) f32
    wdw_wd = wdw_wd_ref[...]                             # (K, Wd) f32
    acc_ch = jnp.zeros((Bt, L, Dp), f32)
    acc_wd = jnp.zeros((Bt, L, Wd), f32)
    for k in range(K):
        acc_ch = acc_ch + xp_ch_ref[:, k:k + L, :] * wdw_ch[k:k + 1, :]
        acc_wd = acc_wd + xp_wd_ref[:, k:k + L, :] * wdw_wd[k:k + 1, :]
    acc_ch = acc_ch + wdb_ch_ref[...]
    acc_wd = acc_wd + wdb_wd_ref[...]

    x = (jnp.dot(acc_ch.reshape(Bt * L, Dp).astype(bf16), wpw_ch_ref[...],
                 preferred_element_type=f32)
         + jnp.dot(acc_wd.reshape(Bt * L, Wd).astype(bf16), wpw_wd_ref[...],
                   preferred_element_type=f32)
         + wpb_ref[...])                                 # (Bt*L, Dp) f32

    # ---- Stage 3: 2-layer Highway, gate||linear fused into one (Dp, 2Dp) dot;
    #      the gate/linear split sits exactly on a 128-lane tile boundary. ----
    for w_ref, b_ref in ((hw_w0_ref, hw_b0_ref), (hw_w1_ref, hw_b1_ref)):
        z = jnp.dot(x.astype(bf16), w_ref[...],
                    preferred_element_type=f32) + b_ref[...]   # (Bt*L, 2Dp)
        g = jax.nn.sigmoid(z[:, :Dp])
        h = jnp.maximum(z[:, Dp:], 0.0)
        x = g * h + (1.0 - g) * x

    # Lane-dense (mult-of-128) output stores; slice to 96 + transpose in XLA.
    o_ref[...] = x.reshape(Bt, L, Dp)


# ----------------------------------------------------------------------------
# Batch-block / VMEM-budget selection
# ----------------------------------------------------------------------------
def _vmem_bytes_estimate(bt, L, cn, C1, Wd, Dp):
    Lp, cnp = L + 2 * PAD, cn + 2 * PAD
    scratch = 4 * (bt * Lp * cnp * C1 + bt * Lp * Dp + bt * Lp * Wd)
    io_blocks = 2 * (2 * bt * L * cn * C1 + 2 * bt * L * Wd + 4 * bt * L * Dp)
    temps = 4 * (bt * L * cn * C1 + bt * Lp * cn * C1 + bt * L * cn * Dp)
    weights = 2 << 20
    return scratch + io_blocks + temps + weights


def _pick_block_batch(N, L, cn, C1, Wd, Dp, budget_bytes=40 << 20):
    """Largest divisor of N (<=8) that fits the VMEM budget and still leaves
    >=2 grid steps so both TensorCores get work on v7x."""
    best = 1
    for bt in range(1, min(N, 8) + 1):
        if N % bt != 0:
            continue
        if N >= 2 and N // bt < 2:
            continue
        if _vmem_bytes_estimate(bt, L, cn, C1, Wd, Dp) <= budget_bytes:
            best = bt
    return best


# ----------------------------------------------------------------------------
# Wrapper: weight padding/casting + one fused pallas_call
# ----------------------------------------------------------------------------
def embedding_forward(ch_emb, wd_emb, p):
    N, L, cn, C1 = ch_emb.shape
    Wd = wd_emb.shape[-1]
    D, Dp = d_model, DP
    Lp, cnp = L + 2 * PAD, cn + 2 * PAD
    bf16 = jnp.bfloat16

    def pad_last(a, target):
        return jnp.pad(a, [(0, 0)] * (a.ndim - 1) + [(0, target - a.shape[-1])])

    # --- pad d_model 96 -> 128 (zeros) and cast matmul weights to bf16 ---
    cdw = p["c_dw_w"]                                   # (25, C1)  f32 (VPU)
    cdb = p["c_dw_b"]                                   # (1, C1)   f32
    cpw = pad_last(p["c_pw_w"], Dp).astype(bf16)        # (C1, Dp)  bf16 (MXU)
    cpb = pad_last(p["c_pw_b"], Dp)                     # (1, Dp)   f32
    wdw_ch = pad_last(p["w_dw_w_ch"], Dp)               # (K, Dp)   f32 (VPU)
    wdb_ch = pad_last(p["w_dw_b_ch"], Dp)               # (1, Dp)   f32
    wdw_wd = p["w_dw_w_wd"]                             # (K, Wd)   f32
    wdb_wd = p["w_dw_b_wd"]                             # (1, Wd)   f32
    wpw_ch = jnp.pad(p["w_pw_w_ch"],
                     ((0, Dp - D), (0, Dp - D))).astype(bf16)   # (Dp, Dp)
    wpw_wd = pad_last(p["w_pw_w_wd"], Dp).astype(bf16)  # (Wd, Dp)
    wpb = pad_last(p["w_pw_b"], Dp)                     # (1, Dp)   f32
    hw_w, hw_b = [], []
    for i in range(2):
        wg = jnp.pad(p["hw_w"][i][:, :D], ((0, Dp - D), (0, Dp - D)))
        wl = jnp.pad(p["hw_w"][i][:, D:], ((0, Dp - D), (0, Dp - D)))
        hw_w.append(jnp.concatenate([wg, wl], axis=1).astype(bf16))  # (Dp, 2Dp)
        bg = pad_last(p["hw_b"][i][:, :D], Dp)
        bl = pad_last(p["hw_b"][i][:, D:], Dp)
        hw_b.append(jnp.concatenate([bg, bl], axis=1))               # (1, 2Dp) f32

    # --- bf16 inputs: halves the dominant HBM->VMEM DMA ---
    ch_bf = ch_emb.astype(bf16)
    wd_bf = wd_emb.astype(bf16)

    # --- batch blocking + explicit VMEM budget ---
    B_t = _pick_block_batch(N, L, cn, C1, Wd, Dp)
    est = _vmem_bytes_estimate(B_t, L, cn, C1, Wd, Dp)
    vmem_limit = int(min(max(2 * est, 32 << 20), 100 << 20))

    def full(shape):
        nd = len(shape)
        return pl.BlockSpec(shape, lambda n, _nd=nd: (0,) * _nd)

    out_nld = pl.pallas_call(
        _embedding_kernel,
        out_shape=jax.ShapeDtypeStruct((N, L, Dp), jnp.float32),
        grid=(N // B_t,),
        in_specs=[
            pl.BlockSpec((B_t, L, cn, C1), lambda n: (n, 0, 0, 0)),   # ch_emb
            pl.BlockSpec((B_t, L, Wd), lambda n: (n, 0, 0)),          # wd_emb
            full((K * K, C1)), full((1, C1)), full((C1, Dp)), full((1, Dp)),
            full((K, Dp)), full((1, Dp)), full((K, Wd)), full((1, Wd)),
            full((Dp, Dp)), full((Wd, Dp)), full((1, Dp)),
            full((Dp, 2 * Dp)), full((1, 2 * Dp)),
            full((Dp, 2 * Dp)), full((1, 2 * Dp)),
        ],
        out_specs=pl.BlockSpec((B_t, L, Dp), lambda n: (n, 0, 0)),
        scratch_shapes=[
            pltpu.VMEM((B_t, Lp, cnp, C1), jnp.float32),   # padded char block
            pltpu.VMEM((B_t, Lp, Dp), jnp.float32),        # padded char-conv out
            pltpu.VMEM((B_t, Lp, Wd), jnp.float32),        # padded word emb
        ],
        compiler_params=pltpu.CompilerParams(
            dimension_semantics=("parallel",),
            vmem_limit_bytes=vmem_limit),
    )(ch_bf, wd_bf,
      cdw, cdb, cpw, cpb,
      wdw_ch, wdb_ch, wdw_wd, wdb_wd,
      wpw_ch, wpw_wd, wpb,
      hw_w[0], hw_b[0], hw_w[1], hw_b[1])

    # Slice the 128->96 padding away and transpose to PyTorch's (N, d_model, L).
    return jnp.transpose(out_nld[:, :, :D], (0, 2, 1))


# ----------------------------------------------------------------------------
# Pure-JAX reference (uses the ORIGINAL concatenated, unpadded, f32
# formulation) to verify the weight splitting / padding / bf16 fusion.
# ----------------------------------------------------------------------------
def reference_forward(ch_emb, wd_emb, p):
    N, L, cn, C = ch_emb.shape
    D = d_model
    x = jnp.pad(ch_emb, ((0, 0), (PAD, PAD), (PAD, PAD), (0, 0)))
    acc = jnp.zeros((N, L, cn, C), jnp.float32)
    for di in range(K):
        for dj in range(K):
            acc = acc + x[:, di:di + L, dj:dj + cn, :] * p["c_dw_w"][di * K + dj]
    acc = acc + p["c_dw_b"][0]
    pw = jnp.einsum("nlcC,CD->nlcD", acc, p["c_pw_w"]) + p["c_pw_b"][0]
    ch = jnp.max(jnp.maximum(pw, 0.0), axis=2)                 # (N, L, 96)

    emb = jnp.concatenate([ch, wd_emb], axis=-1)               # (N, L, 396)
    w_dw = jnp.concatenate([p["w_dw_w_ch"], p["w_dw_w_wd"]], axis=1)   # (K, 396)
    w_db = jnp.concatenate([p["w_dw_b_ch"], p["w_dw_b_wd"]], axis=1)   # (1, 396)
    w_pw = jnp.concatenate([p["w_pw_w_ch"], p["w_pw_w_wd"]], axis=0)   # (396, 96)
    xp = jnp.pad(emb, ((0, 0), (PAD, PAD), (0, 0)))
    acc1 = jnp.zeros_like(emb)
    for k in range(K):
        acc1 = acc1 + xp[:, k:k + L, :] * w_dw[k]
    acc1 = acc1 + w_db[0]
    out = jnp.einsum("nlC,CD->nlD", acc1, w_pw) + p["w_pw_b"][0]

    xh = out
    for i in range(2):
        wg, wl = p["hw_w"][i][:, :D], p["hw_w"][i][:, D:]
        bg, bl = p["hw_b"][i][0, :D], p["hw_b"][i][0, D:]
        g = jax.nn.sigmoid(xh @ wg + bg)
        h = jnp.maximum(xh @ wl + bl, 0.0)
        xh = g * h + (1.0 - g) * xh
    return jnp.transpose(xh, (0, 2, 1))


def init_params(key):
    ks = jax.random.split(key, 15)
    C1, Wd, D = char_emb_size, word_emb_size, d_model
    s = 0.05
    return {
        # char path: depthwise (25 taps, per channel) + pointwise
        "c_dw_w": s * jax.random.normal(ks[0], (K * K, C1), jnp.float32),
        "c_dw_b": s * jax.random.normal(ks[1], (1, C1), jnp.float32),
        "c_pw_w": s * jax.random.normal(ks[2], (C1, D), jnp.float32),
        "c_pw_b": s * jax.random.normal(ks[3], (1, D), jnp.float32),
        # word path: weights pre-split into the ch(96) / wd(300) halves
        "w_dw_w_ch": s * jax.random.normal(ks[4], (K, D), jnp.float32),
        "w_dw_b_ch": s * jax.random.normal(ks[5], (1, D), jnp.float32),
        "w_dw_w_wd": s * jax.random.normal(ks[6], (K, Wd), jnp.float32),
        "w_dw_b_wd": s * jax.random.normal(ks[7], (1, Wd), jnp.float32),
        "w_pw_w_ch": s * jax.random.normal(ks[8], (D, D), jnp.float32),
        "w_pw_w_wd": s * jax.random.normal(ks[9], (Wd, D), jnp.float32),
        "w_pw_b": s * jax.random.normal(ks[10], (1, D), jnp.float32),
        # highway: [Wg | Wl] fused to (D, 2D), [bg | bl] fused to (1, 2D)
        "hw_w": [s * jax.random.normal(ks[11 + i], (D, 2 * D), jnp.float32) for i in range(2)],
        "hw_b": [s * jax.random.normal(ks[13 + i], (1, 2 * D), jnp.float32) for i in range(2)],
    }


if __name__ == "__main__":
    key = jax.random.PRNGKey(0)
    k_p, k_c, k_w = jax.random.split(key, 3)

    N, L, cn = 2, 8, 16  # batch, seq length, chars per word
    params = init_params(k_p)

    ch_emb = jax.random.normal(k_c, (N, L, cn, char_emb_size), jnp.float32)
    wd_emb = jax.random.normal(k_w, (N, L, word_emb_size), jnp.float32)

    out = embedding_forward(ch_emb, wd_emb, params)
    out = jax.block_until_ready(out)
    assert out.shape == (N, d_model, L), out.shape

    ref = reference_forward(ch_emb, wd_emb, params)
    err = float(jnp.max(jnp.abs(out - ref)))
    # bf16 inputs + bf16 matmul operands (f32 accumulation) vs pure-f32 ref
    assert err < 2.5e-2, f"max abs error {err}"

    print("KERNEL_OK")
</pallas_src>

<mosaic_0001>
module attributes {stable_mosaic.version = 11 : i64} {
  func.func @_embedding_kernel(%arg0: i32, %arg1: memref<1x8x16x200xbf16, #tpu.memory_space<vmem>>, %arg2: memref<1x8x300xbf16, #tpu.memory_space<vmem>>, %arg3: memref<25x200xf32, #tpu.memory_space<vmem>>, %arg4: memref<1x200xf32, #tpu.memory_space<vmem>>, %arg5: memref<200x128xbf16, #tpu.memory_space<vmem>>, %arg6: memref<1x128xf32, #tpu.memory_space<vmem>>, %arg7: memref<5x128xf32, #tpu.memory_space<vmem>>, %arg8: memref<1x128xf32, #tpu.memory_space<vmem>>, %arg9: memref<5x300xf32, #tpu.memory_space<vmem>>, %arg10: memref<1x300xf32, #tpu.memory_space<vmem>>, %arg11: memref<128x128xbf16, #tpu.memory_space<vmem>>, %arg12: memref<300x128xbf16, #tpu.memory_space<vmem>>, %arg13: memref<1x128xf32, #tpu.memory_space<vmem>>, %arg14: memref<128x256xbf16, #tpu.memory_space<vmem>>, %arg15: memref<1x256xf32, #tpu.memory_space<vmem>>, %arg16: memref<128x256xbf16, #tpu.memory_space<vmem>>, %arg17: memref<1x256xf32, #tpu.memory_space<vmem>>, %arg18: memref<1x8x128xf32, #tpu.memory_space<vmem>>, %arg19: memref<1x12x20x200xf32, #tpu.memory_space<vmem>>, %arg20: memref<1x12x128xf32, #tpu.memory_space<vmem>>, %arg21: memref<1x12x300xf32, #tpu.memory_space<vmem>>) attributes {dimension_semantics = [#tpu.dimension_semantics<parallel>], iteration_bounds = array<i64: 2>, scalar_prefetch = 0 : i64, scratch_operands = 3 : i64, tpu.core_type = #tpu.core_type<tc>, window_params = [{transform_indices = @transform_0, window_bounds = array<i64: 1, 8, 16, 200>}, {transform_indices = @transform_1, window_bounds = array<i64: 1, 8, 300>}, {pipeline_mode = #tpu.pipeline_mode<synchronous>, transform_indices = @transform_2, window_bounds = array<i64: 25, 200>}, {pipeline_mode = #tpu.pipeline_mode<synchronous>, transform_indices = @transform_3, window_bounds = array<i64: 1, 200>}, {pipeline_mode = #tpu.pipeline_mode<synchronous>, transform_indices = @transform_4, window_bounds = array<i64: 200, 128>}, {pipeline_mode = #tpu.pipeline_mode<synchronous>, transform_indices = @transform_5, window_bounds = array<i64: 1, 128>}, {pipeline_mode = #tpu.pipeline_mode<synchronous>, transform_indices = @transform_6, window_bounds = array<i64: 5, 128>}, {pipeline_mode = #tpu.pipeline_mode<synchronous>, transform_indices = @transform_7, window_bounds = array<i64: 1, 128>}, {pipeline_mode = #tpu.pipeline_mode<synchronous>, transform_indices = @transform_8, window_bounds = array<i64: 5, 300>}, {pipeline_mode = #tpu.pipeline_mode<synchronous>, transform_indices = @transform_9, window_bounds = array<i64: 1, 300>}, {pipeline_mode = #tpu.pipeline_mode<synchronous>, transform_indices = @transform_10, window_bounds = array<i64: 128, 128>}, {pipeline_mode = #tpu.pipeline_mode<synchronous>, transform_indices = @transform_11, window_bounds = array<i64: 300, 128>}, {pipeline_mode = #tpu.pipeline_mode<synchronous>, transform_indices = @transform_12, window_bounds = array<i64: 1, 128>}, {pipeline_mode = #tpu.pipeline_mode<synchronous>, transform_indices = @transform_13, window_bounds = array<i64: 128, 256>}, {pipeline_mode = #tpu.pipeline_mode<synchronous>, transform_indices = @transform_14, window_bounds = array<i64: 1, 256>}, {pipeline_mode = #tpu.pipeline_mode<synchronous>, transform_indices = @transform_15, window_bounds = array<i64: 128, 256>}, {pipeline_mode = #tpu.pipeline_mode<synchronous>, transform_indices = @transform_16, window_bounds = array<i64: 1, 256>}, {transform_indices = @transform_17, window_bounds = array<i64: 1, 8, 128>}]} {
    %cst = arith.constant 0.000000e+00 : f32
    %0 = vector.broadcast %cst : f32 to vector<1x2x20x200xf32>
    %c0 = arith.constant 0 : index
    %c0_0 = arith.constant 0 : index
    %c0_1 = arith.constant 0 : index
    %c0_2 = arith.constant 0 : index
    %1 = vector.load %arg19[%c0, %c0_0, %c0_1, %c0_2] : memref<1x12x20x200xf32, #tpu.memory_space<vmem>>, vector<1x2x20x200xf32>
    tpu.vector_store %arg19[%c0, %c0_0, %c0_1, %c0_2], %0 {strides = array<i32>} : memref<1x12x20x200xf32, #tpu.memory_space<vmem>>, vector<1x2x20x200xf32>,
    %cst_3 = arith.constant 0.000000e+00 : f32
    %2 = vector.broadcast %cst_3 : f32 to vector<1x2x20x200xf32>
    %c0_4 = arith.constant 0 : index
    %c10 = arith.constant 10 : index
    %c0_5 = arith.constant 0 : index
    %c0_6 = arith.constant 0 : index
    %3 = vector.load %arg19[%c0_4, %c10, %c0_5, %c0_6] : memref<1x12x20x200xf32, #tpu.memory_space<vmem>>, vector<1x2x20x200xf32>
    tpu.vector_store %arg19[%c0_4, %c10, %c0_5, %c0_6], %2 {strides = array<i32>} : memref<1x12x20x200xf32, #tpu.memory_space<vmem>>, vector<1x2x20x200xf32>,
    %cst_7 = arith.constant 0.000000e+00 : f32
    %4 = vector.broadcast %cst_7 : f32 to vector<1x12x2x200xf32>
    %c0_8 = arith.constant 0 : index
    %c0_9 = arith.constant 0 : index
    %c0_10 = arith.constant 0 : index
    %c0_11 = arith.constant 0 : index
    %5 = vector.load %arg19[%c0_8, %c0_9, %c0_10, %c0_11] : memref<1x12x20x200xf32, #tpu.memory_space<vmem>>, vector<1x12x2x200xf32>
    tpu.vector_store %arg19[%c0_8, %c0_9, %c0_10, %c0_11], %4 {strides = array<i32>} : memref<1x12x20x200xf32, #tpu.memory_space<vmem>>, vector<1x12x2x200xf32>,
    %cst_12 = arith.constant 0.000000e+00 : f32
    %6 = vector.broadcast %cst_12 : f32 to vector<1x12x2x200xf32>
    %c0_13 = arith.constant 0 : index
    %c0_14 = arith.constant 0 : index
    %c18 = arith.constant 18 : index
    %c0_15 = arith.constant 0 : index
    %7 = vector.load %arg19[%c0_13, %c0_14, %c18, %c0_15] : memref<1x12x20x200xf32, #tpu.memory_space<vmem>>, vector<1x12x2x200xf32>
    tpu.vector_store %arg19[%c0_13, %c0_14, %c18, %c0_15], %6 {strides = array<i32>} : memref<1x12x20x200xf32, #tpu.memory_space<vmem>>, vector<1x12x2x200xf32>,
    %c0_16 = arith.constant 0 : index
    %c0_17 = arith.constant 0 : index
    %c0_18 = arith.constant 0 : index
    %c0_19 = arith.constant 0 : index
    %8 = vector.load %arg1[%c0_16, %c0_17, %c0_18, %c0_19] : memref<1x8x16x200xbf16, #tpu.memory_space<vmem>>, vector<1x8x16x200xbf16>
    %9 = arith.extf %8 : vector<1x8x16x200xbf16> to vector<1x8x16x200xf32>
    %c0_20 = arith.constant 0 : index
    %c2 = arith.constant 2 : index
    %c2_21 = arith.constant 2 : index
    %c0_22 = arith.constant 0 : index
    %10 = vector.load %arg19[%c0_20, %c2, %c2_21, %c0_22] : memref<1x12x20x200xf32, #tpu.memory_space<vmem>>, vector<1x8x16x200xf32>
    tpu.vector_store %arg19[%c0_20, %c2, %c2_21, %c0_22], %9 {strides = array<i32>} : memref<1x12x20x200xf32, #tpu.memory_space<vmem>>, vector<1x8x16x200xf32>,
    %c0_23 = arith.constant 0 : index
    %c0_24 = arith.constant 0 : index
    %11 = vector.load %arg3[%c0_23, %c0_24] : memref<25x200xf32, #tpu.memory_space<vmem>>, vector<25x200xf32>
    %cst_25 = arith.constant 0.000000e+00 : f32
    %12 = vector.broadcast %cst_25 : f32 to vector<1x8x16x200xf32>
    %c0_26 = arith.constant 0 : index
    %c0_27 = arith.constant 0 : index
    %c0_28 = arith.constant 0 : index
    %c0_29 = arith.constant 0 : index
    %13 = vector.load %arg19[%c0_26, %c0_27, %c0_28, %c0_29] : memref<1x12x20x200xf32, #tpu.memory_space<vmem>>, vector<1x12x16x200xf32>
    %14 = vector.extract_strided_slice %11 {offsets = [0, 0], sizes = [1, 200], strides = [1, 1]} : vector<25x200xf32> to vector<1x200xf32>
    %15 = vector.shape_cast %14 : vector<1x200xf32> to vector<200xf32>
    %16 = vector.shape_cast %15 : vector<200xf32> to vector<1x1x1x200xf32>
    %17 = vector.extract_strided_slice %13 {offsets = [0, 0, 0, 0], sizes = [1, 8, 16, 200], strides = [1, 1, 1, 1]} : vector<1x12x16x200xf32> to vector<1x8x16x200xf32>
    %18 = vector.broadcast %16 : vector<1x1x1x200xf32> to vector<1x8x16x200xf32>
    %19 = arith.mulf %17, %18 : vector<1x8x16x200xf32>
    %20 = arith.addf %12, %19 : vector<1x8x16x200xf32>
    %21 = vector.extract_strided_slice %11 {offsets = [5, 0], sizes = [1, 200], strides = [1, 1]} : vector<25x200xf32> to vector<1x200xf32>
    %22 = vector.shape_cast %21 : vector<1x200xf32> to vector<200xf32>
    %23 = vector.shape_cast %22 : vector<200xf32> to vector<1x1x1x200xf32>
    %24 = vector.extract_strided_slice %13 {offsets = [0, 1, 0, 0], sizes = [1, 8, 16, 200], strides = [1, 1, 1, 1]} : vector<1x12x16x200xf32> to vector<1x8x16x200xf32>
    %25 = vector.broadcast %23 : vector<1x1x1x200xf32> to vector<1x8x16x200xf32>
    %26 = arith.mulf %24, %25 : vector<1x8x16x200xf32>
    %27 = arith.addf %20, %26 : vector<1x8x16x200xf32>
    %28 = vector.extract_strided_slice %11 {offsets = [10, 0], sizes = [1, 200], strides = [1, 1]} : vector<25x200xf32> to vector<1x200xf32>
    %29 = vector.shape_cast %28 : vector<1x200xf32> to vector<200xf32>
    %30 = vector.shape_cast %29 : vector<200xf32> to vector<1x1x1x200xf32>
    %31 = vector.extract_strided_slice %13 {offsets = [0, 2, 0, 0], sizes = [1, 8, 16, 200], strides = [1, 1, 1, 1]} : vector<1x12x16x200xf32> to vector<1x8x16x200xf32>
    %32 = vector.broadcast %30 : vector<1x1x1x200xf32> to vector<1x8x16x200xf32>
    %33 = arith.mulf %31, %32 : vector<1x8x16x200xf32>
    %34 = arith.addf %27, %33 : vector<1x8x16x200xf32>
    %35 = vector.extract_strided_slice %11 {offsets = [15, 0], sizes = [1, 200], strides = [1, 1]} : vector<25x200xf32> to vector<1x200xf32>
    %36 = vector.shape_cast %35 : vector<1x200xf32> to vector<200xf32>
    %37 = vector.shape_cast %36 : vector<200xf32> to vector<1x1x1x200xf32>
    %38 = vector.extract_strided_slice %13 {offsets = [0, 3, 0, 0], sizes = [1, 8, 16, 200], strides = [1, 1, 1, 1]} : vector<1x12x16x200xf32> to vector<1x8x16x200xf32>
    %39 = vector.broadcast %37 : vector<1x1x1x200xf32> to vector<1x8x16x200xf32>
    %40 = arith.mulf %38, %39 : vector<1x8x16x200xf32>
    %41 = arith.addf %34, %40 : vector<1x8x16x200xf32>
    %42 = vector.extract_strided_slice %11 {offsets = [20, 0], sizes = [1, 200], strides = [1, 1]} : vector<25x200xf32> to vector<1x200xf32>
    %43 = vector.shape_cast %42 : vector<1x200xf32> to vector<200xf32>
    %44 = vector.shape_cast %43 : vector<200xf32> to vector<1x1x1x200xf32>
    %45 = vector.extract_strided_slice %13 {offsets = [0, 4, 0, 0], sizes = [1, 8, 16, 200], strides = [1, 1, 1, 1]} : vector<1x12x16x200xf32> to vector<1x8x16x200xf32>
    %46 = vector.broadcast %44 : vector<1x1x1x200xf32> to vector<1x8x16x200xf32>
    %47 = arith.mulf %45, %46 : vector<1x8x16x200xf32>
    %48 = arith.addf %41, %47 : vector<1x8x16x200xf32>
    %c0_30 = arith.constant 0 : index
    %c0_31 = arith.constant 0 : index
    %c1 = arith.constant 1 : index
    %c0_32 = arith.constant 0 : index
    %49 = vector.load %arg19[%c0_30, %c0_31, %c1, %c0_32] : memref<1x12x20x200xf32, #tpu.memory_space<vmem>>, vector<1x12x16x200xf32>
    %50 = vector.extract_strided_slice %11 {offsets = [1, 0], sizes = [1, 200], strides = [1, 1]} : vector<25x200xf32> to vector<1x200xf32>
    %51 = vector.shape_cast %50 : vector<1x200xf32> to vector<200xf32>
    %52 = vector.shape_cast %51 : vector<200xf32> to vector<1x1x1x200xf32>
    %53 = vector.extract_strided_slice %49 {offsets = [0, 0, 0, 0], sizes = [1, 8, 16, 200], strides = [1, 1, 1, 1]} : vector<1x12x16x200xf32> to vector<1x8x16x200xf32>
    %54 = vector.broadcast %52 : vector<1x1x1x200xf32> to vector<1x8x16x200xf32>
    %55 = arith.mulf %53, %54 : vector<1x8x16x200xf32>
    %56 = arith.addf %48, %55 : vector<1x8x16x200xf32>
    %57 = vector.extract_strided_slice %11 {offsets = [6, 0], sizes = [1, 200], strides = [1, 1]} : vector<25x200xf32> to vector<1x200xf32>
    %58 = vector.shape_cast %57 : vector<1x200xf32> to vector<200xf32>
    %59 = vector.shape_cast %58 : vector<200xf32> to vector<1x1x1x200xf32>
    %60 = vector.extract_strided_slice %49 {offsets = [0, 1, 0, 0], sizes = [1, 8, 16, 200], strides = [1, 1, 1, 1]} : vector<1x12x16x200xf32> to vector<1x8x16x200xf32>
    %61 = vector.broadcast %59 : vector<1x1x1x200xf32> to vector<1x8x16x200xf32>
    %62 = arith.mulf %60, %61 : vector<1x8x16x200xf32>
    %63 = arith.addf %56, %62 : vector<1x8x16x200xf32>
    %64 = vector.extract_strided_slice %11 {offsets = [11, 0], sizes = [1, 200], strides = [1, 1]} : vector<25x200xf32> to vector<1x200xf32>
    %65 = vector.shape_cast %64 : vector<1x200xf32> to vector<200xf32>
    %66 = vector.shape_cast %65 : vector<200xf32> to vector<1x1x1x200xf32>
    %67 = vector.extract_strided_slice %49 {offsets = [0, 2, 0, 0], sizes = [1, 8, 16, 200], strides = [1, 1, 1, 1]} : vector<1x12x16x200xf32> to vector<1x8x16x200xf32>
    %68 = vector.broadcast %66 : vector<1x1x1x200xf32> to vector<1x8x16x200xf32>
    %69 = arith.mulf %67, %68 : vector<1x8x16x200xf32>
    %70 = arith.addf %63, %69 : vector<1x8x16x200xf32>
    %71 = vector.extract_strided_slice %11 {offsets = [16, 0], sizes = [1, 200], strides = [1, 1]} : vector<25x200xf32> to vector<1x200xf32>
    %72 = vector.shape_cast %71 : vector<1x200xf32> to vector<200xf32>
    %73 = vector.shape_cast %72 : vector<200xf32> to vector<1x1x1x200xf32>
    %74 = vector.extract_strided_slice %49 {offsets = [0, 3, 0, 0], sizes = [1, 8, 16, 200], strides = [1, 1, 1, 1]} : vector<1x12x16x200xf32> to vector<1x8x16x200xf32>
    %75 = vector.broadcast %73 : vector<1x1x1x200xf32> to vector<1x8x16x200xf32>
    %76 = arith.mulf %74, %75 : vector<1x8x16x200xf32>
    %77 = arith.addf %70, %76 : vector<1x8x16x200xf32>
    %78 = vector.extract_strided_slice %11 {offsets = [21, 0], sizes = [1, 200], strides = [1, 1]} : vector<25x200xf32> to vector<1x200xf32>
    %79 = vector.shape_cast %78 : vector<1x200xf32> to vector<200xf32>
    %80 = vector.shape_cast %79 : vector<200xf32> to vector<1x1x1x200xf32>
    %81 = vector.extract_strided_slice %49 {offsets = [0, 4, 0, 0], sizes = [1, 8, 16, 200], strides = [1, 1, 1, 1]} : vector<1x12x16x200xf32> to vector<1x8x16x200xf32>
    %82 = vector.broadcast %80 : vector<1x1x1x200xf32> to vector<1x8x16x200xf32>
    %83 = arith.mulf %81, %82 : vector<1x8x16x200xf32>
    %84 = arith.addf %77, %83 : vector<1x8x16x200xf32>
    %c0_33 = arith.constant 0 : index
    %c0_34 = arith.constant 0 : index
    %c2_35 = arith.constant 2 : index
    %c0_36 = arith.constant 0 : index
    %85 = vector.load %arg19[%c0_33, %c0_34, %c2_35, %c0_36] : memref<1x12x20x200xf32, #tpu.memory_space<vmem>>, vector<1x12x16x200xf32>
    %86 = vector.extract_strided_slice %11 {offsets = [2, 0], sizes = [1, 200], strides = [1, 1]} : vector<25x200xf32> to vector<1x200xf32>
    %87 = vector.shape_cast %86 : vector<1x200xf32> to vector<200xf32>
    %88 = vector.shape_cast %87 : vector<200xf32> to vector<1x1x1x200xf32>
    %89 = vector.extract_strided_slice %85 {offsets = [0, 0, 0, 0], sizes = [1, 8, 16, 200], strides = [1, 1, 1, 1]} : vector<1x12x16x200xf32> to vector<1x8x16x200xf32>
    %90 = vector.broadcast %88 : vector<1x1x1x200xf32> to vector<1x8x16x200xf32>
    %91 = arith.mulf %89, %90 : vector<1x8x16x200xf32>
    %92 = arith.addf %84, %91 : vector<1x8x16x200xf32>
    %93 = vector.extract_strided_slice %11 {offsets = [7, 0], sizes = [1, 200], strides = [1, 1]} : vector<25x200xf32> to vector<1x200xf32>
    %94 = vector.shape_cast %93 : vector<1x200xf32> to vector<200xf32>
    %95 = vector.shape_cast %94 : vector<200xf32> to vector<1x1x1x200xf32>
    %96 = vector.extract_strided_slice %85 {offsets = [0, 1, 0, 0], sizes = [1, 8, 16, 200], strides = [1, 1, 1, 1]} : vector<1x12x16x200xf32> to vector<1x8x16x200xf32>
    %97 = vector.broadcast %95 : vector<1x1x1x200xf32> to vector<1x8x16x200xf32>
    %98 = arith.mulf %96, %97 : vector<1x8x16x200xf32>
    %99 = arith.addf %92, %98 : vector<1x8x16x200xf32>
    %100 = vector.extract_strided_slice %11 {offsets = [12, 0], sizes = [1, 200], strides = [1, 1]} : vector<25x200xf32> to vector<1x200xf32>
    %101 = vector.shape_cast %100 : vector<1x200xf32> to vector<200xf32>
    %102 = vector.shape_cast %101 : vector<200xf32> to vector<1x1x1x200xf32>
    %103 = vector.extract_strided_slice %85 {offsets = [0, 2, 0, 0], sizes = [1, 8, 16, 200], strides = [1, 1, 1, 1]} : vector<1x12x16x200xf32> to vector<1x8x16x200xf32>
    %104 = vector.broadcast %102 : vector<1x1x1x200xf32> to vector<1x8x16x200xf32>
    %105 = arith.mulf %103, %104 : vector<1x8x16x200xf32>
    %106 = arith.addf %99, %105 : vector<1x8x16x200xf32>
    %107 = vector.extract_strided_slice %11 {offsets = [17, 0], sizes = [1, 200], strides = [1, 1]} : vector<25x200xf32> to vector<1x200xf32>
    %108 = vector.shape_cast %107 : vector<1x200xf32> to vector<200xf32>
    %109 = vector.shape_cast %108 : vector<200xf32> to vector<1x1x1x200xf32>
    %110 = vector.extract_strided_slice %85 {offsets = [0, 3, 0, 0], sizes = [1, 8, 16, 200], strides = [1, 1, 1, 1]} : vector<1x12x16x200xf32> to vector<1x8x16x200xf32>
    %111 = vector.broadcast %109 : vector<1x1x1x200xf32> to vector<1x8x16x200xf32>
    %112 = arith.mulf %110, %111 : vector<1x8x16x200xf32>
    %113 = arith.addf %106, %112 : vector<1x8x16x200xf32>
    %114 = vector.extract_strided_slice %11 {offsets = [22, 0], sizes = [1, 200], strides = [1, 1]} : vector<25x200xf32> to vector<1x200xf32>
    %115 = vector.shape_cast %114 : vector<1x200xf32> to vector<200xf32>
    %116 = vector.shape_cast %115 : vector<200xf32> to vector<1x1x1x200xf32>
    %117 = vector.extract_strided_slice %85 {offsets = [0, 4, 0, 0], sizes = [1, 8, 16, 200], strides = [1, 1, 1, 1]} : vector<1x12x16x200xf32> to vector<1x8x16x200xf32>
    %118 = vector.broadcast %116 : vector<1x1x1x200xf32> to vector<1x8x16x200xf32>
    %119 = arith.mulf %117, %118 : vector<1x8x16x200xf32>
    %120 = arith.addf %113, %119 : vector<1x8x16x200xf32>
    %c0_37 = arith.constant 0 : index
    %c0_38 = arith.constant 0 : index
    %c3 = arith.constant 3 : index
    %c0_39 = arith.constant 0 : index
    %121 = vector.load %arg19[%c0_37, %c0_38, %c3, %c0_39] : memref<1x12x20x200xf32, #tpu.memory_space<vmem>>, vector<1x12x16x200xf32>
    %122 = vector.extract_strided_slice %11 {offsets = [3, 0], sizes = [1, 200], strides = [1, 1]} : vector<25x200xf32> to vector<1x200xf32>
    %123 = vector.shape_cast %122 : vector<1x200xf32> to vector<200xf32>
    %124 = vector.shape_cast %123 : vector<200xf32> to vector<1x1x1x200xf32>
    %125 = vector.extract_strided_slice %121 {offsets = [0, 0, 0, 0], sizes = [1, 8, 16, 200], strides = [1, 1, 1, 1]} : vector<1x12x16x200xf32> to vector<1x8x16x200xf32>
    %126 = vector.broadcast %124 : vector<1x1x1x200xf32> to vector<1x8x16x200xf32>
    %127 = arith.mulf %125, %126 : vector<1x8x16x200xf32>
    %128 = arith.addf %120, %127 : vector<1x8x16x200xf32>
    %129 = vector.extract_strided_slice %11 {offsets = [8, 0], sizes = [1, 200], strides = [1, 1]} : vector<25x200xf32> to vector<1x200xf32>
    %130 = vector.shape_cast %129 : vector<1x200xf32> to vector<200xf32>
    %131 = vector.shape_cast %130 : vector<200xf32> to vector<1x1x1x200xf32>
    %132 = vector.extract_strided_slice %121 {offsets = [0, 1, 0, 0], sizes = [1, 8, 16, 200], strides = [1, 1, 1, 1]} : vector<1x12x16x200xf32> to vector<1x8x16x200xf32>
    %133 = vector.broadcast %131 : vector<1x1x1x200xf32> to vector<1x8x16x200xf32>
    %134 = arith.mulf %132, %133 : vector<1x8x16x200xf32>
    %135 = arith.addf %128, %134 : vector<1x8x16x200xf32>
    %136 = vector.extract_strided_slice %11 {offsets = [13, 0], sizes = [1, 200], strides = [1, 1]} : vector<25x200xf32> to vector<1x200xf32>
    %137 = vector.shape_cast %136 : vector<1x200xf32> to vector<200xf32>
    %138 = vector.shape_cast %137 : vector<200xf32> to vector<1x1x1x200xf32>
    %139 = vector.extract_strided_slice %121 {offsets = [0, 2, 0, 0], sizes = [1, 8, 16, 200], strides = [1, 1, 1, 1]} : vector<1x12x16x200xf32> to vector<1x8x16x200xf32>
    %140 = vector.broadcast %138 : vector<1x1x1x200xf32> to vector<1x8x16x200xf32>
    %141 = arith.mulf %139, %140 : vector<1x8x16x200xf32>
    %142 = arith.addf %135, %141 : vector<1x8x16x200xf32>
    %143 = vector.extract_strided_slice %11 {offsets = [18, 0], sizes = [1, 200], strides = [1, 1]} : vector<25x200xf32> to vector<1x200xf32>
    %144 = vector.shape_cast %143 : vector<1x200xf32> to vector<200xf32>
    %145 = vector.shape_cast %144 : vector<200xf32> to vector<1x1x1x200xf32>
    %146 = vector.extract_strided_slice %121 {offsets = [0, 3, 0, 0], sizes = [1, 8, 16, 200], strides = [1, 1, 1, 1]} : vector<1x12x16x200xf32> to vector<1x8x16x200xf32>
    %147 = vector.broadcast %145 : vector<1x1x1x200xf32> to vector<1x8x16x200xf32>
    %148 = arith.mulf %146, %147 : vector<1x8x16x200xf32>
    %149 = arith.addf %142, %148 : vector<1x8x16x200xf32>
    %150 = vector.extract_strided_slice %11 {offsets = [23, 0], sizes = [1, 200], strides = [1, 1]} : vector<25x200xf32> to vector<1x200xf32>
    %151 = vector.shape_cast %150 : vector<1x200xf32> to vector<200xf32>
    %152 = vector.shape_cast %151 : vector<200xf32> to vector<1x1x1x200xf32>
    %153 = vector.extract_strided_slice %121 {offsets = [0, 4, 0, 0], sizes = [1, 8, 16, 200], strides = [1, 1, 1, 1]} : vector<1x12x16x200xf32> to vector<1x8x16x200xf32>
    %154 = vector.broadcast %152 : vector<1x1x1x200xf32> to vector<1x8x16x200xf32>
    %155 = arith.mulf %153, %154 : vector<1x8x16x200xf32>
    %156 = arith.addf %149, %155 : vector<1x8x16x200xf32>
    %c0_40 = arith.constant 0 : index
    %c0_41 = arith.constant 0 : index
    %c4 = arith.constant 4 : index
    %c0_42 = arith.constant 0 : index
    %157 = vector.load %arg19[%c0_40, %c0_41, %c4, %c0_42] : memref<1x12x20x200xf32, #tpu.memory_space<vmem>>, vector<1x12x16x200xf32>
    %158 = vector.extract_strided_slice %11 {offsets = [4, 0], sizes = [1, 200], strides = [1, 1]} : vector<25x200xf32> to vector<1x200xf32>
    %159 = vector.shape_cast %158 : vector<1x200xf32> to vector<200xf32>
    %160 = vector.shape_cast %159 : vector<200xf32> to vector<1x1x1x200xf32>
    %161 = vector.extract_strided_slice %157 {offsets = [0, 0, 0, 0], sizes = [1, 8, 16, 200], strides = [1, 1, 1, 1]} : vector<1x12x16x200xf32> to vector<1x8x16x200xf32>
    %162 = vector.broadcast %160 : vector<1x1x1x200xf32> to vector<1x8x16x200xf32>
    %163 = arith.mulf %161, %162 : vector<1x8x16x200xf32>
    %164 = arith.addf %156, %163 : vector<1x8x16x200xf32>
    %165 = vector.extract_strided_slice %11 {offsets = [9, 0], sizes = [1, 200], strides = [1, 1]} : vector<25x200xf32> to vector<1x200xf32>
    %166 = vector.shape_cast %165 : vector<1x200xf32> to vector<200xf32>
    %167 = vector.shape_cast %166 : vector<200xf32> to vector<1x1x1x200xf32>
    %168 = vector.extract_strided_slice %157 {offsets = [0, 1, 0, 0], sizes = [1, 8, 16, 200], strides = [1, 1, 1, 1]} : vector<1x12x16x200xf32> to vector<1x8x16x200xf32>
    %169 = vector.broadcast %167 : vector<1x1x1x200xf32> to vector<1x8x16x200xf32>
    %170 = arith.mulf %168, %169 : vector<1x8x16x200xf32>
    %171 = arith.addf %164, %170 : vector<1x8x16x200xf32>
    %172 = vector.extract_strided_slice %11 {offsets = [14, 0], sizes = [1, 200], strides = [1, 1]} : vector<25x200xf32> to vector<1x200xf32>
    %173 = vector.shape_cast %172 : vector<1x200xf32> to vector<200xf32>
    %174 = vector.shape_cast %173 : vector<200xf32> to vector<1x1x1x200xf32>
    %175 = vector.extract_strided_slice %157 {offsets = [0, 2, 0, 0], sizes = [1, 8, 16, 200], strides = [1, 1, 1, 1]} : vector<1x12x16x200xf32> to vector<1x8x16x200xf32>
    %176 = vector.broadcast %174 : vector<1x1x1x200xf32> to vector<1x8x16x200xf32>
    %177 = arith.mulf %175, %176 : vector<1x8x16x200xf32>
    %178 = arith.addf %171, %177 : vector<1x8x16x200xf32>
    %179 = vector.extract_strided_slice %11 {offsets = [19, 0], sizes = [1, 200], strides = [1, 1]} : vector<25x200xf32> to vector<1x200xf32>
    %180 = vector.shape_cast %179 : vector<1x200xf32> to vector<200xf32>
    %181 = vector.shape_cast %180 : vector<200xf32> to vector<1x1x1x200xf32>
    %182 = vector.extract_strided_slice %157 {offsets = [0, 3, 0, 0], sizes = [1, 8, 16, 200], strides = [1, 1, 1, 1]} : vector<1x12x16x200xf32> to vector<1x8x16x200xf32>
    %183 = vector.broadcast %181 : vector<1x1x1x200xf32> to vector<1x8x16x200xf32>
    %184 = arith.mulf %182, %183 : vector<1x8x16x200xf32>
    %185 = arith.addf %178, %184 : vector<1x8x16x200xf32>
    %186 = vector.extract_strided_slice %11 {offsets = [24, 0], sizes = [1, 200], strides = [1, 1]} : vector<25x200xf32> to vector<1x200xf32>
    %187 = vector.shape_cast %186 : vector<1x200xf32> to vector<200xf32>
    %188 = vector.shape_cast %187 : vector<200xf32> to vector<1x1x1x200xf32>
    %189 = vector.extract_strided_slice %157 {offsets = [0, 4, 0, 0], sizes = [1, 8, 16, 200], strides = [1, 1, 1, 1]} : vector<1x12x16x200xf32> to vector<1x8x16x200xf32>
    %190 = vector.broadcast %188 : vector<1x1x1x200xf32> to vector<1x8x16x200xf32>
    %191 = arith.mulf %189, %190 : vector<1x8x16x200xf32>
    %192 = arith.addf %185, %191 : vector<1x8x16x200xf32>
    %c0_43 = arith.constant 0 : index
    %c0_44 = arith.constant 0 : index
    %193 = vector.load %arg4[%c0_43, %c0_44] : memref<1x200xf32, #tpu.memory_space<vmem>>, vector<1x200xf32>
    %194 = vector.shape_cast %193 : vector<1x200xf32> to vector<1x1x1x200xf32>
    %195 = vector.broadcast %194 : vector<1x1x1x200xf32> to vector<1x8x16x200xf32>
    %196 = arith.addf %192, %195 : vector<1x8x16x200xf32>
    %197 = vector.shape_cast %196 : vector<1x8x16x200xf32> to vector<128x200xf32>
    %198 = arith.truncf %197 : vector<128x200xf32> to vector<128x200xbf16>
    %c0_45 = arith.constant 0 : index
    %c0_46 = arith.constant 0 : index
    %199 = vector.load %arg5[%c0_45, %c0_46] : memref<200x128xbf16, #tpu.memory_space<vmem>>, vector<200x128xbf16>
    %cst_47 = arith.constant dense<0.000000e+00> : vector<128x128xf32>
    %200 = tpu.matmul %198, %199, %cst_47 {dimension_numbers = #tpu.dot_dimension_numbers<[1], [0], [0], [1], [0, 0, 1, 1], [], []>} : vector<128x200xbf16>, vector<200x128xbf16>, vector<128x128xf32> -> vector<128x128xf32>
    %c0_48 = arith.constant 0 : index
    %c0_49 = arith.constant 0 : index
    %201 = vector.load %arg6[%c0_48, %c0_49] : memref<1x128xf32, #tpu.memory_space<vmem>>, vector<1x128xf32>
    %202 = vector.broadcast %201 : vector<1x128xf32> to vector<128x128xf32>
    %203 = arith.addf %200, %202 : vector<128x128xf32>
    %cst_50 = arith.constant 0.000000e+00 : f32
    %204 = vector.broadcast %cst_50 : f32 to vector<128x128xf32>
    %205 = arith.maximumf %203, %204 : vector<128x128xf32>
    %206 = vector.shape_cast %205 : vector<128x128xf32> to vector<1x8x16x128xf32>
    %cst_51 = arith.constant dense<0xFF800000> : vector<1x8x128xf32>
    %207 = vector.multi_reduction <maximumf>, %206, %cst_51 [2] : vector<1x8x16x128xf32> to vector<1x8x128xf32>
    %cst_52 = arith.constant 0.000000e+00 : f32
    %208 = vector.broadcast %cst_52 : f32 to vector<1x2x128xf32>
    %c0_53 = arith.constant 0 : index
    %c0_54 = arith.constant 0 : index
    %c0_55 = arith.constant 0 : index
    %209 = vector.load %arg20[%c0_53, %c0_54, %c0_55] : memref<1x12x128xf32, #tpu.memory_space<vmem>>, vector<1x2x128xf32>
    tpu.vector_store %arg20[%c0_53, %c0_54, %c0_55], %208 {strides = array<i32>} : memref<1x12x128xf32, #tpu.memory_space<vmem>>, vector<1x2x128xf32>,
    %cst_56 = arith.constant 0.000000e+00 : f32
    %210 = vector.broadcast %cst_56 : f32 to vector<1x2x128xf32>
    %c0_57 = arith.constant 0 : index
    %c10_58 = arith.constant 10 : index
    %c0_59 = arith.constant 0 : index
    %211 = vector.load %arg20[%c0_57, %c10_58, %c0_59] : memref<1x12x128xf32, #tpu.memory_space<vmem>>, vector<1x2x128xf32>
    tpu.vector_store %arg20[%c0_57, %c10_58, %c0_59], %210 {strides = array<i32>} : memref<1x12x128xf32, #tpu.memory_space<vmem>>, vector<1x2x128xf32>,
    %c0_60 = arith.constant 0 : index
    %c2_61 = arith.constant 2 : index
    %c0_62 = arith.constant 0 : index
    %212 = vector.load %arg20[%c0_60, %c2_61, %c0_62] : memref<1x12x128xf32, #tpu.memory_space<vmem>>, vector<1x8x128xf32>
    tpu.vector_store %arg20[%c0_60, %c2_61, %c0_62], %207 {strides = array<i32>} : memref<1x12x128xf32, #tpu.memory_space<vmem>>, vector<1x8x128xf32>,
    %cst_63 = arith.constant 0.000000e+00 : f32
    %213 = vector.broadcast %cst_63 : f32 to vector<1x2x300xf32>
    %c0_64 = arith.constant 0 : index
    %c0_65 = arith.constant 0 : index
    %c0_66 = arith.constant 0 : index
    %214 = vector.load %arg21[%c0_64, %c0_65, %c0_66] : memref<1x12x300xf32, #tpu.memory_space<vmem>>, vector<1x2x300xf32>
    tpu.vector_store %arg21[%c0_64, %c0_65, %c0_66], %213 {strides = array<i32>} : memref<1x12x300xf32, #tpu.memory_space<vmem>>, vector<1x2x300xf32>,
    %cst_67 = arith.constant 0.000000e+00 : f32
    %215 = vector.broadcast %cst_67 : f32 to vector<1x2x300xf32>
    %c0_68 = arith.constant 0 : index
    %c10_69 = arith.constant 10 : index
    %c0_70 = arith.constant 0 : index
    %216 = vector.load %arg21[%c0_68, %c10_69, %c0_70] : memref<1x12x300xf32, #tpu.memory_space<vmem>>, vector<1x2x300xf32>
    tpu.vector_store %arg21[%c0_68, %c10_69, %c0_70], %215 {strides = array<i32>} : memref<1x12x300xf32, #tpu.memory_space<vmem>>, vector<1x2x300xf32>,
    %c0_71 = arith.constant 0 : index
    %c0_72 = arith.constant 0 : index
    %c0_73 = arith.constant 0 : index
    %217 = vector.load %arg2[%c0_71, %c0_72, %c0_73] : memref<1x8x300xbf16, #tpu.memory_space<vmem>>, vector<1x8x300xbf16>
    %218 = arith.extf %217 : vector<1x8x300xbf16> to vector<1x8x300xf32>
    %c0_74 = arith.constant 0 : index
    %c2_75 = arith.constant 2 : index
    %c0_76 = arith.constant 0 : index
    %219 = vector.load %arg21[%c0_74, %c2_75, %c0_76] : memref<1x12x300xf32, #tpu.memory_space<vmem>>, vector<1x8x300xf32>
    tpu.vector_store %arg21[%c0_74, %c2_75, %c0_76], %218 {strides = array<i32>} : memref<1x12x300xf32, #tpu.memory_space<vmem>>, vector<1x8x300xf32>,
    %c0_77 = arith.constant 0 : index
    %c0_78 = arith.constant 0 : index
    %220 = vector.load %arg7[%c0_77, %c0_78] : memref<5x128xf32, #tpu.memory_space<vmem>>, vector<5x128xf32>
    %c0_79 = arith.constant 0 : index
    %c0_80 = arith.constant 0 : index
    %221 = vector.load %arg9[%c0_79, %c0_80] : memref<5x300xf32, #tpu.memory_space<vmem>>, vector<5x300xf32>
    %cst_81 = arith.constant 0.000000e+00 : f32
    %222 = vector.broadcast %cst_81 : f32 to vector<1x8x128xf32>
    %cst_82 = arith.constant 0.000000e+00 : f32
    %223 = vector.broadcast %cst_82 : f32 to vector<1x8x300xf32>
    %c0_83 = arith.constant 0 : index
    %c0_84 = arith.constant 0 : index
    %c0_85 = arith.constant 0 : index
    %224 = vector.load %arg20[%c0_83, %c0_84, %c0_85] : memref<1x12x128xf32, #tpu.memory_space<vmem>>, vector<1x8x128xf32>
    %225 = vector.extract_strided_slice %220 {offsets = [0, 0], sizes = [1, 128], strides = [1, 1]} : vector<5x128xf32> to vector<1x128xf32>
    %226 = vector.shape_cast %225 : vector<1x128xf32> to vector<1x1x128xf32>
    %227 = vector.broadcast %226 : vector<1x1x128xf32> to vector<1x8x128xf32>
    %228 = arith.mulf %224, %227 : vector<1x8x128xf32>
    %229 = arith.addf %222, %228 : vector<1x8x128xf32>
    %c0_86 = arith.constant 0 : index
    %c0_87 = arith.constant 0 : index
    %c0_88 = arith.constant 0 : index
    %230 = vector.load %arg21[%c0_86, %c0_87, %c0_88] : memref<1x12x300xf32, #tpu.memory_space<vmem>>, vector<1x8x300xf32>
    %231 = vector.extract_strided_slice %221 {offsets = [0, 0], sizes = [1, 300], strides = [1, 1]} : vector<5x300xf32> to vector<1x300xf32>
    %232 = vector.shape_cast %231 : vector<1x300xf32> to vector<1x1x300xf32>
    %233 = vector.broadcast %232 : vector<1x1x300xf32> to vector<1x8x300xf32>
    %234 = arith.mulf %230, %233 : vector<1x8x300xf32>
    %235 = arith.addf %223, %234 : vector<1x8x300xf32>
    %c0_89 = arith.constant 0 : index
    %c1_90 = arith.constant 1 : index
    %c0_91 = arith.constant 0 : index
    %236 = vector.load %arg20[%c0_89, %c1_90, %c0_91] : memref<1x12x128xf32, #tpu.memory_space<vmem>>, vector<1x8x128xf32>
    %237 = vector.extract_strided_slice %220 {offsets = [1, 0], sizes = [1, 128], strides = [1, 1]} : vector<5x128xf32> to vector<1x128xf32>
    %238 = vector.shape_cast %237 : vector<1x128xf32> to vector<1x1x128xf32>
    %239 = vector.broadcast %238 : vector<1x1x128xf32> to vector<1x8x128xf32>
    %240 = arith.mulf %236, %239 : vector<1x8x128xf32>
    %241 = arith.addf %229, %240 : vector<1x8x128xf32>
    %c0_92 = arith.constant 0 : index
    %c1_93 = arith.constant 1 : index
    %c0_94 = arith.constant 0 : index
    %242 = vector.load %arg21[%c0_92, %c1_93, %c0_94] : memref<1x12x300xf32, #tpu.memory_space<vmem>>, vector<1x8x300xf32>
    %243 = vector.extract_strided_slice %221 {offsets = [1, 0], sizes = [1, 300], strides = [1, 1]} : vector<5x300xf32> to vector<1x300xf32>
    %244 = vector.shape_cast %243 : vector<1x300xf32> to vector<1x1x300xf32>
    %245 = vector.broadcast %244 : vector<1x1x300xf32> to vector<1x8x300xf32>
    %246 = arith.mulf %242, %245 : vector<1x8x300xf32>
    %247 = arith.addf %235, %246 : vector<1x8x300xf32>
    %c0_95 = arith.constant 0 : index
    %c2_96 = arith.constant 2 : index
    %c0_97 = arith.constant 0 : index
    %248 = vector.load %arg20[%c0_95, %c2_96, %c0_97] : memref<1x12x128xf32, #tpu.memory_space<vmem>>, vector<1x8x128xf32>
    %249 = vector.extract_strided_slice %220 {offsets = [2, 0], sizes = [1, 128], strides = [1, 1]} : vector<5x128xf32> to vector<1x128xf32>
    %250 = vector.shape_cast %249 : vector<1x128xf32> to vector<1x1x128xf32>
    %251 = vector.broadcast %250 : vector<1x1x128xf32> to vector<1x8x128xf32>
    %252 = arith.mulf %248, %251 : vector<1x8x128xf32>
    %253 = arith.addf %241, %252 : vector<1x8x128xf32>
    %c0_98 = arith.constant 0 : index
    %c2_99 = arith.constant 2 : index
    %c0_100 = arith.constant 0 : index
    %254 = vector.load %arg21[%c0_98, %c2_99, %c0_100] : memref<1x12x300xf32, #tpu.memory_space<vmem>>, vector<1x8x300xf32>
    %255 = vector.extract_strided_slice %221 {offsets = [2, 0], sizes = [1, 300], strides = [1, 1]} : vector<5x300xf32> to vector<1x300xf32>
    %256 = vector.shape_cast %255 : vector<1x300xf32> to vector<1x1x300xf32>
    %257 = vector.broadcast %256 : vector<1x1x300xf32> to vector<1x8x300xf32>
    %258 = arith.mulf %254, %257 : vector<1x8x300xf32>
    %259 = arith.addf %247, %258 : vector<1x8x300xf32>
    %c0_101 = arith.constant 0 : index
    %c3_102 = arith.constant 3 : index
    %c0_103 = arith.constant 0 : index
    %260 = vector.load %arg20[%c0_101, %c3_102, %c0_103] : memref<1x12x128xf32, #tpu.memory_space<vmem>>, vector<1x8x128xf32>
    %261 = vector.extract_strided_slice %220 {offsets = [3, 0], sizes = [1, 128], strides = [1, 1]} : vector<5x128xf32> to vector<1x128xf32>
    %262 = vector.shape_cast %261 : vector<1x128xf32> to vector<1x1x128xf32>
    %263 = vector.broadcast %262 : vector<1x1x128xf32> to vector<1x8x128xf32>
    %264 = arith.mulf %260, %263 : vector<1x8x128xf32>
    %265 = arith.addf %253, %264 : vector<1x8x128xf32>
    %c0_104 = arith.constant 0 : index
    %c3_105 = arith.constant 3 : index
    %c0_106 = arith.constant 0 : index
    %266 = vector.load %arg21[%c0_104, %c3_105, %c0_106] : memref<1x12x300xf32, #tpu.memory_space<vmem>>, vector<1x8x300xf32>
    %267 = vector.extract_strided_slice %221 {offsets = [3, 0], sizes = [1, 300], strides = [1, 1]} : vector<5x300xf32> to vector<1x300xf32>
    %268 = vector.shape_cast %267 : vector<1x300xf32> to vector<1x1x300xf32>
    %269 = vector.broadcast %268 : vector<1x1x300xf32> to vector<1x8x300xf32>
    %270 = arith.mulf %266, %269 : vector<1x8x300xf32>
    %271 = arith.addf %259, %270 : vector<1x8x300xf32>
    %c0_107 = arith.constant 0 : index
    %c4_108 = arith.constant 4 : index
    %c0_109 = arith.constant 0 : index
    %272 = vector.load %arg20[%c0_107, %c4_108, %c0_109] : memref<1x12x128xf32, #tpu.memory_space<vmem>>, vector<1x8x128xf32>
    %273 = vector.extract_strided_slice %220 {offsets = [4, 0], sizes = [1, 128], strides = [1, 1]} : vector<5x128xf32> to vector<1x128xf32>
    %274 = vector.shape_cast %273 : vector<1x128xf32> to vector<1x1x128xf32>
    %275 = vector.broadcast %274 : vector<1x1x128xf32> to vector<1x8x128xf32>
    %276 = arith.mulf %272, %275 : vector<1x8x128xf32>
    %277 = arith.addf %265, %276 : vector<1x8x128xf32>
    %c0_110 = arith.constant 0 : index
    %c4_111 = arith.constant 4 : index
    %c0_112 = arith.constant 0 : index
    %278 = vector.load %arg21[%c0_110, %c4_111, %c0_112] : memref<1x12x300xf32, #tpu.memory_space<vmem>>, vector<1x8x300xf32>
    %279 = vector.extract_strided_slice %221 {offsets = [4, 0], sizes = [1, 300], strides = [1, 1]} : vector<5x300xf32> to vector<1x300xf32>
    %280 = vector.shape_cast %279 : vector<1x300xf32> to vector<1x1x300xf32>
    %281 = vector.broadcast %280 : vector<1x1x300xf32> to vector<1x8x300xf32>
    %282 = arith.mulf %278, %281 : vector<1x8x300xf32>
    %283 = arith.addf %271, %282 : vector<1x8x300xf32>
    %c0_113 = arith.constant 0 : index
    %c0_114 = arith.constant 0 : index
    %284 = vector.load %arg8[%c0_113, %c0_114] : memref<1x128xf32, #tpu.memory_space<vmem>>, vector<1x128xf32>
    %285 = vector.shape_cast %284 : vector<1x128xf32> to vector<1x1x128xf32>
    %286 = vector.broadcast %285 : vector<1x1x128xf32> to vector<1x8x128xf32>
    %287 = arith.addf %277, %286 : vector<1x8x128xf32>
    %c0_115 = arith.constant 0 : index
    %c0_116 = arith.constant 0 : index
    %288 = vector.load %arg10[%c0_115, %c0_116] : memref<1x300xf32, #tpu.memory_space<vmem>>, vector<1x300xf32>
    %289 = vector.shape_cast %288 : vector<1x300xf32> to vector<1x1x300xf32>
    %290 = vector.broadcast %289 : vector<1x1x300xf32> to vector<1x8x300xf32>
    %291 = arith.addf %283, %290 : vector<1x8x300xf32>
    %292 = vector.shape_cast %287 : vector<1x8x128xf32> to vector<8x128xf32>
    %293 = arith.truncf %292 : vector<8x128xf32> to vector<8x128xbf16>
    %c0_117 = arith.constant 0 : index
    %c0_118 = arith.constant 0 : index
    %294 = vector.load %arg11[%c0_117, %c0_118] : memref<128x128xbf16, #tpu.memory_space<vmem>>, vector<128x128xbf16>
    %cst_119 = arith.constant dense<0.000000e+00> : vector<8x128xf32>
    %295 = tpu.matmul %293, %294, %cst_119 {dimension_numbers = #tpu.dot_dimension_numbers<[1], [0], [0], [1], [0, 0, 1, 1], [], []>} : vector<8x128xbf16>, vector<128x128xbf16>, vector<8x128xf32> -> vector<8x128xf32>
    %296 = vector.shape_cast %291 : vector<1x8x300xf32> to vector<8x300xf32>
    %297 = arith.truncf %296 : vector<8x300xf32> to vector<8x300xbf16>
    %c0_120 = arith.constant 0 : index
    %c0_121 = arith.constant 0 : index
    %298 = vector.load %arg12[%c0_120, %c0_121] : memref<300x128xbf16, #tpu.memory_space<vmem>>, vector<300x128xbf16>
    %cst_122 = arith.constant dense<0.000000e+00> : vector<8x128xf32>
    %299 = tpu.matmul %297, %298, %cst_122 {dimension_numbers = #tpu.dot_dimension_numbers<[1], [0], [0], [1], [0, 0, 1, 1], [], []>} : vector<8x300xbf16>, vector<300x128xbf16>, vector<8x128xf32> -> vector<8x128xf32>
    %300 = arith.addf %295, %299 : vector<8x128xf32>
    %c0_123 = arith.constant 0 : index
    %c0_124 = arith.constant 0 : index
    %301 = vector.load %arg13[%c0_123, %c0_124] : memref<1x128xf32, #tpu.memory_space<vmem>>, vector<1x128xf32>
    %302 = vector.broadcast %301 : vector<1x128xf32> to vector<8x128xf32>
    %303 = arith.addf %300, %302 : vector<8x128xf32>
    %304 = arith.truncf %303 : vector<8x128xf32> to vector<8x128xbf16>
    %c0_125 = arith.constant 0 : index
    %c0_126 = arith.constant 0 : index
    %305 = vector.load %arg14[%c0_125, %c0_126] : memref<128x256xbf16, #tpu.memory_space<vmem>>, vector<128x256xbf16>
    %cst_127 = arith.constant dense<0.000000e+00> : vector<8x256xf32>
    %306 = tpu.matmul %304, %305, %cst_127 {dimension_numbers = #tpu.dot_dimension_numbers<[1], [0], [0], [1], [0, 0, 1, 1], [], []>} : vector<8x128xbf16>, vector<128x256xbf16>, vector<8x256xf32> -> vector<8x256xf32>
    %c0_128 = arith.constant 0 : index
    %c0_129 = arith.constant 0 : index
    %307 = vector.load %arg15[%c0_128, %c0_129] : memref<1x256xf32, #tpu.memory_space<vmem>>, vector<1x256xf32>
    %308 = vector.broadcast %307 : vector<1x256xf32> to vector<8x256xf32>
    %309 = arith.addf %306, %308 : vector<8x256xf32>
    %310 = vector.extract_strided_slice %309 {offsets = [0, 0], sizes = [8, 128], strides = [1, 1]} : vector<8x256xf32> to vector<8x128xf32>
    %311 = arith.negf %310 : vector<8x128xf32>
    %312 = math.exp %311 : vector<8x128xf32>
    %cst_130 = arith.constant 1.000000e+00 : f32
    %313 = vector.broadcast %cst_130 : f32 to vector<8x128xf32>
    %314 = arith.addf %313, %312 : vector<8x128xf32>
    %315 = arith.divf %313, %314 : vector<8x128xf32>
    %316 = vector.extract_strided_slice %309 {offsets = [0, 128], sizes = [8, 128], strides = [1, 1]} : vector<8x256xf32> to vector<8x128xf32>
    %cst_131 = arith.constant 0.000000e+00 : f32
    %317 = vector.broadcast %cst_131 : f32 to vector<8x128xf32>
    %318 = arith.maximumf %316, %317 : vector<8x128xf32>
    %319 = arith.mulf %315, %318 : vector<8x128xf32>
    %cst_132 = arith.constant 1.000000e+00 : f32
    %320 = vector.broadcast %cst_132 : f32 to vector<8x128xf32>
    %321 = arith.subf %320, %315 : vector<8x128xf32>
    %322 = arith.mulf %321, %303 : vector<8x128xf32>
    %323 = arith.addf %319, %322 : vector<8x128xf32>
    %324 = arith.truncf %323 : vector<8x128xf32> to vector<8x128xbf16>
    %c0_133 = arith.constant 0 : index
    %c0_134 = arith.constant 0 : index
    %325 = vector.load %arg16[%c0_133, %c0_134] : memref<128x256xbf16, #tpu.memory_space<vmem>>, vector<128x256xbf16>
    %cst_135 = arith.constant dense<0.000000e+00> : vector<8x256xf32>
    %326 = tpu.matmul %324, %325, %cst_135 {dimension_numbers = #tpu.dot_dimension_numbers<[1], [0], [0], [1], [0, 0, 1, 1], [], []>} : vector<8x128xbf16>, vector<128x256xbf16>, vector<8x256xf32> -> vector<8x256xf32>
    %c0_136 = arith.constant 0 : index
    %c0_137 = arith.constant 0 : index
    %327 = vector.load %arg17[%c0_136, %c0_137] : memref<1x256xf32, #tpu.memory_space<vmem>>, vector<1x256xf32>
    %328 = vector.broadcast %327 : vector<1x256xf32> to vector<8x256xf32>
    %329 = arith.addf %326, %328 : vector<8x256xf32>
    %330 = vector.extract_strided_slice %329 {offsets = [0, 0], sizes = [8, 128], strides = [1, 1]} : vector<8x256xf32> to vector<8x128xf32>
    %331 = arith.negf %330 : vector<8x128xf32>
    %332 = math.exp %331 : vector<8x128xf32>
    %cst_138 = arith.constant 1.000000e+00 : f32
    %333 = vector.broadcast %cst_138 : f32 to vector<8x128xf32>
    %334 = arith.addf %333, %332 : vector<8x128xf32>
    %335 = arith.divf %333, %334 : vector<8x128xf32>
    %336 = vector.extract_strided_slice %329 {offsets = [0, 128], sizes = [8, 128], strides = [1, 1]} : vector<8x256xf32> to vector<8x128xf32>
    %cst_139 = arith.constant 0.000000e+00 : f32
    %337 = vector.broadcast %cst_139 : f32 to vector<8x128xf32>
    %338 = arith.maximumf %336, %337 : vector<8x128xf32>
    %339 = arith.mulf %335, %338 : vector<8x128xf32>
    %cst_140 = arith.constant 1.000000e+00 : f32
    %340 = vector.broadcast %cst_140 : f32 to vector<8x128xf32>
    %341 = arith.subf %340, %335 : vector<8x128xf32>
    %342 = arith.mulf %341, %323 : vector<8x128xf32>
    %343 = arith.addf %339, %342 : vector<8x128xf32>
    %344 = vector.shape_cast %343 : vector<8x128xf32> to vector<1x8x128xf32>
    %c0_141 = arith.constant 0 : index
    %c0_142 = arith.constant 0 : index
    %c0_143 = arith.constant 0 : index
    %345 = vector.load %arg18[%c0_141, %c0_142, %c0_143] : memref<1x8x128xf32, #tpu.memory_space<vmem>>, vector<1x8x128xf32>
    tpu.vector_store %arg18[%c0_141, %c0_142, %c0_143], %344 {strides = array<i32>} : memref<1x8x128xf32, #tpu.memory_space<vmem>>, vector<1x8x128xf32>,
    return
  }
  func.func @transform_0(%arg0: i32) -> (i32, i32, i32, i32) {
    %c0_i32 = arith.constant 0 : i32
    %c0_i32_0 = arith.constant 0 : i32
    %c0_i32_1 = arith.constant 0 : i32
    %c0_i32_2 = arith.constant 0 : i32
    return %arg0, %c0_i32, %c0_i32_0, %c0_i32_1 : i32, i32, i32, i32
  }
  func.func @transform_1(%arg0: i32) -> (i32, i32, i32) {
    %c0_i32 = arith.constant 0 : i32
    %c0_i32_0 = arith.constant 0 : i32
    %c0_i32_1 = arith.constant 0 : i32
    return %arg0, %c0_i32, %c0_i32_0 : i32, i32, i32
  }
  func.func @transform_2(%arg0: i32) -> (i32, i32) {
    %c0_i32 = arith.constant 0 : i32
    %c0_i32_0 = arith.constant 0 : i32
    %c0_i32_1 = arith.constant 0 : i32
    return %c0_i32, %c0_i32_0 : i32, i32
  }
  func.func @transform_3(%arg0: i32) -> (i32, i32) {
    %c0_i32 = arith.constant 0 : i32
    %c0_i32_0 = arith.constant 0 : i32
    %c0_i32_1 = arith.constant 0 : i32
    return %c0_i32, %c0_i32_0 : i32, i32
  }
  func.func @transform_4(%arg0: i32) -> (i32, i32) {
    %c0_i32 = arith.constant 0 : i32
    %c0_i32_0 = arith.constant 0 : i32
    %c0_i32_1 = arith.constant 0 : i32
    return %c0_i32, %c0_i32_0 : i32, i32
  }
  func.func @transform_5(%arg0: i32) -> (i32, i32) {
    %c0_i32 = arith.constant 0 : i32
    %c0_i32_0 = arith.constant 0 : i32
    %c0_i32_1 = arith.constant 0 : i32
    return %c0_i32, %c0_i32_0 : i32, i32
  }
  func.func @transform_6(%arg0: i32) -> (i32, i32) {
    %c0_i32 = arith.constant 0 : i32
    %c0_i32_0 = arith.constant 0 : i32
    %c0_i32_1 = arith.constant 0 : i32
    return %c0_i32, %c0_i32_0 : i32, i32
  }
  func.func @transform_7(%arg0: i32) -> (i32, i32) {
    %c0_i32 = arith.constant 0 : i32
    %c0_i32_0 = arith.constant 0 : i32
    %c0_i32_1 = arith.constant 0 : i32
    return %c0_i32, %c0_i32_0 : i32, i32
  }
  func.func @transform_8(%arg0: i32) -> (i32, i32) {
    %c0_i32 = arith.constant 0 : i32
    %c0_i32_0 = arith.constant 0 : i32
    %c0_i32_1 = arith.constant 0 : i32
    return %c0_i32, %c0_i32_0 : i32, i32
  }
  func.func @transform_9(%arg0: i32) -> (i32, i32) {
    %c0_i32 = arith.constant 0 : i32
    %c0_i32_0 = arith.constant 0 : i32
    %c0_i32_1 = arith.constant 0 : i32
    return %c0_i32, %c0_i32_0 : i32, i32
  }
  func.func @transform_10(%arg0: i32) -> (i32, i32) {
    %c0_i32 = arith.constant 0 : i32
    %c0_i32_0 = arith.constant 0 : i32
    %c0_i32_1 = arith.constant 0 : i32
    return %c0_i32, %c0_i32_0 : i32, i32
  }
  func.func @transform_11(%arg0: i32) -> (i32, i32) {
    %c0_i32 = arith.constant 0 : i32
    %c0_i32_0 = arith.constant 0 : i32
    %c0_i32_1 = arith.constant 0 : i32
    return %c0_i32, %c0_i32_0 : i32, i32
  }
  func.func @transform_12(%arg0: i32) -> (i32, i32) {
    %c0_i32 = arith.constant 0 : i32
    %c0_i32_0 = arith.constant 0 : i32
    %c0_i32_1 = arith.constant 0 : i32
    return %c0_i32, %c0_i32_0 : i32, i32
  }
  func.func @transform_13(%arg0: i32) -> (i32, i32) {
    %c0_i32 = arith.constant 0 : i32
    %c0_i32_0 = arith.constant 0 : i32
    %c0_i32_1 = arith.constant 0 : i32
    return %c0_i32, %c0_i32_0 : i32, i32
  }
  func.func @transform_14(%arg0: i32) -> (i32, i32) {
    %c0_i32 = arith.constant 0 : i32
    %c0_i32_0 = arith.constant 0 : i32
    %c0_i32_1 = arith.constant 0 : i32
    return %c0_i32, %c0_i32_0 : i32, i32
  }
  func.func @transform_15(%arg0: i32) -> (i32, i32) {
    %c0_i32 = arith.constant 0 : i32
    %c0_i32_0 = arith.constant 0 : i32
    %c0_i32_1 = arith.constant 0 : i32
    return %c0_i32, %c0_i32_0 : i32, i32
  }
  func.func @transform_16(%arg0: i32) -> (i32, i32) {
    %c0_i32 = arith.constant 0 : i32
    %c0_i32_0 = arith.constant 0 : i32
    %c0_i32_1 = arith.constant 0 : i32
    return %c0_i32, %c0_i32_0 : i32, i32
  }
  func.func @transform_17(%arg0: i32) -> (i32, i32, i32) {
    %c0_i32 = arith.constant 0 : i32
    %c0_i32_0 = arith.constant 0 : i32
    %c0_i32_1 = arith.constant 0 : i32
    return %arg0, %c0_i32, %c0_i32_0 : i32, i32, i32
  }
}

</mosaic_0001>

<llo_original>
// kernel: tpu_custom_call.1
$region0: #{tpu_custom_call.1}
  #allocation0 [shape = 'u32[]', space=smem, size = 0x4, offset = 0x4, fixed_abs, tag = 'smem constant byte address 0x4 - core index']
  #allocation1 [shape = 'u32[144,128]{1,0:T(1,128)}', space=vmem, size = 0x12000, scoped, tag = 'internal scratch']
  #allocation2 [shape = 'f32[1,12,20,200]{3,2,1,0:T(8,128)}', space=vmem, size = 0x48000, scoped, tag = 'scratch operand']
  #allocation3 [shape = 'f32[1,12,128]{2,1,0:T(8,128)}', space=vmem, size = 0x2000, scoped, tag = 'scratch operand']
  #allocation4 [shape = 'f32[1,12,300]{2,1,0:T(8,128)}', space=vmem, size = 0x6000, scoped, tag = 'scratch operand']
  %s0 = inlined_call_operand.hbm [shape: bf16[2,8,16,200], index: 0, kind: input, shape index: {}]
  %s1 = inlined_call_operand.hbm [shape: bf16[2,8,300], index: 1, kind: input, shape index: {}]
  %s2 = inlined_call_operand.hbm [shape: f32[25,200], index: 2, kind: input, shape index: {}]
  %s3 = inlined_call_operand.hbm [shape: f32[1,200], index: 3, kind: input, shape index: {}]
  %s4 = inlined_call_operand.hbm [shape: bf16[200,128], index: 4, kind: input, shape index: {}]
  %s5 = inlined_call_operand.vmem [shape: f32[1,128], index: 5, kind: input, shape index: {}]
  %s6 = inlined_call_operand.vmem [shape: f32[5,128], index: 6, kind: input, shape index: {}]
  %s7 = inlined_call_operand.hbm [shape: f32[1,128], index: 7, kind: input, shape index: {}]
  %s8 = inlined_call_operand.hbm [shape: f32[5,300], index: 8, kind: input, shape index: {}]
  %s9 = inlined_call_operand.vmem [shape: f32[1,300], index: 9, kind: input, shape index: {}]
  %s10 = inlined_call_operand.hbm [shape: bf16[128,128], index: 10, kind: input, shape index: {}]
  %s11 = inlined_call_operand.hbm [shape: bf16[300,128], index: 11, kind: input, shape index: {}]
  %s12 = inlined_call_operand.vmem [shape: f32[1,128], index: 12, kind: input, shape index: {}]
  %s13 = inlined_call_operand.hbm [shape: bf16[128,256], index: 13, kind: input, shape index: {}]
  %s14 = inlined_call_operand.vmem [shape: f32[1,256], index: 14, kind: input, shape index: {}]
  %s15 = inlined_call_operand.hbm [shape: bf16[128,256], index: 15, kind: input, shape index: {}]
  %s16 = inlined_call_operand.vmem [shape: f32[1,256], index: 16, kind: input, shape index: {}]
  %s17 = inlined_call_operand.hbm [shape: f32[2,8,128], index: 17, kind: output, shape index: {}]
  %s18 = sld [smem:[#allocation0]]
  $region145: #{tpu_custom_call.1} parent=0
    _
  %s20 = ssub.s32 1, %s18
  %s21 = scalar_select 0, %s20, %s18
  $region1: #{tpu_custom_call.1} parent=0
    #allocation5 [shape = 'u8[131072]{0}', space=vmem, size = 0x20000, scoped, tag = 'input window, operand 0']
    #allocation6 [shape = 's32[2]{0}', space=sflag, size = 0x8, scoped, tag = 'scoped memory for tpu_custom_call.1']
    #allocation7 [shape = 's32[2]{0}', space=sflag, size = 0x8, scoped, tag = 'scoped memory for tpu_custom_call.1']
    #allocation8 [shape = 'u8[12288]{0}', space=vmem, size = 0x3000, scoped, tag = 'input window, operand 1']
    #allocation9 [shape = 's32[2]{0}', space=sflag, size = 0x8, scoped, tag = 'scoped memory for tpu_custom_call.1']
    #allocation10 [shape = 'u8[32768]{0}', space=vmem, size = 0x8000, scoped, tag = 'input window, operand 2, single buffered']
    #allocation11 [shape = 'u8[1024]{0}', space=vmem, size = 0x400, scoped, tag = 'input window, operand 3, single buffered']
    #allocation12 [shape = 's32[1]{0}', space=sflag, size = 0x4, scoped, tag = 'scoped memory for tpu_custom_call.1']
    #allocation13 [shape = 'u8[51200]{0}', space=vmem, size = 0xc800, scoped, tag = 'input window, operand 4, single buffered']
    #allocation14 [shape = 'u8[512]{0}', space=vmem, size = 0x400, scoped, tag = 'input window, operand 7, single buffered']
    #allocation15 [shape = 's32[1]{0}', space=sflag, size = 0x4, scoped, tag = 'scoped memory for tpu_custom_call.1']
    #allocation16 [shape = 'u8[12288]{0}', space=vmem, size = 0x3000, scoped, tag = 'input window, operand 8, single buffered']
    #allocation17 [shape = 'u8[32768]{0}', space=vmem, size = 0x8000, scoped, tag = 'input window, operand 10, single buffered']
    #allocation18 [shape = 's32[1]{0}', space=sflag, size = 0x4, scoped, tag = 'scoped memory for tpu_custom_call.1']
    #allocation19 [shape = 'u8[77824]{0}', space=vmem, size = 0x13000, scoped, tag = 'input window, operand 11, single buffered']
    #allocation20 [shape = 'u8[65536]{0}', space=vmem, size = 0x10000, scoped, tag = 'input window, operand 13, single buffered']
    #allocation21 [shape = 's32[1]{0}', space=sflag, size = 0x4, scoped, tag = 'scoped memory for tpu_custom_call.1']
    #allocation22 [shape = 'u8[65536]{0}', space=vmem, size = 0x10000, scoped, tag = 'input window, operand 15, single buffered']
    #allocation23 [shape = 'u8[8192]{0}', space=vmem, size = 0x2000, scoped, tag = 'output window, operand 0']
    %22 = vsyncpa [#allocation6], 0
    %s23 = scalar_lea.sflag [#allocation6], 1
    %24 = vsyncpa %s23, 0
    %25 = vsyncpa [#allocation9], 0
    %s26 = scalar_lea.sflag [#allocation9], 1
    %27 = vsyncpa %s26, 0
    %28 = vsyncpa [#allocation12], 0
    %29 = vsyncpa [#allocation15], 0
    %30 = vsyncpa [#allocation18], 0
    %31 = vsyncpa [#allocation21], 0
    %32 = vsyncpa [#allocation7], 0
    %s33 = scalar_lea.sflag [#allocation7], 1
    %34 = vsyncpa %s33, 0
    loop: start=0, step=1, limit=4
    $region2: #{tpu_custom_call.1} parent=1 // loop_pre_header
      _
    $region3: #{tpu_custom_call.1} parent=1 // loop_header
      %s36 = sphi 0, %s40
      %p37 = scmp.ge.s32.totalorder %s36, 4
      %s46 = sphi 0, %s48
      %s49 = sphi 0, %s46
      %s50 = sphi 0, %s49
      %s66 = sphi 0, %s50
      %s72 = sphi 0, %s74
      %s75 = sphi 0, %s72
      %s76 = sphi 0, %s75
      %s92 = sphi 0, %s76
      %s96 = sphi 0, %s96
      %s98 = sphi 0, %s96
      %s99 = sphi 0, %s98
      %s113 = sphi 0, %s99
      %s117 = sphi 0, %s117
      %s119 = sphi 0, %s117
      %s120 = sphi 0, %s119
      %s134 = sphi 0, %s120
      %s138 = sphi 0, %s138
      %s140 = sphi 0, %s138
      %s141 = sphi 0, %s140
      %s155 = sphi 0, %s141
      %s159 = sphi 0, %s159
      %s161 = sphi 0, %s159
      %s162 = sphi 0, %s161
      %s176 = sphi 0, %s162
      %s180 = sphi 0, %s180
      %s182 = sphi 0, %s180
      %s183 = sphi 0, %s182
      %s197 = sphi 0, %s183
      %s201 = sphi 0, %s201
      %s203 = sphi 0, %s201
      %s204 = sphi 0, %s203
      %s218 = sphi 0, %s204
      %s222 = sphi 0, %s222
      %s224 = sphi 0, %s222
      %s225 = sphi 0, %s224
      %s239 = sphi 0, %s225
      %s243 = sphi 0, %s243
      %s245 = sphi 0, %s243
      %s246 = sphi 0, %s245
      %s260 = sphi 0, %s246
      %s264 = sphi 0, %s264
      %s266 = sphi 0, %s264
      %s267 = sphi 0, %s266
      %s281 = sphi 0, %s267
      %s285 = sphi 0, %s285
      %s287 = sphi 0, %s285
      %s288 = sphi 0, %s287
      %s302 = sphi 0, %s288
      %s306 = sphi 0, %s306
      %s308 = sphi 0, %s306
      %s309 = sphi 0, %s308
      %s323 = sphi 0, %s309
      %s327 = sphi 0, %s327
      %s329 = sphi 0, %s327
      %s330 = sphi 0, %s329
      %s344 = sphi 0, %s330
      %s348 = sphi 0, %s348
      %s350 = sphi 0, %s348
      %s351 = sphi 0, %s350
      %s365 = sphi 0, %s351
      %s369 = sphi 0, %s369
      %s371 = sphi 0, %s369
      %s372 = sphi 0, %s371
      %s386 = sphi 0, %s372
      %s390 = sphi 0, %s390
      %s392 = sphi 0, %s390
      %s393 = sphi 0, %s392
      %s407 = sphi 0, %s393
      %s413 = sphi 0, %s415
      %s416 = sphi 0, %s413
      %s417 = sphi 0, %s416
      %s433 = sphi 0, %s417
    $region4: #{tpu_custom_call.1} parent=1 // loop_header_branch
      %39 = sbr.rel (%p37) target = $region8
    $region5: #{tpu_custom_call.1} parent=1 // loop_body
      %s41 = ssub.s32 %s36, 1
      %s42 = ssub.s32 %s36, 2
      %s43 = sadd.s32 %s36, 1
      %s44 = ssub.s32 %s36, %s43
      %p45 = scmp.eq.s32.totalorder %s44, 0
      %s47 = sadd.s32 %s46, 1
      %s48 = scalar_select %p45, %s46, %s47
      %p51 = pneg %p45
      %p52 = scmp.eq.s32.totalorder %s36, 1
      %p53 = por %p51, %p52
      %p54 = scmp.ne.s32.totalorder %s46, %s49
      %p55 = scmp.eq.s32.totalorder %s36, 0
      %p56 = por %p54, %p55
      %p57 = scmp.ne.s32.totalorder %s46, %s49
      %p58 = scmp.eq.s32.totalorder %s41, 1
      %p59 = por %p57, %p58
      %p60 = scmp.ne.s32.totalorder %s49, %s50
      %p61 = scmp.eq.s32.totalorder %s41, 0
      %p62 = por %p60, %p61
      %p63 = scmp.ne.s32.totalorder %s49, %s50
      %p64 = scmp.eq.s32.totalorder %s42, 1
      %p65 = por %p63, %p64
      %p67 = scmp.ne.s32.totalorder %s50, %s66
      %p68 = scmp.eq.s32.totalorder %s42, 0
      %p69 = por %p67, %p68
      %s70 = ssub.s32 %s36, %s43
      %p71 = scmp.eq.s32.totalorder %s70, 0
      %s73 = sadd.s32 %s72, 1
      %s74 = scalar_select %p71, %s72, %s73
      %p77 = pneg %p71
      %p78 = scmp.eq.s32.totalorder %s36, 1
      %p79 = por %p77, %p78
      %p80 = scmp.ne.s32.totalorder %s72, %s75
      %p81 = scmp.eq.s32.totalorder %s36, 0
      %p82 = por %p80, %p81
      %p83 = scmp.ne.s32.totalorder %s72, %s75
      %p84 = scmp.eq.s32.totalorder %s41, 1
      %p85 = por %p83, %p84
      %p86 = scmp.ne.s32.totalorder %s75, %s76
      %p87 = scmp.eq.s32.totalorder %s41, 0
      %p88 = por %p86, %p87
      %p89 = scmp.ne.s32.totalorder %s75, %s76
      %p90 = scmp.eq.s32.totalorder %s42, 1
      %p91 = por %p89, %p90
      %p93 = scmp.ne.s32.totalorder %s76, %s92
      %p94 = scmp.eq.s32.totalorder %s42, 0
      %p95 = por %p93, %p94
      %s97 = sadd.s32 %s96, 1
      %p100 = scmp.eq.s32.totalorder %s36, 1
      %p101 = scmp.ne.s32.totalorder %s96, %s98
      %p102 = scmp.eq.s32.totalorder %s36, 0
      %p103 = por %p101, %p102
      %p104 = scmp.ne.s32.totalorder %s96, %s98
      %p105 = scmp.eq.s32.totalorder %s41, 1
      %p106 = por %p104, %p105
      %p107 = scmp.ne.s32.totalorder %s98, %s99
      %p108 = scmp.eq.s32.totalorder %s41, 0
      %p109 = por %p107, %p108
      %p110 = scmp.ne.s32.totalorder %s98, %s99
      %p111 = scmp.eq.s32.totalorder %s42, 1
      %p112 = por %p110, %p111
      %p114 = scmp.ne.s32.totalorder %s99, %s113
      %p115 = scmp.eq.s32.totalorder %s42, 0
      %p116 = por %p114, %p115
      %s118 = sadd.s32 %s117, 1
      %p121 = scmp.eq.s32.totalorder %s36, 1
      %p122 = scmp.ne.s32.totalorder %s117, %s119
      %p123 = scmp.eq.s32.totalorder %s36, 0
      %p124 = por %p122, %p123
      %p125 = scmp.ne.s32.totalorder %s117, %s119
      %p126 = scmp.eq.s32.totalorder %s41, 1
      %p127 = por %p125, %p126
      %p128 = scmp.ne.s32.totalorder %s119, %s120
      %p129 = scmp.eq.s32.totalorder %s41, 0
      %p130 = por %p128, %p129
      %p131 = scmp.ne.s32.totalorder %s119, %s120
      %p132 = scmp.eq.s32.totalorder %s42, 1
      %p133 = por %p131, %p132
      %p135 = scmp.ne.s32.totalorder %s120, %s134
      %p136 = scmp.eq.s32.totalorder %s42, 0
      %p137 = por %p135, %p136
      %s139 = sadd.s32 %s138, 1
      %p142 = scmp.eq.s32.totalorder %s36, 1
      %p143 = scmp.ne.s32.totalorder %s138, %s140
      %p144 = scmp.eq.s32.totalorder %s36, 0
      %p145 = por %p143, %p144
      %p146 = scmp.ne.s32.totalorder %s138, %s140
      %p147 = scmp.eq.s32.totalorder %s41, 1
      %p148 = por %p146, %p147
      %p149 = scmp.ne.s32.totalorder %s140, %s141
      %p150 = scmp.eq.s32.totalorder %s41, 0
      %p151 = por %p149, %p150
      %p152 = scmp.ne.s32.totalorder %s140, %s141
      %p153 = scmp.eq.s32.totalorder %s42, 1
      %p154 = por %p152, %p153
      %p156 = scmp.ne.s32.totalorder %s141, %s155
      %p157 = scmp.eq.s32.totalorder %s42, 0
      %p158 = por %p156, %p157
      %s160 = sadd.s32 %s159, 1
      %p163 = scmp.eq.s32.totalorder %s36, 1
      %p164 = scmp.ne.s32.totalorder %s159, %s161
      %p165 = scmp.eq.s32.totalorder %s36, 0
      %p166 = por %p164, %p165
      %p167 = scmp.ne.s32.totalorder %s159, %s161
      %p168 = scmp.eq.s32.totalorder %s41, 1
      %p169 = por %p167, %p168
      %p170 = scmp.ne.s32.totalorder %s161, %s162
      %p171 = scmp.eq.s32.totalorder %s41, 0
      %p172 = por %p170, %p171
      %p173 = scmp.ne.s32.totalorder %s161, %s162
      %p174 = scmp.eq.s32.totalorder %s42, 1
      %p175 = por %p173, %p174
      %p177 = scmp.ne.s32.totalorder %s162, %s176
      %p178 = scmp.eq.s32.totalorder %s42, 0
      %p179 = por %p177, %p178
      %s181 = sadd.s32 %s180, 1
      %p184 = scmp.eq.s32.totalorder %s36, 1
      %p185 = scmp.ne.s32.totalorder %s180, %s182
      %p186 = scmp.eq.s32.totalorder %s36, 0
      %p187 = por %p185, %p186
      %p188 = scmp.ne.s32.totalorder %s180, %s182
      %p189 = scmp.eq.s32.totalorder %s41, 1
      %p190 = por %p188, %p189
      %p191 = scmp.ne.s32.totalorder %s182, %s183
      %p192 = scmp.eq.s32.totalorder %s41, 0
      %p193 = por %p191, %p192
      %p194 = scmp.ne.s32.totalorder %s182, %s183
      %p195 = scmp.eq.s32.totalorder %s42, 1
      %p196 = por %p194, %p195
      %p198 = scmp.ne.s32.totalorder %s183, %s197
      %p199 = scmp.eq.s32.totalorder %s42, 0
      %p200 = por %p198, %p199
      %s202 = sadd.s32 %s201, 1
      %p205 = scmp.eq.s32.totalorder %s36, 1
      %p206 = scmp.ne.s32.totalorder %s201, %s203
      %p207 = scmp.eq.s32.totalorder %s36, 0
      %p208 = por %p206, %p207
      %p209 = scmp.ne.s32.totalorder %s201, %s203
      %p210 = scmp.eq.s32.totalorder %s41, 1
      %p211 = por %p209, %p210
      %p212 = scmp.ne.s32.totalorder %s203, %s204
      %p213 = scmp.eq.s32.totalorder %s41, 0
      %p214 = por %p212, %p213
      %p215 = scmp.ne.s32.totalorder %s203, %s204
      %p216 = scmp.eq.s32.totalorder %s42, 1
      %p217 = por %p215, %p216
      %p219 = scmp.ne.s32.totalorder %s204, %s218
      %p220 = scmp.eq.s32.totalorder %s42, 0
      %p221 = por %p219, %p220
      %s223 = sadd.s32 %s222, 1
      %p226 = scmp.eq.s32.totalorder %s36, 1
      %p227 = scmp.ne.s32.totalorder %s222, %s224
      %p228 = scmp.eq.s32.totalorder %s36, 0
      %p229 = por %p227, %p228
      %p230 = scmp.ne.s32.totalorder %s222, %s224
      %p231 = scmp.eq.s32.totalorder %s41, 1
      %p232 = por %p230, %p231
      %p233 = scmp.ne.s32.totalorder %s224, %s225
      %p234 = scmp.eq.s32.totalorder %s41, 0
      %p235 = por %p233, %p234
      %p236 = scmp.ne.s32.totalorder %s224, %s225
      %p237 = scmp.eq.s32.totalorder %s42, 1
      %p238 = por %p236, %p237
      %p240 = scmp.ne.s32.totalorder %s225, %s239
      %p241 = scmp.eq.s32.totalorder %s42, 0
      %p242 = por %p240, %p241
      %s244 = sadd.s32 %s243, 1
      %p247 = scmp.eq.s32.totalorder %s36, 1
      %p248 = scmp.ne.s32.totalorder %s243, %s245
      %p249 = scmp.eq.s32.totalorder %s36, 0
      %p250 = por %p248, %p249
      %p251 = scmp.ne.s32.totalorder %s243, %s245
      %p252 = scmp.eq.s32.totalorder %s41, 1
      %p253 = por %p251, %p252
      %p254 = scmp.ne.s32.totalorder %s245, %s246
      %p255 = scmp.eq.s32.totalorder %s41, 0
      %p256 = por %p254, %p255
      %p257 = scmp.ne.s32.totalorder %s245, %s246
      %p258 = scmp.eq.s32.totalorder %s42, 1
      %p259 = por %p257, %p258
      %p261 = scmp.ne.s32.totalorder %s246, %s260
      %p262 = scmp.eq.s32.totalorder %s42, 0
      %p263 = por %p261, %p262
      %s265 = sadd.s32 %s264, 1
      %p268 = scmp.eq.s32.totalorder %s36, 1
      %p269 = scmp.ne.s32.totalorder %s264, %s266
      %p270 = scmp.eq.s32.totalorder %s36, 0
      %p271 = por %p269, %p270
      %p272 = scmp.ne.s32.totalorder %s264, %s266
      %p273 = scmp.eq.s32.totalorder %s41, 1
      %p274 = por %p272, %p273
      %p275 = scmp.ne.s32.totalorder %s266, %s267
      %p276 = scmp.eq.s32.totalorder %s41, 0
      %p277 = por %p275, %p276
      %p278 = scmp.ne.s32.totalorder %s266, %s267
      %p279 = scmp.eq.s32.totalorder %s42, 1
      %p280 = por %p278, %p279
      %p282 = scmp.ne.s32.totalorder %s267, %s281
      %p283 = scmp.eq.s32.totalorder %s42, 0
      %p284 = por %p282, %p283
      %s286 = sadd.s32 %s285, 1
      %p289 = scmp.eq.s32.totalorder %s36, 1
      %p290 = scmp.ne.s32.totalorder %s285, %s287
      %p291 = scmp.eq.s32.totalorder %s36, 0
      %p292 = por %p290, %p291
      %p293 = scmp.ne.s32.totalorder %s285, %s287
      %p294 = scmp.eq.s32.totalorder %s41, 1
      %p295 = por %p293, %p294
      %p296 = scmp.ne.s32.totalorder %s287, %s288
      %p297 = scmp.eq.s32.totalorder %s41, 0
      %p298 = por %p296, %p297
      %p299 = scmp.ne.s32.totalorder %s287, %s288
      %p300 = scmp.eq.s32.totalorder %s42, 1
      %p301 = por %p299, %p300
      %p303 = scmp.ne.s32.totalorder %s288, %s302
      %p304 = scmp.eq.s32.totalorder %s42, 0
      %p305 = por %p303, %p304
      %s307 = sadd.s32 %s306, 1
      %p310 = scmp.eq.s32.totalorder %s36, 1
      %p311 = scmp.ne.s32.totalorder %s306, %s308
      %p312 = scmp.eq.s32.totalorder %s36, 0
      %p313 = por %p311, %p312
      %p314 = scmp.ne.s32.totalorder %s306, %s308
      %p315 = scmp.eq.s32.totalorder %s41, 1
      %p316 = por %p314, %p315
      %p317 = scmp.ne.s32.totalorder %s308, %s309
      %p318 = scmp.eq.s32.totalorder %s41, 0
      %p319 = por %p317, %p318
      %p320 = scmp.ne.s32.totalorder %s308, %s309
      %p321 = scmp.eq.s32.totalorder %s42, 1
      %p322 = por %p320, %p321
      %p324 = scmp.ne.s32.totalorder %s309, %s323
      %p325 = scmp.eq.s32.totalorder %s42, 0
      %p326 = por %p324, %p325
      %s328 = sadd.s32 %s327, 1
      %p331 = scmp.eq.s32.totalorder %s36, 1
      %p332 = scmp.ne.s32.totalorder %s327, %s329
      %p333 = scmp.eq.s32.totalorder %s36, 0
      %p334 = por %p332, %p333
      %p335 = scmp.ne.s32.totalorder %s327, %s329
      %p336 = scmp.eq.s32.totalorder %s41, 1
      %p337 = por %p335, %p336
      %p338 = scmp.ne.s32.totalorder %s329, %s330
      %p339 = scmp.eq.s32.totalorder %s41, 0
      %p340 = por %p338, %p339
      %p341 = scmp.ne.s32.totalorder %s329, %s330
      %p342 = scmp.eq.s32.totalorder %s42, 1
      %p343 = por %p341, %p342
      %p345 = scmp.ne.s32.totalorder %s330, %s344
      %p346 = scmp.eq.s32.totalorder %s42, 0
      %p347 = por %p345, %p346
      %s349 = sadd.s32 %s348, 1
      %p352 = scmp.eq.s32.totalorder %s36, 1
      %p353 = scmp.ne.s32.totalorder %s348, %s350
      %p354 = scmp.eq.s32.totalorder %s36, 0
      %p355 = por %p353, %p354
      %p356 = scmp.ne.s32.totalorder %s348, %s350
      %p357 = scmp.eq.s32.totalorder %s41, 1
      %p358 = por %p356, %p357
      %p359 = scmp.ne.s32.totalorder %s350, %s351
      %p360 = scmp.eq.s32.totalorder %s41, 0
      %p361 = por %p359, %p360
      %p362 = scmp.ne.s32.totalorder %s350, %s351
      %p363 = scmp.eq.s32.totalorder %s42, 1
      %p364 = por %p362, %p363
      %p366 = scmp.ne.s32.totalorder %s351, %s365
      %p367 = scmp.eq.s32.totalorder %s42, 0
      %p368 = por %p366, %p367
      %s370 = sadd.s32 %s369, 1
      %p373 = scmp.eq.s32.totalorder %s36, 1
      %p374 = scmp.ne.s32.totalorder %s369, %s371
      %p375 = scmp.eq.s32.totalorder %s36, 0
      %p376 = por %p374, %p375
      %p377 = scmp.ne.s32.totalorder %s369, %s371
      %p378 = scmp.eq.s32.totalorder %s41, 1
      %p379 = por %p377, %p378
      %p380 = scmp.ne.s32.totalorder %s371, %s372
      %p381 = scmp.eq.s32.totalorder %s41, 0
      %p382 = por %p380, %p381
      %p383 = scmp.ne.s32.totalorder %s371, %s372
      %p384 = scmp.eq.s32.totalorder %s42, 1
      %p385 = por %p383, %p384
      %p387 = scmp.ne.s32.totalorder %s372, %s386
      %p388 = scmp.eq.s32.totalorder %s42, 0
      %p389 = por %p387, %p388
      %s391 = sadd.s32 %s390, 1
      %p394 = scmp.eq.s32.totalorder %s36, 1
      %p395 = scmp.ne.s32.totalorder %s390, %s392
      %p396 = scmp.eq.s32.totalorder %s36, 0
      %p397 = por %p395, %p396
      %p398 = scmp.ne.s32.totalorder %s390, %s392
      %p399 = scmp.eq.s32.totalorder %s41, 1
      %p400 = por %p398, %p399
      %p401 = scmp.ne.s32.totalorder %s392, %s393
      %p402 = scmp.eq.s32.totalorder %s41, 0
      %p403 = por %p401, %p402
      %p404 = scmp.ne.s32.totalorder %s392, %s393
      %p405 = scmp.eq.s32.totalorder %s42, 1
      %p406 = por %p404, %p405
      %p408 = scmp.ne.s32.totalorder %s393, %s407
      %p409 = scmp.eq.s32.totalorder %s42, 0
      %p410 = por %p408, %p409
      %s411 = ssub.s32 %s36, %s43
      %p412 = scmp.eq.s32.totalorder %s411, 0
      %s414 = sadd.s32 %s413, 1
      %s415 = scalar_select %p412, %s413, %s414
      %p418 = pneg %p412
      %p419 = scmp.eq.s32.totalorder %s36, 1
      %p420 = por %p418, %p419
      %p421 = scmp.ne.s32.totalorder %s413, %s416
      %p422 = scmp.eq.s32.totalorder %s36, 0
      %p423 = por %p421, %p422
      %p424 = scmp.ne.s32.totalorder %s413, %s416
      %p425 = scmp.eq.s32.totalorder %s41, 1
      %p426 = por %p424, %p425
      %p427 = scmp.ne.s32.totalorder %s416, %s417
      %p428 = scmp.eq.s32.totalorder %s41, 0
      %p429 = por %p427, %p428
      %p430 = scmp.ne.s32.totalorder %s416, %s417
      %p431 = scmp.eq.s32.totalorder %s42, 1
      %p432 = por %p430, %p431
      %p434 = scmp.ne.s32.totalorder %s417, %s433
      %p435 = scmp.eq.s32.totalorder %s42, 0
      %p436 = por %p434, %p435
      %p437 = scmp.le.s32.totalorder 1, %s36
      %p438 = scmp.lt.s32.totalorder %s36, 3
      %p439 = pnand %p437, %p438
      %p440 = pneg %p439
      // Predicated region
      $region9: #{tpu_custom_call.1} parent=5 // pred_check
        _
      $region10: #{tpu_custom_call.1} parent=5 // pred_check_branch
        %442 = sbr.rel (%p439) target = $region12
      $region11: #{tpu_custom_call.1} parent=5 // pred_region
        %s443 = ssub.s32 %s36, 1
        // Predicated region
        $region13: #{tpu_custom_call.1} parent=11 // pred_check
          %p444 = pneg %p109
        $region14: #{tpu_custom_call.1} parent=11 // pred_check_branch
          %446 = sbr.rel (%p444) target = $region16
        $region15: #{tpu_custom_call.1} parent=11 // pred_region
          %s448 = ssub.s32 1024, 1024
          %449 = vsyncadd [#allocation9], %s448
          %s450 = sshll.u32 [#allocation10], 4
          %s451 = int_to_ptr.vmem [resolvable:$true] %s450
          %456 = dma.hbm_to_vmem [thread:$0]  %s2, 1024, %s451, [#allocation9], 256, 256, 16
        $region16: #{tpu_custom_call.1} parent=11 // pred_fallthru
          _
        // Predicated region
        $region17: #{tpu_custom_call.1} parent=11 // pred_check
          %p457 = pneg %p130
        $region18: #{tpu_custom_call.1} parent=11 // pred_check_branch
          %459 = sbr.rel (%p457) target = $region20
        $region19: #{tpu_custom_call.1} parent=11 // pred_region
          %s461 = ssub.s32 32, 32
          %462 = vsyncadd [#allocation12], %s461
          %s464 = sshll.u32 [#allocation11], 4
          %s465 = int_to_ptr.vmem [resolvable:$true] %s464
          %467 = dma.hbm_to_vmem [thread:$0]  %s3, 32, %s465, [#allocation12]
        $region20: #{tpu_custom_call.1} parent=11 // pred_fallthru
          _
        // Predicated region
        $region21: #{tpu_custom_call.1} parent=11 // pred_check
          %p468 = pneg %p151
        $region22: #{tpu_custom_call.1} parent=11 // pred_check_branch
          %470 = sbr.rel (%p468) target = $region24
        $region23: #{tpu_custom_call.1} parent=11 // pred_region
          %s472 = ssub.s32 1600, 1600
          %473 = vsyncadd [#allocation12], %s472
          %s474 = sshll.u32 [#allocation13], 4
          %s475 = int_to_ptr.vmem [resolvable:$true] %s474
          %480 = dma.hbm_to_vmem [thread:$0]  %s4, 1600, %s475, [#allocation12], 64, 64, 4
        $region24: #{tpu_custom_call.1} parent=11 // pred_fallthru
          _
        // Predicated region
        $region25: #{tpu_custom_call.1} parent=11 // pred_check
          %p481 = pneg %p172
        $region26: #{tpu_custom_call.1} parent=11 // pred_check_branch
          %483 = sbr.rel (%p481) target = $region28
        $region27: #{tpu_custom_call.1} parent=11 // pred_region
          _
        $region28: #{tpu_custom_call.1} parent=11 // pred_fallthru
          _
        // Predicated region
        $region29: #{tpu_custom_call.1} parent=11 // pred_check
          %p484 = pneg %p193
        $region30: #{tpu_custom_call.1} parent=11 // pred_check_branch
          %486 = sbr.rel (%p484) target = $region32
        $region31: #{tpu_custom_call.1} parent=11 // pred_region
          _
        $region32: #{tpu_custom_call.1} parent=11 // pred_fallthru
          _
        // Predicated region
        $region33: #{tpu_custom_call.1} parent=11 // pred_check
          %p487 = pneg %p214
        $region34: #{tpu_custom_call.1} parent=11 // pred_check_branch
          %489 = sbr.rel (%p487) target = $region36
        $region35: #{tpu_custom_call.1} parent=11 // pred_region
          %s491 = ssub.s32 16, 16
          %492 = vsyncadd [#allocation15], %s491
          %s494 = sshll.u32 [#allocation14], 4
          %s495 = int_to_ptr.vmem [resolvable:$true] %s494
          %497 = dma.hbm_to_vmem [thread:$0]  %s7, 16, %s495, [#allocation15]
        $region36: #{tpu_custom_call.1} parent=11 // pred_fallthru
          _
        // Predicated region
        $region37: #{tpu_custom_call.1} parent=11 // pred_check
          %p498 = pneg %p235
        $region38: #{tpu_custom_call.1} parent=11 // pred_check_branch
          %500 = sbr.rel (%p498) target = $region40
        $region39: #{tpu_custom_call.1} parent=11 // pred_region
          %s502 = ssub.s32 384, 384
          %503 = vsyncadd [#allocation15], %s502
          %s505 = sshll.u32 [#allocation16], 4
          %s506 = int_to_ptr.vmem [resolvable:$true] %s505
          %508 = dma.hbm_to_vmem [thread:$0]  %s8, 384, %s506, [#allocation15]
        $region40: #{tpu_custom_call.1} parent=11 // pred_fallthru
          _
        // Predicated region
        $region41: #{tpu_custom_call.1} parent=11 // pred_check
          %p509 = pneg %p256
        $region42: #{tpu_custom_call.1} parent=11 // pred_check_branch
          %511 = sbr.rel (%p509) target = $region44
        $region43: #{tpu_custom_call.1} parent=11 // pred_region
          _
        $region44: #{tpu_custom_call.1} parent=11 // pred_fallthru
          _
        // Predicated region
        $region45: #{tpu_custom_call.1} parent=11 // pred_check
          %p512 = pneg %p277
        $region46: #{tpu_custom_call.1} parent=11 // pred_check_branch
          %514 = sbr.rel (%p512) target = $region48
        $region47: #{tpu_custom_call.1} parent=11 // pred_region
          %s516 = ssub.s32 1024, 1024
          %517 = vsyncadd [#allocation18], %s516
          %s518 = sshll.u32 [#allocation17], 4
          %s519 = int_to_ptr.vmem [resolvable:$true] %s518
          %524 = dma.hbm_to_vmem [thread:$0]  %s10, 1024, %s519, [#allocation18], 64, 64, 4
        $region48: #{tpu_custom_call.1} parent=11 // pred_fallthru
          _
        // Predicated region
        $region49: #{tpu_custom_call.1} parent=11 // pred_check
          %p525 = pneg %p298
        $region50: #{tpu_custom_call.1} parent=11 // pred_check_branch
          %527 = sbr.rel (%p525) target = $region52
        $region51: #{tpu_custom_call.1} parent=11 // pred_region
          %s529 = ssub.s32 2432, 2432
          %530 = vsyncadd [#allocation18], %s529
          %s531 = sshll.u32 [#allocation19], 4
          %s532 = int_to_ptr.vmem [resolvable:$true] %s531
          %537 = dma.hbm_to_vmem [thread:$0]  %s11, 2432, %s532, [#allocation18], 64, 64, 4
        $region52: #{tpu_custom_call.1} parent=11 // pred_fallthru
          _
        // Predicated region
        $region53: #{tpu_custom_call.1} parent=11 // pred_check
          %p538 = pneg %p319
        $region54: #{tpu_custom_call.1} parent=11 // pred_check_branch
          %540 = sbr.rel (%p538) target = $region56
        $region55: #{tpu_custom_call.1} parent=11 // pred_region
          _
        $region56: #{tpu_custom_call.1} parent=11 // pred_fallthru
          _
        // Predicated region
        $region57: #{tpu_custom_call.1} parent=11 // pred_check
          %p541 = pneg %p340
        $region58: #{tpu_custom_call.1} parent=11 // pred_check_branch
          %543 = sbr.rel (%p541) target = $region60
        $region59: #{tpu_custom_call.1} parent=11 // pred_region
          %s545 = ssub.s32 2048, 2048
          %546 = vsyncadd [#allocation21], %s545
          %s547 = sshll.u32 [#allocation20], 4
          %s548 = int_to_ptr.vmem [resolvable:$true] %s547
          %553 = dma.hbm_to_vmem [thread:$0]  %s13, 2048, %s548, [#allocation21], 128, 128, 8
        $region60: #{tpu_custom_call.1} parent=11 // pred_fallthru
          _
        // Predicated region
        $region61: #{tpu_custom_call.1} parent=11 // pred_check
          %p554 = pneg %p361
        $region62: #{tpu_custom_call.1} parent=11 // pred_check_branch
          %556 = sbr.rel (%p554) target = $region64
        $region63: #{tpu_custom_call.1} parent=11 // pred_region
          _
        $region64: #{tpu_custom_call.1} parent=11 // pred_fallthru
          _
        // Predicated region
        $region65: #{tpu_custom_call.1} parent=11 // pred_check
          %p557 = pneg %p382
        $region66: #{tpu_custom_call.1} parent=11 // pred_check_branch
          %559 = sbr.rel (%p557) target = $region68
        $region67: #{tpu_custom_call.1} parent=11 // pred_region
          %s561 = ssub.s32 2048, 2048
          %562 = vsyncadd [#allocation21], %s561
          %s563 = sshll.u32 [#allocation22], 4
          %s564 = int_to_ptr.vmem [resolvable:$true] %s563
          %569 = dma.hbm_to_vmem [thread:$0]  %s15, 2048, %s564, [#allocation21], 128, 128, 8
        $region68: #{tpu_custom_call.1} parent=11 // pred_fallthru
          _
        // Predicated region
        $region69: #{tpu_custom_call.1} parent=11 // pred_check
          %p570 = pneg %p403
        $region70: #{tpu_custom_call.1} parent=11 // pred_check_branch
          %572 = sbr.rel (%p570) target = $region72
        $region71: #{tpu_custom_call.1} parent=11 // pred_region
          _
        $region72: #{tpu_custom_call.1} parent=11 // pred_fallthru
          _
      $region12: #{tpu_custom_call.1} parent=5 // pred_fallthru
        _
      %p573 = scmp.lt.s32.totalorder %s36, 2
      // Predicated region
      $region73: #{tpu_custom_call.1} parent=5 // pred_check
        %p574 = pneg %p573
      $region74: #{tpu_custom_call.1} parent=5 // pred_check_branch
        %576 = sbr.rel (%p574) target = $region76
      $region75: #{tpu_custom_call.1} parent=5 // pred_region
        // Predicated region
        $region77: #{tpu_custom_call.1} parent=75 // pred_check
          %p577 = pneg %p56
        $region78: #{tpu_custom_call.1} parent=75 // pred_check_branch
          %579 = sbr.rel (%p577) target = $region80
        $region79: #{tpu_custom_call.1} parent=75 // pred_region
          %s580 = sand.u32 %s46, 1
          %s581 = scalar_lea.sflag [#allocation6], %s580
          %s582 = sand.u32 %s46, 1
          %s583 = smul.addr %s582, 128
          %s584 = scalar_lea.vmem [#allocation5], %s583
          %s586 = ssub.s32 2048, 2048
          %587 = vsyncadd %s581, %s586
          %s588 = smul.addr %s36, 32
          %s589 = smul.addr %s588, 64
          %s590 = scalar_lea.hbm %s0, %s589
          %s591 = sshll.u32 %s584, 4
          %s592 = int_to_ptr.vmem [resolvable:$true] %s591
          %597 = dma.hbm_to_vmem [thread:$0]  %s590, 2048, %s592, %s581, 128, 128, 8
        $region80: #{tpu_custom_call.1} parent=75 // pred_fallthru
          _
        // Predicated region
        $region81: #{tpu_custom_call.1} parent=75 // pred_check
          %p598 = pneg %p82
        $region82: #{tpu_custom_call.1} parent=75 // pred_check_branch
          %600 = sbr.rel (%p598) target = $region84
        $region83: #{tpu_custom_call.1} parent=75 // pred_region
          %s601 = sand.u32 %s36, 1
          %s602 = scalar_lea.sflag [#allocation9], %s601
          %s603 = sand.u32 %s72, 1
          %s604 = smul.addr %s603, 12
          %s605 = scalar_lea.vmem [#allocation8], %s604
          %s607 = ssub.s32 192, 192
          %608 = vsyncadd %s602, %s607
          %s609 = smul.addr %s36, 3
          %s610 = smul.addr %s609, 64
          %s611 = scalar_lea.hbm %s1, %s610
          %s613 = sshll.u32 %s605, 4
          %s614 = int_to_ptr.vmem [resolvable:$true] %s613
          %616 = dma.hbm_to_vmem [thread:$0]  %s611, 192, %s614, %s602
        $region84: #{tpu_custom_call.1} parent=75 // pred_fallthru
          _
      $region76: #{tpu_custom_call.1} parent=5 // pred_fallthru
        _
      %p617 = scmp.le.s32.totalorder 1, %s36
      %p618 = scmp.lt.s32.totalorder %s36, 3
      %p619 = pnand %p617, %p618
      %p620 = pneg %p619
      // Predicated region
      $region85: #{tpu_custom_call.1} parent=5 // pred_check
        _
      $region86: #{tpu_custom_call.1} parent=5 // pred_check_branch
        %622 = sbr.rel (%p619) target = $region88
      $region87: #{tpu_custom_call.1} parent=5 // pred_region
        %s623 = ssub.s32 %s36, 1
        %s624 = sand.u32 %s49, 1
        %s625 = scalar_lea.sflag [#allocation6], %s624
        %s626 = sand.u32 %s49, 1
        %s627 = smul.addr %s626, 128
        %s628 = scalar_lea.vmem [#allocation5], %s627
        // Predicated region
        $region89: #{tpu_custom_call.1} parent=87 // pred_check
          %p629 = pneg %p62
        $region90: #{tpu_custom_call.1} parent=87 // pred_check_branch
          %631 = sbr.rel (%p629) target = $region92
        $region91: #{tpu_custom_call.1} parent=87 // pred_region
          %632 = dma.done %s625, 2048
        $region92: #{tpu_custom_call.1} parent=87 // pred_fallthru
          _
        %s633 = sand.u32 %s41, 1
        %s634 = scalar_lea.sflag [#allocation9], %s633
        %s635 = sand.u32 %s75, 1
        %s636 = smul.addr %s635, 12
        %s637 = scalar_lea.vmem [#allocation8], %s636
        // Predicated region
        $region93: #{tpu_custom_call.1} parent=87 // pred_check
          %p638 = pneg %p88
        $region94: #{tpu_custom_call.1} parent=87 // pred_check_branch
          %640 = sbr.rel (%p638) target = $region96
        $region95: #{tpu_custom_call.1} parent=87 // pred_region
          %641 = dma.done %s634, 192
        $region96: #{tpu_custom_call.1} parent=87 // pred_fallthru
          _
        // Predicated region
        $region97: #{tpu_custom_call.1} parent=87 // pred_check
          %p642 = pneg %p109
        $region98: #{tpu_custom_call.1} parent=87 // pred_check_branch
          %644 = sbr.rel (%p642) target = $region100
        $region99: #{tpu_custom_call.1} parent=87 // pred_region
          %645 = dma.done [#allocation9], 1024
        $region100: #{tpu_custom_call.1} parent=87 // pred_fallthru
          _
        // Predicated region
        $region101: #{tpu_custom_call.1} parent=87 // pred_check
          %p646 = pneg %p130
        $region102: #{tpu_custom_call.1} parent=87 // pred_check_branch
          %648 = sbr.rel (%p646) target = $region104
        $region103: #{tpu_custom_call.1} parent=87 // pred_region
          %649 = dma.done [#allocation12], 32
        $region104: #{tpu_custom_call.1} parent=87 // pred_fallthru
          _
        // Predicated region
        $region105: #{tpu_custom_call.1} parent=87 // pred_check
          %p650 = pneg %p151
        $region106: #{tpu_custom_call.1} parent=87 // pred_check_branch
          %652 = sbr.rel (%p650) target = $region108
        $region107: #{tpu_custom_call.1} parent=87 // pred_region
          %653 = dma.done [#allocation12], 1600
        $region108: #{tpu_custom_call.1} parent=87 // pred_fallthru
          _
        // Predicated region
        $region109: #{tpu_custom_call.1} parent=87 // pred_check
          %p654 = pneg %p214
        $region110: #{tpu_custom_call.1} parent=87 // pred_check_branch
          %656 = sbr.rel (%p654) target = $region112
        $region111: #{tpu_custom_call.1} parent=87 // pred_region
          %657 = dma.done [#allocation15], 16
        $region112: #{tpu_custom_call.1} parent=87 // pred_fallthru
          _
        // Predicated region
        $region113: #{tpu_custom_call.1} parent=87 // pred_check
          %p658 = pneg %p235
        $region114: #{tpu_custom_call.1} parent=87 // pred_check_branch
          %660 = sbr.rel (%p658) target = $region116
        $region115: #{tpu_custom_call.1} parent=87 // pred_region
          %661 = dma.done [#allocation15], 384
        $region116: #{tpu_custom_call.1} parent=87 // pred_fallthru
          _
        // Predicated region
        $region117: #{tpu_custom_call.1} parent=87 // pred_check
          %p662 = pneg %p277
        $region118: #{tpu_custom_call.1} parent=87 // pred_check_branch
          %664 = sbr.rel (%p662) target = $region120
        $region119: #{tpu_custom_call.1} parent=87 // pred_region
          %665 = dma.done [#allocation18], 1024
        $region120: #{tpu_custom_call.1} parent=87 // pred_fallthru
          _
        // Predicated region
        $region121: #{tpu_custom_call.1} parent=87 // pred_check
          %p666 = pneg %p298
        $region122: #{tpu_custom_call.1} parent=87 // pred_check_branch
          %668 = sbr.rel (%p666) target = $region124
        $region123: #{tpu_custom_call.1} parent=87 // pred_region
          %669 = dma.done [#allocation18], 2432
        $region124: #{tpu_custom_call.1} parent=87 // pred_fallthru
          _
        // Predicated region
        $region125: #{tpu_custom_call.1} parent=87 // pred_check
          %p670 = pneg %p340
        $region126: #{tpu_custom_call.1} parent=87 // pred_check_branch
          %672 = sbr.rel (%p670) target = $region128
        $region127: #{tpu_custom_call.1} parent=87 // pred_region
          %673 = dma.done [#allocation21], 2048
        $region128: #{tpu_custom_call.1} parent=87 // pred_fallthru
          _
        // Predicated region
        $region129: #{tpu_custom_call.1} parent=87 // pred_check
          %p674 = pneg %p382
        $region130: #{tpu_custom_call.1} parent=87 // pred_check_branch
          %676 = sbr.rel (%p674) target = $region132
        $region131: #{tpu_custom_call.1} parent=87 // pred_region
          %677 = dma.done [#allocation21], 2048
        $region132: #{tpu_custom_call.1} parent=87 // pred_fallthru
          _
        %s678 = sand.u32 %s49, 1
        %s679 = scalar_lea.sflag [#allocation6], %s678
        %s680 = sand.u32 %s49, 1
        %s681 = smul.addr %s680, 128
        %s682 = scalar_lea.vmem [#allocation5], %s681
        %p683 = pneg %p62
        %p684 = pneg %p59
        %s685 = sand.u32 %s41, 1
        %s686 = scalar_lea.sflag [#allocation9], %s685
        %s687 = sand.u32 %s75, 1
        %s688 = smul.addr %s687, 12
        %s689 = scalar_lea.vmem [#allocation8], %s688
        %p690 = pneg %p88
        %p691 = pneg %p85
        %p692 = pneg %p109
        %p693 = pneg %p106
        %p694 = pneg %p130
        %p695 = pneg %p127
        %p696 = pneg %p151
        %p697 = pneg %p148
        %p698 = pneg %p172
        %p699 = pneg %p169
        %p700 = pneg %p193
        %p701 = pneg %p190
        %p702 = pneg %p214
        %p703 = pneg %p211
        %p704 = pneg %p235
        %p705 = pneg %p232
        %p706 = pneg %p256
        %p707 = pneg %p253
        %p708 = pneg %p277
        %p709 = pneg %p274
        %p710 = pneg %p298
        %p711 = pneg %p295
        %p712 = pneg %p319
        %p713 = pneg %p316
        %p714 = pneg %p340
        %p715 = pneg %p337
        %p716 = pneg %p361
        %p717 = pneg %p358
        %p718 = pneg %p382
        %p719 = pneg %p379
        %p720 = pneg %p403
        %p721 = pneg %p400
        %p722 = pneg %p429
        %p723 = pneg %p426
        %s724 = sand.u32 %s416, 1
        %s725 = scalar_lea.sflag [#allocation7], %s724
        %s726 = sand.u32 %s416, 1
        %s727 = smul.addr %s726, 8
        %s728 = scalar_lea.vmem [#allocation23], %s727
        %730 = vst [vmem:[#allocation2] sm:$0xff] 0.0
        %vm731 = vcmask 588800
        %732 = vst.msk [vmem:[#allocation2 + $0x8] sm:$0xff] %vm731, 0.0
        %733 = vst [vmem:[#allocation2 + $0x10] sm:$0xff] 0.0
        %734 = vst.msk [vmem:[#allocation2 + $0x18] sm:$0xff] %vm731, 0.0
        %735 = vst [vmem:[#allocation2 + $0x20] sm:$0xf] 0.0
        %vm736 = vcmask 584704
        %737 = vst.msk [vmem:[#allocation2 + $0x28] sm:$0xf] %vm736, 0.0
        %738 = vst [vmem:[#allocation2 + $0x30] sm:$0xff] 0.0
        %739 = vst.msk [vmem:[#allocation2 + $0x38] sm:$0xff] %vm731, 0.0
        %740 = vst [vmem:[#allocation2 + $0x40] sm:$0xff] 0.0
        %741 = vst.msk [vmem:[#allocation2 + $0x48] sm:$0xff] %vm731, 0.0
        %742 = vst [vmem:[#allocation2 + $0x50] sm:$0xf] 0.0
        %743 = vst.msk [vmem:[#allocation2 + $0x58] sm:$0xf] %vm736, 0.0
        %s744 = scalar_lea.vmem [#allocation2], 480
        %745 = vst [vmem:[%s744] sm:$0xff] 0.0
        %746 = vst.msk [vmem:[%s744 + $0x8] sm:$0xff] %vm731, 0.0
        %747 = vst [vmem:[%s744 + $0x10] sm:$0xff] 0.0
        %748 = vst.msk [vmem:[%s744 + $0x18] sm:$0xff] %vm731, 0.0
        %749 = vst [vmem:[%s744 + $0x20] sm:$0xf] 0.0
        %750 = vst.msk [vmem:[%s744 + $0x28] sm:$0xf] %vm736, 0.0
        %751 = vst [vmem:[%s744 + $0x30] sm:$0xff] 0.0
        %752 = vst.msk [vmem:[%s744 + $0x38] sm:$0xff] %vm731, 0.0
        %753 = vst [vmem:[%s744 + $0x40] sm:$0xff] 0.0
        %754 = vst.msk [vmem:[%s744 + $0x48] sm:$0xff] %vm731, 0.0
        %755 = vst [vmem:[%s744 + $0x50] sm:$0xf] 0.0
        %756 = vst.msk [vmem:[%s744 + $0x58] sm:$0xf] %vm736, 0.0
        %757 = vst [vmem:[#allocation2] sm:$0x3] 0.0
        %vm758 = vcmask 582656
        %759 = vst.msk [vmem:[#allocation2 + $0x8] sm:$0x3] %vm758, 0.0
        %760 = vst [vmem:[#allocation2 + $0x30] sm:$0x3] 0.0
        %761 = vst.msk [vmem:[#allocation2 + $0x38] sm:$0x3] %vm758, 0.0
        %762 = vst [vmem:[#allocation2 + $0x60] sm:$0x3] 0.0
        %763 = vst.msk [vmem:[#allocation2 + $0x68] sm:$0x3] %vm758, 0.0
        %764 = vst [vmem:[#allocation2 + $0x90] sm:$0x3] 0.0
        %765 = vst.msk [vmem:[#allocation2 + $0x98] sm:$0x3] %vm758, 0.0
        %766 = vst [vmem:[#allocation2 + $0xc0] sm:$0x3] 0.0
        %767 = vst.msk [vmem:[#allocation2 + $0xc8] sm:$0x3] %vm758, 0.0
        %768 = vst [vmem:[#allocation2 + $0xf0] sm:$0x3] 0.0
        %769 = vst.msk [vmem:[#allocation2 + $0xf8] sm:$0x3] %vm758, 0.0
        %770 = vst [vmem:[#allocation2 + $0x120] sm:$0x3] 0.0
        %771 = vst.msk [vmem:[#allocation2 + $0x128] sm:$0x3] %vm758, 0.0
        %772 = vst [vmem:[#allocation2 + $0x150] sm:$0x3] 0.0
        %773 = vst.msk [vmem:[#allocation2 + $0x158] sm:$0x3] %vm758, 0.0
        %774 = vst [vmem:[#allocation2 + $0x180] sm:$0x3] 0.0
        %775 = vst.msk [vmem:[#allocation2 + $0x188] sm:$0x3] %vm758, 0.0
        %776 = vst [vmem:[#allocation2 + $0x1b0] sm:$0x3] 0.0
        %777 = vst.msk [vmem:[#allocation2 + $0x1b8] sm:$0x3] %vm758, 0.0
        %778 = vst [vmem:[#allocation2 + $0x1e0] sm:$0x3] 0.0
        %779 = vst.msk [vmem:[#allocation2 + $0x1e8] sm:$0x3] %vm758, 0.0
        %780 = vst [vmem:[#allocation2 + $0x210] sm:$0x3] 0.0
        %781 = vst.msk [vmem:[#allocation2 + $0x218] sm:$0x3] %vm758, 0.0
        %782 = vst [vmem:[#allocation2 + $0x20] sm:$0xc] 0.0
        %vm783 = vcmask 584706
        %784 = vst.msk [vmem:[#allocation2 + $0x28] sm:$0xc] %vm783, 0.0
        %785 = vst [vmem:[#allocation2 + $0x50] sm:$0xc] 0.0
        %786 = vst.msk [vmem:[#allocation2 + $0x58] sm:$0xc] %vm783, 0.0
        %787 = vst [vmem:[#allocation2 + $0x80] sm:$0xc] 0.0
        %788 = vst.msk [vmem:[#allocation2 + $0x88] sm:$0xc] %vm783, 0.0
        %789 = vst [vmem:[#allocation2 + $0xb0] sm:$0xc] 0.0
        %790 = vst.msk [vmem:[#allocation2 + $0xb8] sm:$0xc] %vm783, 0.0
        %791 = vst [vmem:[#allocation2 + $0xe0] sm:$0xc] 0.0
        %792 = vst.msk [vmem:[#allocation2 + $0xe8] sm:$0xc] %vm783, 0.0
        %793 = vst [vmem:[#allocation2 + $0x110] sm:$0xc] 0.0
        %794 = vst.msk [vmem:[#allocation2 + $0x118] sm:$0xc] %vm783, 0.0
        %795 = vst [vmem:[#allocation2 + $0x140] sm:$0xc] 0.0
        %796 = vst.msk [vmem:[#allocation2 + $0x148] sm:$0xc] %vm783, 0.0
        %797 = vst [vmem:[#allocation2 + $0x170] sm:$0xc] 0.0
        %798 = vst.msk [vmem:[#allocation2 + $0x178] sm:$0xc] %vm783, 0.0
        %799 = vst [vmem:[#allocation2 + $0x1a0] sm:$0xc] 0.0
        %800 = vst.msk [vmem:[#allocation2 + $0x1a8] sm:$0xc] %vm783, 0.0
        %801 = vst [vmem:[#allocation2 + $0x1d0] sm:$0xc] 0.0
        %802 = vst.msk [vmem:[#allocation2 + $0x1d8] sm:$0xc] %vm783, 0.0
        %803 = vst [vmem:[#allocation2 + $0x200] sm:$0xc] 0.0
        %804 = vst.msk [vmem:[#allocation2 + $0x208] sm:$0xc] %vm783, 0.0
        %805 = vst [vmem:[#allocation2 + $0x230] sm:$0xc] 0.0
        %806 = vst.msk [vmem:[#allocation2 + $0x238] sm:$0xc] %vm783, 0.0
        %v807 = vld [vmem:[%s628] sm:$0xff]
        %v808 = vld [vmem:[%s628 + $0x8] sm:$0xff]
        %v809 = vld [vmem:[%s628 + $0x10] sm:$0xff]
        %v810 = vld [vmem:[%s628 + $0x18] sm:$0xff]
        %v811 = vld [vmem:[%s628 + $0x20] sm:$0xff]
        %v812 = vld [vmem:[%s628 + $0x28] sm:$0xff]
        %v813 = vld [vmem:[%s628 + $0x30] sm:$0xff]
        %v814 = vld [vmem:[%s628 + $0x38] sm:$0xff]
        %v815 = vld [vmem:[%s628 + $0x40] sm:$0xff]
        %v816 = vld [vmem:[%s628 + $0x48] sm:$0xff]
        %v817 = vld [vmem:[%s628 + $0x50] sm:$0xff]
        %v818 = vld [vmem:[%s628 + $0x58] sm:$0xff]
        %v819 = vld [vmem:[%s628 + $0x60] sm:$0xff]
        %v820 = vld [vmem:[%s628 + $0x68] sm:$0xff]
        %v821 = vld [vmem:[%s628 + $0x70] sm:$0xff]
        %v822 = vld [vmem:[%s628 + $0x78] sm:$0xff]
        %v823 = vunpack.c.l.bf16 %v807
        %v824 = vunpack.c.h.bf16 %v807
        %v825 = vunpack.c.l.bf16 %v808
        %v826 = vunpack.c.h.bf16 %v808
        %v827 = vunpack.c.l.bf16 %v809
        %v828 = vunpack.c.h.bf16 %v809
        %v829 = vunpack.c.l.bf16 %v810
        %v830 = vunpack.c.h.bf16 %v810
        %v831 = vunpack.c.l.bf16 %v811
        %v832 = vunpack.c.h.bf16 %v811
        %v833 = vunpack.c.l.bf16 %v812
        %v834 = vunpack.c.h.bf16 %v812
        %v835 = vunpack.c.l.bf16 %v813
        %v836 = vunpack.c.h.bf16 %v813
        %v837 = vunpack.c.l.bf16 %v814
        %v838 = vunpack.c.h.bf16 %v814
        %v839 = vunpack.c.l.bf16 %v815
        %v840 = vunpack.c.h.bf16 %v815
        %v841 = vunpack.c.l.bf16 %v816
        %v842 = vunpack.c.h.bf16 %v816
        %v843 = vunpack.c.l.bf16 %v817
        %v844 = vunpack.c.h.bf16 %v817
        %v845 = vunpack.c.l.bf16 %v818
        %v846 = vunpack.c.h.bf16 %v818
        %v847 = vunpack.c.l.bf16 %v819
        %v848 = vunpack.c.h.bf16 %v819
        %v849 = vunpack.c.l.bf16 %v820
        %v850 = vunpack.c.h.bf16 %v820
        %v851 = vunpack.c.l.bf16 %v821
        %v852 = vunpack.c.h.bf16 %v821
        %v853 = vunpack.c.l.bf16 %v822
        %v854 = vunpack.c.h.bf16 %v822
        %vm887 = vcmask 1041408
        %v888 = vrot.slane %v823, 6
        %v889 = vrot.slane %v824, 6
        %v890 = vrot.slane %v825, 6
        %v891 = vsel %vm887, %v888, %v890
        %v892 = vrot.slane %v826, 6
        %v893 = vsel %vm887, %v889, %v892
        %v894 = vrot.slane %v827, 6
        %v895 = vrot.slane %v828, 6
        %v896 = vrot.slane %v829, 6
        %v897 = vsel %vm887, %v894, %v896
        %v898 = vrot.slane %v830, 6
        %v899 = vsel %vm887, %v895, %v898
        %v900 = vrot.slane %v831, 6
        %v901 = vrot.slane %v832, 6
        %v902 = vrot.slane %v833, 6
        %v903 = vsel %vm887, %v900, %v902
        %v904 = vrot.slane %v834, 6
        %v905 = vsel %vm887, %v901, %v904
        %v906 = vrot.slane %v835, 6
        %v907 = vrot.slane %v836, 6
        %v908 = vrot.slane %v837, 6
        %v909 = vsel %vm887, %v906, %v908
        %v910 = vrot.slane %v838, 6
        %v911 = vsel %vm887, %v907, %v910
        %v912 = vrot.slane %v839, 6
        %v913 = vrot.slane %v840, 6
        %v914 = vrot.slane %v841, 6
        %v915 = vsel %vm887, %v912, %v914
        %v916 = vrot.slane %v842, 6
        %v917 = vsel %vm887, %v913, %v916
        %v918 = vrot.slane %v843, 6
        %v919 = vrot.slane %v844, 6
        %v920 = vrot.slane %v845, 6
        %v921 = vsel %vm887, %v918, %v920
        %v922 = vrot.slane %v846, 6
        %v923 = vsel %vm887, %v919, %v922
        %v924 = vrot.slane %v847, 6
        %v925 = vrot.slane %v848, 6
        %v926 = vrot.slane %v849, 6
        %v927 = vsel %vm887, %v924, %v926
        %v928 = vrot.slane %v850, 6
        %v929 = vsel %vm887, %v925, %v928
        %v930 = vrot.slane %v851, 6
        %v931 = vrot.slane %v852, 6
        %v932 = vrot.slane %v853, 6
        %v933 = vsel %vm887, %v930, %v932
        %v934 = vrot.slane %v854, 6
        %v935 = vsel %vm887, %v931, %v934
        %s984 = scalar_lea.vmem [#allocation2], 96
        %985 = vst [vmem:[%s984] sm:$0xfc] %v888
        %vm986 = vcmask 588802
        %987 = vst.msk [vmem:[%s984 + $0x8] sm:$0xfc] %vm986, %v889
        %988 = vst [vmem:[%s984 + $0x10] sm:$0xff] %v891
        %989 = vst.msk [vmem:[%s984 + $0x18] sm:$0xff] %vm731, %v893
        %990 = vst [vmem:[%s984 + $0x20] sm:$0x3] %v890
        %991 = vst.msk [vmem:[%s984 + $0x28] sm:$0x3] %vm758, %v892
        %992 = vst [vmem:[%s984 + $0x30] sm:$0xfc] %v894
        %993 = vst.msk [vmem:[%s984 + $0x38] sm:$0xfc] %vm986, %v895
        %994 = vst [vmem:[%s984 + $0x40] sm:$0xff] %v897
        %995 = vst.msk [vmem:[%s984 + $0x48] sm:$0xff] %vm731, %v899
        %996 = vst [vmem:[%s984 + $0x50] sm:$0x3] %v896
        %997 = vst.msk [vmem:[%s984 + $0x58] sm:$0x3] %vm758, %v898
        %998 = vst [vmem:[%s984 + $0x60] sm:$0xfc] %v900
        %999 = vst.msk [vmem:[%s984 + $0x68] sm:$0xfc] %vm986, %v901
        %1000 = vst [vmem:[%s984 + $0x70] sm:$0xff] %v903
        %1001 = vst.msk [vmem:[%s984 + $0x78] sm:$0xff] %vm731, %v905
        %1002 = vst [vmem:[%s984 + $0x80] sm:$0x3] %v902
        %1003 = vst.msk [vmem:[%s984 + $0x88] sm:$0x3] %vm758, %v904
        %1004 = vst [vmem:[%s984 + $0x90] sm:$0xfc] %v906
        %1005 = vst.msk [vmem:[%s984 + $0x98] sm:$0xfc] %vm986, %v907
        %1006 = vst [vmem:[%s984 + $0xa0] sm:$0xff] %v909
        %1007 = vst.msk [vmem:[%s984 + $0xa8] sm:$0xff] %vm731, %v911
        %1008 = vst [vmem:[%s984 + $0xb0] sm:$0x3] %v908
        %1009 = vst.msk [vmem:[%s984 + $0xb8] sm:$0x3] %vm758, %v910
        %1010 = vst [vmem:[%s984 + $0xc0] sm:$0xfc] %v912
        %1011 = vst.msk [vmem:[%s984 + $0xc8] sm:$0xfc] %vm986, %v913
        %1012 = vst [vmem:[%s984 + $0xd0] sm:$0xff] %v915
        %1013 = vst.msk [vmem:[%s984 + $0xd8] sm:$0xff] %vm731, %v917
        %1014 = vst [vmem:[%s984 + $0xe0] sm:$0x3] %v914
        %1015 = vst.msk [vmem:[%s984 + $0xe8] sm:$0x3] %vm758, %v916
        %1016 = vst [vmem:[%s984 + $0xf0] sm:$0xfc] %v918
        %1017 = vst.msk [vmem:[%s984 + $0xf8] sm:$0xfc] %vm986, %v919
        %1018 = vst [vmem:[%s984 + $0x100] sm:$0xff] %v921
        %1019 = vst.msk [vmem:[%s984 + $0x108] sm:$0xff] %vm731, %v923
        %1020 = vst [vmem:[%s984 + $0x110] sm:$0x3] %v920
        %1021 = vst.msk [vmem:[%s984 + $0x118] sm:$0x3] %vm758, %v922
        %1022 = vst [vmem:[%s984 + $0x120] sm:$0xfc] %v924
        %1023 = vst.msk [vmem:[%s984 + $0x128] sm:$0xfc] %vm986, %v925
        %1024 = vst [vmem:[%s984 + $0x130] sm:$0xff] %v927
        %1025 = vst.msk [vmem:[%s984 + $0x138] sm:$0xff] %vm731, %v929
        %1026 = vst [vmem:[%s984 + $0x140] sm:$0x3] %v926
        %1027 = vst.msk [vmem:[%s984 + $0x148] sm:$0x3] %vm758, %v928
        %1028 = vst [vmem:[%s984 + $0x150] sm:$0xfc] %v930
        %1029 = vst.msk [vmem:[%s984 + $0x158] sm:$0xfc] %vm986, %v931
        %1030 = vst [vmem:[%s984 + $0x160] sm:$0xff] %v933
        %1031 = vst.msk [vmem:[%s984 + $0x168] sm:$0xff] %vm731, %v935
        %1032 = vst [vmem:[%s984 + $0x170] sm:$0x3] %v932
        %1033 = vst.msk [vmem:[%s984 + $0x178] sm:$0x3] %vm758, %v934
        %v1034 = vld [vmem:[#allocation10] sm:$0xff]
        %v1035 = vld [vmem:[#allocation10 + $0x8] sm:$0xff]
        %v1036 = vld [vmem:[#allocation10 + $0x10] sm:$0xff]
        %v1037 = vld [vmem:[#allocation10 + $0x18] sm:$0xff]
        %v1038 = vld [vmem:[#allocation10 + $0x20] sm:$0xff]
        %v1039 = vld [vmem:[#allocation10 + $0x28] sm:$0xff]
        %v1040 = vld [vmem:[#allocation10 + $0x30] sm:$0x1]
        %v1041 = vld [vmem:[#allocation10 + $0x38] sm:$0x1]
        %v1042 = vld [vmem:[#allocation2] sm:$0xff]
        %v1043 = vld [vmem:[#allocation2 + $0x8] sm:$0xff]
        %v1044 = vld [vmem:[#allocation2 + $0x10] sm:$0xff]
        %v1045 = vld [vmem:[#allocation2 + $0x18] sm:$0xff]
        %v1046 = vld [vmem:[#allocation2 + $0x30] sm:$0xff]
        %v1047 = vld [vmem:[#allocation2 + $0x38] sm:$0xff]
        %v1048 = vld [vmem:[#allocation2 + $0x40] sm:$0xff]
        %v1049 = vld [vmem:[#allocation2 + $0x48] sm:$0xff]
        %v1050 = vld [vmem:[#allocation2 + $0x60] sm:$0xff]
        %v1051 = vld [vmem:[#allocation2 + $0x68] sm:$0xff]
        %v1052 = vld [vmem:[#allocation2 + $0x70] sm:$0xff]
        %v1053 = vld [vmem:[#allocation2 + $0x78] sm:$0xff]
        %v1054 = vld [vmem:[#allocation2 + $0x90] sm:$0xff]
        %v1055 = vld [vmem:[#allocation2 + $0x98] sm:$0xff]
        %v1056 = vld [vmem:[#allocation2 + $0xa0] sm:$0xff]
        %v1057 = vld [vmem:[#allocation2 + $0xa8] sm:$0xff]
        %v1058 = vld [vmem:[#allocation2 + $0xc0] sm:$0xff]
        %v1059 = vld [vmem:[#allocation2 + $0xc8] sm:$0xff]
        %v1060 = vld [vmem:[#allocation2 + $0xd0] sm:$0xff]
        %v1061 = vld [vmem:[#allocation2 + $0xd8] sm:$0xff]
        %v1062 = vld [vmem:[#allocation2 + $0xf0] sm:$0xff]
        %v1063 = vld [vmem:[#allocation2 + $0xf8] sm:$0xff]
        %v1064 = vld [vmem:[#allocation2 + $0x100] sm:$0xff]
        %v1065 = vld [vmem:[#allocation2 + $0x108] sm:$0xff]
        %v1066 = vld [vmem:[#allocation2 + $0x120] sm:$0xff]
        %v1067 = vld [vmem:[#allocation2 + $0x128] sm:$0xff]
        %v1068 = vld [vmem:[#allocation2 + $0x130] sm:$0xff]
        %v1069 = vld [vmem:[#allocation2 + $0x138] sm:$0xff]
        %v1070 = vld [vmem:[#allocation2 + $0x150] sm:$0xff]
        %v1071 = vld [vmem:[#allocation2 + $0x158] sm:$0xff]
        %v1072 = vld [vmem:[#allocation2 + $0x160] sm:$0xff]
        %v1073 = vld [vmem:[#allocation2 + $0x168] sm:$0xff]
        %v1074 = vld [vmem:[#allocation2 + $0x180] sm:$0xff]
        %v1075 = vld [vmem:[#allocation2 + $0x188] sm:$0xff]
        %v1076 = vld [vmem:[#allocation2 + $0x190] sm:$0xff]
        %v1077 = vld [vmem:[#allocation2 + $0x198] sm:$0xff]
        %v1078 = vld [vmem:[#allocation2 + $0x1b0] sm:$0xff]
        %v1079 = vld [vmem:[#allocation2 + $0x1b8] sm:$0xff]
        %v1080 = vld [vmem:[#allocation2 + $0x1c0] sm:$0xff]
        %v1081 = vld [vmem:[#allocation2 + $0x1c8] sm:$0xff]
        %v1082 = vld [vmem:[#allocation2 + $0x1e0] sm:$0xff]
        %v1083 = vld [vmem:[#allocation2 + $0x1e8] sm:$0xff]
        %v1084 = vld [vmem:[#allocation2 + $0x1f0] sm:$0xff]
        %v1085 = vld [vmem:[#allocation2 + $0x1f8] sm:$0xff]
        %v1086 = vld [vmem:[#allocation2 + $0x210] sm:$0xff]
        %v1087 = vld [vmem:[#allocation2 + $0x218] sm:$0xff]
        %v1088 = vld [vmem:[#allocation2 + $0x220] sm:$0xff]
        %v1089 = vld [vmem:[#allocation2 + $0x228] sm:$0xff]
        %v1090 = vlaneseq
        %v1091 = vshrl.u32 %v1090, 7
        %v1092 = vsub.s32 0, %v1091
        %v1093 = vrot.slane %v1034, %v1092
        %v1094 = vlaneseq
        %v1095 = vshrl.u32 %v1094, 7
        %v1096 = vsub.s32 0, %v1095
        %v1097 = vrot.slane %v1035, %v1096
        %v1098 = vmul.f32 %v1042, %v1093
        %v1099 = vmul.f32 %v1043, %v1097
        %v1100 = vmul.f32 %v1044, %v1093
        %v1101 = vmul.f32 %v1045, %v1097
        %v1102 = vmul.f32 %v1046, %v1093
        %v1103 = vmul.f32 %v1047, %v1097
        %v1104 = vmul.f32 %v1048, %v1093
        %v1105 = vmul.f32 %v1049, %v1097
        %v1106 = vmul.f32 %v1050, %v1093
        %v1107 = vmul.f32 %v1051, %v1097
        %v1108 = vmul.f32 %v1052, %v1093
        %v1109 = vmul.f32 %v1053, %v1097
        %v1110 = vmul.f32 %v1054, %v1093
        %v1111 = vmul.f32 %v1055, %v1097
        %v1112 = vmul.f32 %v1056, %v1093
        %v1113 = vmul.f32 %v1057, %v1097
        %v1114 = vmul.f32 %v1058, %v1093
        %v1115 = vmul.f32 %v1059, %v1097
        %v1116 = vmul.f32 %v1060, %v1093
        %v1117 = vmul.f32 %v1061, %v1097
        %v1118 = vmul.f32 %v1062, %v1093
        %v1119 = vmul.f32 %v1063, %v1097
        %v1120 = vmul.f32 %v1064, %v1093
        %v1121 = vmul.f32 %v1065, %v1097
        %v1122 = vmul.f32 %v1066, %v1093
        %v1123 = vmul.f32 %v1067, %v1097
        %v1124 = vmul.f32 %v1068, %v1093
        %v1125 = vmul.f32 %v1069, %v1097
        %v1126 = vmul.f32 %v1070, %v1093
        %v1127 = vmul.f32 %v1071, %v1097
        %v1128 = vmul.f32 %v1072, %v1093
        %v1129 = vmul.f32 %v1073, %v1097
        %v1130 = vadd.f32 %v1098, 0.0
        %v1131 = vadd.f32 %v1099, 0.0
        %v1132 = vadd.f32 %v1100, 0.0
        %v1133 = vadd.f32 %v1101, 0.0
        %v1134 = vadd.f32 %v1102, 0.0
        %v1135 = vadd.f32 %v1103, 0.0
        %v1136 = vadd.f32 %v1104, 0.0
        %v1137 = vadd.f32 %v1105, 0.0
        %v1138 = vadd.f32 %v1106, 0.0
        %v1139 = vadd.f32 %v1107, 0.0
        %v1140 = vadd.f32 %v1108, 0.0
        %v1141 = vadd.f32 %v1109, 0.0
        %v1142 = vadd.f32 %v1110, 0.0
        %v1143 = vadd.f32 %v1111, 0.0
        %v1144 = vadd.f32 %v1112, 0.0
        %v1145 = vadd.f32 %v1113, 0.0
        %v1146 = vadd.f32 %v1114, 0.0
        %v1147 = vadd.f32 %v1115, 0.0
        %v1148 = vadd.f32 %v1116, 0.0
        %v1149 = vadd.f32 %v1117, 0.0
        %v1150 = vadd.f32 %v1118, 0.0
        %v1151 = vadd.f32 %v1119, 0.0
        %v1152 = vadd.f32 %v1120, 0.0
        %v1153 = vadd.f32 %v1121, 0.0
        %v1154 = vadd.f32 %v1122, 0.0
        %v1155 = vadd.f32 %v1123, 0.0
        %v1156 = vadd.f32 %v1124, 0.0
        %v1157 = vadd.f32 %v1125, 0.0
        %v1158 = vadd.f32 %v1126, 0.0
        %v1159 = vadd.f32 %v1127, 0.0
        %v1160 = vadd.f32 %v1128, 0.0
        %v1161 = vadd.f32 %v1129, 0.0
        %v1162 = vlaneseq
        %v1163 = vshrl.u32 %v1162, 7
        %v1164 = vsub.s32 5, %v1163
        %v1165 = vrot.slane %v1034, %v1164
        %v1166 = vlaneseq
        %v1167 = vshrl.u32 %v1166, 7
        %v1168 = vsub.s32 5, %v1167
        %v1169 = vrot.slane %v1035, %v1168
        %v1170 = vmul.f32 %v1046, %v1165
        %v1171 = vmul.f32 %v1047, %v1169
        %v1172 = vmul.f32 %v1048, %v1165
        %v1173 = vmul.f32 %v1049, %v1169
        %v1174 = vmul.f32 %v1050, %v1165
        %v1175 = vmul.f32 %v1051, %v1169
        %v1176 = vmul.f32 %v1052, %v1165
        %v1177 = vmul.f32 %v1053, %v1169
        %v1178 = vmul.f32 %v1054, %v1165
        %v1179 = vmul.f32 %v1055, %v1169
        %v1180 = vmul.f32 %v1056, %v1165
        %v1181 = vmul.f32 %v1057, %v1169
        %v1182 = vmul.f32 %v1058, %v1165
        %v1183 = vmul.f32 %v1059, %v1169
        %v1184 = vmul.f32 %v1060, %v1165
        %v1185 = vmul.f32 %v1061, %v1169
        %v1186 = vmul.f32 %v1062, %v1165
        %v1187 = vmul.f32 %v1063, %v1169
        %v1188 = vmul.f32 %v1064, %v1165
        %v1189 = vmul.f32 %v1065, %v1169
        %v1190 = vmul.f32 %v1066, %v1165
        %v1191 = vmul.f32 %v1067, %v1169
        %v1192 = vmul.f32 %v1068, %v1165
        %v1193 = vmul.f32 %v1069, %v1169
        %v1194 = vmul.f32 %v1070, %v1165
        %v1195 = vmul.f32 %v1071, %v1169
        %v1196 = vmul.f32 %v1072, %v1165
        %v1197 = vmul.f32 %v1073, %v1169
        %v1198 = vmul.f32 %v1074, %v1165
        %v1199 = vmul.f32 %v1075, %v1169
        %v1200 = vmul.f32 %v1076, %v1165
        %v1201 = vmul.f32 %v1077, %v1169
        %v1202 = vadd.f32 %v1130, %v1170
        %v1203 = vadd.f32 %v1131, %v1171
        %v1204 = vadd.f32 %v1132, %v1172
        %v1205 = vadd.f32 %v1133, %v1173
        %v1206 = vadd.f32 %v1134, %v1174
        %v1207 = vadd.f32 %v1135, %v1175
        %v1208 = vadd.f32 %v1136, %v1176
        %v1209 = vadd.f32 %v1137, %v1177
        %v1210 = vadd.f32 %v1138, %v1178
        %v1211 = vadd.f32 %v1139, %v1179
        %v1212 = vadd.f32 %v1140, %v1180
        %v1213 = vadd.f32 %v1141, %v1181
        %v1214 = vadd.f32 %v1142, %v1182
        %v1215 = vadd.f32 %v1143, %v1183
        %v1216 = vadd.f32 %v1144, %v1184
        %v1217 = vadd.f32 %v1145, %v1185
        %v1218 = vadd.f32 %v1146, %v1186
        %v1219 = vadd.f32 %v1147, %v1187
        %v1220 = vadd.f32 %v1148, %v1188
        %v1221 = vadd.f32 %v1149, %v1189
        %v1222 = vadd.f32 %v1150, %v1190
        %v1223 = vadd.f32 %v1151, %v1191
        %v1224 = vadd.f32 %v1152, %v1192
        %v1225 = vadd.f32 %v1153, %v1193
        %v1226 = vadd.f32 %v1154, %v1194
        %v1227 = vadd.f32 %v1155, %v1195
        %v1228 = vadd.f32 %v1156, %v1196
        %v1229 = vadd.f32 %v1157, %v1197
        %v1230 = vadd.f32 %v1158, %v1198
        %v1231 = vadd.f32 %v1159, %v1199
        %v1232 = vadd.f32 %v1160, %v1200
        %v1233 = vadd.f32 %v1161, %v1201
        %v1234 = vlaneseq
        %v1235 = vshrl.u32 %v1234, 7
        %v1236 = vsub.s32 2, %v1235
        %v1237 = vrot.slane %v1036, %v1236
        %v1238 = vlaneseq
        %v1239 = vshrl.u32 %v1238, 7
        %v1240 = vsub.s32 2, %v1239
        %v1241 = vrot.slane %v1037, %v1240
        %v1242 = vmul.f32 %v1050, %v1237
        %v1243 = vmul.f32 %v1051, %v1241
        %v1244 = vmul.f32 %v1052, %v1237
        %v1245 = vmul.f32 %v1053, %v1241
        %v1246 = vmul.f32 %v1054, %v1237
        %v1247 = vmul.f32 %v1055, %v1241
        %v1248 = vmul.f32 %v1056, %v1237
        %v1249 = vmul.f32 %v1057, %v1241
        %v1250 = vmul.f32 %v1058, %v1237
        %v1251 = vmul.f32 %v1059, %v1241
        %v1252 = vmul.f32 %v1060, %v1237
        %v1253 = vmul.f32 %v1061, %v1241
        %v1254 = vmul.f32 %v1062, %v1237
        %v1255 = vmul.f32 %v1063, %v1241
        %v1256 = vmul.f32 %v1064, %v1237
        %v1257 = vmul.f32 %v1065, %v1241
        %v1258 = vmul.f32 %v1066, %v1237
        %v1259 = vmul.f32 %v1067, %v1241
        %v1260 = vmul.f32 %v1068, %v1237
        %v1261 = vmul.f32 %v1069, %v1241
        %v1262 = vmul.f32 %v1070, %v1237
        %v1263 = vmul.f32 %v1071, %v1241
        %v1264 = vmul.f32 %v1072, %v1237
        %v1265 = vmul.f32 %v1073, %v1241
        %v1266 = vmul.f32 %v1074, %v1237
        %v1267 = vmul.f32 %v1075, %v1241
        %v1268 = vmul.f32 %v1076, %v1237
        %v1269 = vmul.f32 %v1077, %v1241
        %v1270 = vmul.f32 %v1078, %v1237
        %v1271 = vmul.f32 %v1079, %v1241
        %v1272 = vmul.f32 %v1080, %v1237
        %v1273 = vmul.f32 %v1081, %v1241
        %v1274 = vadd.f32 %v1202, %v1242
        %v1275 = vadd.f32 %v1203, %v1243
        %v1276 = vadd.f32 %v1204, %v1244
        %v1277 = vadd.f32 %v1205, %v1245
        %v1278 = vadd.f32 %v1206, %v1246
        %v1279 = vadd.f32 %v1207, %v1247
        %v1280 = vadd.f32 %v1208, %v1248
        %v1281 = vadd.f32 %v1209, %v1249
        %v1282 = vadd.f32 %v1210, %v1250
        %v1283 = vadd.f32 %v1211, %v1251
        %v1284 = vadd.f32 %v1212, %v1252
        %v1285 = vadd.f32 %v1213, %v1253
        %v1286 = vadd.f32 %v1214, %v1254
        %v1287 = vadd.f32 %v1215, %v1255
        %v1288 = vadd.f32 %v1216, %v1256
        %v1289 = vadd.f32 %v1217, %v1257
        %v1290 = vadd.f32 %v1218, %v1258
        %v1291 = vadd.f32 %v1219, %v1259
        %v1292 = vadd.f32 %v1220, %v1260
        %v1293 = vadd.f32 %v1221, %v1261
        %v1294 = vadd.f32 %v1222, %v1262
        %v1295 = vadd.f32 %v1223, %v1263
        %v1296 = vadd.f32 %v1224, %v1264
        %v1297 = vadd.f32 %v1225, %v1265
        %v1298 = vadd.f32 %v1226, %v1266
        %v1299 = vadd.f32 %v1227, %v1267
        %v1300 = vadd.f32 %v1228, %v1268
        %v1301 = vadd.f32 %v1229, %v1269
        %v1302 = vadd.f32 %v1230, %v1270
        %v1303 = vadd.f32 %v1231, %v1271
        %v1304 = vadd.f32 %v1232, %v1272
        %v1305 = vadd.f32 %v1233, %v1273
        %v1306 = vlaneseq
        %v1307 = vshrl.u32 %v1306, 7
        %v1308 = vsub.s32 7, %v1307
        %v1309 = vrot.slane %v1036, %v1308
        %v1310 = vlaneseq
        %v1311 = vshrl.u32 %v1310, 7
        %v1312 = vsub.s32 7, %v1311
        %v1313 = vrot.slane %v1037, %v1312
        %v1314 = vmul.f32 %v1054, %v1309
        %v1315 = vmul.f32 %v1055, %v1313
        %v1316 = vmul.f32 %v1056, %v1309
        %v1317 = vmul.f32 %v1057, %v1313
        %v1318 = vmul.f32 %v1058, %v1309
        %v1319 = vmul.f32 %v1059, %v1313
        %v1320 = vmul.f32 %v1060, %v1309
        %v1321 = vmul.f32 %v1061, %v1313
        %v1322 = vmul.f32 %v1062, %v1309
        %v1323 = vmul.f32 %v1063, %v1313
        %v1324 = vmul.f32 %v1064, %v1309
        %v1325 = vmul.f32 %v1065, %v1313
        %v1326 = vmul.f32 %v1066, %v1309
        %v1327 = vmul.f32 %v1067, %v1313
        %v1328 = vmul.f32 %v1068, %v1309
        %v1329 = vmul.f32 %v1069, %v1313
        %v1330 = vmul.f32 %v1070, %v1309
        %v1331 = vmul.f32 %v1071, %v1313
        %v1332 = vmul.f32 %v1072, %v1309
        %v1333 = vmul.f32 %v1073, %v1313
        %v1334 = vmul.f32 %v1074, %v1309
        %v1335 = vmul.f32 %v1075, %v1313
        %v1336 = vmul.f32 %v1076, %v1309
        %v1337 = vmul.f32 %v1077, %v1313
        %v1338 = vmul.f32 %v1078, %v1309
        %v1339 = vmul.f32 %v1079, %v1313
        %v1340 = vmul.f32 %v1080, %v1309
        %v1341 = vmul.f32 %v1081, %v1313
        %v1342 = vmul.f32 %v1082, %v1309
        %v1343 = vmul.f32 %v1083, %v1313
        %v1344 = vmul.f32 %v1084, %v1309
        %v1345 = vmul.f32 %v1085, %v1313
        %v1346 = vadd.f32 %v1274, %v1314
        %v1347 = vadd.f32 %v1275, %v1315
        %v1348 = vadd.f32 %v1276, %v1316
        %v1349 = vadd.f32 %v1277, %v1317
        %v1350 = vadd.f32 %v1278, %v1318
        %v1351 = vadd.f32 %v1279, %v1319
        %v1352 = vadd.f32 %v1280, %v1320
        %v1353 = vadd.f32 %v1281, %v1321
        %v1354 = vadd.f32 %v1282, %v1322
        %v1355 = vadd.f32 %v1283, %v1323
        %v1356 = vadd.f32 %v1284, %v1324
        %v1357 = vadd.f32 %v1285, %v1325
        %v1358 = vadd.f32 %v1286, %v1326
        %v1359 = vadd.f32 %v1287, %v1327
        %v1360 = vadd.f32 %v1288, %v1328
        %v1361 = vadd.f32 %v1289, %v1329
        %v1362 = vadd.f32 %v1290, %v1330
        %v1363 = vadd.f32 %v1291, %v1331
        %v1364 = vadd.f32 %v1292, %v1332
        %v1365 = vadd.f32 %v1293, %v1333
        %v1366 = vadd.f32 %v1294, %v1334
        %v1367 = vadd.f32 %v1295, %v1335
        %v1368 = vadd.f32 %v1296, %v1336
        %v1369 = vadd.f32 %v1297, %v1337
        %v1370 = vadd.f32 %v1298, %v1338
        %v1371 = vadd.f32 %v1299, %v1339
        %v1372 = vadd.f32 %v1300, %v1340
        %v1373 = vadd.f32 %v1301, %v1341
        %v1374 = vadd.f32 %v1302, %v1342
        %v1375 = vadd.f32 %v1303, %v1343
        %v1376 = vadd.f32 %v1304, %v1344
        %v1377 = vadd.f32 %v1305, %v1345
        %v1378 = vlaneseq
        %v1379 = vshrl.u32 %v1378, 7
        %v1380 = vsub.s32 4, %v1379
        %v1381 = vrot.slane %v1038, %v1380
        %v1382 = vlaneseq
        %v1383 = vshrl.u32 %v1382, 7
        %v1384 = vsub.s32 4, %v1383
        %v1385 = vrot.slane %v1039, %v1384
        %v1386 = vmul.f32 %v1058, %v1381
        %v1387 = vmul.f32 %v1059, %v1385
        %v1388 = vmul.f32 %v1060, %v1381
        %v1389 = vmul.f32 %v1061, %v1385
        %v1390 = vmul.f32 %v1062, %v1381
        %v1391 = vmul.f32 %v1063, %v1385
        %v1392 = vmul.f32 %v1064, %v1381
        %v1393 = vmul.f32 %v1065, %v1385
        %v1394 = vmul.f32 %v1066, %v1381
        %v1395 = vmul.f32 %v1067, %v1385
        %v1396 = vmul.f32 %v1068, %v1381
        %v1397 = vmul.f32 %v1069, %v1385
        %v1398 = vmul.f32 %v1070, %v1381
        %v1399 = vmul.f32 %v1071, %v1385
        %v1400 = vmul.f32 %v1072, %v1381
        %v1401 = vmul.f32 %v1073, %v1385
        %v1402 = vmul.f32 %v1074, %v1381
        %v1403 = vmul.f32 %v1075, %v1385
        %v1404 = vmul.f32 %v1076, %v1381
        %v1405 = vmul.f32 %v1077, %v1385
        %v1406 = vmul.f32 %v1078, %v1381
        %v1407 = vmul.f32 %v1079, %v1385
        %v1408 = vmul.f32 %v1080, %v1381
        %v1409 = vmul.f32 %v1081, %v1385
        %v1410 = vmul.f32 %v1082, %v1381
        %v1411 = vmul.f32 %v1083, %v1385
        %v1412 = vmul.f32 %v1084, %v1381
        %v1413 = vmul.f32 %v1085, %v1385
        %v1414 = vmul.f32 %v1086, %v1381
        %v1415 = vmul.f32 %v1087, %v1385
        %v1416 = vmul.f32 %v1088, %v1381
        %v1417 = vmul.f32 %v1089, %v1385
        %v1418 = vadd.f32 %v1346, %v1386
        %v1419 = vadd.f32 %v1347, %v1387
        %v1420 = vadd.f32 %v1348, %v1388
        %v1421 = vadd.f32 %v1349, %v1389
        %v1422 = vadd.f32 %v1350, %v1390
        %v1423 = vadd.f32 %v1351, %v1391
        %v1424 = vadd.f32 %v1352, %v1392
        %v1425 = vadd.f32 %v1353, %v1393
        %v1426 = vadd.f32 %v1354, %v1394
        %v1427 = vadd.f32 %v1355, %v1395
        %v1428 = vadd.f32 %v1356, %v1396
        %v1429 = vadd.f32 %v1357, %v1397
        %v1430 = vadd.f32 %v1358, %v1398
        %v1431 = vadd.f32 %v1359, %v1399
        %v1432 = vadd.f32 %v1360, %v1400
        %v1433 = vadd.f32 %v1361, %v1401
        %v1434 = vadd.f32 %v1362, %v1402
        %v1435 = vadd.f32 %v1363, %v1403
        %v1436 = vadd.f32 %v1364, %v1404
        %v1437 = vadd.f32 %v1365, %v1405
        %v1438 = vadd.f32 %v1366, %v1406
        %v1439 = vadd.f32 %v1367, %v1407
        %v1440 = vadd.f32 %v1368, %v1408
        %v1441 = vadd.f32 %v1369, %v1409
        %v1442 = vadd.f32 %v1370, %v1410
        %v1443 = vadd.f32 %v1371, %v1411
        %v1444 = vadd.f32 %v1372, %v1412
        %v1445 = vadd.f32 %v1373, %v1413
        %v1446 = vadd.f32 %v1374, %v1414
        %v1447 = vadd.f32 %v1375, %v1415
        %v1448 = vadd.f32 %v1376, %v1416
        %v1449 = vadd.f32 %v1377, %v1417
        %v1450 = vld [vmem:[#allocation2] sm:$0xfe]
        %v1451 = vld [vmem:[#allocation2 + $0x8] sm:$0xfe]
        %v1452 = vld [vmem:[#allocation2 + $0x20] sm:$0x1]
        %v1453 = vld [vmem:[#allocation2 + $0x28] sm:$0x1]
        %v1454 = vld [vmem:[#allocation2 + $0x30] sm:$0xfe]
        %v1455 = vld [vmem:[#allocation2 + $0x38] sm:$0xfe]
        %v1456 = vld [vmem:[#allocation2 + $0x50] sm:$0x1]
        %v1457 = vld [vmem:[#allocation2 + $0x58] sm:$0x1]
        %v1458 = vld [vmem:[#allocation2 + $0x60] sm:$0xfe]
        %v1459 = vld [vmem:[#allocation2 + $0x68] sm:$0xfe]
        %v1460 = vld [vmem:[#allocation2 + $0x80] sm:$0x1]
        %v1461 = vld [vmem:[#allocation2 + $0x88] sm:$0x1]
        %v1462 = vld [vmem:[#allocation2 + $0x90] sm:$0xfe]
        %v1463 = vld [vmem:[#allocation2 + $0x98] sm:$0xfe]
        %v1464 = vld [vmem:[#allocation2 + $0xb0] sm:$0x1]
        %v1465 = vld [vmem:[#allocation2 + $0xb8] sm:$0x1]
        %v1466 = vld [vmem:[#allocation2 + $0xc0] sm:$0xfe]
        %v1467 = vld [vmem:[#allocation2 + $0xc8] sm:$0xfe]
        %v1468 = vld [vmem:[#allocation2 + $0xe0] sm:$0x1]
        %v1469 = vld [vmem:[#allocation2 + $0xe8] sm:$0x1]
        %v1470 = vld [vmem:[#allocation2 + $0xf0] sm:$0xfe]
        %v1471 = vld [vmem:[#allocation2 + $0xf8] sm:$0xfe]
        %v1472 = vld [vmem:[#allocation2 + $0x110] sm:$0x1]
        %v1473 = vld [vmem:[#allocation2 + $0x118] sm:$0x1]
        %v1474 = vld [vmem:[#allocation2 + $0x120] sm:$0xfe]
        %v1475 = vld [vmem:[#allocation2 + $0x128] sm:$0xfe]
        %v1476 = vld [vmem:[#allocation2 + $0x140] sm:$0x1]
        %v1477 = vld [vmem:[#allocation2 + $0x148] sm:$0x1]
        %v1478 = vld [vmem:[#allocation2 + $0x150] sm:$0xfe]
        %v1479 = vld [vmem:[#allocation2 + $0x158] sm:$0xfe]
        %v1480 = vld [vmem:[#allocation2 + $0x170] sm:$0x1]
        %v1481 = vld [vmem:[#allocation2 + $0x178] sm:$0x1]
        %v1482 = vld [vmem:[#allocation2 + $0x180] sm:$0xfe]
        %v1483 = vld [vmem:[#allocation2 + $0x188] sm:$0xfe]
        %v1484 = vld [vmem:[#allocation2 + $0x1a0] sm:$0x1]
        %v1485 = vld [vmem:[#allocation2 + $0x1a8] sm:$0x1]
        %v1486 = vld [vmem:[#allocation2 + $0x1b0] sm:$0xfe]
        %v1487 = vld [vmem:[#allocation2 + $0x1b8] sm:$0xfe]
        %v1488 = vld [vmem:[#allocation2 + $0x1d0] sm:$0x1]
        %v1489 = vld [vmem:[#allocation2 + $0x1d8] sm:$0x1]
        %v1490 = vld [vmem:[#allocation2 + $0x1e0] sm:$0xfe]
        %v1491 = vld [vmem:[#allocation2 + $0x1e8] sm:$0xfe]
        %v1492 = vld [vmem:[#allocation2 + $0x200] sm:$0x1]
        %v1493 = vld [vmem:[#allocation2 + $0x208] sm:$0x1]
        %v1494 = vld [vmem:[#allocation2 + $0x210] sm:$0xfe]
        %v1495 = vld [vmem:[#allocation2 + $0x218] sm:$0xfe]
        %v1496 = vld [vmem:[#allocation2 + $0x230] sm:$0x1]
        %v1497 = vld [vmem:[#allocation2 + $0x238] sm:$0x1]
        %v1498 = vlaneseq
        %v1499 = vshrl.u32 %v1498, 7
        %v1500 = vsub.s32 1, %v1499
        %v1501 = vrot.slane %v1034, %v1500
        %v1502 = vlaneseq
        %v1503 = vshrl.u32 %v1502, 7
        %v1504 = vsub.s32 1, %v1503
        %v1505 = vrot.slane %v1035, %v1504
        %v1506 = vmul.f32 %v1450, %v1501
        %v1507 = vmul.f32 %v1451, %v1505
        %v1508 = vmul.f32 %v1044, %v1501
        %v1509 = vmul.f32 %v1045, %v1505
        %v1510 = vmul.f32 %v1452, %v1501
        %v1511 = vmul.f32 %v1453, %v1505
        %v1512 = vmul.f32 %v1454, %v1501
        %v1513 = vmul.f32 %v1455, %v1505
        %v1514 = vmul.f32 %v1048, %v1501
        %v1515 = vmul.f32 %v1049, %v1505
        %v1516 = vmul.f32 %v1456, %v1501
        %v1517 = vmul.f32 %v1457, %v1505
        %v1518 = vmul.f32 %v1458, %v1501
        %v1519 = vmul.f32 %v1459, %v1505
        %v1520 = vmul.f32 %v1052, %v1501
        %v1521 = vmul.f32 %v1053, %v1505
        %v1522 = vmul.f32 %v1460, %v1501
        %v1523 = vmul.f32 %v1461, %v1505
        %v1524 = vmul.f32 %v1462, %v1501
        %v1525 = vmul.f32 %v1463, %v1505
        %v1526 = vmul.f32 %v1056, %v1501
        %v1527 = vmul.f32 %v1057, %v1505
        %v1528 = vmul.f32 %v1464, %v1501
        %v1529 = vmul.f32 %v1465, %v1505
        %v1530 = vmul.f32 %v1466, %v1501
        %v1531 = vmul.f32 %v1467, %v1505
        %v1532 = vmul.f32 %v1060, %v1501
        %v1533 = vmul.f32 %v1061, %v1505
        %v1534 = vmul.f32 %v1468, %v1501
        %v1535 = vmul.f32 %v1469, %v1505
        %v1536 = vmul.f32 %v1470, %v1501
        %v1537 = vmul.f32 %v1471, %v1505
        %v1538 = vmul.f32 %v1064, %v1501
        %v1539 = vmul.f32 %v1065, %v1505
        %v1540 = vmul.f32 %v1472, %v1501
        %v1541 = vmul.f32 %v1473, %v1505
        %v1542 = vmul.f32 %v1474, %v1501
        %v1543 = vmul.f32 %v1475, %v1505
        %v1544 = vmul.f32 %v1068, %v1501
        %v1545 = vmul.f32 %v1069, %v1505
        %v1546 = vmul.f32 %v1476, %v1501
        %v1547 = vmul.f32 %v1477, %v1505
        %v1548 = vmul.f32 %v1478, %v1501
        %v1549 = vmul.f32 %v1479, %v1505
        %v1550 = vmul.f32 %v1072, %v1501
        %v1551 = vmul.f32 %v1073, %v1505
        %v1552 = vmul.f32 %v1480, %v1501
        %v1553 = vmul.f32 %v1481, %v1505
        %vm1602 = vcmask 1046528
        %v1603 = vrot.slane %v1506, 1
        %v1604 = vrot.slane %v1508, 1
        %v1605 = vsel %vm1602, %v1603, %v1604
        %v1606 = vrot.slane %v1507, 1
        %v1607 = vrot.slane %v1509, 1
        %v1608 = vsel %vm1602, %v1606, %v1607
        %v1609 = vrot.slane %v1510, 1
        %v1610 = vsel %vm1602, %v1604, %v1609
        %v1611 = vrot.slane %v1511, 1
        %v1612 = vsel %vm1602, %v1607, %v1611
        %v1613 = vrot.slane %v1512, 1
        %v1614 = vrot.slane %v1514, 1
        %v1615 = vsel %vm1602, %v1613, %v1614
        %v1616 = vrot.slane %v1513, 1
        %v1617 = vrot.slane %v1515, 1
        %v1618 = vsel %vm1602, %v1616, %v1617
        %v1619 = vrot.slane %v1516, 1
        %v1620 = vsel %vm1602, %v1614, %v1619
        %v1621 = vrot.slane %v1517, 1
        %v1622 = vsel %vm1602, %v1617, %v1621
        %v1623 = vrot.slane %v1518, 1
        %v1624 = vrot.slane %v1520, 1
        %v1625 = vsel %vm1602, %v1623, %v1624
        %v1626 = vrot.slane %v1519, 1
        %v1627 = vrot.slane %v1521, 1
        %v1628 = vsel %vm1602, %v1626, %v1627
        %v1629 = vrot.slane %v1522, 1
        %v1630 = vsel %vm1602, %v1624, %v1629
        %v1631 = vrot.slane %v1523, 1
        %v1632 = vsel %vm1602, %v1627, %v1631
        %v1633 = vrot.slane %v1524, 1
        %v1634 = vrot.slane %v1526, 1
        %v1635 = vsel %vm1602, %v1633, %v1634
        %v1636 = vrot.slane %v1525, 1
        %v1637 = vrot.slane %v1527, 1
        %v1638 = vsel %vm1602, %v1636, %v1637
        %v1639 = vrot.slane %v1528, 1
        %v1640 = vsel %vm1602, %v1634, %v1639
        %v1641 = vrot.slane %v1529, 1
        %v1642 = vsel %vm1602, %v1637, %v1641
        %v1643 = vrot.slane %v1530, 1
        %v1644 = vrot.slane %v1532, 1
        %v1645 = vsel %vm1602, %v1643, %v1644
        %v1646 = vrot.slane %v1531, 1
        %v1647 = vrot.slane %v1533, 1
        %v1648 = vsel %vm1602, %v1646, %v1647
        %v1649 = vrot.slane %v1534, 1
        %v1650 = vsel %vm1602, %v1644, %v1649
        %v1651 = vrot.slane %v1535, 1
        %v1652 = vsel %vm1602, %v1647, %v1651
        %v1653 = vrot.slane %v1536, 1
        %v1654 = vrot.slane %v1538, 1
        %v1655 = vsel %vm1602, %v1653, %v1654
        %v1656 = vrot.slane %v1537, 1
        %v1657 = vrot.slane %v1539, 1
        %v1658 = vsel %vm1602, %v1656, %v1657
        %v1659 = vrot.slane %v1540, 1
        %v1660 = vsel %vm1602, %v1654, %v1659
        %v1661 = vrot.slane %v1541, 1
        %v1662 = vsel %vm1602, %v1657, %v1661
        %v1663 = vrot.slane %v1542, 1
        %v1664 = vrot.slane %v1544, 1
        %v1665 = vsel %vm1602, %v1663, %v1664
        %v1666 = vrot.slane %v1543, 1
        %v1667 = vrot.slane %v1545, 1
        %v1668 = vsel %vm1602, %v1666, %v1667
        %v1669 = vrot.slane %v1546, 1
        %v1670 = vsel %vm1602, %v1664, %v1669
        %v1671 = vrot.slane %v1547, 1
        %v1672 = vsel %vm1602, %v1667, %v1671
        %v1673 = vrot.slane %v1548, 1
        %v1674 = vrot.slane %v1550, 1
        %v1675 = vsel %vm1602, %v1673, %v1674
        %v1676 = vrot.slane %v1549, 1
        %v1677 = vrot.slane %v1551, 1
        %v1678 = vsel %vm1602, %v1676, %v1677
        %v1679 = vrot.slane %v1552, 1
        %v1680 = vsel %vm1602, %v1674, %v1679
        %v1681 = vrot.slane %v1553, 1
        %v1682 = vsel %vm1602, %v1677, %v1681
        %v1715 = vadd.f32 %v1418, %v1605
        %v1716 = vadd.f32 %v1419, %v1608
        %v1717 = vadd.f32 %v1420, %v1610
        %v1718 = vadd.f32 %v1421, %v1612
        %v1719 = vadd.f32 %v1422, %v1615
        %v1720 = vadd.f32 %v1423, %v1618
        %v1721 = vadd.f32 %v1424, %v1620
        %v1722 = vadd.f32 %v1425, %v1622
        %v1723 = vadd.f32 %v1426, %v1625
        %v1724 = vadd.f32 %v1427, %v1628
        %v1725 = vadd.f32 %v1428, %v1630
        %v1726 = vadd.f32 %v1429, %v1632
        %v1727 = vadd.f32 %v1430, %v1635
        %v1728 = vadd.f32 %v1431, %v1638
        %v1729 = vadd.f32 %v1432, %v1640
        %v1730 = vadd.f32 %v1433, %v1642
        %v1731 = vadd.f32 %v1434, %v1645
        %v1732 = vadd.f32 %v1435, %v1648
        %v1733 = vadd.f32 %v1436, %v1650
        %v1734 = vadd.f32 %v1437, %v1652
        %v1735 = vadd.f32 %v1438, %v1655
        %v1736 = vadd.f32 %v1439, %v1658
        %v1737 = vadd.f32 %v1440, %v1660
        %v1738 = vadd.f32 %v1441, %v1662
        %v1739 = vadd.f32 %v1442, %v1665
        %v1740 = vadd.f32 %v1443, %v1668
        %v1741 = vadd.f32 %v1444, %v1670
        %v1742 = vadd.f32 %v1445, %v1672
        %v1743 = vadd.f32 %v1446, %v1675
        %v1744 = vadd.f32 %v1447, %v1678
        %v1745 = vadd.f32 %v1448, %v1680
        %v1746 = vadd.f32 %v1449, %v1682
        %v1747 = vlaneseq
        %v1748 = vshrl.u32 %v1747, 7
        %v1749 = vsub.s32 6, %v1748
        %v1750 = vrot.slane %v1034, %v1749
        %v1751 = vlaneseq
        %v1752 = vshrl.u32 %v1751, 7
        %v1753 = vsub.s32 6, %v1752
        %v1754 = vrot.slane %v1035, %v1753
        %v1755 = vmul.f32 %v1454, %v1750
        %v1756 = vmul.f32 %v1455, %v1754
        %v1757 = vmul.f32 %v1048, %v1750
        %v1758 = vmul.f32 %v1049, %v1754
        %v1759 = vmul.f32 %v1456, %v1750
        %v1760 = vmul.f32 %v1457, %v1754
        %v1761 = vmul.f32 %v1458, %v1750
        %v1762 = vmul.f32 %v1459, %v1754
        %v1763 = vmul.f32 %v1052, %v1750
        %v1764 = vmul.f32 %v1053, %v1754
        %v1765 = vmul.f32 %v1460, %v1750
        %v1766 = vmul.f32 %v1461, %v1754
        %v1767 = vmul.f32 %v1462, %v1750
        %v1768 = vmul.f32 %v1463, %v1754
        %v1769 = vmul.f32 %v1056, %v1750
        %v1770 = vmul.f32 %v1057, %v1754
        %v1771 = vmul.f32 %v1464, %v1750
        %v1772 = vmul.f32 %v1465, %v1754
        %v1773 = vmul.f32 %v1466, %v1750
        %v1774 = vmul.f32 %v1467, %v1754
        %v1775 = vmul.f32 %v1060, %v1750
        %v1776 = vmul.f32 %v1061, %v1754
        %v1777 = vmul.f32 %v1468, %v1750
        %v1778 = vmul.f32 %v1469, %v1754
        %v1779 = vmul.f32 %v1470, %v1750
        %v1780 = vmul.f32 %v1471, %v1754
        %v1781 = vmul.f32 %v1064, %v1750
        %v1782 = vmul.f32 %v1065, %v1754
        %v1783 = vmul.f32 %v1472, %v1750
        %v1784 = vmul.f32 %v1473, %v1754
        %v1785 = vmul.f32 %v1474, %v1750
        %v1786 = vmul.f32 %v1475, %v1754
        %v1787 = vmul.f32 %v1068, %v1750
        %v1788 = vmul.f32 %v1069, %v1754
        %v1789 = vmul.f32 %v1476, %v1750
        %v1790 = vmul.f32 %v1477, %v1754
        %v1791 = vmul.f32 %v1478, %v1750
        %v1792 = vmul.f32 %v1479, %v1754
        %v1793 = vmul.f32 %v1072, %v1750
        %v1794 = vmul.f32 %v1073, %v1754
        %v1795 = vmul.f32 %v1480, %v1750
        %v1796 = vmul.f32 %v1481, %v1754
        %v1797 = vmul.f32 %v1482, %v1750
        %v1798 = vmul.f32 %v1483, %v1754
        %v1799 = vmul.f32 %v1076, %v1750
        %v1800 = vmul.f32 %v1077, %v1754
        %v1801 = vmul.f32 %v1484, %v1750
        %v1802 = vmul.f32 %v1485, %v1754
        %v1851 = vrot.slane %v1755, 1
        %v1852 = vrot.slane %v1757, 1
        %v1853 = vsel %vm1602, %v1851, %v1852
        %v1854 = vrot.slane %v1756, 1
        %v1855 = vrot.slane %v1758, 1
        %v1856 = vsel %vm1602, %v1854, %v1855
        %v1857 = vrot.slane %v1759, 1
        %v1858 = vsel %vm1602, %v1852, %v1857
        %v1859 = vrot.slane %v1760, 1
        %v1860 = vsel %vm1602, %v1855, %v1859
        %v1861 = vrot.slane %v1761, 1
        %v1862 = vrot.slane %v1763, 1
        %v1863 = vsel %vm1602, %v1861, %v1862
        %v1864 = vrot.slane %v1762, 1
        %v1865 = vrot.slane %v1764, 1
        %v1866 = vsel %vm1602, %v1864, %v1865
        %v1867 = vrot.slane %v1765, 1
        %v1868 = vsel %vm1602, %v1862, %v1867
        %v1869 = vrot.slane %v1766, 1
        %v1870 = vsel %vm1602, %v1865, %v1869
        %v1871 = vrot.slane %v1767, 1
        %v1872 = vrot.slane %v1769, 1
        %v1873 = vsel %vm1602, %v1871, %v1872
        %v1874 = vrot.slane %v1768, 1
        %v1875 = vrot.slane %v1770, 1
        %v1876 = vsel %vm1602, %v1874, %v1875
        %v1877 = vrot.slane %v1771, 1
        %v1878 = vsel %vm1602, %v1872, %v1877
        %v1879 = vrot.slane %v1772, 1
        %v1880 = vsel %vm1602, %v1875, %v1879
        %v1881 = vrot.slane %v1773, 1
        %v1882 = vrot.slane %v1775, 1
        %v1883 = vsel %vm1602, %v1881, %v1882
        %v1884 = vrot.slane %v1774, 1
        %v1885 = vrot.slane %v1776, 1
        %v1886 = vsel %vm1602, %v1884, %v1885
        %v1887 = vrot.slane %v1777, 1
        %v1888 = vsel %vm1602, %v1882, %v1887
        %v1889 = vrot.slane %v1778, 1
        %v1890 = vsel %vm1602, %v1885, %v1889
        %v1891 = vrot.slane %v1779, 1
        %v1892 = vrot.slane %v1781, 1
        %v1893 = vsel %vm1602, %v1891, %v1892
        %v1894 = vrot.slane %v1780, 1
        %v1895 = vrot.slane %v1782, 1
        %v1896 = vsel %vm1602, %v1894, %v1895
        %v1897 = vrot.slane %v1783, 1
        %v1898 = vsel %vm1602, %v1892, %v1897
        %v1899 = vrot.slane %v1784, 1
        %v1900 = vsel %vm1602, %v1895, %v1899
        %v1901 = vrot.slane %v1785, 1
        %v1902 = vrot.slane %v1787, 1
        %v1903 = vsel %vm1602, %v1901, %v1902
        %v1904 = vrot.slane %v1786, 1
        %v1905 = vrot.slane %v1788, 1
        %v1906 = vsel %vm1602, %v1904, %v1905
        %v1907 = vrot.slane %v1789, 1
        %v1908 = vsel %vm1602, %v1902, %v1907
        %v1909 = vrot.slane %v1790, 1
        %v1910 = vsel %vm1602, %v1905, %v1909
        %v1911 = vrot.slane %v1791, 1
        %v1912 = vrot.slane %v1793, 1
        %v1913 = vsel %vm1602, %v1911, %v1912
        %v1914 = vrot.slane %v1792, 1
        %v1915 = vrot.slane %v1794, 1
        %v1916 = vsel %vm1602, %v1914, %v1915
        %v1917 = vrot.slane %v1795, 1
        %v1918 = vsel %vm1602, %v1912, %v1917
        %v1919 = vrot.slane %v1796, 1
        %v1920 = vsel %vm1602, %v1915, %v1919
        %v1921 = vrot.slane %v1797, 1
        %v1922 = vrot.slane %v1799, 1
        %v1923 = vsel %vm1602, %v1921, %v1922
        %v1924 = vrot.slane %v1798, 1
        %v1925 = vrot.slane %v1800, 1
        %v1926 = vsel %vm1602, %v1924, %v1925
        %v1927 = vrot.slane %v1801, 1
        %v1928 = vsel %vm1602, %v1922, %v1927
        %v1929 = vrot.slane %v1802, 1
        %v1930 = vsel %vm1602, %v1925, %v1929
        %v1963 = vadd.f32 %v1715, %v1853
        %v1964 = vadd.f32 %v1716, %v1856
        %v1965 = vadd.f32 %v1717, %v1858
        %v1966 = vadd.f32 %v1718, %v1860
        %v1967 = vadd.f32 %v1719, %v1863
        %v1968 = vadd.f32 %v1720, %v1866
        %v1969 = vadd.f32 %v1721, %v1868
        %v1970 = vadd.f32 %v1722, %v1870
        %v1971 = vadd.f32 %v1723, %v1873
        %v1972 = vadd.f32 %v1724, %v1876
        %v1973 = vadd.f32 %v1725, %v1878
        %v1974 = vadd.f32 %v1726, %v1880
        %v1975 = vadd.f32 %v1727, %v1883
        %v1976 = vadd.f32 %v1728, %v1886
        %v1977 = vadd.f32 %v1729, %v1888
        %v1978 = vadd.f32 %v1730, %v1890
        %v1979 = vadd.f32 %v1731, %v1893
        %v1980 = vadd.f32 %v1732, %v1896
        %v1981 = vadd.f32 %v1733, %v1898
        %v1982 = vadd.f32 %v1734, %v1900
        %v1983 = vadd.f32 %v1735, %v1903
        %v1984 = vadd.f32 %v1736, %v1906
        %v1985 = vadd.f32 %v1737, %v1908
        %v1986 = vadd.f32 %v1738, %v1910
        %v1987 = vadd.f32 %v1739, %v1913
        %v1988 = vadd.f32 %v1740, %v1916
        %v1989 = vadd.f32 %v1741, %v1918
        %v1990 = vadd.f32 %v1742, %v1920
        %v1991 = vadd.f32 %v1743, %v1923
        %v1992 = vadd.f32 %v1744, %v1926
        %v1993 = vadd.f32 %v1745, %v1928
        %v1994 = vadd.f32 %v1746, %v1930
        %v1995 = vlaneseq
        %v1996 = vshrl.u32 %v1995, 7
        %v1997 = vsub.s32 3, %v1996
        %v1998 = vrot.slane %v1036, %v1997
        %v1999 = vlaneseq
        %v2000 = vshrl.u32 %v1999, 7
        %v2001 = vsub.s32 3, %v2000
        %v2002 = vrot.slane %v1037, %v2001
        %v2003 = vmul.f32 %v1458, %v1998
        %v2004 = vmul.f32 %v1459, %v2002
        %v2005 = vmul.f32 %v1052, %v1998
        %v2006 = vmul.f32 %v1053, %v2002
        %v2007 = vmul.f32 %v1460, %v1998
        %v2008 = vmul.f32 %v1461, %v2002
        %v2009 = vmul.f32 %v1462, %v1998
        %v2010 = vmul.f32 %v1463, %v2002
        %v2011 = vmul.f32 %v1056, %v1998
        %v2012 = vmul.f32 %v1057, %v2002
        %v2013 = vmul.f32 %v1464, %v1998
        %v2014 = vmul.f32 %v1465, %v2002
        %v2015 = vmul.f32 %v1466, %v1998
        %v2016 = vmul.f32 %v1467, %v2002
        %v2017 = vmul.f32 %v1060, %v1998
        %v2018 = vmul.f32 %v1061, %v2002
        %v2019 = vmul.f32 %v1468, %v1998
        %v2020 = vmul.f32 %v1469, %v2002
        %v2021 = vmul.f32 %v1470, %v1998
        %v2022 = vmul.f32 %v1471, %v2002
        %v2023 = vmul.f32 %v1064, %v1998
        %v2024 = vmul.f32 %v1065, %v2002
        %v2025 = vmul.f32 %v1472, %v1998
        %v2026 = vmul.f32 %v1473, %v2002
        %v2027 = vmul.f32 %v1474, %v1998
        %v2028 = vmul.f32 %v1475, %v2002
        %v2029 = vmul.f32 %v1068, %v1998
        %v2030 = vmul.f32 %v1069, %v2002
        %v2031 = vmul.f32 %v1476, %v1998
        %v2032 = vmul.f32 %v1477, %v2002
        %v2033 = vmul.f32 %v1478, %v1998
        %v2034 = vmul.f32 %v1479, %v2002
        %v2035 = vmul.f32 %v1072, %v1998
        %v2036 = vmul.f32 %v1073, %v2002
        %v2037 = vmul.f32 %v1480, %v1998
        %v2038 = vmul.f32 %v1481, %v2002
        %v2039 = vmul.f32 %v1482, %v1998
        %v2040 = vmul.f32 %v1483, %v2002
        %v2041 = vmul.f32 %v1076, %v1998
        %v2042 = vmul.f32 %v1077, %v2002
        %v2043 = vmul.f32 %v1484, %v1998
        %v2044 = vmul.f32 %v1485, %v2002
        %v2045 = vmul.f32 %v1486, %v1998
        %v2046 = vmul.f32 %v1487, %v2002
        %v2047 = vmul.f32 %v1080, %v1998
        %v2048 = vmul.f32 %v1081, %v2002
        %v2049 = vmul.f32 %v1488, %v1998
        %v2050 = vmul.f32 %v1489, %v2002
        %v2099 = vrot.slane %v2003, 1
        %v2100 = vrot.slane %v2005, 1
        %v2101 = vsel %vm1602, %v2099, %v2100
        %v2102 = vrot.slane %v2004, 1
        %v2103 = vrot.slane %v2006, 1
        %v2104 = vsel %vm1602, %v2102, %v2103
        %v2105 = vrot.slane %v2007, 1
        %v2106 = vsel %vm1602, %v2100, %v2105
        %v2107 = vrot.slane %v2008, 1
        %v2108 = vsel %vm1602, %v2103, %v2107
        %v2109 = vrot.slane %v2009, 1
        %v2110 = vrot.slane %v2011, 1
        %v2111 = vsel %vm1602, %v2109, %v2110
        %v2112 = vrot.slane %v2010, 1
        %v2113 = vrot.slane %v2012, 1
        %v2114 = vsel %vm1602, %v2112, %v2113
        %v2115 = vrot.slane %v2013, 1
        %v2116 = vsel %vm1602, %v2110, %v2115
        %v2117 = vrot.slane %v2014, 1
        %v2118 = vsel %vm1602, %v2113, %v2117
        %v2119 = vrot.slane %v2015, 1
        %v2120 = vrot.slane %v2017, 1
        %v2121 = vsel %vm1602, %v2119, %v2120
        %v2122 = vrot.slane %v2016, 1
        %v2123 = vrot.slane %v2018, 1
        %v2124 = vsel %vm1602, %v2122, %v2123
        %v2125 = vrot.slane %v2019, 1
        %v2126 = vsel %vm1602, %v2120, %v2125
        %v2127 = vrot.slane %v2020, 1
        %v2128 = vsel %vm1602, %v2123, %v2127
        %v2129 = vrot.slane %v2021, 1
        %v2130 = vrot.slane %v2023, 1
        %v2131 = vsel %vm1602, %v2129, %v2130
        %v2132 = vrot.slane %v2022, 1
        %v2133 = vrot.slane %v2024, 1
        %v2134 = vsel %vm1602, %v2132, %v2133
        %v2135 = vrot.slane %v2025, 1
        %v2136 = vsel %vm1602, %v2130, %v2135
        %v2137 = vrot.slane %v2026, 1
        %v2138 = vsel %vm1602, %v2133, %v2137
        %v2139 = vrot.slane %v2027, 1
        %v2140 = vrot.slane %v2029, 1
        %v2141 = vsel %vm1602, %v2139, %v2140
        %v2142 = vrot.slane %v2028, 1
        %v2143 = vrot.slane %v2030, 1
        %v2144 = vsel %vm1602, %v2142, %v2143
        %v2145 = vrot.slane %v2031, 1
        %v2146 = vsel %vm1602, %v2140, %v2145
        %v2147 = vrot.slane %v2032, 1
        %v2148 = vsel %vm1602, %v2143, %v2147
        %v2149 = vrot.slane %v2033, 1
        %v2150 = vrot.slane %v2035, 1
        %v2151 = vsel %vm1602, %v2149, %v2150
        %v2152 = vrot.slane %v2034, 1
        %v2153 = vrot.slane %v2036, 1
        %v2154 = vsel %vm1602, %v2152, %v2153
        %v2155 = vrot.slane %v2037, 1
        %v2156 = vsel %vm1602, %v2150, %v2155
        %v2157 = vrot.slane %v2038, 1
        %v2158 = vsel %vm1602, %v2153, %v2157
        %v2159 = vrot.slane %v2039, 1
        %v2160 = vrot.slane %v2041, 1
        %v2161 = vsel %vm1602, %v2159, %v2160
        %v2162 = vrot.slane %v2040, 1
        %v2163 = vrot.slane %v2042, 1
        %v2164 = vsel %vm1602, %v2162, %v2163
        %v2165 = vrot.slane %v2043, 1
        %v2166 = vsel %vm1602, %v2160, %v2165
        %v2167 = vrot.slane %v2044, 1
        %v2168 = vsel %vm1602, %v2163, %v2167
        %v2169 = vrot.slane %v2045, 1
        %v2170 = vrot.slane %v2047, 1
        %v2171 = vsel %vm1602, %v2169, %v2170
        %v2172 = vrot.slane %v2046, 1
        %v2173 = vrot.slane %v2048, 1
        %v2174 = vsel %vm1602, %v2172, %v2173
        %v2175 = vrot.slane %v2049, 1
        %v2176 = vsel %vm1602, %v2170, %v2175
        %v2177 = vrot.slane %v2050, 1
        %v2178 = vsel %vm1602, %v2173, %v2177
        %v2211 = vadd.f32 %v1963, %v2101
        %v2212 = vadd.f32 %v1964, %v2104
        %v2213 = vadd.f32 %v1965, %v2106
        %v2214 = vadd.f32 %v1966, %v2108
        %v2215 = vadd.f32 %v1967, %v2111
        %v2216 = vadd.f32 %v1968, %v2114
        %v2217 = vadd.f32 %v1969, %v2116
        %v2218 = vadd.f32 %v1970, %v2118
        %v2219 = vadd.f32 %v1971, %v2121
        %v2220 = vadd.f32 %v1972, %v2124
        %v2221 = vadd.f32 %v1973, %v2126
        %v2222 = vadd.f32 %v1974, %v2128
        %v2223 = vadd.f32 %v1975, %v2131
        %v2224 = vadd.f32 %v1976, %v2134
        %v2225 = vadd.f32 %v1977, %v2136
        %v2226 = vadd.f32 %v1978, %v2138
        %v2227 = vadd.f32 %v1979, %v2141
        %v2228 = vadd.f32 %v1980, %v2144
        %v2229 = vadd.f32 %v1981, %v2146
        %v2230 = vadd.f32 %v1982, %v2148
        %v2231 = vadd.f32 %v1983, %v2151
        %v2232 = vadd.f32 %v1984, %v2154
        %v2233 = vadd.f32 %v1985, %v2156
        %v2234 = vadd.f32 %v1986, %v2158
        %v2235 = vadd.f32 %v1987, %v2161
        %v2236 = vadd.f32 %v1988, %v2164
        %v2237 = vadd.f32 %v1989, %v2166
        %v2238 = vadd.f32 %v1990, %v2168
        %v2239 = vadd.f32 %v1991, %v2171
        %v2240 = vadd.f32 %v1992, %v2174
        %v2241 = vadd.f32 %v1993, %v2176
        %v2242 = vadd.f32 %v1994, %v2178
        %v2243 = vlaneseq
        %v2244 = vshrl.u32 %v2243, 7
        %v2245 = vsub.s32 0, %v2244
        %v2246 = vrot.slane %v1038, %v2245
        %v2247 = vlaneseq
        %v2248 = vshrl.u32 %v2247, 7
        %v2249 = vsub.s32 0, %v2248
        %v2250 = vrot.slane %v1039, %v2249
        %v2251 = vmul.f32 %v1462, %v2246
        %v2252 = vmul.f32 %v1463, %v2250
        %v2253 = vmul.f32 %v1056, %v2246
        %v2254 = vmul.f32 %v1057, %v2250
        %v2255 = vmul.f32 %v1464, %v2246
        %v2256 = vmul.f32 %v1465, %v2250
        %v2257 = vmul.f32 %v1466, %v2246
        %v2258 = vmul.f32 %v1467, %v2250
        %v2259 = vmul.f32 %v1060, %v2246
        %v2260 = vmul.f32 %v1061, %v2250
        %v2261 = vmul.f32 %v1468, %v2246
        %v2262 = vmul.f32 %v1469, %v2250
        %v2263 = vmul.f32 %v1470, %v2246
        %v2264 = vmul.f32 %v1471, %v2250
        %v2265 = vmul.f32 %v1064, %v2246
        %v2266 = vmul.f32 %v1065, %v2250
        %v2267 = vmul.f32 %v1472, %v2246
        %v2268 = vmul.f32 %v1473, %v2250
        %v2269 = vmul.f32 %v1474, %v2246
        %v2270 = vmul.f32 %v1475, %v2250
        %v2271 = vmul.f32 %v1068, %v2246
        %v2272 = vmul.f32 %v1069, %v2250
        %v2273 = vmul.f32 %v1476, %v2246
        %v2274 = vmul.f32 %v1477, %v2250
        %v2275 = vmul.f32 %v1478, %v2246
        %v2276 = vmul.f32 %v1479, %v2250
        %v2277 = vmul.f32 %v1072, %v2246
        %v2278 = vmul.f32 %v1073, %v2250
        %v2279 = vmul.f32 %v1480, %v2246
        %v2280 = vmul.f32 %v1481, %v2250
        %v2281 = vmul.f32 %v1482, %v2246
        %v2282 = vmul.f32 %v1483, %v2250
        %v2283 = vmul.f32 %v1076, %v2246
        %v2284 = vmul.f32 %v1077, %v2250
        %v2285 = vmul.f32 %v1484, %v2246
        %v2286 = vmul.f32 %v1485, %v2250
        %v2287 = vmul.f32 %v1486, %v2246
        %v2288 = vmul.f32 %v1487, %v2250
        %v2289 = vmul.f32 %v1080, %v2246
        %v2290 = vmul.f32 %v1081, %v2250
        %v2291 = vmul.f32 %v1488, %v2246
        %v2292 = vmul.f32 %v1489, %v2250
        %v2293 = vmul.f32 %v1490, %v2246
        %v2294 = vmul.f32 %v1491, %v2250
        %v2295 = vmul.f32 %v1084, %v2246
        %v2296 = vmul.f32 %v1085, %v2250
        %v2297 = vmul.f32 %v1492, %v2246
        %v2298 = vmul.f32 %v1493, %v2250
        %v2347 = vrot.slane %v2251, 1
        %v2348 = vrot.slane %v2253, 1
        %v2349 = vsel %vm1602, %v2347, %v2348
        %v2350 = vrot.slane %v2252, 1
        %v2351 = vrot.slane %v2254, 1
        %v2352 = vsel %vm1602, %v2350, %v2351
        %v2353 = vrot.slane %v2255, 1
        %v2354 = vsel %vm1602, %v2348, %v2353
        %v2355 = vrot.slane %v2256, 1
        %v2356 = vsel %vm1602, %v2351, %v2355
        %v2357 = vrot.slane %v2257, 1
        %v2358 = vrot.slane %v2259, 1
        %v2359 = vsel %vm1602, %v2357, %v2358
        %v2360 = vrot.slane %v2258, 1
        %v2361 = vrot.slane %v2260, 1
        %v2362 = vsel %vm1602, %v2360, %v2361
        %v2363 = vrot.slane %v2261, 1
        %v2364 = vsel %vm1602, %v2358, %v2363
        %v2365 = vrot.slane %v2262, 1
        %v2366 = vsel %vm1602, %v2361, %v2365
        %v2367 = vrot.slane %v2263, 1
        %v2368 = vrot.slane %v2265, 1
        %v2369 = vsel %vm1602, %v2367, %v2368
        %v2370 = vrot.slane %v2264, 1
        %v2371 = vrot.slane %v2266, 1
        %v2372 = vsel %vm1602, %v2370, %v2371
        %v2373 = vrot.slane %v2267, 1
        %v2374 = vsel %vm1602, %v2368, %v2373
        %v2375 = vrot.slane %v2268, 1
        %v2376 = vsel %vm1602, %v2371, %v2375
        %v2377 = vrot.slane %v2269, 1
        %v2378 = vrot.slane %v2271, 1
        %v2379 = vsel %vm1602, %v2377, %v2378
        %v2380 = vrot.slane %v2270, 1
        %v2381 = vrot.slane %v2272, 1
        %v2382 = vsel %vm1602, %v2380, %v2381
        %v2383 = vrot.slane %v2273, 1
        %v2384 = vsel %vm1602, %v2378, %v2383
        %v2385 = vrot.slane %v2274, 1
        %v2386 = vsel %vm1602, %v2381, %v2385
        %v2387 = vrot.slane %v2275, 1
        %v2388 = vrot.slane %v2277, 1
        %v2389 = vsel %vm1602, %v2387, %v2388
        %v2390 = vrot.slane %v2276, 1
        %v2391 = vrot.slane %v2278, 1
        %v2392 = vsel %vm1602, %v2390, %v2391
        %v2393 = vrot.slane %v2279, 1
        %v2394 = vsel %vm1602, %v2388, %v2393
        %v2395 = vrot.slane %v2280, 1
        %v2396 = vsel %vm1602, %v2391, %v2395
        %v2397 = vrot.slane %v2281, 1
        %v2398 = vrot.slane %v2283, 1
        %v2399 = vsel %vm1602, %v2397, %v2398
        %v2400 = vrot.slane %v2282, 1
        %v2401 = vrot.slane %v2284, 1
        %v2402 = vsel %vm1602, %v2400, %v2401
        %v2403 = vrot.slane %v2285, 1
        %v2404 = vsel %vm1602, %v2398, %v2403
        %v2405 = vrot.slane %v2286, 1
        %v2406 = vsel %vm1602, %v2401, %v2405
        %v2407 = vrot.slane %v2287, 1
        %v2408 = vrot.slane %v2289, 1
        %v2409 = vsel %vm1602, %v2407, %v2408
        %v2410 = vrot.slane %v2288, 1
        %v2411 = vrot.slane %v2290, 1
        %v2412 = vsel %vm1602, %v2410, %v2411
        %v2413 = vrot.slane %v2291, 1
        %v2414 = vsel %vm1602, %v2408, %v2413
        %v2415 = vrot.slane %v2292, 1
        %v2416 = vsel %vm1602, %v2411, %v2415
        %v2417 = vrot.slane %v2293, 1
        %v2418 = vrot.slane %v2295, 1
        %v2419 = vsel %vm1602, %v2417, %v2418
        %v2420 = vrot.slane %v2294, 1
        %v2421 = vrot.slane %v2296, 1
        %v2422 = vsel %vm1602, %v2420, %v2421
        %v2423 = vrot.slane %v2297, 1
        %v2424 = vsel %vm1602, %v2418, %v2423
        %v2425 = vrot.slane %v2298, 1
        %v2426 = vsel %vm1602, %v2421, %v2425
        %v2459 = vadd.f32 %v2211, %v2349
        %v2460 = vadd.f32 %v2212, %v2352
        %v2461 = vadd.f32 %v2213, %v2354
        %v2462 = vadd.f32 %v2214, %v2356
        %v2463 = vadd.f32 %v2215, %v2359
        %v2464 = vadd.f32 %v2216, %v2362
        %v2465 = vadd.f32 %v2217, %v2364
        %v2466 = vadd.f32 %v2218, %v2366
        %v2467 = vadd.f32 %v2219, %v2369
        %v2468 = vadd.f32 %v2220, %v2372
        %v2469 = vadd.f32 %v2221, %v2374
        %v2470 = vadd.f32 %v2222, %v2376
        %v2471 = vadd.f32 %v2223, %v2379
        %v2472 = vadd.f32 %v2224, %v2382
        %v2473 = vadd.f32 %v2225, %v2384
        %v2474 = vadd.f32 %v2226, %v2386
        %v2475 = vadd.f32 %v2227, %v2389
        %v2476 = vadd.f32 %v2228, %v2392
        %v2477 = vadd.f32 %v2229, %v2394
        %v2478 = vadd.f32 %v2230, %v2396
        %v2479 = vadd.f32 %v2231, %v2399
        %v2480 = vadd.f32 %v2232, %v2402
        %v2481 = vadd.f32 %v2233, %v2404
        %v2482 = vadd.f32 %v2234, %v2406
        %v2483 = vadd.f32 %v2235, %v2409
        %v2484 = vadd.f32 %v2236, %v2412
        %v2485 = vadd.f32 %v2237, %v2414
        %v2486 = vadd.f32 %v2238, %v2416
        %v2487 = vadd.f32 %v2239, %v2419
        %v2488 = vadd.f32 %v2240, %v2422
        %v2489 = vadd.f32 %v2241, %v2424
        %v2490 = vadd.f32 %v2242, %v2426
        %v2491 = vlaneseq
        %v2492 = vshrl.u32 %v2491, 7
        %v2493 = vsub.s32 5, %v2492
        %v2494 = vrot.slane %v1038, %v2493
        %v2495 = vlaneseq
        %v2496 = vshrl.u32 %v2495, 7
        %v2497 = vsub.s32 5, %v2496
        %v2498 = vrot.slane %v1039, %v2497
        %v2499 = vmul.f32 %v1466, %v2494
        %v2500 = vmul.f32 %v1467, %v2498
        %v2501 = vmul.f32 %v1060, %v2494
        %v2502 = vmul.f32 %v1061, %v2498
        %v2503 = vmul.f32 %v1468, %v2494
        %v2504 = vmul.f32 %v1469, %v2498
        %v2505 = vmul.f32 %v1470, %v2494
        %v2506 = vmul.f32 %v1471, %v2498
        %v2507 = vmul.f32 %v1064, %v2494
        %v2508 = vmul.f32 %v1065, %v2498
        %v2509 = vmul.f32 %v1472, %v2494
        %v2510 = vmul.f32 %v1473, %v2498
        %v2511 = vmul.f32 %v1474, %v2494
        %v2512 = vmul.f32 %v1475, %v2498
        %v2513 = vmul.f32 %v1068, %v2494
        %v2514 = vmul.f32 %v1069, %v2498
        %v2515 = vmul.f32 %v1476, %v2494
        %v2516 = vmul.f32 %v1477, %v2498
        %v2517 = vmul.f32 %v1478, %v2494
        %v2518 = vmul.f32 %v1479, %v2498
        %v2519 = vmul.f32 %v1072, %v2494
        %v2520 = vmul.f32 %v1073, %v2498
        %v2521 = vmul.f32 %v1480, %v2494
        %v2522 = vmul.f32 %v1481, %v2498
        %v2523 = vmul.f32 %v1482, %v2494
        %v2524 = vmul.f32 %v1483, %v2498
        %v2525 = vmul.f32 %v1076, %v2494
        %v2526 = vmul.f32 %v1077, %v2498
        %v2527 = vmul.f32 %v1484, %v2494
        %v2528 = vmul.f32 %v1485, %v2498
        %v2529 = vmul.f32 %v1486, %v2494
        %v2530 = vmul.f32 %v1487, %v2498
        %v2531 = vmul.f32 %v1080, %v2494
        %v2532 = vmul.f32 %v1081, %v2498
        %v2533 = vmul.f32 %v1488, %v2494
        %v2534 = vmul.f32 %v1489, %v2498
        %v2535 = vmul.f32 %v1490, %v2494
        %v2536 = vmul.f32 %v1491, %v2498
        %v2537 = vmul.f32 %v1084, %v2494
        %v2538 = vmul.f32 %v1085, %v2498
        %v2539 = vmul.f32 %v1492, %v2494
        %v2540 = vmul.f32 %v1493, %v2498
        %v2541 = vmul.f32 %v1494, %v2494
        %v2542 = vmul.f32 %v1495, %v2498
        %v2543 = vmul.f32 %v1088, %v2494
        %v2544 = vmul.f32 %v1089, %v2498
        %v2545 = vmul.f32 %v1496, %v2494
        %v2546 = vmul.f32 %v1497, %v2498
        %v2595 = vrot.slane %v2499, 1
        %v2596 = vrot.slane %v2501, 1
        %v2597 = vsel %vm1602, %v2595, %v2596
        %v2598 = vrot.slane %v2500, 1
        %v2599 = vrot.slane %v2502, 1
        %v2600 = vsel %vm1602, %v2598, %v2599
        %v2601 = vrot.slane %v2503, 1
        %v2602 = vsel %vm1602, %v2596, %v2601
        %v2603 = vrot.slane %v2504, 1
        %v2604 = vsel %vm1602, %v2599, %v2603
        %v2605 = vrot.slane %v2505, 1
        %v2606 = vrot.slane %v2507, 1
        %v2607 = vsel %vm1602, %v2605, %v2606
        %v2608 = vrot.slane %v2506, 1
        %v2609 = vrot.slane %v2508, 1
        %v2610 = vsel %vm1602, %v2608, %v2609
        %v2611 = vrot.slane %v2509, 1
        %v2612 = vsel %vm1602, %v2606, %v2611
        %v2613 = vrot.slane %v2510, 1
        %v2614 = vsel %vm1602, %v2609, %v2613
        %v2615 = vrot.slane %v2511, 1
        %v2616 = vrot.slane %v2513, 1
        %v2617 = vsel %vm1602, %v2615, %v2616
        %v2618 = vrot.slane %v2512, 1
        %v2619 = vrot.slane %v2514, 1
        %v2620 = vsel %vm1602, %v2618, %v2619
        %v2621 = vrot.slane %v2515, 1
        %v2622 = vsel %vm1602, %v2616, %v2621
        %v2623 = vrot.slane %v2516, 1
        %v2624 = vsel %vm1602, %v2619, %v2623
        %v2625 = vrot.slane %v2517, 1
        %v2626 = vrot.slane %v2519, 1
        %v2627 = vsel %vm1602, %v2625, %v2626
        %v2628 = vrot.slane %v2518, 1
        %v2629 = vrot.slane %v2520, 1
        %v2630 = vsel %vm1602, %v2628, %v2629
        %v2631 = vrot.slane %v2521, 1
        %v2632 = vsel %vm1602, %v2626, %v2631
        %v2633 = vrot.slane %v2522, 1
        %v2634 = vsel %vm1602, %v2629, %v2633
        %v2635 = vrot.slane %v2523, 1
        %v2636 = vrot.slane %v2525, 1
        %v2637 = vsel %vm1602, %v2635, %v2636
        %v2638 = vrot.slane %v2524, 1
        %v2639 = vrot.slane %v2526, 1
        %v2640 = vsel %vm1602, %v2638, %v2639
        %v2641 = vrot.slane %v2527, 1
        %v2642 = vsel %vm1602, %v2636, %v2641
        %v2643 = vrot.slane %v2528, 1
        %v2644 = vsel %vm1602, %v2639, %v2643
        %v2645 = vrot.slane %v2529, 1
        %v2646 = vrot.slane %v2531, 1
        %v2647 = vsel %vm1602, %v2645, %v2646
        %v2648 = vrot.slane %v2530, 1
        %v2649 = vrot.slane %v2532, 1
        %v2650 = vsel %vm1602, %v2648, %v2649
        %v2651 = vrot.slane %v2533, 1
        %v2652 = vsel %vm1602, %v2646, %v2651
        %v2653 = vrot.slane %v2534, 1
        %v2654 = vsel %vm1602, %v2649, %v2653
        %v2655 = vrot.slane %v2535, 1
        %v2656 = vrot.slane %v2537, 1
        %v2657 = vsel %vm1602, %v2655, %v2656
        %v2658 = vrot.slane %v2536, 1
        %v2659 = vrot.slane %v2538, 1
        %v2660 = vsel %vm1602, %v2658, %v2659
        %v2661 = vrot.slane %v2539, 1
        %v2662 = vsel %vm1602, %v2656, %v2661
        %v2663 = vrot.slane %v2540, 1
        %v2664 = vsel %vm1602, %v2659, %v2663
        %v2665 = vrot.slane %v2541, 1
        %v2666 = vrot.slane %v2543, 1
        %v2667 = vsel %vm1602, %v2665, %v2666
        %v2668 = vrot.slane %v2542, 1
        %v2669 = vrot.slane %v2544, 1
        %v2670 = vsel %vm1602, %v2668, %v2669
        %v2671 = vrot.slane %v2545, 1
        %v2672 = vsel %vm1602, %v2666, %v2671
        %v2673 = vrot.slane %v2546, 1
        %v2674 = vsel %vm1602, %v2669, %v2673
        %v2707 = vadd.f32 %v2459, %v2597
        %v2708 = vadd.f32 %v2460, %v2600
        %v2709 = vadd.f32 %v2461, %v2602
        %v2710 = vadd.f32 %v2462, %v2604
        %v2711 = vadd.f32 %v2463, %v2607
        %v2712 = vadd.f32 %v2464, %v2610
        %v2713 = vadd.f32 %v2465, %v2612
        %v2714 = vadd.f32 %v2466, %v2614
        %v2715 = vadd.f32 %v2467, %v2617
        %v2716 = vadd.f32 %v2468, %v2620
        %v2717 = vadd.f32 %v2469, %v2622
        %v2718 = vadd.f32 %v2470, %v2624
        %v2719 = vadd.f32 %v2471, %v2627
        %v2720 = vadd.f32 %v2472, %v2630
        %v2721 = vadd.f32 %v2473, %v2632
        %v2722 = vadd.f32 %v2474, %v2634
        %v2723 = vadd.f32 %v2475, %v2637
        %v2724 = vadd.f32 %v2476, %v2640
        %v2725 = vadd.f32 %v2477, %v2642
        %v2726 = vadd.f32 %v2478, %v2644
        %v2727 = vadd.f32 %v2479, %v2647
        %v2728 = vadd.f32 %v2480, %v2650
        %v2729 = vadd.f32 %v2481, %v2652
        %v2730 = vadd.f32 %v2482, %v2654
        %v2731 = vadd.f32 %v2483, %v2657
        %v2732 = vadd.f32 %v2484, %v2660
        %v2733 = vadd.f32 %v2485, %v2662
        %v2734 = vadd.f32 %v2486, %v2664
        %v2735 = vadd.f32 %v2487, %v2667
        %v2736 = vadd.f32 %v2488, %v2670
        %v2737 = vadd.f32 %v2489, %v2672
        %v2738 = vadd.f32 %v2490, %v2674
        %v2739 = vld [vmem:[#allocation2] sm:$0xfc]
        %v2740 = vld [vmem:[#allocation2 + $0x8] sm:$0xfc]
        %v2741 = vld [vmem:[#allocation2 + $0x20] sm:$0x3]
        %v2742 = vld [vmem:[#allocation2 + $0x28] sm:$0x3]
        %v2743 = vld [vmem:[#allocation2 + $0x30] sm:$0xfc]
        %v2744 = vld [vmem:[#allocation2 + $0x38] sm:$0xfc]
        %v2745 = vld [vmem:[#allocation2 + $0x50] sm:$0x3]
        %v2746 = vld [vmem:[#allocation2 + $0x58] sm:$0x3]
        %v2747 = vld [vmem:[#allocation2 + $0x60] sm:$0xfc]
        %v2748 = vld [vmem:[#allocation2 + $0x68] sm:$0xfc]
        %v2749 = vld [vmem:[#allocation2 + $0x80] sm:$0x3]
        %v2750 = vld [vmem:[#allocation2 + $0x88] sm:$0x3]
        %v2751 = vld [vmem:[#allocation2 + $0x90] sm:$0xfc]
        %v2752 = vld [vmem:[#allocation2 + $0x98] sm:$0xfc]
        %v2753 = vld [vmem:[#allocation2 + $0xb0] sm:$0x3]
        %v2754 = vld [vmem:[#allocation2 + $0xb8] sm:$0x3]
        %v2755 = vld [vmem:[#allocation2 + $0xc0] sm:$0xfc]
        %v2756 = vld [vmem:[#allocation2 + $0xc8] sm:$0xfc]
        %v2757 = vld [vmem:[#allocation2 + $0xe0] sm:$0x3]
        %v2758 = vld [vmem:[#allocation2 + $0xe8] sm:$0x3]
        %v2759 = vld [vmem:[#allocation2 + $0xf0] sm:$0xfc]
        %v2760 = vld [vmem:[#allocation2 + $0xf8] sm:$0xfc]
        %v2761 = vld [vmem:[#allocation2 + $0x110] sm:$0x3]
        %v2762 = vld [vmem:[#allocation2 + $0x118] sm:$0x3]
        %v2763 = vld [vmem:[#allocation2 + $0x120] sm:$0xfc]
        %v2764 = vld [vmem:[#allocation2 + $0x128] sm:$0xfc]
        %v2765 = vld [vmem:[#allocation2 + $0x140] sm:$0x3]
        %v2766 = vld [vmem:[#allocation2 + $0x148] sm:$0x3]
        %v2767 = vld [vmem:[#allocation2 + $0x150] sm:$0xfc]
        %v2768 = vld [vmem:[#allocation2 + $0x158] sm:$0xfc]
        %v2769 = vld [vmem:[#allocation2 + $0x170] sm:$0x3]
        %v2770 = vld [vmem:[#allocation2 + $0x178] sm:$0x3]
        %v2771 = vld [vmem:[#allocation2 + $0x180] sm:$0xfc]
        %v2772 = vld [vmem:[#allocation2 + $0x188] sm:$0xfc]
        %v2773 = vld [vmem:[#allocation2 + $0x1a0] sm:$0x3]
        %v2774 = vld [vmem:[#allocation2 + $0x1a8] sm:$0x3]
        %v2775 = vld [vmem:[#allocation2 + $0x1b0] sm:$0xfc]
        %v2776 = vld [vmem:[#allocation2 + $0x1b8] sm:$0xfc]
        %v2777 = vld [vmem:[#allocation2 + $0x1d0] sm:$0x3]
        %v2778 = vld [vmem:[#allocation2 + $0x1d8] sm:$0x3]
        %v2779 = vld [vmem:[#allocation2 + $0x1e0] sm:$0xfc]
        %v2780 = vld [vmem:[#allocation2 + $0x1e8] sm:$0xfc]
        %v2781 = vld [vmem:[#allocation2 + $0x200] sm:$0x3]
        %v2782 = vld [vmem:[#allocation2 + $0x208] sm:$0x3]
        %v2783 = vld [vmem:[#allocation2 + $0x210] sm:$0xfc]
        %v2784 = vld [vmem:[#allocation2 + $0x218] sm:$0xfc]
        %v2785 = vld [vmem:[#allocation2 + $0x230] sm:$0x3]
        %v2786 = vld [vmem:[#allocation2 + $0x238] sm:$0x3]
        %v2787 = vlaneseq
        %v2788 = vshrl.u32 %v2787, 7
        %v2789 = vsub.s32 2, %v2788
        %v2790 = vrot.slane %v1034, %v2789
        %v2791 = vlaneseq
        %v2792 = vshrl.u32 %v2791, 7
        %v2793 = vsub.s32 2, %v2792
        %v2794 = vrot.slane %v1035, %v2793
        %v2795 = vmul.f32 %v2739, %v2790
        %v2796 = vmul.f32 %v2740, %v2794
        %v2797 = vmul.f32 %v1044, %v2790
        %v2798 = vmul.f32 %v1045, %v2794
        %v2799 = vmul.f32 %v2741, %v2790
        %v2800 = vmul.f32 %v2742, %v2794
        %v2801 = vmul.f32 %v2743, %v2790
        %v2802 = vmul.f32 %v2744, %v2794
        %v2803 = vmul.f32 %v1048, %v2790
        %v2804 = vmul.f32 %v1049, %v2794
        %v2805 = vmul.f32 %v2745, %v2790
        %v2806 = vmul.f32 %v2746, %v2794
        %v2807 = vmul.f32 %v2747, %v2790
        %v2808 = vmul.f32 %v2748, %v2794
        %v2809 = vmul.f32 %v1052, %v2790
        %v2810 = vmul.f32 %v1053, %v2794
        %v2811 = vmul.f32 %v2749, %v2790
        %v2812 = vmul.f32 %v2750, %v2794
        %v2813 = vmul.f32 %v2751, %v2790
        %v2814 = vmul.f32 %v2752, %v2794
        %v2815 = vmul.f32 %v1056, %v2790
        %v2816 = vmul.f32 %v1057, %v2794
        %v2817 = vmul.f32 %v2753, %v2790
        %v2818 = vmul.f32 %v2754, %v2794
        %v2819 = vmul.f32 %v2755, %v2790
        %v2820 = vmul.f32 %v2756, %v2794
        %v2821 = vmul.f32 %v1060, %v2790
        %v2822 = vmul.f32 %v1061, %v2794
        %v2823 = vmul.f32 %v2757, %v2790
        %v2824 = vmul.f32 %v2758, %v2794
        %v2825 = vmul.f32 %v2759, %v2790
        %v2826 = vmul.f32 %v2760, %v2794
        %v2827 = vmul.f32 %v1064, %v2790
        %v2828 = vmul.f32 %v1065, %v2794
        %v2829 = vmul.f32 %v2761, %v2790
        %v2830 = vmul.f32 %v2762, %v2794
        %v2831 = vmul.f32 %v2763, %v2790
        %v2832 = vmul.f32 %v2764, %v2794
        %v2833 = vmul.f32 %v1068, %v2790
        %v2834 = vmul.f32 %v1069, %v2794
        %v2835 = vmul.f32 %v2765, %v2790
        %v2836 = vmul.f32 %v2766, %v2794
        %v2837 = vmul.f32 %v2767, %v2790
        %v2838 = vmul.f32 %v2768, %v2794
        %v2839 = vmul.f32 %v1072, %v2790
        %v2840 = vmul.f32 %v1073, %v2794
        %v2841 = vmul.f32 %v2769, %v2790
        %v2842 = vmul.f32 %v2770, %v2794
        %vm2891 = vcmask 1045504
        %v2892 = vrot.slane %v2795, 2
        %v2893 = vrot.slane %v2797, 2
        %v2894 = vsel %vm2891, %v2892, %v2893
        %v2895 = vrot.slane %v2796, 2
        %v2896 = vrot.slane %v2798, 2
        %v2897 = vsel %vm2891, %v2895, %v2896
        %v2898 = vrot.slane %v2799, 2
        %v2899 = vsel %vm2891, %v2893, %v2898
        %v2900 = vrot.slane %v2800, 2
        %v2901 = vsel %vm2891, %v2896, %v2900
        %v2902 = vrot.slane %v2801, 2
        %v2903 = vrot.slane %v2803, 2
        %v2904 = vsel %vm2891, %v2902, %v2903
        %v2905 = vrot.slane %v2802, 2
        %v2906 = vrot.slane %v2804, 2
        %v2907 = vsel %vm2891, %v2905, %v2906
        %v2908 = vrot.slane %v2805, 2
        %v2909 = vsel %vm2891, %v2903, %v2908
        %v2910 = vrot.slane %v2806, 2
        %v2911 = vsel %vm2891, %v2906, %v2910
        %v2912 = vrot.slane %v2807, 2
        %v2913 = vrot.slane %v2809, 2
        %v2914 = vsel %vm2891, %v2912, %v2913
        %v2915 = vrot.slane %v2808, 2
        %v2916 = vrot.slane %v2810, 2
        %v2917 = vsel %vm2891, %v2915, %v2916
        %v2918 = vrot.slane %v2811, 2
        %v2919 = vsel %vm2891, %v2913, %v2918
        %v2920 = vrot.slane %v2812, 2
        %v2921 = vsel %vm2891, %v2916, %v2920
        %v2922 = vrot.slane %v2813, 2
        %v2923 = vrot.slane %v2815, 2
        %v2924 = vsel %vm2891, %v2922, %v2923
        %v2925 = vrot.slane %v2814, 2
        %v2926 = vrot.slane %v2816, 2
        %v2927 = vsel %vm2891, %v2925, %v2926
        %v2928 = vrot.slane %v2817, 2
        %v2929 = vsel %vm2891, %v2923, %v2928
        %v2930 = vrot.slane %v2818, 2
        %v2931 = vsel %vm2891, %v2926, %v2930
        %v2932 = vrot.slane %v2819, 2
        %v2933 = vrot.slane %v2821, 2
        %v2934 = vsel %vm2891, %v2932, %v2933
        %v2935 = vrot.slane %v2820, 2
        %v2936 = vrot.slane %v2822, 2
        %v2937 = vsel %vm2891, %v2935, %v2936
        %v2938 = vrot.slane %v2823, 2
        %v2939 = vsel %vm2891, %v2933, %v2938
        %v2940 = vrot.slane %v2824, 2
        %v2941 = vsel %vm2891, %v2936, %v2940
        %v2942 = vrot.slane %v2825, 2
        %v2943 = vrot.slane %v2827, 2
        %v2944 = vsel %vm2891, %v2942, %v2943
        %v2945 = vrot.slane %v2826, 2
        %v2946 = vrot.slane %v2828, 2
        %v2947 = vsel %vm2891, %v2945, %v2946
        %v2948 = vrot.slane %v2829, 2
        %v2949 = vsel %vm2891, %v2943, %v2948
        %v2950 = vrot.slane %v2830, 2
        %v2951 = vsel %vm2891, %v2946, %v2950
        %v2952 = vrot.slane %v2831, 2
        %v2953 = vrot.slane %v2833, 2
        %v2954 = vsel %vm2891, %v2952, %v2953
        %v2955 = vrot.slane %v2832, 2
        %v2956 = vrot.slane %v2834, 2
        %v2957 = vsel %vm2891, %v2955, %v2956
        %v2958 = vrot.slane %v2835, 2
        %v2959 = vsel %vm2891, %v2953, %v2958
        %v2960 = vrot.slane %v2836, 2
        %v2961 = vsel %vm2891, %v2956, %v2960
        %v2962 = vrot.slane %v2837, 2
        %v2963 = vrot.slane %v2839, 2
        %v2964 = vsel %vm2891, %v2962, %v2963
        %v2965 = vrot.slane %v2838, 2
        %v2966 = vrot.slane %v2840, 2
        %v2967 = vsel %vm2891, %v2965, %v2966
        %v2968 = vrot.slane %v2841, 2
        %v2969 = vsel %vm2891, %v2963, %v2968
        %v2970 = vrot.slane %v2842, 2
        %v2971 = vsel %vm2891, %v2966, %v2970
        %v3004 = vadd.f32 %v2707, %v2894
        %v3005 = vadd.f32 %v2708, %v2897
        %v3006 = vadd.f32 %v2709, %v2899
        %v3007 = vadd.f32 %v2710, %v2901
        %v3008 = vadd.f32 %v2711, %v2904
        %v3009 = vadd.f32 %v2712, %v2907
        %v3010 = vadd.f32 %v2713, %v2909
        %v3011 = vadd.f32 %v2714, %v2911
        %v3012 = vadd.f32 %v2715, %v2914
        %v3013 = vadd.f32 %v2716, %v2917
        %v3014 = vadd.f32 %v2717, %v2919
        %v3015 = vadd.f32 %v2718, %v2921
        %v3016 = vadd.f32 %v2719, %v2924
        %v3017 = vadd.f32 %v2720, %v2927
        %v3018 = vadd.f32 %v2721, %v2929
        %v3019 = vadd.f32 %v2722, %v2931
        %v3020 = vadd.f32 %v2723, %v2934
        %v3021 = vadd.f32 %v2724, %v2937
        %v3022 = vadd.f32 %v2725, %v2939
        %v3023 = vadd.f32 %v2726, %v2941
        %v3024 = vadd.f32 %v2727, %v2944
        %v3025 = vadd.f32 %v2728, %v2947
        %v3026 = vadd.f32 %v2729, %v2949
        %v3027 = vadd.f32 %v2730, %v2951
        %v3028 = vadd.f32 %v2731, %v2954
        %v3029 = vadd.f32 %v2732, %v2957
        %v3030 = vadd.f32 %v2733, %v2959
        %v3031 = vadd.f32 %v2734, %v2961
        %v3032 = vadd.f32 %v2735, %v2964
        %v3033 = vadd.f32 %v2736, %v2967
        %v3034 = vadd.f32 %v2737, %v2969
        %v3035 = vadd.f32 %v2738, %v2971
        %v3036 = vlaneseq
        %v3037 = vshrl.u32 %v3036, 7
        %v3038 = vsub.s32 7, %v3037
        %v3039 = vrot.slane %v1034, %v3038
        %v3040 = vlaneseq
        %v3041 = vshrl.u32 %v3040, 7
        %v3042 = vsub.s32 7, %v3041
        %v3043 = vrot.slane %v1035, %v3042
        %v3044 = vmul.f32 %v2743, %v3039
        %v3045 = vmul.f32 %v2744, %v3043
        %v3046 = vmul.f32 %v1048, %v3039
        %v3047 = vmul.f32 %v1049, %v3043
        %v3048 = vmul.f32 %v2745, %v3039
        %v3049 = vmul.f32 %v2746, %v3043
        %v3050 = vmul.f32 %v2747, %v3039
        %v3051 = vmul.f32 %v2748, %v3043
        %v3052 = vmul.f32 %v1052, %v3039
        %v3053 = vmul.f32 %v1053, %v3043
        %v3054 = vmul.f32 %v2749, %v3039
        %v3055 = vmul.f32 %v2750, %v3043
        %v3056 = vmul.f32 %v2751, %v3039
        %v3057 = vmul.f32 %v2752, %v3043
        %v3058 = vmul.f32 %v1056, %v3039
        %v3059 = vmul.f32 %v1057, %v3043
        %v3060 = vmul.f32 %v2753, %v3039
        %v3061 = vmul.f32 %v2754, %v3043
        %v3062 = vmul.f32 %v2755, %v3039
        %v3063 = vmul.f32 %v2756, %v3043
        %v3064 = vmul.f32 %v1060, %v3039
        %v3065 = vmul.f32 %v1061, %v3043
        %v3066 = vmul.f32 %v2757, %v3039
        %v3067 = vmul.f32 %v2758, %v3043
        %v3068 = vmul.f32 %v2759, %v3039
        %v3069 = vmul.f32 %v2760, %v3043
        %v3070 = vmul.f32 %v1064, %v3039
        %v3071 = vmul.f32 %v1065, %v3043
        %v3072 = vmul.f32 %v2761, %v3039
        %v3073 = vmul.f32 %v2762, %v3043
        %v3074 = vmul.f32 %v2763, %v3039
        %v3075 = vmul.f32 %v2764, %v3043
        %v3076 = vmul.f32 %v1068, %v3039
        %v3077 = vmul.f32 %v1069, %v3043
        %v3078 = vmul.f32 %v2765, %v3039
        %v3079 = vmul.f32 %v2766, %v3043
        %v3080 = vmul.f32 %v2767, %v3039
        %v3081 = vmul.f32 %v2768, %v3043
        %v3082 = vmul.f32 %v1072, %v3039
        %v3083 = vmul.f32 %v1073, %v3043
        %v3084 = vmul.f32 %v2769, %v3039
        %v3085 = vmul.f32 %v2770, %v3043
        %v3086 = vmul.f32 %v2771, %v3039
        %v3087 = vmul.f32 %v2772, %v3043
        %v3088 = vmul.f32 %v1076, %v3039
        %v3089 = vmul.f32 %v1077, %v3043
        %v3090 = vmul.f32 %v2773, %v3039
        %v3091 = vmul.f32 %v2774, %v3043
        %v3140 = vrot.slane %v3044, 2
        %v3141 = vrot.slane %v3046, 2
        %v3142 = vsel %vm2891, %v3140, %v3141
        %v3143 = vrot.slane %v3045, 2
        %v3144 = vrot.slane %v3047, 2
        %v3145 = vsel %vm2891, %v3143, %v3144
        %v3146 = vrot.slane %v3048, 2
        %v3147 = vsel %vm2891, %v3141, %v3146
        %v3148 = vrot.slane %v3049, 2
        %v3149 = vsel %vm2891, %v3144, %v3148
        %v3150 = vrot.slane %v3050, 2
        %v3151 = vrot.slane %v3052, 2
        %v3152 = vsel %vm2891, %v3150, %v3151
        %v3153 = vrot.slane %v3051, 2
        %v3154 = vrot.slane %v3053, 2
        %v3155 = vsel %vm2891, %v3153, %v3154
        %v3156 = vrot.slane %v3054, 2
        %v3157 = vsel %vm2891, %v3151, %v3156
        %v3158 = vrot.slane %v3055, 2
        %v3159 = vsel %vm2891, %v3154, %v3158
        %v3160 = vrot.slane %v3056, 2
        %v3161 = vrot.slane %v3058, 2
        %v3162 = vsel %vm2891, %v3160, %v3161
        %v3163 = vrot.slane %v3057, 2
        %v3164 = vrot.slane %v3059, 2
        %v3165 = vsel %vm2891, %v3163, %v3164
        %v3166 = vrot.slane %v3060, 2
        %v3167 = vsel %vm2891, %v3161, %v3166
        %v3168 = vrot.slane %v3061, 2
        %v3169 = vsel %vm2891, %v3164, %v3168
        %v3170 = vrot.slane %v3062, 2
        %v3171 = vrot.slane %v3064, 2
        %v3172 = vsel %vm2891, %v3170, %v3171
        %v3173 = vrot.slane %v3063, 2
        %v3174 = vrot.slane %v3065, 2
        %v3175 = vsel %vm2891, %v3173, %v3174
        %v3176 = vrot.slane %v3066, 2
        %v3177 = vsel %vm2891, %v3171, %v3176
        %v3178 = vrot.slane %v3067, 2
        %v3179 = vsel %vm2891, %v3174, %v3178
        %v3180 = vrot.slane %v3068, 2
        %v3181 = vrot.slane %v3070, 2
        %v3182 = vsel %vm2891, %v3180, %v3181
        %v3183 = vrot.slane %v3069, 2
        %v3184 = vrot.slane %v3071, 2
        %v3185 = vsel %vm2891, %v3183, %v3184
        %v3186 = vrot.slane %v3072, 2
        %v3187 = vsel %vm2891, %v3181, %v3186
        %v3188 = vrot.slane %v3073, 2
        %v3189 = vsel %vm2891, %v3184, %v3188
        %v3190 = vrot.slane %v3074, 2
        %v3191 = vrot.slane %v3076, 2
        %v3192 = vsel %vm2891, %v3190, %v3191
        %v3193 = vrot.slane %v3075, 2
        %v3194 = vrot.slane %v3077, 2
        %v3195 = vsel %vm2891, %v3193, %v3194
        %v3196 = vrot.slane %v3078, 2
        %v3197 = vsel %vm2891, %v3191, %v3196
        %v3198 = vrot.slane %v3079, 2
        %v3199 = vsel %vm2891, %v3194, %v3198
        %v3200 = vrot.slane %v3080, 2
        %v3201 = vrot.slane %v3082, 2
        %v3202 = vsel %vm2891, %v3200, %v3201
        %v3203 = vrot.slane %v3081, 2
        %v3204 = vrot.slane %v3083, 2
        %v3205 = vsel %vm2891, %v3203, %v3204
        %v3206 = vrot.slane %v3084, 2
        %v3207 = vsel %vm2891, %v3201, %v3206
        %v3208 = vrot.slane %v3085, 2
        %v3209 = vsel %vm2891, %v3204, %v3208
        %v3210 = vrot.slane %v3086, 2
        %v3211 = vrot.slane %v3088, 2
        %v3212 = vsel %vm2891, %v3210, %v3211
        %v3213 = vrot.slane %v3087, 2
        %v3214 = vrot.slane %v3089, 2
        %v3215 = vsel %vm2891, %v3213, %v3214
        %v3216 = vrot.slane %v3090, 2
        %v3217 = vsel %vm2891, %v3211, %v3216
        %v3218 = vrot.slane %v3091, 2
        %v3219 = vsel %vm2891, %v3214, %v3218
        %v3252 = vadd.f32 %v3004, %v3142
        %v3253 = vadd.f32 %v3005, %v3145
        %v3254 = vadd.f32 %v3006, %v3147
        %v3255 = vadd.f32 %v3007, %v3149
        %v3256 = vadd.f32 %v3008, %v3152
        %v3257 = vadd.f32 %v3009, %v3155
        %v3258 = vadd.f32 %v3010, %v3157
        %v3259 = vadd.f32 %v3011, %v3159
        %v3260 = vadd.f32 %v3012, %v3162
        %v3261 = vadd.f32 %v3013, %v3165
        %v3262 = vadd.f32 %v3014, %v3167
        %v3263 = vadd.f32 %v3015, %v3169
        %v3264 = vadd.f32 %v3016, %v3172
        %v3265 = vadd.f32 %v3017, %v3175
        %v3266 = vadd.f32 %v3018, %v3177
        %v3267 = vadd.f32 %v3019, %v3179
        %v3268 = vadd.f32 %v3020, %v3182
        %v3269 = vadd.f32 %v3021, %v3185
        %v3270 = vadd.f32 %v3022, %v3187
        %v3271 = vadd.f32 %v3023, %v3189
        %v3272 = vadd.f32 %v3024, %v3192
        %v3273 = vadd.f32 %v3025, %v3195
        %v3274 = vadd.f32 %v3026, %v3197
        %v3275 = vadd.f32 %v3027, %v3199
        %v3276 = vadd.f32 %v3028, %v3202
        %v3277 = vadd.f32 %v3029, %v3205
        %v3278 = vadd.f32 %v3030, %v3207
        %v3279 = vadd.f32 %v3031, %v3209
        %v3280 = vadd.f32 %v3032, %v3212
        %v3281 = vadd.f32 %v3033, %v3215
        %v3282 = vadd.f32 %v3034, %v3217
        %v3283 = vadd.f32 %v3035, %v3219
        %v3284 = vlaneseq
        %v3285 = vshrl.u32 %v3284, 7
        %v3286 = vsub.s32 4, %v3285
        %v3287 = vrot.slane %v1036, %v3286
        %v3288 = vlaneseq
        %v3289 = vshrl.u32 %v3288, 7
        %v3290 = vsub.s32 4, %v3289
        %v3291 = vrot.slane %v1037, %v3290
        %v3292 = vmul.f32 %v2747, %v3287
        %v3293 = vmul.f32 %v2748, %v3291
        %v3294 = vmul.f32 %v1052, %v3287
        %v3295 = vmul.f32 %v1053, %v3291
        %v3296 = vmul.f32 %v2749, %v3287
        %v3297 = vmul.f32 %v2750, %v3291
        %v3298 = vmul.f32 %v2751, %v3287
        %v3299 = vmul.f32 %v2752, %v3291
        %v3300 = vmul.f32 %v1056, %v3287
        %v3301 = vmul.f32 %v1057, %v3291
        %v3302 = vmul.f32 %v2753, %v3287
        %v3303 = vmul.f32 %v2754, %v3291
        %v3304 = vmul.f32 %v2755, %v3287
        %v3305 = vmul.f32 %v2756, %v3291
        %v3306 = vmul.f32 %v1060, %v3287
        %v3307 = vmul.f32 %v1061, %v3291
        %v3308 = vmul.f32 %v2757, %v3287
        %v3309 = vmul.f32 %v2758, %v3291
        %v3310 = vmul.f32 %v2759, %v3287
        %v3311 = vmul.f32 %v2760, %v3291
        %v3312 = vmul.f32 %v1064, %v3287
        %v3313 = vmul.f32 %v1065, %v3291
        %v3314 = vmul.f32 %v2761, %v3287
        %v3315 = vmul.f32 %v2762, %v3291
        %v3316 = vmul.f32 %v2763, %v3287
        %v3317 = vmul.f32 %v2764, %v3291
        %v3318 = vmul.f32 %v1068, %v3287
        %v3319 = vmul.f32 %v1069, %v3291
        %v3320 = vmul.f32 %v2765, %v3287
        %v3321 = vmul.f32 %v2766, %v3291
        %v3322 = vmul.f32 %v2767, %v3287
        %v3323 = vmul.f32 %v2768, %v3291
        %v3324 = vmul.f32 %v1072, %v3287
        %v3325 = vmul.f32 %v1073, %v3291
        %v3326 = vmul.f32 %v2769, %v3287
        %v3327 = vmul.f32 %v2770, %v3291
        %v3328 = vmul.f32 %v2771, %v3287
        %v3329 = vmul.f32 %v2772, %v3291
        %v3330 = vmul.f32 %v1076, %v3287
        %v3331 = vmul.f32 %v1077, %v3291
        %v3332 = vmul.f32 %v2773, %v3287
        %v3333 = vmul.f32 %v2774, %v3291
        %v3334 = vmul.f32 %v2775, %v3287
        %v3335 = vmul.f32 %v2776, %v3291
        %v3336 = vmul.f32 %v1080, %v3287
        %v3337 = vmul.f32 %v1081, %v3291
        %v3338 = vmul.f32 %v2777, %v3287
        %v3339 = vmul.f32 %v2778, %v3291
        %v3388 = vrot.slane %v3292, 2
        %v3389 = vrot.slane %v3294, 2
        %v3390 = vsel %vm2891, %v3388, %v3389
        %v3391 = vrot.slane %v3293, 2
        %v3392 = vrot.slane %v3295, 2
        %v3393 = vsel %vm2891, %v3391, %v3392
        %v3394 = vrot.slane %v3296, 2
        %v3395 = vsel %vm2891, %v3389, %v3394
        %v3396 = vrot.slane %v3297, 2
        %v3397 = vsel %vm2891, %v3392, %v3396
        %v3398 = vrot.slane %v3298, 2
        %v3399 = vrot.slane %v3300, 2
        %v3400 = vsel %vm2891, %v3398, %v3399
        %v3401 = vrot.slane %v3299, 2
        %v3402 = vrot.slane %v3301, 2
        %v3403 = vsel %vm2891, %v3401, %v3402
        %v3404 = vrot.slane %v3302, 2
        %v3405 = vsel %vm2891, %v3399, %v3404
        %v3406 = vrot.slane %v3303, 2
        %v3407 = vsel %vm2891, %v3402, %v3406
        %v3408 = vrot.slane %v3304, 2
        %v3409 = vrot.slane %v3306, 2
        %v3410 = vsel %vm2891, %v3408, %v3409
        %v3411 = vrot.slane %v3305, 2
        %v3412 = vrot.slane %v3307, 2
        %v3413 = vsel %vm2891, %v3411, %v3412
        %v3414 = vrot.slane %v3308, 2
        %v3415 = vsel %vm2891, %v3409, %v3414
        %v3416 = vrot.slane %v3309, 2
        %v3417 = vsel %vm2891, %v3412, %v3416
        %v3418 = vrot.slane %v3310, 2
        %v3419 = vrot.slane %v3312, 2
        %v3420 = vsel %vm2891, %v3418, %v3419
        %v3421 = vrot.slane %v3311, 2
        %v3422 = vrot.slane %v3313, 2
        %v3423 = vsel %vm2891, %v3421, %v3422
        %v3424 = vrot.slane %v3314, 2
        %v3425 = vsel %vm2891, %v3419, %v3424
        %v3426 = vrot.slane %v3315, 2
        %v3427 = vsel %vm2891, %v3422, %v3426
        %v3428 = vrot.slane %v3316, 2
        %v3429 = vrot.slane %v3318, 2
        %v3430 = vsel %vm2891, %v3428, %v3429
        %v3431 = vrot.slane %v3317, 2
        %v3432 = vrot.slane %v3319, 2
        %v3433 = vsel %vm2891, %v3431, %v3432
        %v3434 = vrot.slane %v3320, 2
        %v3435 = vsel %vm2891, %v3429, %v3434
        %v3436 = vrot.slane %v3321, 2
        %v3437 = vsel %vm2891, %v3432, %v3436
        %v3438 = vrot.slane %v3322, 2
        %v3439 = vrot.slane %v3324, 2
        %v3440 = vsel %vm2891, %v3438, %v3439
        %v3441 = vrot.slane %v3323, 2
        %v3442 = vrot.slane %v3325, 2
        %v3443 = vsel %vm2891, %v3441, %v3442
        %v3444 = vrot.slane %v3326, 2
        %v3445 = vsel %vm2891, %v3439, %v3444
        %v3446 = vrot.slane %v3327, 2
        %v3447 = vsel %vm2891, %v3442, %v3446
        %v3448 = vrot.slane %v3328, 2
        %v3449 = vrot.slane %v3330, 2
        %v3450 = vsel %vm2891, %v3448, %v3449
        %v3451 = vrot.slane %v3329, 2
        %v3452 = vrot.slane %v3331, 2
        %v3453 = vsel %vm2891, %v3451, %v3452
        %v3454 = vrot.slane %v3332, 2
        %v3455 = vsel %vm2891, %v3449, %v3454
        %v3456 = vrot.slane %v3333, 2
        %v3457 = vsel %vm2891, %v3452, %v3456
        %v3458 = vrot.slane %v3334, 2
        %v3459 = vrot.slane %v3336, 2
        %v3460 = vsel %vm2891, %v3458, %v3459
        %v3461 = vrot.slane %v3335, 2
        %v3462 = vrot.slane %v3337, 2
        %v3463 = vsel %vm2891, %v3461, %v3462
        %v3464 = vrot.slane %v3338, 2
        %v3465 = vsel %vm2891, %v3459, %v3464
        %v3466 = vrot.slane %v3339, 2
        %v3467 = vsel %vm2891, %v3462, %v3466
        %v3500 = vadd.f32 %v3252, %v3390
        %v3501 = vadd.f32 %v3253, %v3393
        %v3502 = vadd.f32 %v3254, %v3395
        %v3503 = vadd.f32 %v3255, %v3397
        %v3504 = vadd.f32 %v3256, %v3400
        %v3505 = vadd.f32 %v3257, %v3403
        %v3506 = vadd.f32 %v3258, %v3405
        %v3507 = vadd.f32 %v3259, %v3407
        %v3508 = vadd.f32 %v3260, %v3410
        %v3509 = vadd.f32 %v3261, %v3413
        %v3510 = vadd.f32 %v3262, %v3415
        %v3511 = vadd.f32 %v3263, %v3417
        %v3512 = vadd.f32 %v3264, %v3420
        %v3513 = vadd.f32 %v3265, %v3423
        %v3514 = vadd.f32 %v3266, %v3425
        %v3515 = vadd.f32 %v3267, %v3427
        %v3516 = vadd.f32 %v3268, %v3430
        %v3517 = vadd.f32 %v3269, %v3433
        %v3518 = vadd.f32 %v3270, %v3435
        %v3519 = vadd.f32 %v3271, %v3437
        %v3520 = vadd.f32 %v3272, %v3440
        %v3521 = vadd.f32 %v3273, %v3443
        %v3522 = vadd.f32 %v3274, %v3445
        %v3523 = vadd.f32 %v3275, %v3447
        %v3524 = vadd.f32 %v3276, %v3450
        %v3525 = vadd.f32 %v3277, %v3453
        %v3526 = vadd.f32 %v3278, %v3455
        %v3527 = vadd.f32 %v3279, %v3457
        %v3528 = vadd.f32 %v3280, %v3460
        %v3529 = vadd.f32 %v3281, %v3463
        %v3530 = vadd.f32 %v3282, %v3465
        %v3531 = vadd.f32 %v3283, %v3467
        %v3532 = vlaneseq
        %v3533 = vshrl.u32 %v3532, 7
        %v3534 = vsub.s32 1, %v3533
        %v3535 = vrot.slane %v1038, %v3534
        %v3536 = vlaneseq
        %v3537 = vshrl.u32 %v3536, 7
        %v3538 = vsub.s32 1, %v3537
        %v3539 = vrot.slane %v1039, %v3538
        %v3540 = vmul.f32 %v2751, %v3535
        %v3541 = vmul.f32 %v2752, %v3539
        %v3542 = vmul.f32 %v1056, %v3535
        %v3543 = vmul.f32 %v1057, %v3539
        %v3544 = vmul.f32 %v2753, %v3535
        %v3545 = vmul.f32 %v2754, %v3539
        %v3546 = vmul.f32 %v2755, %v3535
        %v3547 = vmul.f32 %v2756, %v3539
        %v3548 = vmul.f32 %v1060, %v3535
        %v3549 = vmul.f32 %v1061, %v3539
        %v3550 = vmul.f32 %v2757, %v3535
        %v3551 = vmul.f32 %v2758, %v3539
        %v3552 = vmul.f32 %v2759, %v3535
        %v3553 = vmul.f32 %v2760, %v3539
        %v3554 = vmul.f32 %v1064, %v3535
        %v3555 = vmul.f32 %v1065, %v3539
        %v3556 = vmul.f32 %v2761, %v3535
        %v3557 = vmul.f32 %v2762, %v3539
        %v3558 = vmul.f32 %v2763, %v3535
        %v3559 = vmul.f32 %v2764, %v3539
        %v3560 = vmul.f32 %v1068, %v3535
        %v3561 = vmul.f32 %v1069, %v3539
        %v3562 = vmul.f32 %v2765, %v3535
        %v3563 = vmul.f32 %v2766, %v3539
        %v3564 = vmul.f32 %v2767, %v3535
        %v3565 = vmul.f32 %v2768, %v3539
        %v3566 = vmul.f32 %v1072, %v3535
        %v3567 = vmul.f32 %v1073, %v3539
        %v3568 = vmul.f32 %v2769, %v3535
        %v3569 = vmul.f32 %v2770, %v3539
        %v3570 = vmul.f32 %v2771, %v3535
        %v3571 = vmul.f32 %v2772, %v3539
        %v3572 = vmul.f32 %v1076, %v3535
        %v3573 = vmul.f32 %v1077, %v3539
        %v3574 = vmul.f32 %v2773, %v3535
        %v3575 = vmul.f32 %v2774, %v3539
        %v3576 = vmul.f32 %v2775, %v3535
        %v3577 = vmul.f32 %v2776, %v3539
        %v3578 = vmul.f32 %v1080, %v3535
        %v3579 = vmul.f32 %v1081, %v3539
        %v3580 = vmul.f32 %v2777, %v3535
        %v3581 = vmul.f32 %v2778, %v3539
        %v3582 = vmul.f32 %v2779, %v3535
        %v3583 = vmul.f32 %v2780, %v3539
        %v3584 = vmul.f32 %v1084, %v3535
        %v3585 = vmul.f32 %v1085, %v3539
        %v3586 = vmul.f32 %v2781, %v3535
        %v3587 = vmul.f32 %v2782, %v3539
        %v3636 = vrot.slane %v3540, 2
        %v3637 = vrot.slane %v3542, 2
        %v3638 = vsel %vm2891, %v3636, %v3637
        %v3639 = vrot.slane %v3541, 2
        %v3640 = vrot.slane %v3543, 2
        %v3641 = vsel %vm2891, %v3639, %v3640
        %v3642 = vrot.slane %v3544, 2
        %v3643 = vsel %vm2891, %v3637, %v3642
        %v3644 = vrot.slane %v3545, 2
        %v3645 = vsel %vm2891, %v3640, %v3644
        %v3646 = vrot.slane %v3546, 2
        %v3647 = vrot.slane %v3548, 2
        %v3648 = vsel %vm2891, %v3646, %v3647
        %v3649 = vrot.slane %v3547, 2
        %v3650 = vrot.slane %v3549, 2
        %v3651 = vsel %vm2891, %v3649, %v3650
        %v3652 = vrot.slane %v3550, 2
        %v3653 = vsel %vm2891, %v3647, %v3652
        %v3654 = vrot.slane %v3551, 2
        %v3655 = vsel %vm2891, %v3650, %v3654
        %v3656 = vrot.slane %v3552, 2
        %v3657 = vrot.slane %v3554, 2
        %v3658 = vsel %vm2891, %v3656, %v3657
        %v3659 = vrot.slane %v3553, 2
        %v3660 = vrot.slane %v3555, 2
        %v3661 = vsel %vm2891, %v3659, %v3660
        %v3662 = vrot.slane %v3556, 2
        %v3663 = vsel %vm2891, %v3657, %v3662
        %v3664 = vrot.slane %v3557, 2
        %v3665 = vsel %vm2891, %v3660, %v3664
        %v3666 = vrot.slane %v3558, 2
        %v3667 = vrot.slane %v3560, 2
        %v3668 = vsel %vm2891, %v3666, %v3667
        %v3669 = vrot.slane %v3559, 2
        %v3670 = vrot.slane %v3561, 2
        %v3671 = vsel %vm2891, %v3669, %v3670
        %v3672 = vrot.slane %v3562, 2
        %v3673 = vsel %vm2891, %v3667, %v3672
        %v3674 = vrot.slane %v3563, 2
        %v3675 = vsel %vm2891, %v3670, %v3674
        %v3676 = vrot.slane %v3564, 2
        %v3677 = vrot.slane %v3566, 2
        %v3678 = vsel %vm2891, %v3676, %v3677
        %v3679 = vrot.slane %v3565, 2
        %v3680 = vrot.slane %v3567, 2
        %v3681 = vsel %vm2891, %v3679, %v3680
        %v3682 = vrot.slane %v3568, 2
        %v3683 = vsel %vm2891, %v3677, %v3682
        %v3684 = vrot.slane %v3569, 2
        %v3685 = vsel %vm2891, %v3680, %v3684
        %v3686 = vrot.slane %v3570, 2
        %v3687 = vrot.slane %v3572, 2
        %v3688 = vsel %vm2891, %v3686, %v3687
        %v3689 = vrot.slane %v3571, 2
        %v3690 = vrot.slane %v3573, 2
        %v3691 = vsel %vm2891, %v3689, %v3690
        %v3692 = vrot.slane %v3574, 2
        %v3693 = vsel %vm2891, %v3687, %v3692
        %v3694 = vrot.slane %v3575, 2
        %v3695 = vsel %vm2891, %v3690, %v3694
        %v3696 = vrot.slane %v3576, 2
        %v3697 = vrot.slane %v3578, 2
        %v3698 = vsel %vm2891, %v3696, %v3697
        %v3699 = vrot.slane %v3577, 2
        %v3700 = vrot.slane %v3579, 2
        %v3701 = vsel %vm2891, %v3699, %v3700
        %v3702 = vrot.slane %v3580, 2
        %v3703 = vsel %vm2891, %v3697, %v3702
        %v3704 = vrot.slane %v3581, 2
        %v3705 = vsel %vm2891, %v3700, %v3704
        %v3706 = vrot.slane %v3582, 2
        %v3707 = vrot.slane %v3584, 2
        %v3708 = vsel %vm2891, %v3706, %v3707
        %v3709 = vrot.slane %v3583, 2
        %v3710 = vrot.slane %v3585, 2
        %v3711 = vsel %vm2891, %v3709, %v3710
        %v3712 = vrot.slane %v3586, 2
        %v3713 = vsel %vm2891, %v3707, %v3712
        %v3714 = vrot.slane %v3587, 2
        %v3715 = vsel %vm2891, %v3710, %v3714
        %v3748 = vadd.f32 %v3500, %v3638
        %v3749 = vadd.f32 %v3501, %v3641
        %v3750 = vadd.f32 %v3502, %v3643
        %v3751 = vadd.f32 %v3503, %v3645
        %v3752 = vadd.f32 %v3504, %v3648
        %v3753 = vadd.f32 %v3505, %v3651
        %v3754 = vadd.f32 %v3506, %v3653
        %v3755 = vadd.f32 %v3507, %v3655
        %v3756 = vadd.f32 %v3508, %v3658
        %v3757 = vadd.f32 %v3509, %v3661
        %v3758 = vadd.f32 %v3510, %v3663
        %v3759 = vadd.f32 %v3511, %v3665
        %v3760 = vadd.f32 %v3512, %v3668
        %v3761 = vadd.f32 %v3513, %v3671
        %v3762 = vadd.f32 %v3514, %v3673
        %v3763 = vadd.f32 %v3515, %v3675
        %v3764 = vadd.f32 %v3516, %v3678
        %v3765 = vadd.f32 %v3517, %v3681
        %v3766 = vadd.f32 %v3518, %v3683
        %v3767 = vadd.f32 %v3519, %v3685
        %v3768 = vadd.f32 %v3520, %v3688
        %v3769 = vadd.f32 %v3521, %v3691
        %v3770 = vadd.f32 %v3522, %v3693
        %v3771 = vadd.f32 %v3523, %v3695
        %v3772 = vadd.f32 %v3524, %v3698
        %v3773 = vadd.f32 %v3525, %v3701
        %v3774 = vadd.f32 %v3526, %v3703
        %v3775 = vadd.f32 %v3527, %v3705
        %v3776 = vadd.f32 %v3528, %v3708
        %v3777 = vadd.f32 %v3529, %v3711
        %v3778 = vadd.f32 %v3530, %v3713
        %v3779 = vadd.f32 %v3531, %v3715
        %v3780 = vlaneseq
        %v3781 = vshrl.u32 %v3780, 7
        %v3782 = vsub.s32 6, %v3781
        %v3783 = vrot.slane %v1038, %v3782
        %v3784 = vlaneseq
        %v3785 = vshrl.u32 %v3784, 7
        %v3786 = vsub.s32 6, %v3785
        %v3787 = vrot.slane %v1039, %v3786
        %v3788 = vmul.f32 %v2755, %v3783
        %v3789 = vmul.f32 %v2756, %v3787
        %v3790 = vmul.f32 %v1060, %v3783
        %v3791 = vmul.f32 %v1061, %v3787
        %v3792 = vmul.f32 %v2757, %v3783
        %v3793 = vmul.f32 %v2758, %v3787
        %v3794 = vmul.f32 %v2759, %v3783
        %v3795 = vmul.f32 %v2760, %v3787
        %v3796 = vmul.f32 %v1064, %v3783
        %v3797 = vmul.f32 %v1065, %v3787
        %v3798 = vmul.f32 %v2761, %v3783
        %v3799 = vmul.f32 %v2762, %v3787
        %v3800 = vmul.f32 %v2763, %v3783
        %v3801 = vmul.f32 %v2764, %v3787
        %v3802 = vmul.f32 %v1068, %v3783
        %v3803 = vmul.f32 %v1069, %v3787
        %v3804 = vmul.f32 %v2765, %v3783
        %v3805 = vmul.f32 %v2766, %v3787
        %v3806 = vmul.f32 %v2767, %v3783
        %v3807 = vmul.f32 %v2768, %v3787
        %v3808 = vmul.f32 %v1072, %v3783
        %v3809 = vmul.f32 %v1073, %v3787
        %v3810 = vmul.f32 %v2769, %v3783
        %v3811 = vmul.f32 %v2770, %v3787
        %v3812 = vmul.f32 %v2771, %v3783
        %v3813 = vmul.f32 %v2772, %v3787
        %v3814 = vmul.f32 %v1076, %v3783
        %v3815 = vmul.f32 %v1077, %v3787
        %v3816 = vmul.f32 %v2773, %v3783
        %v3817 = vmul.f32 %v2774, %v3787
        %v3818 = vmul.f32 %v2775, %v3783
        %v3819 = vmul.f32 %v2776, %v3787
        %v3820 = vmul.f32 %v1080, %v3783
        %v3821 = vmul.f32 %v1081, %v3787
        %v3822 = vmul.f32 %v2777, %v3783
        %v3823 = vmul.f32 %v2778, %v3787
        %v3824 = vmul.f32 %v2779, %v3783
        %v3825 = vmul.f32 %v2780, %v3787
        %v3826 = vmul.f32 %v1084, %v3783
        %v3827 = vmul.f32 %v1085, %v3787
        %v3828 = vmul.f32 %v2781, %v3783
        %v3829 = vmul.f32 %v2782, %v3787
        %v3830 = vmul.f32 %v2783, %v3783
        %v3831 = vmul.f32 %v2784, %v3787
        %v3832 = vmul.f32 %v1088, %v3783
        %v3833 = vmul.f32 %v1089, %v3787
        %v3834 = vmul.f32 %v2785, %v3783
        %v3835 = vmul.f32 %v2786, %v3787
        %v3884 = vrot.slane %v3788, 2
        %v3885 = vrot.slane %v3790, 2
        %v3886 = vsel %vm2891, %v3884, %v3885
        %v3887 = vrot.slane %v3789, 2
        %v3888 = vrot.slane %v3791, 2
        %v3889 = vsel %vm2891, %v3887, %v3888
        %v3890 = vrot.slane %v3792, 2
        %v3891 = vsel %vm2891, %v3885, %v3890
        %v3892 = vrot.slane %v3793, 2
        %v3893 = vsel %vm2891, %v3888, %v3892
        %v3894 = vrot.slane %v3794, 2
        %v3895 = vrot.slane %v3796, 2
        %v3896 = vsel %vm2891, %v3894, %v3895
        %v3897 = vrot.slane %v3795, 2
        %v3898 = vrot.slane %v3797, 2
        %v3899 = vsel %vm2891, %v3897, %v3898
        %v3900 = vrot.slane %v3798, 2
        %v3901 = vsel %vm2891, %v3895, %v3900
        %v3902 = vrot.slane %v3799, 2
        %v3903 = vsel %vm2891, %v3898, %v3902
        %v3904 = vrot.slane %v3800, 2
        %v3905 = vrot.slane %v3802, 2
        %v3906 = vsel %vm2891, %v3904, %v3905
        %v3907 = vrot.slane %v3801, 2
        %v3908 = vrot.slane %v3803, 2
        %v3909 = vsel %vm2891, %v3907, %v3908
        %v3910 = vrot.slane %v3804, 2
        %v3911 = vsel %vm2891, %v3905, %v3910
        %v3912 = vrot.slane %v3805, 2
        %v3913 = vsel %vm2891, %v3908, %v3912
        %v3914 = vrot.slane %v3806, 2
        %v3915 = vrot.slane %v3808, 2
        %v3916 = vsel %vm2891, %v3914, %v3915
        %v3917 = vrot.slane %v3807, 2
        %v3918 = vrot.slane %v3809, 2
        %v3919 = vsel %vm2891, %v3917, %v3918
        %v3920 = vrot.slane %v3810, 2
        %v3921 = vsel %vm2891, %v3915, %v3920
        %v3922 = vrot.slane %v3811, 2
        %v3923 = vsel %vm2891, %v3918, %v3922
        %v3924 = vrot.slane %v3812, 2
        %v3925 = vrot.slane %v3814, 2
        %v3926 = vsel %vm2891, %v3924, %v3925
        %v3927 = vrot.slane %v3813, 2
        %v3928 = vrot.slane %v3815, 2
        %v3929 = vsel %vm2891, %v3927, %v3928
        %v3930 = vrot.slane %v3816, 2
        %v3931 = vsel %vm2891, %v3925, %v3930
        %v3932 = vrot.slane %v3817, 2
        %v3933 = vsel %vm2891, %v3928, %v3932
        %v3934 = vrot.slane %v3818, 2
        %v3935 = vrot.slane %v3820, 2
        %v3936 = vsel %vm2891, %v3934, %v3935
        %v3937 = vrot.slane %v3819, 2
        %v3938 = vrot.slane %v3821, 2
        %v3939 = vsel %vm2891, %v3937, %v3938
        %v3940 = vrot.slane %v3822, 2
        %v3941 = vsel %vm2891, %v3935, %v3940
        %v3942 = vrot.slane %v3823, 2
        %v3943 = vsel %vm2891, %v3938, %v3942
        %v3944 = vrot.slane %v3824, 2
        %v3945 = vrot.slane %v3826, 2
        %v3946 = vsel %vm2891, %v3944, %v3945
        %v3947 = vrot.slane %v3825, 2
        %v3948 = vrot.slane %v3827, 2
        %v3949 = vsel %vm2891, %v3947, %v3948
        %v3950 = vrot.slane %v3828, 2
        %v3951 = vsel %vm2891, %v3945, %v3950
        %v3952 = vrot.slane %v3829, 2
        %v3953 = vsel %vm2891, %v3948, %v3952
        %v3954 = vrot.slane %v3830, 2
        %v3955 = vrot.slane %v3832, 2
        %v3956 = vsel %vm2891, %v3954, %v3955
        %v3957 = vrot.slane %v3831, 2
        %v3958 = vrot.slane %v3833, 2
        %v3959 = vsel %vm2891, %v3957, %v3958
        %v3960 = vrot.slane %v3834, 2
        %v3961 = vsel %vm2891, %v3955, %v3960
        %v3962 = vrot.slane %v3835, 2
        %v3963 = vsel %vm2891, %v3958, %v3962
        %v3996 = vadd.f32 %v3748, %v3886
        %v3997 = vadd.f32 %v3749, %v3889
        %v3998 = vadd.f32 %v3750, %v3891
        %v3999 = vadd.f32 %v3751, %v3893
        %v4000 = vadd.f32 %v3752, %v3896
        %v4001 = vadd.f32 %v3753, %v3899
        %v4002 = vadd.f32 %v3754, %v3901
        %v4003 = vadd.f32 %v3755, %v3903
        %v4004 = vadd.f32 %v3756, %v3906
        %v4005 = vadd.f32 %v3757, %v3909
        %v4006 = vadd.f32 %v3758, %v3911
        %v4007 = vadd.f32 %v3759, %v3913
        %v4008 = vadd.f32 %v3760, %v3916
        %v4009 = vadd.f32 %v3761, %v3919
        %v4010 = vadd.f32 %v3762, %v3921
        %v4011 = vadd.f32 %v3763, %v3923
        %v4012 = vadd.f32 %v3764, %v3926
        %v4013 = vadd.f32 %v3765, %v3929
        %v4014 = vadd.f32 %v3766, %v3931
        %v4015 = vadd.f32 %v3767, %v3933
        %v4016 = vadd.f32 %v3768, %v3936
        %v4017 = vadd.f32 %v3769, %v3939
        %v4018 = vadd.f32 %v3770, %v3941
        %v4019 = vadd.f32 %v3771, %v3943
        %v4020 = vadd.f32 %v3772, %v3946
        %v4021 = vadd.f32 %v3773, %v3949
        %v4022 = vadd.f32 %v3774, %v3951
        %v4023 = vadd.f32 %v3775, %v3953
        %v4024 = vadd.f32 %v3776, %v3956
        %v4025 = vadd.f32 %v3777, %v3959
        %v4026 = vadd.f32 %v3778, %v3961
        %v4027 = vadd.f32 %v3779, %v3963
        %v4028 = vld [vmem:[#allocation2] sm:$0xf8]
        %v4029 = vld [vmem:[#allocation2 + $0x8] sm:$0xf8]
        %v4030 = vld [vmem:[#allocation2 + $0x20] sm:$0x7]
        %v4031 = vld [vmem:[#allocation2 + $0x28] sm:$0x7]
        %v4032 = vld [vmem:[#allocation2 + $0x30] sm:$0xf8]
        %v4033 = vld [vmem:[#allocation2 + $0x38] sm:$0xf8]
        %v4034 = vld [vmem:[#allocation2 + $0x50] sm:$0x7]
        %v4035 = vld [vmem:[#allocation2 + $0x58] sm:$0x7]
        %v4036 = vld [vmem:[#allocation2 + $0x60] sm:$0xf8]
        %v4037 = vld [vmem:[#allocation2 + $0x68] sm:$0xf8]
        %v4038 = vld [vmem:[#allocation2 + $0x80] sm:$0x7]
        %v4039 = vld [vmem:[#allocation2 + $0x88] sm:$0x7]
        %v4040 = vld [vmem:[#allocation2 + $0x90] sm:$0xf8]
        %v4041 = vld [vmem:[#allocation2 + $0x98] sm:$0xf8]
        %v4042 = vld [vmem:[#allocation2 + $0xb0] sm:$0x7]
        %v4043 = vld [vmem:[#allocation2 + $0xb8] sm:$0x7]
        %v4044 = vld [vmem:[#allocation2 + $0xc0] sm:$0xf8]
        %v4045 = vld [vmem:[#allocation2 + $0xc8] sm:$0xf8]
        %v4046 = vld [vmem:[#allocation2 + $0xe0] sm:$0x7]
        %v4047 = vld [vmem:[#allocation2 + $0xe8] sm:$0x7]
        %v4048 = vld [vmem:[#allocation2 + $0xf0] sm:$0xf8]
        %v4049 = vld [vmem:[#allocation2 + $0xf8] sm:$0xf8]
        %v4050 = vld [vmem:[#allocation2 + $0x110] sm:$0x7]
        %v4051 = vld [vmem:[#allocation2 + $0x118] sm:$0x7]
        %v4052 = vld [vmem:[#allocation2 + $0x120] sm:$0xf8]
        %v4053 = vld [vmem:[#allocation2 + $0x128] sm:$0xf8]
        %v4054 = vld [vmem:[#allocation2 + $0x140] sm:$0x7]
        %v4055 = vld [vmem:[#allocation2 + $0x148] sm:$0x7]
        %v4056 = vld [vmem:[#allocation2 + $0x150] sm:$0xf8]
        %v4057 = vld [vmem:[#allocation2 + $0x158] sm:$0xf8]
        %v4058 = vld [vmem:[#allocation2 + $0x170] sm:$0x7]
        %v4059 = vld [vmem:[#allocation2 + $0x178] sm:$0x7]
        %v4060 = vld [vmem:[#allocation2 + $0x180] sm:$0xf8]
        %v4061 = vld [vmem:[#allocation2 + $0x188] sm:$0xf8]
        %v4062 = vld [vmem:[#allocation2 + $0x1a0] sm:$0x7]
        %v4063 = vld [vmem:[#allocation2 + $0x1a8] sm:$0x7]
        %v4064 = vld [vmem:[#allocation2 + $0x1b0] sm:$0xf8]
        %v4065 = vld [vmem:[#allocation2 + $0x1b8] sm:$0xf8]
        %v4066 = vld [vmem:[#allocation2 + $0x1d0] sm:$0x7]
        %v4067 = vld [vmem:[#allocation2 + $0x1d8] sm:$0x7]
        %v4068 = vld [vmem:[#allocation2 + $0x1e0] sm:$0xf8]
        %v4069 = vld [vmem:[#allocation2 + $0x1e8] sm:$0xf8]
        %v4070 = vld [vmem:[#allocation2 + $0x200] sm:$0x7]
        %v4071 = vld [vmem:[#allocation2 + $0x208] sm:$0x7]
        %v4072 = vld [vmem:[#allocation2 + $0x210] sm:$0xf8]
        %v4073 = vld [vmem:[#allocation2 + $0x218] sm:$0xf8]
        %v4074 = vld [vmem:[#allocation2 + $0x230] sm:$0x7]
        %v4075 = vld [vmem:[#allocation2 + $0x238] sm:$0x7]
        %v4076 = vlaneseq
        %v4077 = vshrl.u32 %v4076, 7
        %v4078 = vsub.s32 3, %v4077
        %v4079 = vrot.slane %v1034, %v4078
        %v4080 = vlaneseq
        %v4081 = vshrl.u32 %v4080, 7
        %v4082 = vsub.s32 3, %v4081
        %v4083 = vrot.slane %v1035, %v4082
        %v4084 = vmul.f32 %v4028, %v4079
        %v4085 = vmul.f32 %v4029, %v4083
        %v4086 = vmul.f32 %v1044, %v4079
        %v4087 = vmul.f32 %v1045, %v4083
        %v4088 = vmul.f32 %v4030, %v4079
        %v4089 = vmul.f32 %v4031, %v4083
        %v4090 = vmul.f32 %v4032, %v4079
        %v4091 = vmul.f32 %v4033, %v4083
        %v4092 = vmul.f32 %v1048, %v4079
        %v4093 = vmul.f32 %v1049, %v4083
        %v4094 = vmul.f32 %v4034, %v4079
        %v4095 = vmul.f32 %v4035, %v4083
        %v4096 = vmul.f32 %v4036, %v4079
        %v4097 = vmul.f32 %v4037, %v4083
        %v4098 = vmul.f32 %v1052, %v4079
        %v4099 = vmul.f32 %v1053, %v4083
        %v4100 = vmul.f32 %v4038, %v4079
        %v4101 = vmul.f32 %v4039, %v4083
        %v4102 = vmul.f32 %v4040, %v4079
        %v4103 = vmul.f32 %v4041, %v4083
        %v4104 = vmul.f32 %v1056, %v4079
        %v4105 = vmul.f32 %v1057, %v4083
        %v4106 = vmul.f32 %v4042, %v4079
        %v4107 = vmul.f32 %v4043, %v4083
        %v4108 = vmul.f32 %v4044, %v4079
        %v4109 = vmul.f32 %v4045, %v4083
        %v4110 = vmul.f32 %v1060, %v4079
        %v4111 = vmul.f32 %v1061, %v4083
        %v4112 = vmul.f32 %v4046, %v4079
        %v4113 = vmul.f32 %v4047, %v4083
        %v4114 = vmul.f32 %v4048, %v4079
        %v4115 = vmul.f32 %v4049, %v4083
        %v4116 = vmul.f32 %v1064, %v4079
        %v4117 = vmul.f32 %v1065, %v4083
        %v4118 = vmul.f32 %v4050, %v4079
        %v4119 = vmul.f32 %v4051, %v4083
        %v4120 = vmul.f32 %v4052, %v4079
        %v4121 = vmul.f32 %v4053, %v4083
        %v4122 = vmul.f32 %v1068, %v4079
        %v4123 = vmul.f32 %v1069, %v4083
        %v4124 = vmul.f32 %v4054, %v4079
        %v4125 = vmul.f32 %v4055, %v4083
        %v4126 = vmul.f32 %v4056, %v4079
        %v4127 = vmul.f32 %v4057, %v4083
        %v4128 = vmul.f32 %v1072, %v4079
        %v4129 = vmul.f32 %v1073, %v4083
        %v4130 = vmul.f32 %v4058, %v4079
        %v4131 = vmul.f32 %v4059, %v4083
        %vm4180 = vcmask 1044480
        %v4181 = vrot.slane %v4084, 3
        %v4182 = vrot.slane %v4086, 3
        %v4183 = vsel %vm4180, %v4181, %v4182
        %v4184 = vrot.slane %v4085, 3
        %v4185 = vrot.slane %v4087, 3
        %v4186 = vsel %vm4180, %v4184, %v4185
        %v4187 = vrot.slane %v4088, 3
        %v4188 = vsel %vm4180, %v4182, %v4187
        %v4189 = vrot.slane %v4089, 3
        %v4190 = vsel %vm4180, %v4185, %v4189
        %v4191 = vrot.slane %v4090, 3
        %v4192 = vrot.slane %v4092, 3
        %v4193 = vsel %vm4180, %v4191, %v4192
        %v4194 = vrot.slane %v4091, 3
        %v4195 = vrot.slane %v4093, 3
        %v4196 = vsel %vm4180, %v4194, %v4195
        %v4197 = vrot.slane %v4094, 3
        %v4198 = vsel %vm4180, %v4192, %v4197
        %v4199 = vrot.slane %v4095, 3
        %v4200 = vsel %vm4180, %v4195, %v4199
        %v4201 = vrot.slane %v4096, 3
        %v4202 = vrot.slane %v4098, 3
        %v4203 = vsel %vm4180, %v4201, %v4202
        %v4204 = vrot.slane %v4097, 3
        %v4205 = vrot.slane %v4099, 3
        %v4206 = vsel %vm4180, %v4204, %v4205
        %v4207 = vrot.slane %v4100, 3
        %v4208 = vsel %vm4180, %v4202, %v4207
        %v4209 = vrot.slane %v4101, 3
        %v4210 = vsel %vm4180, %v4205, %v4209
        %v4211 = vrot.slane %v4102, 3
        %v4212 = vrot.slane %v4104, 3
        %v4213 = vsel %vm4180, %v4211, %v4212
        %v4214 = vrot.slane %v4103, 3
        %v4215 = vrot.slane %v4105, 3
        %v4216 = vsel %vm4180, %v4214, %v4215
        %v4217 = vrot.slane %v4106, 3
        %v4218 = vsel %vm4180, %v4212, %v4217
        %v4219 = vrot.slane %v4107, 3
        %v4220 = vsel %vm4180, %v4215, %v4219
        %v4221 = vrot.slane %v4108, 3
        %v4222 = vrot.slane %v4110, 3
        %v4223 = vsel %vm4180, %v4221, %v4222
        %v4224 = vrot.slane %v4109, 3
        %v4225 = vrot.slane %v4111, 3
        %v4226 = vsel %vm4180, %v4224, %v4225
        %v4227 = vrot.slane %v4112, 3
        %v4228 = vsel %vm4180, %v4222, %v4227
        %v4229 = vrot.slane %v4113, 3
        %v4230 = vsel %vm4180, %v4225, %v4229
        %v4231 = vrot.slane %v4114, 3
        %v4232 = vrot.slane %v4116, 3
        %v4233 = vsel %vm4180, %v4231, %v4232
        %v4234 = vrot.slane %v4115, 3
        %v4235 = vrot.slane %v4117, 3
        %v4236 = vsel %vm4180, %v4234, %v4235
        %v4237 = vrot.slane %v4118, 3
        %v4238 = vsel %vm4180, %v4232, %v4237
        %v4239 = vrot.slane %v4119, 3
        %v4240 = vsel %vm4180, %v4235, %v4239
        %v4241 = vrot.slane %v4120, 3
        %v4242 = vrot.slane %v4122, 3
        %v4243 = vsel %vm4180, %v4241, %v4242
        %v4244 = vrot.slane %v4121, 3
        %v4245 = vrot.slane %v4123, 3
        %v4246 = vsel %vm4180, %v4244, %v4245
        %v4247 = vrot.slane %v4124, 3
        %v4248 = vsel %vm4180, %v4242, %v4247
        %v4249 = vrot.slane %v4125, 3
        %v4250 = vsel %vm4180, %v4245, %v4249
        %v4251 = vrot.slane %v4126, 3
        %v4252 = vrot.slane %v4128, 3
        %v4253 = vsel %vm4180, %v4251, %v4252
        %v4254 = vrot.slane %v4127, 3
        %v4255 = vrot.slane %v4129, 3
        %v4256 = vsel %vm4180, %v4254, %v4255
        %v4257 = vrot.slane %v4130, 3
        %v4258 = vsel %vm4180, %v4252, %v4257
        %v4259 = vrot.slane %v4131, 3
        %v4260 = vsel %vm4180, %v4255, %v4259
        %v4293 = vadd.f32 %v3996, %v4183
        %v4294 = vadd.f32 %v3997, %v4186
        %v4295 = vadd.f32 %v3998, %v4188
        %v4296 = vadd.f32 %v3999, %v4190
        %v4297 = vadd.f32 %v4000, %v4193
        %v4298 = vadd.f32 %v4001, %v4196
        %v4299 = vadd.f32 %v4002, %v4198
        %v4300 = vadd.f32 %v4003, %v4200
        %v4301 = vadd.f32 %v4004, %v4203
        %v4302 = vadd.f32 %v4005, %v4206
        %v4303 = vadd.f32 %v4006, %v4208
        %v4304 = vadd.f32 %v4007, %v4210
        %v4305 = vadd.f32 %v4008, %v4213
        %v4306 = vadd.f32 %v4009, %v4216
        %v4307 = vadd.f32 %v4010, %v4218
        %v4308 = vadd.f32 %v4011, %v4220
        %v4309 = vadd.f32 %v4012, %v4223
        %v4310 = vadd.f32 %v4013, %v4226
        %v4311 = vadd.f32 %v4014, %v4228
        %v4312 = vadd.f32 %v4015, %v4230
        %v4313 = vadd.f32 %v4016, %v4233
        %v4314 = vadd.f32 %v4017, %v4236
        %v4315 = vadd.f32 %v4018, %v4238
        %v4316 = vadd.f32 %v4019, %v4240
        %v4317 = vadd.f32 %v4020, %v4243
        %v4318 = vadd.f32 %v4021, %v4246
        %v4319 = vadd.f32 %v4022, %v4248
        %v4320 = vadd.f32 %v4023, %v4250
        %v4321 = vadd.f32 %v4024, %v4253
        %v4322 = vadd.f32 %v4025, %v4256
        %v4323 = vadd.f32 %v4026, %v4258
        %v4324 = vadd.f32 %v4027, %v4260
        %v4325 = vlaneseq
        %v4326 = vshrl.u32 %v4325, 7
        %v4327 = vsub.s32 0, %v4326
        %v4328 = vrot.slane %v1036, %v4327
        %v4329 = vlaneseq
        %v4330 = vshrl.u32 %v4329, 7
        %v4331 = vsub.s32 0, %v4330
        %v4332 = vrot.slane %v1037, %v4331
        %v4333 = vmul.f32 %v4032, %v4328
        %v4334 = vmul.f32 %v4033, %v4332
        %v4335 = vmul.f32 %v1048, %v4328
        %v4336 = vmul.f32 %v1049, %v4332
        %v4337 = vmul.f32 %v4034, %v4328
        %v4338 = vmul.f32 %v4035, %v4332
        %v4339 = vmul.f32 %v4036, %v4328
        %v4340 = vmul.f32 %v4037, %v4332
        %v4341 = vmul.f32 %v1052, %v4328
        %v4342 = vmul.f32 %v1053, %v4332
        %v4343 = vmul.f32 %v4038, %v4328
        %v4344 = vmul.f32 %v4039, %v4332
        %v4345 = vmul.f32 %v4040, %v4328
        %v4346 = vmul.f32 %v4041, %v4332
        %v4347 = vmul.f32 %v1056, %v4328
        %v4348 = vmul.f32 %v1057, %v4332
        %v4349 = vmul.f32 %v4042, %v4328
        %v4350 = vmul.f32 %v4043, %v4332
        %v4351 = vmul.f32 %v4044, %v4328
        %v4352 = vmul.f32 %v4045, %v4332
        %v4353 = vmul.f32 %v1060, %v4328
        %v4354 = vmul.f32 %v1061, %v4332
        %v4355 = vmul.f32 %v4046, %v4328
        %v4356 = vmul.f32 %v4047, %v4332
        %v4357 = vmul.f32 %v4048, %v4328
        %v4358 = vmul.f32 %v4049, %v4332
        %v4359 = vmul.f32 %v1064, %v4328
        %v4360 = vmul.f32 %v1065, %v4332
        %v4361 = vmul.f32 %v4050, %v4328
        %v4362 = vmul.f32 %v4051, %v4332
        %v4363 = vmul.f32 %v4052, %v4328
        %v4364 = vmul.f32 %v4053, %v4332
        %v4365 = vmul.f32 %v1068, %v4328
        %v4366 = vmul.f32 %v1069, %v4332
        %v4367 = vmul.f32 %v4054, %v4328
        %v4368 = vmul.f32 %v4055, %v4332
        %v4369 = vmul.f32 %v4056, %v4328
        %v4370 = vmul.f32 %v4057, %v4332
        %v4371 = vmul.f32 %v1072, %v4328
        %v4372 = vmul.f32 %v1073, %v4332
        %v4373 = vmul.f32 %v4058, %v4328
        %v4374 = vmul.f32 %v4059, %v4332
        %v4375 = vmul.f32 %v4060, %v4328
        %v4376 = vmul.f32 %v4061, %v4332
        %v4377 = vmul.f32 %v1076, %v4328
        %v4378 = vmul.f32 %v1077, %v4332
        %v4379 = vmul.f32 %v4062, %v4328
        %v4380 = vmul.f32 %v4063, %v4332
        %v4429 = vrot.slane %v4333, 3
        %v4430 = vrot.slane %v4335, 3
        %v4431 = vsel %vm4180, %v4429, %v4430
        %v4432 = vrot.slane %v4334, 3
        %v4433 = vrot.slane %v4336, 3
        %v4434 = vsel %vm4180, %v4432, %v4433
        %v4435 = vrot.slane %v4337, 3
        %v4436 = vsel %vm4180, %v4430, %v4435
        %v4437 = vrot.slane %v4338, 3
        %v4438 = vsel %vm4180, %v4433, %v4437
        %v4439 = vrot.slane %v4339, 3
        %v4440 = vrot.slane %v4341, 3
        %v4441 = vsel %vm4180, %v4439, %v4440
        %v4442 = vrot.slane %v4340, 3
        %v4443 = vrot.slane %v4342, 3
        %v4444 = vsel %vm4180, %v4442, %v4443
        %v4445 = vrot.slane %v4343, 3
        %v4446 = vsel %vm4180, %v4440, %v4445
        %v4447 = vrot.slane %v4344, 3
        %v4448 = vsel %vm4180, %v4443, %v4447
        %v4449 = vrot.slane %v4345, 3
        %v4450 = vrot.slane %v4347, 3
        %v4451 = vsel %vm4180, %v4449, %v4450
        %v4452 = vrot.slane %v4346, 3
        %v4453 = vrot.slane %v4348, 3
        %v4454 = vsel %vm4180, %v4452, %v4453
        %v4455 = vrot.slane %v4349, 3
        %v4456 = vsel %vm4180, %v4450, %v4455
        %v4457 = vrot.slane %v4350, 3
        %v4458 = vsel %vm4180, %v4453, %v4457
        %v4459 = vrot.slane %v4351, 3
        %v4460 = vrot.slane %v4353, 3
        %v4461 = vsel %vm4180, %v4459, %v4460
        %v4462 = vrot.slane %v4352, 3
        %v4463 = vrot.slane %v4354, 3
        %v4464 = vsel %vm4180, %v4462, %v4463
        %v4465 = vrot.slane %v4355, 3
        %v4466 = vsel %vm4180, %v4460, %v4465
        %v4467 = vrot.slane %v4356, 3
        %v4468 = vsel %vm4180, %v4463, %v4467
        %v4469 = vrot.slane %v4357, 3
        %v4470 = vrot.slane %v4359, 3
        %v4471 = vsel %vm4180, %v4469, %v4470
        %v4472 = vrot.slane %v4358, 3
        %v4473 = vrot.slane %v4360, 3
        %v4474 = vsel %vm4180, %v4472, %v4473
        %v4475 = vrot.slane %v4361, 3
        %v4476 = vsel %vm4180, %v4470, %v4475
        %v4477 = vrot.slane %v4362, 3
        %v4478 = vsel %vm4180, %v4473, %v4477
        %v4479 = vrot.slane %v4363, 3
        %v4480 = vrot.slane %v4365, 3
        %v4481 = vsel %vm4180, %v4479, %v4480
        %v4482 = vrot.slane %v4364, 3
        %v4483 = vrot.slane %v4366, 3
        %v4484 = vsel %vm4180, %v4482, %v4483
        %v4485 = vrot.slane %v4367, 3
        %v4486 = vsel %vm4180, %v4480, %v4485
        %v4487 = vrot.slane %v4368, 3
        %v4488 = vsel %vm4180, %v4483, %v4487
        %v4489 = vrot.slane %v4369, 3
        %v4490 = vrot.slane %v4371, 3
        %v4491 = vsel %vm4180, %v4489, %v4490
        %v4492 = vrot.slane %v4370, 3
        %v4493 = vrot.slane %v4372, 3
        %v4494 = vsel %vm4180, %v4492, %v4493
        %v4495 = vrot.slane %v4373, 3
        %v4496 = vsel %vm4180, %v4490, %v4495
        %v4497 = vrot.slane %v4374, 3
        %v4498 = vsel %vm4180, %v4493, %v4497
        %v4499 = vrot.slane %v4375, 3
        %v4500 = vrot.slane %v4377, 3
        %v4501 = vsel %vm4180, %v4499, %v4500
        %v4502 = vrot.slane %v4376, 3
        %v4503 = vrot.slane %v4378, 3
        %v4504 = vsel %vm4180, %v4502, %v4503
        %v4505 = vrot.slane %v4379, 3
        %v4506 = vsel %vm4180, %v4500, %v4505
        %v4507 = vrot.slane %v4380, 3
        %v4508 = vsel %vm4180, %v4503, %v4507
        %v4541 = vadd.f32 %v4293, %v4431
        %v4542 = vadd.f32 %v4294, %v4434
        %v4543 = vadd.f32 %v4295, %v4436
        %v4544 = vadd.f32 %v4296, %v4438
        %v4545 = vadd.f32 %v4297, %v4441
        %v4546 = vadd.f32 %v4298, %v4444
        %v4547 = vadd.f32 %v4299, %v4446
        %v4548 = vadd.f32 %v4300, %v4448
        %v4549 = vadd.f32 %v4301, %v4451
        %v4550 = vadd.f32 %v4302, %v4454
        %v4551 = vadd.f32 %v4303, %v4456
        %v4552 = vadd.f32 %v4304, %v4458
        %v4553 = vadd.f32 %v4305, %v4461
        %v4554 = vadd.f32 %v4306, %v4464
        %v4555 = vadd.f32 %v4307, %v4466
        %v4556 = vadd.f32 %v4308, %v4468
        %v4557 = vadd.f32 %v4309, %v4471
        %v4558 = vadd.f32 %v4310, %v4474
        %v4559 = vadd.f32 %v4311, %v4476
        %v4560 = vadd.f32 %v4312, %v4478
        %v4561 = vadd.f32 %v4313, %v4481
        %v4562 = vadd.f32 %v4314, %v4484
        %v4563 = vadd.f32 %v4315, %v4486
        %v4564 = vadd.f32 %v4316, %v4488
        %v4565 = vadd.f32 %v4317, %v4491
        %v4566 = vadd.f32 %v4318, %v4494
        %v4567 = vadd.f32 %v4319, %v4496
        %v4568 = vadd.f32 %v4320, %v4498
        %v4569 = vadd.f32 %v4321, %v4501
        %v4570 = vadd.f32 %v4322, %v4504
        %v4571 = vadd.f32 %v4323, %v4506
        %v4572 = vadd.f32 %v4324, %v4508
        %v4573 = vlaneseq
        %v4574 = vshrl.u32 %v4573, 7
        %v4575 = vsub.s32 5, %v4574
        %v4576 = vrot.slane %v1036, %v4575
        %v4577 = vlaneseq
        %v4578 = vshrl.u32 %v4577, 7
        %v4579 = vsub.s32 5, %v4578
        %v4580 = vrot.slane %v1037, %v4579
        %v4581 = vmul.f32 %v4036, %v4576
        %v4582 = vmul.f32 %v4037, %v4580
        %v4583 = vmul.f32 %v1052, %v4576
        %v4584 = vmul.f32 %v1053, %v4580
        %v4585 = vmul.f32 %v4038, %v4576
        %v4586 = vmul.f32 %v4039, %v4580
        %v4587 = vmul.f32 %v4040, %v4576
        %v4588 = vmul.f32 %v4041, %v4580
        %v4589 = vmul.f32 %v1056, %v4576
        %v4590 = vmul.f32 %v1057, %v4580
        %v4591 = vmul.f32 %v4042, %v4576
        %v4592 = vmul.f32 %v4043, %v4580
        %v4593 = vmul.f32 %v4044, %v4576
        %v4594 = vmul.f32 %v4045, %v4580
        %v4595 = vmul.f32 %v1060, %v4576
        %v4596 = vmul.f32 %v1061, %v4580
        %v4597 = vmul.f32 %v4046, %v4576
        %v4598 = vmul.f32 %v4047, %v4580
        %v4599 = vmul.f32 %v4048, %v4576
        %v4600 = vmul.f32 %v4049, %v4580
        %v4601 = vmul.f32 %v1064, %v4576
        %v4602 = vmul.f32 %v1065, %v4580
        %v4603 = vmul.f32 %v4050, %v4576
        %v4604 = vmul.f32 %v4051, %v4580
        %v4605 = vmul.f32 %v4052, %v4576
        %v4606 = vmul.f32 %v4053, %v4580
        %v4607 = vmul.f32 %v1068, %v4576
        %v4608 = vmul.f32 %v1069, %v4580
        %v4609 = vmul.f32 %v4054, %v4576
        %v4610 = vmul.f32 %v4055, %v4580
        %v4611 = vmul.f32 %v4056, %v4576
        %v4612 = vmul.f32 %v4057, %v4580
        %v4613 = vmul.f32 %v1072, %v4576
        %v4614 = vmul.f32 %v1073, %v4580
        %v4615 = vmul.f32 %v4058, %v4576
        %v4616 = vmul.f32 %v4059, %v4580
        %v4617 = vmul.f32 %v4060, %v4576
        %v4618 = vmul.f32 %v4061, %v4580
        %v4619 = vmul.f32 %v1076, %v4576
        %v4620 = vmul.f32 %v1077, %v4580
        %v4621 = vmul.f32 %v4062, %v4576
        %v4622 = vmul.f32 %v4063, %v4580
        %v4623 = vmul.f32 %v4064, %v4576
        %v4624 = vmul.f32 %v4065, %v4580
        %v4625 = vmul.f32 %v1080, %v4576
        %v4626 = vmul.f32 %v1081, %v4580
        %v4627 = vmul.f32 %v4066, %v4576
        %v4628 = vmul.f32 %v4067, %v4580
        %v4677 = vrot.slane %v4581, 3
        %v4678 = vrot.slane %v4583, 3
        %v4679 = vsel %vm4180, %v4677, %v4678
        %v4680 = vrot.slane %v4582, 3
        %v4681 = vrot.slane %v4584, 3
        %v4682 = vsel %vm4180, %v4680, %v4681
        %v4683 = vrot.slane %v4585, 3
        %v4684 = vsel %vm4180, %v4678, %v4683
        %v4685 = vrot.slane %v4586, 3
        %v4686 = vsel %vm4180, %v4681, %v4685
        %v4687 = vrot.slane %v4587, 3
        %v4688 = vrot.slane %v4589, 3
        %v4689 = vsel %vm4180, %v4687, %v4688
        %v4690 = vrot.slane %v4588, 3
        %v4691 = vrot.slane %v4590, 3
        %v4692 = vsel %vm4180, %v4690, %v4691
        %v4693 = vrot.slane %v4591, 3
        %v4694 = vsel %vm4180, %v4688, %v4693
        %v4695 = vrot.slane %v4592, 3
        %v4696 = vsel %vm4180, %v4691, %v4695
        %v4697 = vrot.slane %v4593, 3
        %v4698 = vrot.slane %v4595, 3
        %v4699 = vsel %vm4180, %v4697, %v4698
        %v4700 = vrot.slane %v4594, 3
        %v4701 = vrot.slane %v4596, 3
        %v4702 = vsel %vm4180, %v4700, %v4701
        %v4703 = vrot.slane %v4597, 3
        %v4704 = vsel %vm4180, %v4698, %v4703
        %v4705 = vrot.slane %v4598, 3
        %v4706 = vsel %vm4180, %v4701, %v4705
        %v4707 = vrot.slane %v4599, 3
        %v4708 = vrot.slane %v4601, 3
        %v4709 = vsel %vm4180, %v4707, %v4708
        %v4710 = vrot.slane %v4600, 3
        %v4711 = vrot.slane %v4602, 3
        %v4712 = vsel %vm4180, %v4710, %v4711
        %v4713 = vrot.slane %v4603, 3
        %v4714 = vsel %vm4180, %v4708, %v4713
        %v4715 = vrot.slane %v4604, 3
        %v4716 = vsel %vm4180, %v4711, %v4715
        %v4717 = vrot.slane %v4605, 3
        %v4718 = vrot.slane %v4607, 3
        %v4719 = vsel %vm4180, %v4717, %v4718
        %v4720 = vrot.slane %v4606, 3
        %v4721 = vrot.slane %v4608, 3
        %v4722 = vsel %vm4180, %v4720, %v4721
        %v4723 = vrot.slane %v4609, 3
        %v4724 = vsel %vm4180, %v4718, %v4723
        %v4725 = vrot.slane %v4610, 3
        %v4726 = vsel %vm4180, %v4721, %v4725
        %v4727 = vrot.slane %v4611, 3
        %v4728 = vrot.slane %v4613, 3
        %v4729 = vsel %vm4180, %v4727, %v4728
        %v4730 = vrot.slane %v4612, 3
        %v4731 = vrot.slane %v4614, 3
        %v4732 = vsel %vm4180, %v4730, %v4731
        %v4733 = vrot.slane %v4615, 3
        %v4734 = vsel %vm4180, %v4728, %v4733
        %v4735 = vrot.slane %v4616, 3
        %v4736 = vsel %vm4180, %v4731, %v4735
        %v4737 = vrot.slane %v4617, 3
        %v4738 = vrot.slane %v4619, 3
        %v4739 = vsel %vm4180, %v4737, %v4738
        %v4740 = vrot.slane %v4618, 3
        %v4741 = vrot.slane %v4620, 3
        %v4742 = vsel %vm4180, %v4740, %v4741
        %v4743 = vrot.slane %v4621, 3
        %v4744 = vsel %vm4180, %v4738, %v4743
        %v4745 = vrot.slane %v4622, 3
        %v4746 = vsel %vm4180, %v4741, %v4745
        %v4747 = vrot.slane %v4623, 3
        %v4748 = vrot.slane %v4625, 3
        %v4749 = vsel %vm4180, %v4747, %v4748
        %v4750 = vrot.slane %v4624, 3
        %v4751 = vrot.slane %v4626, 3
        %v4752 = vsel %vm4180, %v4750, %v4751
        %v4753 = vrot.slane %v4627, 3
        %v4754 = vsel %vm4180, %v4748, %v4753
        %v4755 = vrot.slane %v4628, 3
        %v4756 = vsel %vm4180, %v4751, %v4755
        %v4789 = vadd.f32 %v4541, %v4679
        %v4790 = vadd.f32 %v4542, %v4682
        %v4791 = vadd.f32 %v4543, %v4684
        %v4792 = vadd.f32 %v4544, %v4686
        %v4793 = vadd.f32 %v4545, %v4689
        %v4794 = vadd.f32 %v4546, %v4692
        %v4795 = vadd.f32 %v4547, %v4694
        %v4796 = vadd.f32 %v4548, %v4696
        %v4797 = vadd.f32 %v4549, %v4699
        %v4798 = vadd.f32 %v4550, %v4702
        %v4799 = vadd.f32 %v4551, %v4704
        %v4800 = vadd.f32 %v4552, %v4706
        %v4801 = vadd.f32 %v4553, %v4709
        %v4802 = vadd.f32 %v4554, %v4712
        %v4803 = vadd.f32 %v4555, %v4714
        %v4804 = vadd.f32 %v4556, %v4716
        %v4805 = vadd.f32 %v4557, %v4719
        %v4806 = vadd.f32 %v4558, %v4722
        %v4807 = vadd.f32 %v4559, %v4724
        %v4808 = vadd.f32 %v4560, %v4726
        %v4809 = vadd.f32 %v4561, %v4729
        %v4810 = vadd.f32 %v4562, %v4732
        %v4811 = vadd.f32 %v4563, %v4734
        %v4812 = vadd.f32 %v4564, %v4736
        %v4813 = vadd.f32 %v4565, %v4739
        %v4814 = vadd.f32 %v4566, %v4742
        %v4815 = vadd.f32 %v4567, %v4744
        %v4816 = vadd.f32 %v4568, %v4746
        %v4817 = vadd.f32 %v4569, %v4749
        %v4818 = vadd.f32 %v4570, %v4752
        %v4819 = vadd.f32 %v4571, %v4754
        %v4820 = vadd.f32 %v4572, %v4756
        %v4821 = vlaneseq
        %v4822 = vshrl.u32 %v4821, 7
        %v4823 = vsub.s32 2, %v4822
        %v4824 = vrot.slane %v1038, %v4823
        %v4825 = vlaneseq
        %v4826 = vshrl.u32 %v4825, 7
        %v4827 = vsub.s32 2, %v4826
        %v4828 = vrot.slane %v1039, %v4827
        %v4829 = vmul.f32 %v4040, %v4824
        %v4830 = vmul.f32 %v4041, %v4828
        %v4831 = vmul.f32 %v1056, %v4824
        %v4832 = vmul.f32 %v1057, %v4828
        %v4833 = vmul.f32 %v4042, %v4824
        %v4834 = vmul.f32 %v4043, %v4828
        %v4835 = vmul.f32 %v4044, %v4824
        %v4836 = vmul.f32 %v4045, %v4828
        %v4837 = vmul.f32 %v1060, %v4824
        %v4838 = vmul.f32 %v1061, %v4828
        %v4839 = vmul.f32 %v4046, %v4824
        %v4840 = vmul.f32 %v4047, %v4828
        %v4841 = vmul.f32 %v4048, %v4824
        %v4842 = vmul.f32 %v4049, %v4828
        %v4843 = vmul.f32 %v1064, %v4824
        %v4844 = vmul.f32 %v1065, %v4828
        %v4845 = vmul.f32 %v4050, %v4824
        %v4846 = vmul.f32 %v4051, %v4828
        %v4847 = vmul.f32 %v4052, %v4824
        %v4848 = vmul.f32 %v4053, %v4828
        %v4849 = vmul.f32 %v1068, %v4824
        %v4850 = vmul.f32 %v1069, %v4828
        %v4851 = vmul.f32 %v4054, %v4824
        %v4852 = vmul.f32 %v4055, %v4828
        %v4853 = vmul.f32 %v4056, %v4824
        %v4854 = vmul.f32 %v4057, %v4828
        %v4855 = vmul.f32 %v1072, %v4824
        %v4856 = vmul.f32 %v1073, %v4828
        %v4857 = vmul.f32 %v4058, %v4824
        %v4858 = vmul.f32 %v4059, %v4828
        %v4859 = vmul.f32 %v4060, %v4824
        %v4860 = vmul.f32 %v4061, %v4828
        %v4861 = vmul.f32 %v1076, %v4824
        %v4862 = vmul.f32 %v1077, %v4828
        %v4863 = vmul.f32 %v4062, %v4824
        %v4864 = vmul.f32 %v4063, %v4828
        %v4865 = vmul.f32 %v4064, %v4824
        %v4866 = vmul.f32 %v4065, %v4828
        %v4867 = vmul.f32 %v1080, %v4824
        %v4868 = vmul.f32 %v1081, %v4828
        %v4869 = vmul.f32 %v4066, %v4824
        %v4870 = vmul.f32 %v4067, %v4828
        %v4871 = vmul.f32 %v4068, %v4824
        %v4872 = vmul.f32 %v4069, %v4828
        %v4873 = vmul.f32 %v1084, %v4824
        %v4874 = vmul.f32 %v1085, %v4828
        %v4875 = vmul.f32 %v4070, %v4824
        %v4876 = vmul.f32 %v4071, %v4828
        %v4925 = vrot.slane %v4829, 3
        %v4926 = vrot.slane %v4831, 3
        %v4927 = vsel %vm4180, %v4925, %v4926
        %v4928 = vrot.slane %v4830, 3
        %v4929 = vrot.slane %v4832, 3
        %v4930 = vsel %vm4180, %v4928, %v4929
        %v4931 = vrot.slane %v4833, 3
        %v4932 = vsel %vm4180, %v4926, %v4931
        %v4933 = vrot.slane %v4834, 3
        %v4934 = vsel %vm4180, %v4929, %v4933
        %v4935 = vrot.slane %v4835, 3
        %v4936 = vrot.slane %v4837, 3
        %v4937 = vsel %vm4180, %v4935, %v4936
        %v4938 = vrot.slane %v4836, 3
        %v4939 = vrot.slane %v4838, 3
        %v4940 = vsel %vm4180, %v4938, %v4939
        %v4941 = vrot.slane %v4839, 3
        %v4942 = vsel %vm4180, %v4936, %v4941
        %v4943 = vrot.slane %v4840, 3
        %v4944 = vsel %vm4180, %v4939, %v4943
        %v4945 = vrot.slane %v4841, 3
        %v4946 = vrot.slane %v4843, 3
        %v4947 = vsel %vm4180, %v4945, %v4946
        %v4948 = vrot.slane %v4842, 3
        %v4949 = vrot.slane %v4844, 3
        %v4950 = vsel %vm4180, %v4948, %v4949
        %v4951 = vrot.slane %v4845, 3
        %v4952 = vsel %vm4180, %v4946, %v4951
        %v4953 = vrot.slane %v4846, 3
        %v4954 = vsel %vm4180, %v4949, %v4953
        %v4955 = vrot.slane %v4847, 3
        %v4956 = vrot.slane %v4849, 3
        %v4957 = vsel %vm4180, %v4955, %v4956
        %v4958 = vrot.slane %v4848, 3
        %v4959 = vrot.slane %v4850, 3
        %v4960 = vsel %vm4180, %v4958, %v4959
        %v4961 = vrot.slane %v4851, 3
        %v4962 = vsel %vm4180, %v4956, %v4961
        %v4963 = vrot.slane %v4852, 3
        %v4964 = vsel %vm4180, %v4959, %v4963
        %v4965 = vrot.slane %v4853, 3
        %v4966 = vrot.slane %v4855, 3
        %v4967 = vsel %vm4180, %v4965, %v4966
        %v4968 = vrot.slane %v4854, 3
        %v4969 = vrot.slane %v4856, 3
        %v4970 = vsel %vm4180, %v4968, %v4969
        %v4971 = vrot.slane %v4857, 3
        %v4972 = vsel %vm4180, %v4966, %v4971
        %v4973 = vrot.slane %v4858, 3
        %v4974 = vsel %vm4180, %v4969, %v4973
        %v4975 = vrot.slane %v4859, 3
        %v4976 = vrot.slane %v4861, 3
        %v4977 = vsel %vm4180, %v4975, %v4976
        %v4978 = vrot.slane %v4860, 3
        %v4979 = vrot.slane %v4862, 3
        %v4980 = vsel %vm4180, %v4978, %v4979
        %v4981 = vrot.slane %v4863, 3
        %v4982 = vsel %vm4180, %v4976, %v4981
        %v4983 = vrot.slane %v4864, 3
        %v4984 = vsel %vm4180, %v4979, %v4983
        %v4985 = vrot.slane %v4865, 3
        %v4986 = vrot.slane %v4867, 3
        %v4987 = vsel %vm4180, %v4985, %v4986
        %v4988 = vrot.slane %v4866, 3
        %v4989 = vrot.slane %v4868, 3
        %v4990 = vsel %vm4180, %v4988, %v4989
        %v4991 = vrot.slane %v4869, 3
        %v4992 = vsel %vm4180, %v4986, %v4991
        %v4993 = vrot.slane %v4870, 3
        %v4994 = vsel %vm4180, %v4989, %v4993
        %v4995 = vrot.slane %v4871, 3
        %v4996 = vrot.slane %v4873, 3
        %v4997 = vsel %vm4180, %v4995, %v4996
        %v4998 = vrot.slane %v4872, 3
        %v4999 = vrot.slane %v4874, 3
        %v5000 = vsel %vm4180, %v4998, %v4999
        %v5001 = vrot.slane %v4875, 3
        %v5002 = vsel %vm4180, %v4996, %v5001
        %v5003 = vrot.slane %v4876, 3
        %v5004 = vsel %vm4180, %v4999, %v5003
        %v5037 = vadd.f32 %v4789, %v4927
        %v5038 = vadd.f32 %v4790, %v4930
        %v5039 = vadd.f32 %v4791, %v4932
        %v5040 = vadd.f32 %v4792, %v4934
        %v5041 = vadd.f32 %v4793, %v4937
        %v5042 = vadd.f32 %v4794, %v4940
        %v5043 = vadd.f32 %v4795, %v4942
        %v5044 = vadd.f32 %v4796, %v4944
        %v5045 = vadd.f32 %v4797, %v4947
        %v5046 = vadd.f32 %v4798, %v4950
        %v5047 = vadd.f32 %v4799, %v4952
        %v5048 = vadd.f32 %v4800, %v4954
        %v5049 = vadd.f32 %v4801, %v4957
        %v5050 = vadd.f32 %v4802, %v4960
        %v5051 = vadd.f32 %v4803, %v4962
        %v5052 = vadd.f32 %v4804, %v4964
        %v5053 = vadd.f32 %v4805, %v4967
        %v5054 = vadd.f32 %v4806, %v4970
        %v5055 = vadd.f32 %v4807, %v4972
        %v5056 = vadd.f32 %v4808, %v4974
        %v5057 = vadd.f32 %v4809, %v4977
        %v5058 = vadd.f32 %v4810, %v4980
        %v5059 = vadd.f32 %v4811, %v4982
        %v5060 = vadd.f32 %v4812, %v4984
        %v5061 = vadd.f32 %v4813, %v4987
        %v5062 = vadd.f32 %v4814, %v4990
        %v5063 = vadd.f32 %v4815, %v4992
        %v5064 = vadd.f32 %v4816, %v4994
        %v5065 = vadd.f32 %v4817, %v4997
        %v5066 = vadd.f32 %v4818, %v5000
        %v5067 = vadd.f32 %v4819, %v5002
        %v5068 = vadd.f32 %v4820, %v5004
        %v5069 = vlaneseq
        %v5070 = vshrl.u32 %v5069, 7
        %v5071 = vsub.s32 7, %v5070
        %v5072 = vrot.slane %v1038, %v5071
        %v5073 = vlaneseq
        %v5074 = vshrl.u32 %v5073, 7
        %v5075 = vsub.s32 7, %v5074
        %v5076 = vrot.slane %v1039, %v5075
        %v5077 = vmul.f32 %v4044, %v5072
        %v5078 = vmul.f32 %v4045, %v5076
        %v5079 = vmul.f32 %v1060, %v5072
        %v5080 = vmul.f32 %v1061, %v5076
        %v5081 = vmul.f32 %v4046, %v5072
        %v5082 = vmul.f32 %v4047, %v5076
        %v5083 = vmul.f32 %v4048, %v5072
        %v5084 = vmul.f32 %v4049, %v5076
        %v5085 = vmul.f32 %v1064, %v5072
        %v5086 = vmul.f32 %v1065, %v5076
        %v5087 = vmul.f32 %v4050, %v5072
        %v5088 = vmul.f32 %v4051, %v5076
        %v5089 = vmul.f32 %v4052, %v5072
        %v5090 = vmul.f32 %v4053, %v5076
        %v5091 = vmul.f32 %v1068, %v5072
        %v5092 = vmul.f32 %v1069, %v5076
        %v5093 = vmul.f32 %v4054, %v5072
        %v5094 = vmul.f32 %v4055, %v5076
        %v5095 = vmul.f32 %v4056, %v5072
        %v5096 = vmul.f32 %v4057, %v5076
        %v5097 = vmul.f32 %v1072, %v5072
        %v5098 = vmul.f32 %v1073, %v5076
        %v5099 = vmul.f32 %v4058, %v5072
        %v5100 = vmul.f32 %v4059, %v5076
        %v5101 = vmul.f32 %v4060, %v5072
        %v5102 = vmul.f32 %v4061, %v5076
        %v5103 = vmul.f32 %v1076, %v5072
        %v5104 = vmul.f32 %v1077, %v5076
        %v5105 = vmul.f32 %v4062, %v5072
        %v5106 = vmul.f32 %v4063, %v5076
        %v5107 = vmul.f32 %v4064, %v5072
        %v5108 = vmul.f32 %v4065, %v5076
        %v5109 = vmul.f32 %v1080, %v5072
        %v5110 = vmul.f32 %v1081, %v5076
        %v5111 = vmul.f32 %v4066, %v5072
        %v5112 = vmul.f32 %v4067, %v5076
        %v5113 = vmul.f32 %v4068, %v5072
        %v5114 = vmul.f32 %v4069, %v5076
        %v5115 = vmul.f32 %v1084, %v5072
        %v5116 = vmul.f32 %v1085, %v5076
        %v5117 = vmul.f32 %v4070, %v5072
        %v5118 = vmul.f32 %v4071, %v5076
        %v5119 = vmul.f32 %v4072, %v5072
        %v5120 = vmul.f32 %v4073, %v5076
        %v5121 = vmul.f32 %v1088, %v5072
        %v5122 = vmul.f32 %v1089, %v5076
        %v5123 = vmul.f32 %v4074, %v5072
        %v5124 = vmul.f32 %v4075, %v5076
        %v5173 = vrot.slane %v5077, 3
        %v5174 = vrot.slane %v5079, 3
        %v5175 = vsel %vm4180, %v5173, %v5174
        %v5176 = vrot.slane %v5078, 3
        %v5177 = vrot.slane %v5080, 3
        %v5178 = vsel %vm4180, %v5176, %v5177
        %v5179 = vrot.slane %v5081, 3
        %v5180 = vsel %vm4180, %v5174, %v5179
        %v5181 = vrot.slane %v5082, 3
        %v5182 = vsel %vm4180, %v5177, %v5181
        %v5183 = vrot.slane %v5083, 3
        %v5184 = vrot.slane %v5085, 3
        %v5185 = vsel %vm4180, %v5183, %v5184
        %v5186 = vrot.slane %v5084, 3
        %v5187 = vrot.slane %v5086, 3
        %v5188 = vsel %vm4180, %v5186, %v5187
        %v5189 = vrot.slane %v5087, 3
        %v5190 = vsel %vm4180, %v5184, %v5189
        %v5191 = vrot.slane %v5088, 3
        %v5192 = vsel %vm4180, %v5187, %v5191
        %v5193 = vrot.slane %v5089, 3
        %v5194 = vrot.slane %v5091, 3
        %v5195 = vsel %vm4180, %v5193, %v5194
        %v5196 = vrot.slane %v5090, 3
        %v5197 = vrot.slane %v5092, 3
        %v5198 = vsel %vm4180, %v5196, %v5197
        %v5199 = vrot.slane %v5093, 3
        %v5200 = vsel %vm4180, %v5194, %v5199
        %v5201 = vrot.slane %v5094, 3
        %v5202 = vsel %vm4180, %v5197, %v5201
        %v5203 = vrot.slane %v5095, 3
        %v5204 = vrot.slane %v5097, 3
        %v5205 = vsel %vm4180, %v5203, %v5204
        %v5206 = vrot.slane %v5096, 3
        %v5207 = vrot.slane %v5098, 3
        %v5208 = vsel %vm4180, %v5206, %v5207
        %v5209 = vrot.slane %v5099, 3
        %v5210 = vsel %vm4180, %v5204, %v5209
        %v5211 = vrot.slane %v5100, 3
        %v5212 = vsel %vm4180, %v5207, %v5211
        %v5213 = vrot.slane %v5101, 3
        %v5214 = vrot.slane %v5103, 3
        %v5215 = vsel %vm4180, %v5213, %v5214
        %v5216 = vrot.slane %v5102, 3
        %v5217 = vrot.slane %v5104, 3
        %v5218 = vsel %vm4180, %v5216, %v5217
        %v5219 = vrot.slane %v5105, 3
        %v5220 = vsel %vm4180, %v5214, %v5219
        %v5221 = vrot.slane %v5106, 3
        %v5222 = vsel %vm4180, %v5217, %v5221
        %v5223 = vrot.slane %v5107, 3
        %v5224 = vrot.slane %v5109, 3
        %v5225 = vsel %vm4180, %v5223, %v5224
        %v5226 = vrot.slane %v5108, 3
        %v5227 = vrot.slane %v5110, 3
        %v5228 = vsel %vm4180, %v5226, %v5227
        %v5229 = vrot.slane %v5111, 3
        %v5230 = vsel %vm4180, %v5224, %v5229
        %v5231 = vrot.slane %v5112, 3
        %v5232 = vsel %vm4180, %v5227, %v5231
        %v5233 = vrot.slane %v5113, 3
        %v5234 = vrot.slane %v5115, 3
        %v5235 = vsel %vm4180, %v5233, %v5234
        %v5236 = vrot.slane %v5114, 3
        %v5237 = vrot.slane %v5116, 3
        %v5238 = vsel %vm4180, %v5236, %v5237
        %v5239 = vrot.slane %v5117, 3
        %v5240 = vsel %vm4180, %v5234, %v5239
        %v5241 = vrot.slane %v5118, 3
        %v5242 = vsel %vm4180, %v5237, %v5241
        %v5243 = vrot.slane %v5119, 3
        %v5244 = vrot.slane %v5121, 3
        %v5245 = vsel %vm4180, %v5243, %v5244
        %v5246 = vrot.slane %v5120, 3
        %v5247 = vrot.slane %v5122, 3
        %v5248 = vsel %vm4180, %v5246, %v5247
        %v5249 = vrot.slane %v5123, 3
        %v5250 = vsel %vm4180, %v5244, %v5249
        %v5251 = vrot.slane %v5124, 3
        %v5252 = vsel %vm4180, %v5247, %v5251
        %v5285 = vadd.f32 %v5037, %v5175
        %v5286 = vadd.f32 %v5038, %v5178
        %v5287 = vadd.f32 %v5039, %v5180
        %v5288 = vadd.f32 %v5040, %v5182
        %v5289 = vadd.f32 %v5041, %v5185
        %v5290 = vadd.f32 %v5042, %v5188
        %v5291 = vadd.f32 %v5043, %v5190
        %v5292 = vadd.f32 %v5044, %v5192
        %v5293 = vadd.f32 %v5045, %v5195
        %v5294 = vadd.f32 %v5046, %v5198
        %v5295 = vadd.f32 %v5047, %v5200
        %v5296 = vadd.f32 %v5048, %v5202
        %v5297 = vadd.f32 %v5049, %v5205
        %v5298 = vadd.f32 %v5050, %v5208
        %v5299 = vadd.f32 %v5051, %v5210
        %v5300 = vadd.f32 %v5052, %v5212
        %v5301 = vadd.f32 %v5053, %v5215
        %v5302 = vadd.f32 %v5054, %v5218
        %v5303 = vadd.f32 %v5055, %v5220
        %v5304 = vadd.f32 %v5056, %v5222
        %v5305 = vadd.f32 %v5057, %v5225
        %v5306 = vadd.f32 %v5058, %v5228
        %v5307 = vadd.f32 %v5059, %v5230
        %v5308 = vadd.f32 %v5060, %v5232
        %v5309 = vadd.f32 %v5061, %v5235
        %v5310 = vadd.f32 %v5062, %v5238
        %v5311 = vadd.f32 %v5063, %v5240
        %v5312 = vadd.f32 %v5064, %v5242
        %v5313 = vadd.f32 %v5065, %v5245
        %v5314 = vadd.f32 %v5066, %v5248
        %v5315 = vadd.f32 %v5067, %v5250
        %v5316 = vadd.f32 %v5068, %v5252
        %v5317 = vld [vmem:[#allocation2] sm:$0xf0]
        %v5318 = vld [vmem:[#allocation2 + $0x8] sm:$0xf0]
        %v5319 = vld [vmem:[#allocation2 + $0x20] sm:$0xf]
        %v5320 = vld [vmem:[#allocation2 + $0x28] sm:$0xf]
        %v5321 = vld [vmem:[#allocation2 + $0x30] sm:$0xf0]
        %v5322 = vld [vmem:[#allocation2 + $0x38] sm:$0xf0]
        %v5323 = vld [vmem:[#allocation2 + $0x50] sm:$0xf]
        %v5324 = vld [vmem:[#allocation2 + $0x58] sm:$0xf]
        %v5325 = vld [vmem:[#allocation2 + $0x60] sm:$0xf0]
        %v5326 = vld [vmem:[#allocation2 + $0x68] sm:$0xf0]
        %v5327 = vld [vmem:[#allocation2 + $0x80] sm:$0xf]
        %v5328 = vld [vmem:[#allocation2 + $0x88] sm:$0xf]
        %v5329 = vld [vmem:[#allocation2 + $0x90] sm:$0xf0]
        %v5330 = vld [vmem:[#allocation2 + $0x98] sm:$0xf0]
        %v5331 = vld [vmem:[#allocation2 + $0xb0] sm:$0xf]
        %v5332 = vld [vmem:[#allocation2 + $0xb8] sm:$0xf]
        %v5333 = vld [vmem:[#allocation2 + $0xc0] sm:$0xf0]
        %v5334 = vld [vmem:[#allocation2 + $0xc8] sm:$0xf0]
        %v5335 = vld [vmem:[#allocation2 + $0xe0] sm:$0xf]
        %v5336 = vld [vmem:[#allocation2 + $0xe8] sm:$0xf]
        %v5337 = vld [vmem:[#allocation2 + $0xf0] sm:$0xf0]
        %v5338 = vld [vmem:[#allocation2 + $0xf8] sm:$0xf0]
        %v5339 = vld [vmem:[#allocation2 + $0x110] sm:$0xf]
        %v5340 = vld [vmem:[#allocation2 + $0x118] sm:$0xf]
        %v5341 = vld [vmem:[#allocation2 + $0x120] sm:$0xf0]
        %v5342 = vld [vmem:[#allocation2 + $0x128] sm:$0xf0]
        %v5343 = vld [vmem:[#allocation2 + $0x140] sm:$0xf]
        %v5344 = vld [vmem:[#allocation2 + $0x148] sm:$0xf]
        %v5345 = vld [vmem:[#allocation2 + $0x150] sm:$0xf0]
        %v5346 = vld [vmem:[#allocation2 + $0x158] sm:$0xf0]
        %v5347 = vld [vmem:[#allocation2 + $0x170] sm:$0xf]
        %v5348 = vld [vmem:[#allocation2 + $0x178] sm:$0xf]
        %v5349 = vld [vmem:[#allocation2 + $0x180] sm:$0xf0]
        %v5350 = vld [vmem:[#allocation2 + $0x188] sm:$0xf0]
        %v5351 = vld [vmem:[#allocation2 + $0x1a0] sm:$0xf]
        %v5352 = vld [vmem:[#allocation2 + $0x1a8] sm:$0xf]
        %v5353 = vld [vmem:[#allocation2 + $0x1b0] sm:$0xf0]
        %v5354 = vld [vmem:[#allocation2 + $0x1b8] sm:$0xf0]
        %v5355 = vld [vmem:[#allocation2 + $0x1d0] sm:$0xf]
        %v5356 = vld [vmem:[#allocation2 + $0x1d8] sm:$0xf]
        %v5357 = vld [vmem:[#allocation2 + $0x1e0] sm:$0xf0]
        %v5358 = vld [vmem:[#allocation2 + $0x1e8] sm:$0xf0]
        %v5359 = vld [vmem:[#allocation2 + $0x200] sm:$0xf]
        %v5360 = vld [vmem:[#allocation2 + $0x208] sm:$0xf]
        %v5361 = vld [vmem:[#allocation2 + $0x210] sm:$0xf0]
        %v5362 = vld [vmem:[#allocation2 + $0x218] sm:$0xf0]
        %v5363 = vld [vmem:[#allocation2 + $0x230] sm:$0xf]
        %v5364 = vld [vmem:[#allocation2 + $0x238] sm:$0xf]
        %v5365 = vlaneseq
        %v5366 = vshrl.u32 %v5365, 7
        %v5367 = vsub.s32 4, %v5366
        %v5368 = vrot.slane %v1034, %v5367
        %v5369 = vlaneseq
        %v5370 = vshrl.u32 %v5369, 7
        %v5371 = vsub.s32 4, %v5370
        %v5372 = vrot.slane %v1035, %v5371
        %v5373 = vmul.f32 %v5317, %v5368
        %v5374 = vmul.f32 %v5318, %v5372
        %v5375 = vmul.f32 %v1044, %v5368
        %v5376 = vmul.f32 %v1045, %v5372
        %v5377 = vmul.f32 %v5319, %v5368
        %v5378 = vmul.f32 %v5320, %v5372
        %v5379 = vmul.f32 %v5321, %v5368
        %v5380 = vmul.f32 %v5322, %v5372
        %v5381 = vmul.f32 %v1048, %v5368
        %v5382 = vmul.f32 %v1049, %v5372
        %v5383 = vmul.f32 %v5323, %v5368
        %v5384 = vmul.f32 %v5324, %v5372
        %v5385 = vmul.f32 %v5325, %v5368
        %v5386 = vmul.f32 %v5326, %v5372
        %v5387 = vmul.f32 %v1052, %v5368
        %v5388 = vmul.f32 %v1053, %v5372
        %v5389 = vmul.f32 %v5327, %v5368
        %v5390 = vmul.f32 %v5328, %v5372
        %v5391 = vmul.f32 %v5329, %v5368
        %v5392 = vmul.f32 %v5330, %v5372
        %v5393 = vmul.f32 %v1056, %v5368
        %v5394 = vmul.f32 %v1057, %v5372
        %v5395 = vmul.f32 %v5331, %v5368
        %v5396 = vmul.f32 %v5332, %v5372
        %v5397 = vmul.f32 %v5333, %v5368
        %v5398 = vmul.f32 %v5334, %v5372
        %v5399 = vmul.f32 %v1060, %v5368
        %v5400 = vmul.f32 %v1061, %v5372
        %v5401 = vmul.f32 %v5335, %v5368
        %v5402 = vmul.f32 %v5336, %v5372
        %v5403 = vmul.f32 %v5337, %v5368
        %v5404 = vmul.f32 %v5338, %v5372
        %v5405 = vmul.f32 %v1064, %v5368
        %v5406 = vmul.f32 %v1065, %v5372
        %v5407 = vmul.f32 %v5339, %v5368
        %v5408 = vmul.f32 %v5340, %v5372
        %v5409 = vmul.f32 %v5341, %v5368
        %v5410 = vmul.f32 %v5342, %v5372
        %v5411 = vmul.f32 %v1068, %v5368
        %v5412 = vmul.f32 %v1069, %v5372
        %v5413 = vmul.f32 %v5343, %v5368
        %v5414 = vmul.f32 %v5344, %v5372
        %v5415 = vmul.f32 %v5345, %v5368
        %v5416 = vmul.f32 %v5346, %v5372
        %v5417 = vmul.f32 %v1072, %v5368
        %v5418 = vmul.f32 %v1073, %v5372
        %v5419 = vmul.f32 %v5347, %v5368
        %v5420 = vmul.f32 %v5348, %v5372
        %vm5469 = vcmask 1043456
        %v5470 = vrot.slane %v5373, 4
        %v5471 = vrot.slane %v5375, 4
        %v5472 = vsel %vm5469, %v5470, %v5471
        %v5473 = vrot.slane %v5374, 4
        %v5474 = vrot.slane %v5376, 4
        %v5475 = vsel %vm5469, %v5473, %v5474
        %v5476 = vrot.slane %v5377, 4
        %v5477 = vsel %vm5469, %v5471, %v5476
        %v5478 = vrot.slane %v5378, 4
        %v5479 = vsel %vm5469, %v5474, %v5478
        %v5480 = vrot.slane %v5379, 4
        %v5481 = vrot.slane %v5381, 4
        %v5482 = vsel %vm5469, %v5480, %v5481
        %v5483 = vrot.slane %v5380, 4
        %v5484 = vrot.slane %v5382, 4
        %v5485 = vsel %vm5469, %v5483, %v5484
        %v5486 = vrot.slane %v5383, 4
        %v5487 = vsel %vm5469, %v5481, %v5486
        %v5488 = vrot.slane %v5384, 4
        %v5489 = vsel %vm5469, %v5484, %v5488
        %v5490 = vrot.slane %v5385, 4
        %v5491 = vrot.slane %v5387, 4
        %v5492 = vsel %vm5469, %v5490, %v5491
        %v5493 = vrot.slane %v5386, 4
        %v5494 = vrot.slane %v5388, 4
        %v5495 = vsel %vm5469, %v5493, %v5494
        %v5496 = vrot.slane %v5389, 4
        %v5497 = vsel %vm5469, %v5491, %v5496
        %v5498 = vrot.slane %v5390, 4
        %v5499 = vsel %vm5469, %v5494, %v5498
        %v5500 = vrot.slane %v5391, 4
        %v5501 = vrot.slane %v5393, 4
        %v5502 = vsel %vm5469, %v5500, %v5501
        %v5503 = vrot.slane %v5392, 4
        %v5504 = vrot.slane %v5394, 4
        %v5505 = vsel %vm5469, %v5503, %v5504
        %v5506 = vrot.slane %v5395, 4
        %v5507 = vsel %vm5469, %v5501, %v5506
        %v5508 = vrot.slane %v5396, 4
        %v5509 = vsel %vm5469, %v5504, %v5508
        %v5510 = vrot.slane %v5397, 4
        %v5511 = vrot.slane %v5399, 4
        %v5512 = vsel %vm5469, %v5510, %v5511
        %v5513 = vrot.slane %v5398, 4
        %v5514 = vrot.slane %v5400, 4
        %v5515 = vsel %vm5469, %v5513, %v5514
        %v5516 = vrot.slane %v5401, 4
        %v5517 = vsel %vm5469, %v5511, %v5516
        %v5518 = vrot.slane %v5402, 4
        %v5519 = vsel %vm5469, %v5514, %v5518
        %v5520 = vrot.slane %v5403, 4
        %v5521 = vrot.slane %v5405, 4
        %v5522 = vsel %vm5469, %v5520, %v5521
        %v5523 = vrot.slane %v5404, 4
        %v5524 = vrot.slane %v5406, 4
        %v5525 = vsel %vm5469, %v5523, %v5524
        %v5526 = vrot.slane %v5407, 4
        %v5527 = vsel %vm5469, %v5521, %v5526
        %v5528 = vrot.slane %v5408, 4
        %v5529 = vsel %vm5469, %v5524, %v5528
        %v5530 = vrot.slane %v5409, 4
        %v5531 = vrot.slane %v5411, 4
        %v5532 = vsel %vm5469, %v5530, %v5531
        %v5533 = vrot.slane %v5410, 4
        %v5534 = vrot.slane %v5412, 4
        %v5535 = vsel %vm5469, %v5533, %v5534
        %v5536 = vrot.slane %v5413, 4
        %v5537 = vsel %vm5469, %v5531, %v5536
        %v5538 = vrot.slane %v5414, 4
        %v5539 = vsel %vm5469, %v5534, %v5538
        %v5540 = vrot.slane %v5415, 4
        %v5541 = vrot.slane %v5417, 4
        %v5542 = vsel %vm5469, %v5540, %v5541
        %v5543 = vrot.slane %v5416, 4
        %v5544 = vrot.slane %v5418, 4
        %v5545 = vsel %vm5469, %v5543, %v5544
        %v5546 = vrot.slane %v5419, 4
        %v5547 = vsel %vm5469, %v5541, %v5546
        %v5548 = vrot.slane %v5420, 4
        %v5549 = vsel %vm5469, %v5544, %v5548
        %v5582 = vadd.f32 %v5285, %v5472
        %v5583 = vadd.f32 %v5286, %v5475
        %v5584 = vadd.f32 %v5287, %v5477
        %v5585 = vadd.f32 %v5288, %v5479
        %v5586 = vadd.f32 %v5289, %v5482
        %v5587 = vadd.f32 %v5290, %v5485
        %v5588 = vadd.f32 %v5291, %v5487
        %v5589 = vadd.f32 %v5292, %v5489
        %v5590 = vadd.f32 %v5293, %v5492
        %v5591 = vadd.f32 %v5294, %v5495
        %v5592 = vadd.f32 %v5295, %v5497
        %v5593 = vadd.f32 %v5296, %v5499
        %v5594 = vadd.f32 %v5297, %v5502
        %v5595 = vadd.f32 %v5298, %v5505
        %v5596 = vadd.f32 %v5299, %v5507
        %v5597 = vadd.f32 %v5300, %v5509
        %v5598 = vadd.f32 %v5301, %v5512
        %v5599 = vadd.f32 %v5302, %v5515
        %v5600 = vadd.f32 %v5303, %v5517
        %v5601 = vadd.f32 %v5304, %v5519
        %v5602 = vadd.f32 %v5305, %v5522
        %v5603 = vadd.f32 %v5306, %v5525
        %v5604 = vadd.f32 %v5307, %v5527
        %v5605 = vadd.f32 %v5308, %v5529
        %v5606 = vadd.f32 %v5309, %v5532
        %v5607 = vadd.f32 %v5310, %v5535
        %v5608 = vadd.f32 %v5311, %v5537
        %v5609 = vadd.f32 %v5312, %v5539
        %v5610 = vadd.f32 %v5313, %v5542
        %v5611 = vadd.f32 %v5314, %v5545
        %v5612 = vadd.f32 %v5315, %v5547
        %v5613 = vadd.f32 %v5316, %v5549
        %v5614 = vlaneseq
        %v5615 = vshrl.u32 %v5614, 7
        %v5616 = vsub.s32 1, %v5615
        %v5617 = vrot.slane %v1036, %v5616
        %v5618 = vlaneseq
        %v5619 = vshrl.u32 %v5618, 7
        %v5620 = vsub.s32 1, %v5619
        %v5621 = vrot.slane %v1037, %v5620
        %v5622 = vmul.f32 %v5321, %v5617
        %v5623 = vmul.f32 %v5322, %v5621
        %v5624 = vmul.f32 %v1048, %v5617
        %v5625 = vmul.f32 %v1049, %v5621
        %v5626 = vmul.f32 %v5323, %v5617
        %v5627 = vmul.f32 %v5324, %v5621
        %v5628 = vmul.f32 %v5325, %v5617
        %v5629 = vmul.f32 %v5326, %v5621
        %v5630 = vmul.f32 %v1052, %v5617
        %v5631 = vmul.f32 %v1053, %v5621
        %v5632 = vmul.f32 %v5327, %v5617
        %v5633 = vmul.f32 %v5328, %v5621
        %v5634 = vmul.f32 %v5329, %v5617
        %v5635 = vmul.f32 %v5330, %v5621
        %v5636 = vmul.f32 %v1056, %v5617
        %v5637 = vmul.f32 %v1057, %v5621
        %v5638 = vmul.f32 %v5331, %v5617
        %v5639 = vmul.f32 %v5332, %v5621
        %v5640 = vmul.f32 %v5333, %v5617
        %v5641 = vmul.f32 %v5334, %v5621
        %v5642 = vmul.f32 %v1060, %v5617
        %v5643 = vmul.f32 %v1061, %v5621
        %v5644 = vmul.f32 %v5335, %v5617
        %v5645 = vmul.f32 %v5336, %v5621
        %v5646 = vmul.f32 %v5337, %v5617
        %v5647 = vmul.f32 %v5338, %v5621
        %v5648 = vmul.f32 %v1064, %v5617
        %v5649 = vmul.f32 %v1065, %v5621
        %v5650 = vmul.f32 %v5339, %v5617
        %v5651 = vmul.f32 %v5340, %v5621
        %v5652 = vmul.f32 %v5341, %v5617
        %v5653 = vmul.f32 %v5342, %v5621
        %v5654 = vmul.f32 %v1068, %v5617
        %v5655 = vmul.f32 %v1069, %v5621
        %v5656 = vmul.f32 %v5343, %v5617
        %v5657 = vmul.f32 %v5344, %v5621
        %v5658 = vmul.f32 %v5345, %v5617
        %v5659 = vmul.f32 %v5346, %v5621
        %v5660 = vmul.f32 %v1072, %v5617
        %v5661 = vmul.f32 %v1073, %v5621
        %v5662 = vmul.f32 %v5347, %v5617
        %v5663 = vmul.f32 %v5348, %v5621
        %v5664 = vmul.f32 %v5349, %v5617
        %v5665 = vmul.f32 %v5350, %v5621
        %v5666 = vmul.f32 %v1076, %v5617
        %v5667 = vmul.f32 %v1077, %v5621
        %v5668 = vmul.f32 %v5351, %v5617
        %v5669 = vmul.f32 %v5352, %v5621
        %v5718 = vrot.slane %v5622, 4
        %v5719 = vrot.slane %v5624, 4
        %v5720 = vsel %vm5469, %v5718, %v5719
        %v5721 = vrot.slane %v5623, 4
        %v5722 = vrot.slane %v5625, 4
        %v5723 = vsel %vm5469, %v5721, %v5722
        %v5724 = vrot.slane %v5626, 4
        %v5725 = vsel %vm5469, %v5719, %v5724
        %v5726 = vrot.slane %v5627, 4
        %v5727 = vsel %vm5469, %v5722, %v5726
        %v5728 = vrot.slane %v5628, 4
        %v5729 = vrot.slane %v5630, 4
        %v5730 = vsel %vm5469, %v5728, %v5729
        %v5731 = vrot.slane %v5629, 4
        %v5732 = vrot.slane %v5631, 4
        %v5733 = vsel %vm5469, %v5731, %v5732
        %v5734 = vrot.slane %v5632, 4
        %v5735 = vsel %vm5469, %v5729, %v5734
        %v5736 = vrot.slane %v5633, 4
        %v5737 = vsel %vm5469, %v5732, %v5736
        %v5738 = vrot.slane %v5634, 4
        %v5739 = vrot.slane %v5636, 4
        %v5740 = vsel %vm5469, %v5738, %v5739
        %v5741 = vrot.slane %v5635, 4
        %v5742 = vrot.slane %v5637, 4
        %v5743 = vsel %vm5469, %v5741, %v5742
        %v5744 = vrot.slane %v5638, 4
        %v5745 = vsel %vm5469, %v5739, %v5744
        %v5746 = vrot.slane %v5639, 4
        %v5747 = vsel %vm5469, %v5742, %v5746
        %v5748 = vrot.slane %v5640, 4
        %v5749 = vrot.slane %v5642, 4
        %v5750 = vsel %vm5469, %v5748, %v5749
        %v5751 = vrot.slane %v5641, 4
        %v5752 = vrot.slane %v5643, 4
        %v5753 = vsel %vm5469, %v5751, %v5752
        %v5754 = vrot.slane %v5644, 4
        %v5755 = vsel %vm5469, %v5749, %v5754
        %v5756 = vrot.slane %v5645, 4
        %v5757 = vsel %vm5469, %v5752, %v5756
        %v5758 = vrot.slane %v5646, 4
        %v5759 = vrot.slane %v5648, 4
        %v5760 = vsel %vm5469, %v5758, %v5759
        %v5761 = vrot.slane %v5647, 4
        %v5762 = vrot.slane %v5649, 4
        %v5763 = vsel %vm5469, %v5761, %v5762
        %v5764 = vrot.slane %v5650, 4
        %v5765 = vsel %vm5469, %v5759, %v5764
        %v5766 = vrot.slane %v5651, 4
        %v5767 = vsel %vm5469, %v5762, %v5766
        %v5768 = vrot.slane %v5652, 4
        %v5769 = vrot.slane %v5654, 4
        %v5770 = vsel %vm5469, %v5768, %v5769
        %v5771 = vrot.slane %v5653, 4
        %v5772 = vrot.slane %v5655, 4
        %v5773 = vsel %vm5469, %v5771, %v5772
        %v5774 = vrot.slane %v5656, 4
        %v5775 = vsel %vm5469, %v5769, %v5774
        %v5776 = vrot.slane %v5657, 4
        %v5777 = vsel %vm5469, %v5772, %v5776
        %v5778 = vrot.slane %v5658, 4
        %v5779 = vrot.slane %v5660, 4
        %v5780 = vsel %vm5469, %v5778, %v5779
        %v5781 = vrot.slane %v5659, 4
        %v5782 = vrot.slane %v5661, 4
        %v5783 = vsel %vm5469, %v5781, %v5782
        %v5784 = vrot.slane %v5662, 4
        %v5785 = vsel %vm5469, %v5779, %v5784
        %v5786 = vrot.slane %v5663, 4
        %v5787 = vsel %vm5469, %v5782, %v5786
        %v5788 = vrot.slane %v5664, 4
        %v5789 = vrot.slane %v5666, 4
        %v5790 = vsel %vm5469, %v5788, %v5789
        %v5791 = vrot.slane %v5665, 4
        %v5792 = vrot.slane %v5667, 4
        %v5793 = vsel %vm5469, %v5791, %v5792
        %v5794 = vrot.slane %v5668, 4
        %v5795 = vsel %vm5469, %v5789, %v5794
        %v5796 = vrot.slane %v5669, 4
        %v5797 = vsel %vm5469, %v5792, %v5796
        %v5830 = vadd.f32 %v5582, %v5720
        %v5831 = vadd.f32 %v5583, %v5723
        %v5832 = vadd.f32 %v5584, %v5725
        %v5833 = vadd.f32 %v5585, %v5727
        %v5834 = vadd.f32 %v5586, %v5730
        %v5835 = vadd.f32 %v5587, %v5733
        %v5836 = vadd.f32 %v5588, %v5735
        %v5837 = vadd.f32 %v5589, %v5737
        %v5838 = vadd.f32 %v5590, %v5740
        %v5839 = vadd.f32 %v5591, %v5743
        %v5840 = vadd.f32 %v5592, %v5745
        %v5841 = vadd.f32 %v5593, %v5747
        %v5842 = vadd.f32 %v5594, %v5750
        %v5843 = vadd.f32 %v5595, %v5753
        %v5844 = vadd.f32 %v5596, %v5755
        %v5845 = vadd.f32 %v5597, %v5757
        %v5846 = vadd.f32 %v5598, %v5760
        %v5847 = vadd.f32 %v5599, %v5763
        %v5848 = vadd.f32 %v5600, %v5765
        %v5849 = vadd.f32 %v5601, %v5767
        %v5850 = vadd.f32 %v5602, %v5770
        %v5851 = vadd.f32 %v5603, %v5773
        %v5852 = vadd.f32 %v5604, %v5775
        %v5853 = vadd.f32 %v5605, %v5777
        %v5854 = vadd.f32 %v5606, %v5780
        %v5855 = vadd.f32 %v5607, %v5783
        %v5856 = vadd.f32 %v5608, %v5785
        %v5857 = vadd.f32 %v5609, %v5787
        %v5858 = vadd.f32 %v5610, %v5790
        %v5859 = vadd.f32 %v5611, %v5793
        %v5860 = vadd.f32 %v5612, %v5795
        %v5861 = vadd.f32 %v5613, %v5797
        %v5862 = vlaneseq
        %v5863 = vshrl.u32 %v5862, 7
        %v5864 = vsub.s32 6, %v5863
        %v5865 = vrot.slane %v1036, %v5864
        %v5866 = vlaneseq
        %v5867 = vshrl.u32 %v5866, 7
        %v5868 = vsub.s32 6, %v5867
        %v5869 = vrot.slane %v1037, %v5868
        %v5870 = vmul.f32 %v5325, %v5865
        %v5871 = vmul.f32 %v5326, %v5869
        %v5872 = vmul.f32 %v1052, %v5865
        %v5873 = vmul.f32 %v1053, %v5869
        %v5874 = vmul.f32 %v5327, %v5865
        %v5875 = vmul.f32 %v5328, %v5869
        %v5876 = vmul.f32 %v5329, %v5865
        %v5877 = vmul.f32 %v5330, %v5869
        %v5878 = vmul.f32 %v1056, %v5865
        %v5879 = vmul.f32 %v1057, %v5869
        %v5880 = vmul.f32 %v5331, %v5865
        %v5881 = vmul.f32 %v5332, %v5869
        %v5882 = vmul.f32 %v5333, %v5865
        %v5883 = vmul.f32 %v5334, %v5869
        %v5884 = vmul.f32 %v1060, %v5865
        %v5885 = vmul.f32 %v1061, %v5869
        %v5886 = vmul.f32 %v5335, %v5865
        %v5887 = vmul.f32 %v5336, %v5869
        %v5888 = vmul.f32 %v5337, %v5865
        %v5889 = vmul.f32 %v5338, %v5869
        %v5890 = vmul.f32 %v1064, %v5865
        %v5891 = vmul.f32 %v1065, %v5869
        %v5892 = vmul.f32 %v5339, %v5865
        %v5893 = vmul.f32 %v5340, %v5869
        %v5894 = vmul.f32 %v5341, %v5865
        %v5895 = vmul.f32 %v5342, %v5869
        %v5896 = vmul.f32 %v1068, %v5865
        %v5897 = vmul.f32 %v1069, %v5869
        %v5898 = vmul.f32 %v5343, %v5865
        %v5899 = vmul.f32 %v5344, %v5869
        %v5900 = vmul.f32 %v5345, %v5865
        %v5901 = vmul.f32 %v5346, %v5869
        %v5902 = vmul.f32 %v1072, %v5865
        %v5903 = vmul.f32 %v1073, %v5869
        %v5904 = vmul.f32 %v5347, %v5865
        %v5905 = vmul.f32 %v5348, %v5869
        %v5906 = vmul.f32 %v5349, %v5865
        %v5907 = vmul.f32 %v5350, %v5869
        %v5908 = vmul.f32 %v1076, %v5865
        %v5909 = vmul.f32 %v1077, %v5869
        %v5910 = vmul.f32 %v5351, %v5865
        %v5911 = vmul.f32 %v5352, %v5869
        %v5912 = vmul.f32 %v5353, %v5865
        %v5913 = vmul.f32 %v5354, %v5869
        %v5914 = vmul.f32 %v1080, %v5865
        %v5915 = vmul.f32 %v1081, %v5869
        %v5916 = vmul.f32 %v5355, %v5865
        %v5917 = vmul.f32 %v5356, %v5869
        %v5966 = vrot.slane %v5870, 4
        %v5967 = vrot.slane %v5872, 4
        %v5968 = vsel %vm5469, %v5966, %v5967
        %v5969 = vrot.slane %v5871, 4
        %v5970 = vrot.slane %v5873, 4
        %v5971 = vsel %vm5469, %v5969, %v5970
        %v5972 = vrot.slane %v5874, 4
        %v5973 = vsel %vm5469, %v5967, %v5972
        %v5974 = vrot.slane %v5875, 4
        %v5975 = vsel %vm5469, %v5970, %v5974
        %v5976 = vrot.slane %v5876, 4
        %v5977 = vrot.slane %v5878, 4
        %v5978 = vsel %vm5469, %v5976, %v5977
        %v5979 = vrot.slane %v5877, 4
        %v5980 = vrot.slane %v5879, 4
        %v5981 = vsel %vm5469, %v5979, %v5980
        %v5982 = vrot.slane %v5880, 4
        %v5983 = vsel %vm5469, %v5977, %v5982
        %v5984 = vrot.slane %v5881, 4
        %v5985 = vsel %vm5469, %v5980, %v5984
        %v5986 = vrot.slane %v5882, 4
        %v5987 = vrot.slane %v5884, 4
        %v5988 = vsel %vm5469, %v5986, %v5987
        %v5989 = vrot.slane %v5883, 4
        %v5990 = vrot.slane %v5885, 4
        %v5991 = vsel %vm5469, %v5989, %v5990
        %v5992 = vrot.slane %v5886, 4
        %v5993 = vsel %vm5469, %v5987, %v5992
        %v5994 = vrot.slane %v5887, 4
        %v5995 = vsel %vm5469, %v5990, %v5994
        %v5996 = vrot.slane %v5888, 4
        %v5997 = vrot.slane %v5890, 4
        %v5998 = vsel %vm5469, %v5996, %v5997
        %v5999 = vrot.slane %v5889, 4
        %v6000 = vrot.slane %v5891, 4
        %v6001 = vsel %vm5469, %v5999, %v6000
        %v6002 = vrot.slane %v5892, 4
        %v6003 = vsel %vm5469, %v5997, %v6002
        %v6004 = vrot.slane %v5893, 4
        %v6005 = vsel %vm5469, %v6000, %v6004
        %v6006 = vrot.slane %v5894, 4
        %v6007 = vrot.slane %v5896, 4
        %v6008 = vsel %vm5469, %v6006, %v6007
        %v6009 = vrot.slane %v5895, 4
        %v6010 = vrot.slane %v5897, 4
        %v6011 = vsel %vm5469, %v6009, %v6010
        %v6012 = vrot.slane %v5898, 4
        %v6013 = vsel %vm5469, %v6007, %v6012
        %v6014 = vrot.slane %v5899, 4
        %v6015 = vsel %vm5469, %v6010, %v6014
        %v6016 = vrot.slane %v5900, 4
        %v6017 = vrot.slane %v5902, 4
        %v6018 = vsel %vm5469, %v6016, %v6017
        %v6019 = vrot.slane %v5901, 4
        %v6020 = vrot.slane %v5903, 4
        %v6021 = vsel %vm5469, %v6019, %v6020
        %v6022 = vrot.slane %v5904, 4
        %v6023 = vsel %vm5469, %v6017, %v6022
        %v6024 = vrot.slane %v5905, 4
        %v6025 = vsel %vm5469, %v6020, %v6024
        %v6026 = vrot.slane %v5906, 4
        %v6027 = vrot.slane %v5908, 4
        %v6028 = vsel %vm5469, %v6026, %v6027
        %v6029 = vrot.slane %v5907, 4
        %v6030 = vrot.slane %v5909, 4
        %v6031 = vsel %vm5469, %v6029, %v6030
        %v6032 = vrot.slane %v5910, 4
        %v6033 = vsel %vm5469, %v6027, %v6032
        %v6034 = vrot.slane %v5911, 4
        %v6035 = vsel %vm5469, %v6030, %v6034
        %v6036 = vrot.slane %v5912, 4
        %v6037 = vrot.slane %v5914, 4
        %v6038 = vsel %vm5469, %v6036, %v6037
        %v6039 = vrot.slane %v5913, 4
        %v6040 = vrot.slane %v5915, 4
        %v6041 = vsel %vm5469, %v6039, %v6040
        %v6042 = vrot.slane %v5916, 4
        %v6043 = vsel %vm5469, %v6037, %v6042
        %v6044 = vrot.slane %v5917, 4
        %v6045 = vsel %vm5469, %v6040, %v6044
        %v6078 = vadd.f32 %v5830, %v5968
        %v6079 = vadd.f32 %v5831, %v5971
        %v6080 = vadd.f32 %v5832, %v5973
        %v6081 = vadd.f32 %v5833, %v5975
        %v6082 = vadd.f32 %v5834, %v5978
        %v6083 = vadd.f32 %v5835, %v5981
        %v6084 = vadd.f32 %v5836, %v5983
        %v6085 = vadd.f32 %v5837, %v5985
        %v6086 = vadd.f32 %v5838, %v5988
        %v6087 = vadd.f32 %v5839, %v5991
        %v6088 = vadd.f32 %v5840, %v5993
        %v6089 = vadd.f32 %v5841, %v5995
        %v6090 = vadd.f32 %v5842, %v5998
        %v6091 = vadd.f32 %v5843, %v6001
        %v6092 = vadd.f32 %v5844, %v6003
        %v6093 = vadd.f32 %v5845, %v6005
        %v6094 = vadd.f32 %v5846, %v6008
        %v6095 = vadd.f32 %v5847, %v6011
        %v6096 = vadd.f32 %v5848, %v6013
        %v6097 = vadd.f32 %v5849, %v6015
        %v6098 = vadd.f32 %v5850, %v6018
        %v6099 = vadd.f32 %v5851, %v6021
        %v6100 = vadd.f32 %v5852, %v6023
        %v6101 = vadd.f32 %v5853, %v6025
        %v6102 = vadd.f32 %v5854, %v6028
        %v6103 = vadd.f32 %v5855, %v6031
        %v6104 = vadd.f32 %v5856, %v6033
        %v6105 = vadd.f32 %v5857, %v6035
        %v6106 = vadd.f32 %v5858, %v6038
        %v6107 = vadd.f32 %v5859, %v6041
        %v6108 = vadd.f32 %v5860, %v6043
        %v6109 = vadd.f32 %v5861, %v6045
        %v6110 = vlaneseq
        %v6111 = vshrl.u32 %v6110, 7
        %v6112 = vsub.s32 3, %v6111
        %v6113 = vrot.slane %v1038, %v6112
        %v6114 = vlaneseq
        %v6115 = vshrl.u32 %v6114, 7
        %v6116 = vsub.s32 3, %v6115
        %v6117 = vrot.slane %v1039, %v6116
        %v6118 = vmul.f32 %v5329, %v6113
        %v6119 = vmul.f32 %v5330, %v6117
        %v6120 = vmul.f32 %v1056, %v6113
        %v6121 = vmul.f32 %v1057, %v6117
        %v6122 = vmul.f32 %v5331, %v6113
        %v6123 = vmul.f32 %v5332, %v6117
        %v6124 = vmul.f32 %v5333, %v6113
        %v6125 = vmul.f32 %v5334, %v6117
        %v6126 = vmul.f32 %v1060, %v6113
        %v6127 = vmul.f32 %v1061, %v6117
        %v6128 = vmul.f32 %v5335, %v6113
        %v6129 = vmul.f32 %v5336, %v6117
        %v6130 = vmul.f32 %v5337, %v6113
        %v6131 = vmul.f32 %v5338, %v6117
        %v6132 = vmul.f32 %v1064, %v6113
        %v6133 = vmul.f32 %v1065, %v6117
        %v6134 = vmul.f32 %v5339, %v6113
        %v6135 = vmul.f32 %v5340, %v6117
        %v6136 = vmul.f32 %v5341, %v6113
        %v6137 = vmul.f32 %v5342, %v6117
        %v6138 = vmul.f32 %v1068, %v6113
        %v6139 = vmul.f32 %v1069, %v6117
        %v6140 = vmul.f32 %v5343, %v6113
        %v6141 = vmul.f32 %v5344, %v6117
        %v6142 = vmul.f32 %v5345, %v6113
        %v6143 = vmul.f32 %v5346, %v6117
        %v6144 = vmul.f32 %v1072, %v6113
        %v6145 = vmul.f32 %v1073, %v6117
        %v6146 = vmul.f32 %v5347, %v6113
        %v6147 = vmul.f32 %v5348, %v6117
        %v6148 = vmul.f32 %v5349, %v6113
        %v6149 = vmul.f32 %v5350, %v6117
        %v6150 = vmul.f32 %v1076, %v6113
        %v6151 = vmul.f32 %v1077, %v6117
        %v6152 = vmul.f32 %v5351, %v6113
        %v6153 = vmul.f32 %v5352, %v6117
        %v6154 = vmul.f32 %v5353, %v6113
        %v6155 = vmul.f32 %v5354, %v6117
        %v6156 = vmul.f32 %v1080, %v6113
        %v6157 = vmul.f32 %v1081, %v6117
        %v6158 = vmul.f32 %v5355, %v6113
        %v6159 = vmul.f32 %v5356, %v6117
        %v6160 = vmul.f32 %v5357, %v6113
        %v6161 = vmul.f32 %v5358, %v6117
        %v6162 = vmul.f32 %v1084, %v6113
        %v6163 = vmul.f32 %v1085, %v6117
        %v6164 = vmul.f32 %v5359, %v6113
        %v6165 = vmul.f32 %v5360, %v6117
        %v6214 = vrot.slane %v6118, 4
        %v6215 = vrot.slane %v6120, 4
        %v6216 = vsel %vm5469, %v6214, %v6215
        %v6217 = vrot.slane %v6119, 4
        %v6218 = vrot.slane %v6121, 4
        %v6219 = vsel %vm5469, %v6217, %v6218
        %v6220 = vrot.slane %v6122, 4
        %v6221 = vsel %vm5469, %v6215, %v6220
        %v6222 = vrot.slane %v6123, 4
        %v6223 = vsel %vm5469, %v6218, %v6222
        %v6224 = vrot.slane %v6124, 4
        %v6225 = vrot.slane %v6126, 4
        %v6226 = vsel %vm5469, %v6224, %v6225
        %v6227 = vrot.slane %v6125, 4
        %v6228 = vrot.slane %v6127, 4
        %v6229 = vsel %vm5469, %v6227, %v6228
        %v6230 = vrot.slane %v6128, 4
        %v6231 = vsel %vm5469, %v6225, %v6230
        %v6232 = vrot.slane %v6129, 4
        %v6233 = vsel %vm5469, %v6228, %v6232
        %v6234 = vrot.slane %v6130, 4
        %v6235 = vrot.slane %v6132, 4
        %v6236 = vsel %vm5469, %v6234, %v6235
        %v6237 = vrot.slane %v6131, 4
        %v6238 = vrot.slane %v6133, 4
        %v6239 = vsel %vm5469, %v6237, %v6238
        %v6240 = vrot.slane %v6134, 4
        %v6241 = vsel %vm5469, %v6235, %v6240
        %v6242 = vrot.slane %v6135, 4
        %v6243 = vsel %vm5469, %v6238, %v6242
        %v6244 = vrot.slane %v6136, 4
        %v6245 = vrot.slane %v6138, 4
        %v6246 = vsel %vm5469, %v6244, %v6245
        %v6247 = vrot.slane %v6137, 4
        %v6248 = vrot.slane %v6139, 4
        %v6249 = vsel %vm5469, %v6247, %v6248
        %v6250 = vrot.slane %v6140, 4
        %v6251 = vsel %vm5469, %v6245, %v6250
        %v6252 = vrot.slane %v6141, 4
        %v6253 = vsel %vm5469, %v6248, %v6252
        %v6254 = vrot.slane %v6142, 4
        %v6255 = vrot.slane %v6144, 4
        %v6256 = vsel %vm5469, %v6254, %v6255
        %v6257 = vrot.slane %v6143, 4
        %v6258 = vrot.slane %v6145, 4
        %v6259 = vsel %vm5469, %v6257, %v6258
        %v6260 = vrot.slane %v6146, 4
        %v6261 = vsel %vm5469, %v6255, %v6260
        %v6262 = vrot.slane %v6147, 4
        %v6263 = vsel %vm5469, %v6258, %v6262
        %v6264 = vrot.slane %v6148, 4
        %v6265 = vrot.slane %v6150, 4
        %v6266 = vsel %vm5469, %v6264, %v6265
        %v6267 = vrot.slane %v6149, 4
        %v6268 = vrot.slane %v6151, 4
        %v6269 = vsel %vm5469, %v6267, %v6268
        %v6270 = vrot.slane %v6152, 4
        %v6271 = vsel %vm5469, %v6265, %v6270
        %v6272 = vrot.slane %v6153, 4
        %v6273 = vsel %vm5469, %v6268, %v6272
        %v6274 = vrot.slane %v6154, 4
        %v6275 = vrot.slane %v6156, 4
        %v6276 = vsel %vm5469, %v6274, %v6275
        %v6277 = vrot.slane %v6155, 4
        %v6278 = vrot.slane %v6157, 4
        %v6279 = vsel %vm5469, %v6277, %v6278
        %v6280 = vrot.slane %v6158, 4
        %v6281 = vsel %vm5469, %v6275, %v6280
        %v6282 = vrot.slane %v6159, 4
        %v6283 = vsel %vm5469, %v6278, %v6282
        %v6284 = vrot.slane %v6160, 4
        %v6285 = vrot.slane %v6162, 4
        %v6286 = vsel %vm5469, %v6284, %v6285
        %v6287 = vrot.slane %v6161, 4
        %v6288 = vrot.slane %v6163, 4
        %v6289 = vsel %vm5469, %v6287, %v6288
        %v6290 = vrot.slane %v6164, 4
        %v6291 = vsel %vm5469, %v6285, %v6290
        %v6292 = vrot.slane %v6165, 4
        %v6293 = vsel %vm5469, %v6288, %v6292
        %v6326 = vadd.f32 %v6078, %v6216
        %v6327 = vadd.f32 %v6079, %v6219
        %v6328 = vadd.f32 %v6080, %v6221
        %v6329 = vadd.f32 %v6081, %v6223
        %v6330 = vadd.f32 %v6082, %v6226
        %v6331 = vadd.f32 %v6083, %v6229
        %v6332 = vadd.f32 %v6084, %v6231
        %v6333 = vadd.f32 %v6085, %v6233
        %v6334 = vadd.f32 %v6086, %v6236
        %v6335 = vadd.f32 %v6087, %v6239
        %v6336 = vadd.f32 %v6088, %v6241
        %v6337 = vadd.f32 %v6089, %v6243
        %v6338 = vadd.f32 %v6090, %v6246
        %v6339 = vadd.f32 %v6091, %v6249
        %v6340 = vadd.f32 %v6092, %v6251
        %v6341 = vadd.f32 %v6093, %v6253
        %v6342 = vadd.f32 %v6094, %v6256
        %v6343 = vadd.f32 %v6095, %v6259
        %v6344 = vadd.f32 %v6096, %v6261
        %v6345 = vadd.f32 %v6097, %v6263
        %v6346 = vadd.f32 %v6098, %v6266
        %v6347 = vadd.f32 %v6099, %v6269
        %v6348 = vadd.f32 %v6100, %v6271
        %v6349 = vadd.f32 %v6101, %v6273
        %v6350 = vadd.f32 %v6102, %v6276
        %v6351 = vadd.f32 %v6103, %v6279
        %v6352 = vadd.f32 %v6104, %v6281
        %v6353 = vadd.f32 %v6105, %v6283
        %v6354 = vadd.f32 %v6106, %v6286
        %v6355 = vadd.f32 %v6107, %v6289
        %v6356 = vadd.f32 %v6108, %v6291
        %v6357 = vadd.f32 %v6109, %v6293
        %v6358 = vlaneseq
        %v6359 = vshrl.u32 %v6358, 7
        %v6360 = vsub.s32 0, %v6359
        %v6361 = vrot.slane %v1040, %v6360
        %v6362 = vlaneseq
        %v6363 = vshrl.u32 %v6362, 7
        %v6364 = vsub.s32 0, %v6363
        %v6365 = vrot.slane %v1041, %v6364
        %v6366 = vmul.f32 %v5333, %v6361
        %v6367 = vmul.f32 %v5334, %v6365
        %v6368 = vmul.f32 %v1060, %v6361
        %v6369 = vmul.f32 %v1061, %v6365
        %v6370 = vmul.f32 %v5335, %v6361
        %v6371 = vmul.f32 %v5336, %v6365
        %v6372 = vmul.f32 %v5337, %v6361
        %v6373 = vmul.f32 %v5338, %v6365
        %v6374 = vmul.f32 %v1064, %v6361
        %v6375 = vmul.f32 %v1065, %v6365
        %v6376 = vmul.f32 %v5339, %v6361
        %v6377 = vmul.f32 %v5340, %v6365
        %v6378 = vmul.f32 %v5341, %v6361
        %v6379 = vmul.f32 %v5342, %v6365
        %v6380 = vmul.f32 %v1068, %v6361
        %v6381 = vmul.f32 %v1069, %v6365
        %v6382 = vmul.f32 %v5343, %v6361
        %v6383 = vmul.f32 %v5344, %v6365
        %v6384 = vmul.f32 %v5345, %v6361
        %v6385 = vmul.f32 %v5346, %v6365
        %v6386 = vmul.f32 %v1072, %v6361
        %v6387 = vmul.f32 %v1073, %v6365
        %v6388 = vmul.f32 %v5347, %v6361
        %v6389 = vmul.f32 %v5348, %v6365
        %v6390 = vmul.f32 %v5349, %v6361
        %v6391 = vmul.f32 %v5350, %v6365
        %v6392 = vmul.f32 %v1076, %v6361
        %v6393 = vmul.f32 %v1077, %v6365
        %v6394 = vmul.f32 %v5351, %v6361
        %v6395 = vmul.f32 %v5352, %v6365
        %v6396 = vmul.f32 %v5353, %v6361
        %v6397 = vmul.f32 %v5354, %v6365
        %v6398 = vmul.f32 %v1080, %v6361
        %v6399 = vmul.f32 %v1081, %v6365
        %v6400 = vmul.f32 %v5355, %v6361
        %v6401 = vmul.f32 %v5356, %v6365
        %v6402 = vmul.f32 %v5357, %v6361
        %v6403 = vmul.f32 %v5358, %v6365
        %v6404 = vmul.f32 %v1084, %v6361
        %v6405 = vmul.f32 %v1085, %v6365
        %v6406 = vmul.f32 %v5359, %v6361
        %v6407 = vmul.f32 %v5360, %v6365
        %v6408 = vmul.f32 %v5361, %v6361
        %v6409 = vmul.f32 %v5362, %v6365
        %v6410 = vmul.f32 %v1088, %v6361
        %v6411 = vmul.f32 %v1089, %v6365
        %v6412 = vmul.f32 %v5363, %v6361
        %v6413 = vmul.f32 %v5364, %v6365
        %v6462 = vrot.slane %v6366, 4
        %v6463 = vrot.slane %v6368, 4
        %v6464 = vsel %vm5469, %v6462, %v6463
        %v6465 = vrot.slane %v6367, 4
        %v6466 = vrot.slane %v6369, 4
        %v6467 = vsel %vm5469, %v6465, %v6466
        %v6468 = vrot.slane %v6370, 4
        %v6469 = vsel %vm5469, %v6463, %v6468
        %v6470 = vrot.slane %v6371, 4
        %v6471 = vsel %vm5469, %v6466, %v6470
        %v6472 = vrot.slane %v6372, 4
        %v6473 = vrot.slane %v6374, 4
        %v6474 = vsel %vm5469, %v6472, %v6473
        %v6475 = vrot.slane %v6373, 4
        %v6476 = vrot.slane %v6375, 4
        %v6477 = vsel %vm5469, %v6475, %v6476
        %v6478 = vrot.slane %v6376, 4
        %v6479 = vsel %vm5469, %v6473, %v6478
        %v6480 = vrot.slane %v6377, 4
        %v6481 = vsel %vm5469, %v6476, %v6480
        %v6482 = vrot.slane %v6378, 4
        %v6483 = vrot.slane %v6380, 4
        %v6484 = vsel %vm5469, %v6482, %v6483
        %v6485 = vrot.slane %v6379, 4
        %v6486 = vrot.slane %v6381, 4
        %v6487 = vsel %vm5469, %v6485, %v6486
        %v6488 = vrot.slane %v6382, 4
        %v6489 = vsel %vm5469, %v6483, %v6488
        %v6490 = vrot.slane %v6383, 4
        %v6491 = vsel %vm5469, %v6486, %v6490
        %v6492 = vrot.slane %v6384, 4
        %v6493 = vrot.slane %v6386, 4
        %v6494 = vsel %vm5469, %v6492, %v6493
        %v6495 = vrot.slane %v6385, 4
        %v6496 = vrot.slane %v6387, 4
        %v6497 = vsel %vm5469, %v6495, %v6496
        %v6498 = vrot.slane %v6388, 4
        %v6499 = vsel %vm5469, %v6493, %v6498
        %v6500 = vrot.slane %v6389, 4
        %v6501 = vsel %vm5469, %v6496, %v6500
        %v6502 = vrot.slane %v6390, 4
        %v6503 = vrot.slane %v6392, 4
        %v6504 = vsel %vm5469, %v6502, %v6503
        %v6505 = vrot.slane %v6391, 4
        %v6506 = vrot.slane %v6393, 4
        %v6507 = vsel %vm5469, %v6505, %v6506
        %v6508 = vrot.slane %v6394, 4
        %v6509 = vsel %vm5469, %v6503, %v6508
        %v6510 = vrot.slane %v6395, 4
        %v6511 = vsel %vm5469, %v6506, %v6510
        %v6512 = vrot.slane %v6396, 4
        %v6513 = vrot.slane %v6398, 4
        %v6514 = vsel %vm5469, %v6512, %v6513
        %v6515 = vrot.slane %v6397, 4
        %v6516 = vrot.slane %v6399, 4
        %v6517 = vsel %vm5469, %v6515, %v6516
        %v6518 = vrot.slane %v6400, 4
        %v6519 = vsel %vm5469, %v6513, %v6518
        %v6520 = vrot.slane %v6401, 4
        %v6521 = vsel %vm5469, %v6516, %v6520
        %v6522 = vrot.slane %v6402, 4
        %v6523 = vrot.slane %v6404, 4
        %v6524 = vsel %vm5469, %v6522, %v6523
        %v6525 = vrot.slane %v6403, 4
        %v6526 = vrot.slane %v6405, 4
        %v6527 = vsel %vm5469, %v6525, %v6526
        %v6528 = vrot.slane %v6406, 4
        %v6529 = vsel %vm5469, %v6523, %v6528
        %v6530 = vrot.slane %v6407, 4
        %v6531 = vsel %vm5469, %v6526, %v6530
        %v6532 = vrot.slane %v6408, 4
        %v6533 = vrot.slane %v6410, 4
        %v6534 = vsel %vm5469, %v6532, %v6533
        %v6535 = vrot.slane %v6409, 4
        %v6536 = vrot.slane %v6411, 4
        %v6537 = vsel %vm5469, %v6535, %v6536
        %v6538 = vrot.slane %v6412, 4
        %v6539 = vsel %vm5469, %v6533, %v6538
        %v6540 = vrot.slane %v6413, 4
        %v6541 = vsel %vm5469, %v6536, %v6540
        %v6574 = vadd.f32 %v6326, %v6464
        %v6575 = vadd.f32 %v6327, %v6467
        %v6576 = vadd.f32 %v6328, %v6469
        %v6577 = vadd.f32 %v6329, %v6471
        %v6578 = vadd.f32 %v6330, %v6474
        %v6579 = vadd.f32 %v6331, %v6477
        %v6580 = vadd.f32 %v6332, %v6479
        %v6581 = vadd.f32 %v6333, %v6481
        %v6582 = vadd.f32 %v6334, %v6484
        %v6583 = vadd.f32 %v6335, %v6487
        %v6584 = vadd.f32 %v6336, %v6489
        %v6585 = vadd.f32 %v6337, %v6491
        %v6586 = vadd.f32 %v6338, %v6494
        %v6587 = vadd.f32 %v6339, %v6497
        %v6588 = vadd.f32 %v6340, %v6499
        %v6589 = vadd.f32 %v6341, %v6501
        %v6590 = vadd.f32 %v6342, %v6504
        %v6591 = vadd.f32 %v6343, %v6507
        %v6592 = vadd.f32 %v6344, %v6509
        %v6593 = vadd.f32 %v6345, %v6511
        %v6594 = vadd.f32 %v6346, %v6514
        %v6595 = vadd.f32 %v6347, %v6517
        %v6596 = vadd.f32 %v6348, %v6519
        %v6597 = vadd.f32 %v6349, %v6521
        %v6598 = vadd.f32 %v6350, %v6524
        %v6599 = vadd.f32 %v6351, %v6527
        %v6600 = vadd.f32 %v6352, %v6529
        %v6601 = vadd.f32 %v6353, %v6531
        %v6602 = vadd.f32 %v6354, %v6534
        %v6603 = vadd.f32 %v6355, %v6537
        %v6604 = vadd.f32 %v6356, %v6539
        %v6605 = vadd.f32 %v6357, %v6541
        %v6606 = vld [vmem:[#allocation11] sm:$0x3]
        %v6608 = vlaneseq
        %v6609 = vshrl.u32 %v6608, 7
        %v6610 = vsub.s32 0, %v6609
        %v6611 = vrot.slane %v6606, %v6610
        %v6612 = vlaneseq
        %v6613 = vshrl.u32 %v6612, 7
        %v6614 = vsub.s32 1, %v6613
        %v6615 = vrot.slane %v6606, %v6614
        %v6618 = vadd.f32 %v6574, %v6611
        %v6619 = vadd.f32 %v6575, %v6615
        %v6620 = vadd.f32 %v6576, %v6611
        %v6621 = vadd.f32 %v6577, %v6615
        %v6622 = vadd.f32 %v6578, %v6611
        %v6623 = vadd.f32 %v6579, %v6615
        %v6624 = vadd.f32 %v6580, %v6611
        %v6625 = vadd.f32 %v6581, %v6615
        %v6626 = vadd.f32 %v6582, %v6611
        %v6627 = vadd.f32 %v6583, %v6615
        %v6628 = vadd.f32 %v6584, %v6611
        %v6629 = vadd.f32 %v6585, %v6615
        %v6630 = vadd.f32 %v6586, %v6611
        %v6631 = vadd.f32 %v6587, %v6615
        %v6632 = vadd.f32 %v6588, %v6611
        %v6633 = vadd.f32 %v6589, %v6615
        %v6634 = vadd.f32 %v6590, %v6611
        %v6635 = vadd.f32 %v6591, %v6615
        %v6636 = vadd.f32 %v6592, %v6611
        %v6637 = vadd.f32 %v6593, %v6615
        %v6638 = vadd.f32 %v6594, %v6611
        %v6639 = vadd.f32 %v6595, %v6615
        %v6640 = vadd.f32 %v6596, %v6611
        %v6641 = vadd.f32 %v6597, %v6615
        %v6642 = vadd.f32 %v6598, %v6611
        %v6643 = vadd.f32 %v6599, %v6615
        %v6644 = vadd.f32 %v6600, %v6611
        %v6645 = vadd.f32 %v6601, %v6615
        %v6646 = vadd.f32 %v6602, %v6611
        %v6647 = vadd.f32 %v6603, %v6615
        %v6648 = vadd.f32 %v6604, %v6611
        %v6649 = vadd.f32 %v6605, %v6615
        %v6650 = vpack.c.bf16 %v6620, %v6618
        %v6651 = vpack.c.bf16 %v6621, %v6619
        %v6652 = vpack.c.bf16 %v6624, %v6622
        %v6653 = vpack.c.bf16 %v6625, %v6623
        %v6654 = vpack.c.bf16 %v6628, %v6626
        %v6655 = vpack.c.bf16 %v6629, %v6627
        %v6656 = vpack.c.bf16 %v6632, %v6630
        %v6657 = vpack.c.bf16 %v6633, %v6631
        %v6658 = vpack.c.bf16 %v6636, %v6634
        %v6659 = vpack.c.bf16 %v6637, %v6635
        %v6660 = vpack.c.bf16 %v6640, %v6638
        %v6661 = vpack.c.bf16 %v6641, %v6639
        %v6662 = vpack.c.bf16 %v6644, %v6642
        %v6663 = vpack.c.bf16 %v6645, %v6643
        %v6664 = vpack.c.bf16 %v6648, %v6646
        %v6665 = vpack.c.bf16 %v6649, %v6647
        %v6666 = vld [vmem:[#allocation13] sm:$0xf]
        %v6667 = vld [vmem:[#allocation13 + $0x4] sm:$0xf]
        %v6668 = vld [vmem:[#allocation13 + $0x8] sm:$0xf]
        %v6669 = vld [vmem:[#allocation13 + $0xc] sm:$0xf]
        %v6670 = vld [vmem:[#allocation13 + $0x10] sm:$0xf]
        %v6671 = vld [vmem:[#allocation13 + $0x14] sm:$0xf]
        %v6672 = vld [vmem:[#allocation13 + $0x18] sm:$0xf]
        %v6673 = vld [vmem:[#allocation13 + $0x1c] sm:$0xf]
        %v6674 = vld [vmem:[#allocation13 + $0x20] sm:$0xf]
        %v6675 = vld [vmem:[#allocation13 + $0x24] sm:$0xf]
        %v6676 = vld [vmem:[#allocation13 + $0x28] sm:$0xf]
        %v6677 = vld [vmem:[#allocation13 + $0x2c] sm:$0xf]
        %v6678 = vld [vmem:[#allocation13 + $0x30] sm:$0xf]
        %v6679 = vld [vmem:[#allocation13 + $0x34] sm:$0xf]
        %v6680 = vld [vmem:[#allocation13 + $0x38] sm:$0xf]
        %v6681 = vld [vmem:[#allocation13 + $0x3c] sm:$0xf]
        %v6682 = vld [vmem:[#allocation13 + $0x40] sm:$0xf]
        %v6683 = vld [vmem:[#allocation13 + $0x44] sm:$0xf]
        %v6684 = vld [vmem:[#allocation13 + $0x48] sm:$0xf]
        %v6685 = vld [vmem:[#allocation13 + $0x4c] sm:$0xf]
        %v6686 = vld [vmem:[#allocation13 + $0x50] sm:$0xf]
        %v6687 = vld [vmem:[#allocation13 + $0x54] sm:$0xf]
        %v6688 = vld [vmem:[#allocation13 + $0x58] sm:$0xf]
        %v6689 = vld [vmem:[#allocation13 + $0x5c] sm:$0xf]
        %v6690 = vld [vmem:[#allocation13 + $0x60] sm:$0xf]
        %v6691 = vld [vmem:[%s5] sm:$0x1]
        %v6693 = vlaneseq
        %v6694 = vshrl.u32 %v6693, 7
        %v6695 = vsub.s32 0, %v6694
        %v6696 = vrot.slane %v6691, %v6695
        %v6723 = vunpack.c.l.b16 %v6666
        %v6724 = vunpack.c.l.b16 %v6667
        %v6725 = vunpack.c.l.b16 %v6668
        %v6726 = vunpack.c.l.b16 %v6669
        %v6727 = vunpack.c.l.b16 %v6670
        %v6728 = vunpack.c.l.b16 %v6671
        %v6729 = vunpack.c.l.b16 %v6672
        %v6730 = vunpack.c.l.b16 %v6673
        %v6731 = vunpack.c.l.b16 %v6674
        %v6732 = vunpack.c.l.b16 %v6675
        %v6733 = vunpack.c.l.b16 %v6676
        %v6734 = vunpack.c.l.b16 %v6677
        %v6735 = vunpack.c.l.b16 %v6678
        %v6736 = vunpack.c.l.b16 %v6679
        %v6737 = vunpack.c.l.b16 %v6680
        %v6738 = vunpack.c.l.b16 %v6681
        %v6739 = vunpack.c.l.b16 %v6682
        %v6740 = vunpack.c.l.b16 %v6683
        %v6741 = vunpack.c.l.b16 %v6684
        %v6742 = vunpack.c.l.b16 %v6685
        %v6743 = vunpack.c.l.b16 %v6686
        %v6744 = vunpack.c.l.b16 %v6687
        %v6745 = vunpack.c.l.b16 %v6688
        %v6746 = vunpack.c.l.b16 %v6689
        %v6747 = vunpack.c.l.b16 %v6690
        %v6748 = vpack.c.b16 %v6724, %v6723
        %v6749 = vpack.c.b16 %v6726, %v6725
        %v6750 = vpack.c.b16 %v6728, %v6727
        %v6751 = vpack.c.b16 %v6730, %v6729
        %v6752 = vpack.c.b16 %v6732, %v6731
        %v6753 = vpack.c.b16 %v6734, %v6733
        %v6754 = vpack.c.b16 %v6736, %v6735
        %v6755 = vpack.c.b16 %v6738, %v6737
        %v6756 = vpack.c.b16 %v6740, %v6739
        %v6757 = vpack.c.b16 %v6742, %v6741
        %v6758 = vpack.c.b16 %v6744, %v6743
        %v6759 = vpack.c.b16 %v6746, %v6745
        %v6760 = vpack.c.b16 %v6747, %v6747
        %v6774 = vsel %vm731, %v6651, 0
        %v6777 = vsel %vm731, %v6653, 0
        %v6780 = vsel %vm731, %v6655, 0
        %v6783 = vsel %vm731, %v6657, 0
        %v6786 = vsel %vm731, %v6659, 0
        %v6789 = vsel %vm731, %v6661, 0
        %v6792 = vsel %vm731, %v6663, 0
        %v6795 = vsel %vm731, %v6665, 0
        %v6798 = vsel %vm5469, %v6760, 0
        %6800 = vmatprep.subr.bf16.mxu0 0
        %6801 = vmatpush1.bf16.msra.mxu0 %v6755
        %6802 = vmatprep.subr.bf16.mxu0 0
        %6803 = vmatpush1.bf16.msra.mxu0 %v6754
        %6804 = vmatprep.subr.bf16.mxu0 0
        %6805 = vmatpush1.bf16.msra.mxu0 %v6753
        %6806 = vmatprep.subr.bf16.mxu0 0
        %6807 = vmatpush1.bf16.msra.mxu0 %v6752
        %6808 = vmatprep.subr.bf16.mxu0 0
        %6809 = vmatpush1.bf16.msra.mxu0 %v6751
        %6810 = vmatprep.subr.bf16.mxu0 0
        %6811 = vmatpush1.bf16.msra.mxu0 %v6750
        %6812 = vmatprep.subr.bf16.mxu0 0
        %6813 = vmatpush1.bf16.msra.mxu0 %v6749
        %6814 = vmatprep.subr.bf16.mxu0 0
        %6815 = vmatpush1.bf16.msra.mxu0 %v6748
        %6816 = vmatprep.subr.bf16.mxu0 0
        %6817 = vmatpush2.bf16.msra.mxu0 0
        %6818 = vmatprep.subr.bf16.mxu0 0
        %6819 = vmatpush2.bf16.msra.mxu0 0
        %6820 = vmatprep.subr.bf16.mxu0 0
        %6821 = vmatpush2.bf16.msra.mxu0 0
        %6822 = vmatprep.subr.bf16.mxu0 0
        %6823 = vmatpush2.bf16.msra.mxu0 %v6798
        %6824 = vmatprep.subr.bf16.mxu0 0
        %6825 = vmatpush2.bf16.msra.mxu0 %v6759
        %6826 = vmatprep.subr.bf16.mxu0 0
        %6827 = vmatpush2.bf16.msra.mxu0 %v6758
        %6828 = vmatprep.subr.bf16.mxu0 0
        %6829 = vmatpush2.bf16.msra.mxu0 %v6757
        %6830 = vmatprep.subr.bf16.mxu0 0
        %6831 = vmatpush2.bf16.msra.mxu0 %v6756
        %6832 = vmatprep.mubr.bf16.mxu0 %v6774
        %6833 = vmatmul.mubr.bf16.gmra.mxu0 %v6650
        %v6834 = vpop.f32.mrf.mxu0
        %v6835 = vadd.f32 %v6696, %v6834
        %v6836 = vpop.f32.mrf.mxu0
        %v6837 = vpop.f32.mrf.mxu0
        %v6838 = vadd.f32 %v6696, %v6837
        %v6839 = vpop.f32.mrf.mxu0
        %6840 = vmatprep.mubr.bf16.mxu0 %v6777
        %6841 = vmatmul.mubr.bf16.gmra.mxu0 %v6652
        %v6842 = vpop.f32.mrf.mxu0
        %v6843 = vadd.f32 %v6696, %v6842
        %v6844 = vpop.f32.mrf.mxu0
        %v6845 = vpop.f32.mrf.mxu0
        %v6846 = vadd.f32 %v6696, %v6845
        %v6847 = vpop.f32.mrf.mxu0
        %6848 = vmatprep.mubr.bf16.mxu0 %v6780
        %6849 = vmatmul.mubr.bf16.gmra.mxu0 %v6654
        %v6850 = vpop.f32.mrf.mxu0
        %v6851 = vadd.f32 %v6696, %v6850
        %v6852 = vpop.f32.mrf.mxu0
        %v6853 = vpop.f32.mrf.mxu0
        %v6854 = vadd.f32 %v6696, %v6853
        %v6855 = vpop.f32.mrf.mxu0
        %6856 = vmatprep.mubr.bf16.mxu0 %v6783
        %6857 = vmatmul.mubr.bf16.gmra.mxu0 %v6656
        %v6858 = vpop.f32.mrf.mxu0
        %v6859 = vadd.f32 %v6696, %v6858
        %v6860 = vpop.f32.mrf.mxu0
        %v6861 = vpop.f32.mrf.mxu0
        %v6862 = vadd.f32 %v6696, %v6861
        %v6863 = vpop.f32.mrf.mxu0
        %6864 = vmatprep.mubr.bf16.mxu0 %v6786
        %6865 = vmatmul.mubr.bf16.gmra.mxu0 %v6658
        %v6866 = vpop.f32.mrf.mxu0
        %v6867 = vadd.f32 %v6696, %v6866
        %v6868 = vpop.f32.mrf.mxu0
        %v6869 = vpop.f32.mrf.mxu0
        %v6870 = vadd.f32 %v6696, %v6869
        %v6871 = vpop.f32.mrf.mxu0
        %6872 = vmatprep.mubr.bf16.mxu0 %v6789
        %6873 = vmatmul.mubr.bf16.gmra.mxu0 %v6660
        %v6874 = vpop.f32.mrf.mxu0
        %v6875 = vadd.f32 %v6696, %v6874
        %v6876 = vpop.f32.mrf.mxu0
        %v6877 = vpop.f32.mrf.mxu0
        %v6878 = vadd.f32 %v6696, %v6877
        %v6879 = vpop.f32.mrf.mxu0
        %6880 = vmatprep.mubr.bf16.mxu0 %v6792
        %6881 = vmatmul.mubr.bf16.gmra.mxu0 %v6662
        %v6882 = vpop.f32.mrf.mxu0
        %v6883 = vadd.f32 %v6696, %v6882
        %v6884 = vpop.f32.mrf.mxu0
        %v6885 = vpop.f32.mrf.mxu0
        %v6886 = vadd.f32 %v6696, %v6885
        %v6887 = vpop.f32.mrf.mxu0
        %6888 = vmatprep.mubr.bf16.mxu0 %v6795
        %6889 = vmatmul.mubr.bf16.gmra.mxu0 %v6664
        %v6890 = vpop.f32.mrf.mxu0
        %v6891 = vadd.f32 %v6696, %v6890
        %v6892 = vpop.f32.mrf.mxu0
        %v6893 = vpop.f32.mrf.mxu0
        %v6894 = vadd.f32 %v6696, %v6893
        %v6895 = vpop.f32.mrf.mxu0
        %6896 = vdwg.mxu0
        %v6897 = vmax.f32 %v6835, 0.0
        %v6898 = vmax.f32 %v6838, 0.0
        %v6899 = vmax.f32 %v6843, 0.0
        %v6900 = vmax.f32 %v6846, 0.0
        %v6901 = vmax.f32 %v6851, 0.0
        %v6902 = vmax.f32 %v6854, 0.0
        %v6903 = vmax.f32 %v6859, 0.0
        %v6904 = vmax.f32 %v6862, 0.0
        %v6905 = vmax.f32 %v6867, 0.0
        %v6906 = vmax.f32 %v6870, 0.0
        %v6907 = vmax.f32 %v6875, 0.0
        %v6908 = vmax.f32 %v6878, 0.0
        %v6909 = vmax.f32 %v6883, 0.0
        %v6910 = vmax.f32 %v6886, 0.0
        %v6911 = vmax.f32 %v6891, 0.0
        %v6912 = vmax.f32 %v6894, 0.0
        %v6913 = vmax.f32 %v6897, %v6898
        %v6914 = vrot.slane %v6913, 4
        %v6915 = vmax.f32 %v6913, %v6914
        %v6916 = vrot.slane %v6915, 2
        %v6917 = vmax.f32 %v6915, %v6916
        %v6918 = vrot.slane %v6917, 1
        %v6919 = vmax.f32 %v6917, %v6918
        %v6920 = vmax.f32 %v6899, %v6900
        %v6921 = vrot.slane %v6920, 4
        %v6922 = vmax.f32 %v6920, %v6921
        %v6923 = vrot.slane %v6922, 2
        %v6924 = vmax.f32 %v6922, %v6923
        %v6925 = vrot.slane %v6924, 1
        %v6926 = vmax.f32 %v6924, %v6925
        %v6927 = vmax.f32 %v6901, %v6902
        %v6928 = vrot.slane %v6927, 4
        %v6929 = vmax.f32 %v6927, %v6928
        %v6930 = vrot.slane %v6929, 2
        %v6931 = vmax.f32 %v6929, %v6930
        %v6932 = vrot.slane %v6931, 1
        %v6933 = vmax.f32 %v6931, %v6932
        %v6934 = vmax.f32 %v6903, %v6904
        %v6935 = vrot.slane %v6934, 4
        %v6936 = vmax.f32 %v6934, %v6935
        %v6937 = vrot.slane %v6936, 2
        %v6938 = vmax.f32 %v6936, %v6937
        %v6939 = vrot.slane %v6938, 1
        %v6940 = vmax.f32 %v6938, %v6939
        %v6941 = vmax.f32 %v6905, %v6906
        %v6942 = vrot.slane %v6941, 4
        %v6943 = vmax.f32 %v6941, %v6942
        %v6944 = vrot.slane %v6943, 2
        %v6945 = vmax.f32 %v6943, %v6944
        %v6946 = vrot.slane %v6945, 1
        %v6947 = vmax.f32 %v6945, %v6946
        %v6948 = vmax.f32 %v6907, %v6908
        %v6949 = vrot.slane %v6948, 4
        %v6950 = vmax.f32 %v6948, %v6949
        %v6951 = vrot.slane %v6950, 2
        %v6952 = vmax.f32 %v6950, %v6951
        %v6953 = vrot.slane %v6952, 1
        %v6954 = vmax.f32 %v6952, %v6953
        %v6955 = vmax.f32 %v6909, %v6910
        %v6956 = vrot.slane %v6955, 4
        %v6957 = vmax.f32 %v6955, %v6956
        %v6958 = vrot.slane %v6957, 2
        %v6959 = vmax.f32 %v6957, %v6958
        %v6960 = vrot.slane %v6959, 1
        %v6961 = vmax.f32 %v6959, %v6960
        %v6962 = vmax.f32 %v6911, %v6912
        %v6963 = vrot.slane %v6962, 4
        %v6964 = vmax.f32 %v6962, %v6963
        %v6965 = vrot.slane %v6964, 2
        %v6966 = vmax.f32 %v6964, %v6965
        %v6967 = vrot.slane %v6966, 1
        %v6968 = vmax.f32 %v6966, %v6967
        %6969 = vst [vmem:[#allocation3] sm:$0x3] 0.0
        %6970 = vst [vmem:[#allocation3 + $0xa] sm:$0x3] 0.0
        %vm6979 = vcmask 1041409
        %v6980 = vsel %vm6979, %v6926, %v6919
        %vm6981 = vcmask 1042434
        %v6982 = vsel %vm6981, %v6933, %v6980
        %vm6983 = vcmask 1043459
        %v6984 = vsel %vm6983, %v6940, %v6982
        %vm6985 = vcmask 1044484
        %v6986 = vsel %vm6985, %v6947, %v6984
        %vm6987 = vcmask 1045509
        %v6988 = vsel %vm6987, %v6954, %v6986
        %vm6989 = vcmask 1046534
        %v6990 = vsel %vm6989, %v6961, %v6988
        %vm6991 = vcmask 1047559
        %v6992 = vsel %vm6991, %v6968, %v6990
        %6994 = vst [vmem:[#allocation3 + $0x2] sm:$0xff] %v6992
        %6995 = vst [vmem:[#allocation4] sm:$0x3] 0.0
        %6996 = vst [vmem:[#allocation4 + $0x8] sm:$0x3] 0.0
        %vm6997 = vcmask 353280
        %6998 = vst.msk [vmem:[#allocation4 + $0x10] sm:$0x3] %vm6997, 0.0
        %6999 = vst [vmem:[#allocation4 + $0x18] sm:$0xc] 0.0
        %7000 = vst [vmem:[#allocation4 + $0x20] sm:$0xc] 0.0
        %vm7001 = vcmask 355330
        %7002 = vst.msk [vmem:[#allocation4 + $0x28] sm:$0xc] %vm7001, 0.0
        %v7003 = vld [vmem:[%s637] sm:$0xff]
        %v7004 = vld [vmem:[%s637 + $0x8] sm:$0xf]
        %v7005 = vunpack.c.l.bf16 %v7003
        %v7006 = vunpack.c.h.bf16 %v7003
        %v7007 = vunpack.c.l.bf16 %v7004
        %v7011 = vrot.slane %v7005, 6
        %v7012 = vrot.slane %v7006, 6
        %v7013 = vrot.slane %v7007, 6
        %7017 = vst [vmem:[#allocation4] sm:$0xfc] %v7011
        %7018 = vst [vmem:[#allocation4 + $0x8] sm:$0xfc] %v7012
        %vm7019 = vcmask 359426
        %7020 = vst.msk [vmem:[#allocation4 + $0x10] sm:$0xfc] %vm7019, %v7013
        %7021 = vst [vmem:[#allocation4 + $0x18] sm:$0x3] %v7011
        %7022 = vst [vmem:[#allocation4 + $0x20] sm:$0x3] %v7012
        %7023 = vst.msk [vmem:[#allocation4 + $0x28] sm:$0x3] %vm6997, %v7013
        %v7024 = vld [vmem:[%s6] sm:$0x1f]
        %v7025 = vld [vmem:[#allocation16] sm:$0x1f]
        %v7026 = vld [vmem:[#allocation16 + $0x8] sm:$0x1f]
        %v7027 = vld [vmem:[#allocation16 + $0x10] sm:$0x1f]
        %v7028 = vld [vmem:[#allocation3] sm:$0xff]
        %v7029 = vlaneseq
        %v7030 = vshrl.u32 %v7029, 7
        %v7031 = vsub.s32 0, %v7030
        %v7032 = vrot.slane %v7024, %v7031
        %v7033 = vmul.f32 %v7028, %v7032
        %v7034 = vadd.f32 %v7033, 0.0
        %v7035 = vld [vmem:[#allocation4] sm:$0xff]
        %v7036 = vld [vmem:[#allocation4 + $0x8] sm:$0xff]
        %v7037 = vld [vmem:[#allocation4 + $0x10] sm:$0xff]
        %v7038 = vlaneseq
        %v7039 = vshrl.u32 %v7038, 7
        %v7040 = vsub.s32 0, %v7039
        %v7041 = vrot.slane %v7025, %v7040
        %v7042 = vlaneseq
        %v7043 = vshrl.u32 %v7042, 7
        %v7044 = vsub.s32 0, %v7043
        %v7045 = vrot.slane %v7026, %v7044
        %v7046 = vlaneseq
        %v7047 = vshrl.u32 %v7046, 7
        %v7048 = vsub.s32 0, %v7047
        %v7049 = vrot.slane %v7027, %v7048
        %v7050 = vmul.f32 %v7035, %v7041
        %v7051 = vmul.f32 %v7036, %v7045
        %v7052 = vmul.f32 %v7037, %v7049
        %v7053 = vadd.f32 %v7050, 0.0
        %v7054 = vadd.f32 %v7051, 0.0
        %v7055 = vadd.f32 %v7052, 0.0
        %v7056 = vld [vmem:[#allocation3 + $0x1] sm:$0xff]
        %v7057 = vlaneseq
        %v7058 = vshrl.u32 %v7057, 7
        %v7059 = vsub.s32 1, %v7058
        %v7060 = vrot.slane %v7024, %v7059
        %v7061 = vmul.f32 %v7056, %v7060
        %v7062 = vadd.f32 %v7034, %v7061
        %v7063 = vld [vmem:[#allocation4] sm:$0xfe]
        %v7064 = vld [vmem:[#allocation4 + $0x8] sm:$0xfe]
        %v7065 = vld [vmem:[#allocation4 + $0x10] sm:$0xfe]
        %v7066 = vld [vmem:[#allocation4 + $0x18] sm:$0x1]
        %v7067 = vld [vmem:[#allocation4 + $0x20] sm:$0x1]
        %v7068 = vld [vmem:[#allocation4 + $0x28] sm:$0x1]
        %v7069 = vlaneseq
        %v7070 = vshrl.u32 %v7069, 7
        %v7071 = vsub.s32 1, %v7070
        %v7072 = vrot.slane %v7025, %v7071
        %v7073 = vlaneseq
        %v7074 = vshrl.u32 %v7073, 7
        %v7075 = vsub.s32 1, %v7074
        %v7076 = vrot.slane %v7026, %v7075
        %v7077 = vlaneseq
        %v7078 = vshrl.u32 %v7077, 7
        %v7079 = vsub.s32 1, %v7078
        %v7080 = vrot.slane %v7027, %v7079
        %v7081 = vmul.f32 %v7063, %v7072
        %v7082 = vmul.f32 %v7064, %v7076
        %v7083 = vmul.f32 %v7065, %v7080
        %v7084 = vmul.f32 %v7066, %v7072
        %v7085 = vmul.f32 %v7067, %v7076
        %v7086 = vmul.f32 %v7068, %v7080
        %v7093 = vrot.slane %v7081, 1
        %v7094 = vrot.slane %v7084, 1
        %v7095 = vsel %vm1602, %v7093, %v7094
        %v7096 = vrot.slane %v7082, 1
        %v7097 = vrot.slane %v7085, 1
        %v7098 = vsel %vm1602, %v7096, %v7097
        %v7099 = vrot.slane %v7083, 1
        %v7100 = vrot.slane %v7086, 1
        %v7101 = vsel %vm1602, %v7099, %v7100
        %v7105 = vadd.f32 %v7053, %v7095
        %v7106 = vadd.f32 %v7054, %v7098
        %v7107 = vadd.f32 %v7055, %v7101
        %v7108 = vld [vmem:[#allocation3 + $0x2] sm:$0xff]
        %v7109 = vlaneseq
        %v7110 = vshrl.u32 %v7109, 7
        %v7111 = vsub.s32 2, %v7110
        %v7112 = vrot.slane %v7024, %v7111
        %v7113 = vmul.f32 %v7108, %v7112
        %v7114 = vadd.f32 %v7062, %v7113
        %v7115 = vld [vmem:[#allocation4] sm:$0xfc]
        %v7116 = vld [vmem:[#allocation4 + $0x8] sm:$0xfc]
        %v7117 = vld [vmem:[#allocation4 + $0x10] sm:$0xfc]
        %v7118 = vld [vmem:[#allocation4 + $0x18] sm:$0x3]
        %v7119 = vld [vmem:[#allocation4 + $0x20] sm:$0x3]
        %v7120 = vld [vmem:[#allocation4 + $0x28] sm:$0x3]
        %v7121 = vlaneseq
        %v7122 = vshrl.u32 %v7121, 7
        %v7123 = vsub.s32 2, %v7122
        %v7124 = vrot.slane %v7025, %v7123
        %v7125 = vlaneseq
        %v7126 = vshrl.u32 %v7125, 7
        %v7127 = vsub.s32 2, %v7126
        %v7128 = vrot.slane %v7026, %v7127
        %v7129 = vlaneseq
        %v7130 = vshrl.u32 %v7129, 7
        %v7131 = vsub.s32 2, %v7130
        %v7132 = vrot.slane %v7027, %v7131
        %v7133 = vmul.f32 %v7115, %v7124
        %v7134 = vmul.f32 %v7116, %v7128
        %v7135 = vmul.f32 %v7117, %v7132
        %v7136 = vmul.f32 %v7118, %v7124
        %v7137 = vmul.f32 %v7119, %v7128
        %v7138 = vmul.f32 %v7120, %v7132
        %v7145 = vrot.slane %v7133, 2
        %v7146 = vrot.slane %v7136, 2
        %v7147 = vsel %vm2891, %v7145, %v7146
        %v7148 = vrot.slane %v7134, 2
        %v7149 = vrot.slane %v7137, 2
        %v7150 = vsel %vm2891, %v7148, %v7149
        %v7151 = vrot.slane %v7135, 2
        %v7152 = vrot.slane %v7138, 2
        %v7153 = vsel %vm2891, %v7151, %v7152
        %v7157 = vadd.f32 %v7105, %v7147
        %v7158 = vadd.f32 %v7106, %v7150
        %v7159 = vadd.f32 %v7107, %v7153
        %v7160 = vld [vmem:[#allocation3 + $0x3] sm:$0xff]
        %v7161 = vlaneseq
        %v7162 = vshrl.u32 %v7161, 7
        %v7163 = vsub.s32 3, %v7162
        %v7164 = vrot.slane %v7024, %v7163
        %v7165 = vmul.f32 %v7160, %v7164
        %v7166 = vadd.f32 %v7114, %v7165
        %v7167 = vld [vmem:[#allocation4] sm:$0xf8]
        %v7168 = vld [vmem:[#allocation4 + $0x8] sm:$0xf8]
        %v7169 = vld [vmem:[#allocation4 + $0x10] sm:$0xf8]
        %v7170 = vld [vmem:[#allocation4 + $0x18] sm:$0x7]
        %v7171 = vld [vmem:[#allocation4 + $0x20] sm:$0x7]
        %v7172 = vld [vmem:[#allocation4 + $0x28] sm:$0x7]
        %v7173 = vlaneseq
        %v7174 = vshrl.u32 %v7173, 7
        %v7175 = vsub.s32 3, %v7174
        %v7176 = vrot.slane %v7025, %v7175
        %v7177 = vlaneseq
        %v7178 = vshrl.u32 %v7177, 7
        %v7179 = vsub.s32 3, %v7178
        %v7180 = vrot.slane %v7026, %v7179
        %v7181 = vlaneseq
        %v7182 = vshrl.u32 %v7181, 7
        %v7183 = vsub.s32 3, %v7182
        %v7184 = vrot.slane %v7027, %v7183
        %v7185 = vmul.f32 %v7167, %v7176
        %v7186 = vmul.f32 %v7168, %v7180
        %v7187 = vmul.f32 %v7169, %v7184
        %v7188 = vmul.f32 %v7170, %v7176
        %v7189 = vmul.f32 %v7171, %v7180
        %v7190 = vmul.f32 %v7172, %v7184
        %v7197 = vrot.slane %v7185, 3
        %v7198 = vrot.slane %v7188, 3
        %v7199 = vsel %vm4180, %v7197, %v7198
        %v7200 = vrot.slane %v7186, 3
        %v7201 = vrot.slane %v7189, 3
        %v7202 = vsel %vm4180, %v7200, %v7201
        %v7203 = vrot.slane %v7187, 3
        %v7204 = vrot.slane %v7190, 3
        %v7205 = vsel %vm4180, %v7203, %v7204
        %v7209 = vadd.f32 %v7157, %v7199
        %v7210 = vadd.f32 %v7158, %v7202
        %v7211 = vadd.f32 %v7159, %v7205
        %v7212 = vld [vmem:[#allocation3 + $0x4] sm:$0xff]
        %v7213 = vlaneseq
        %v7214 = vshrl.u32 %v7213, 7
        %v7215 = vsub.s32 4, %v7214
        %v7216 = vrot.slane %v7024, %v7215
        %v7217 = vmul.f32 %v7212, %v7216
        %v7218 = vadd.f32 %v7166, %v7217
        %v7219 = vld [vmem:[#allocation4] sm:$0xf0]
        %v7220 = vld [vmem:[#allocation4 + $0x8] sm:$0xf0]
        %v7221 = vld [vmem:[#allocation4 + $0x10] sm:$0xf0]
        %v7222 = vld [vmem:[#allocation4 + $0x18] sm:$0xf]
        %v7223 = vld [vmem:[#allocation4 + $0x20] sm:$0xf]
        %v7224 = vld [vmem:[#allocation4 + $0x28] sm:$0xf]
        %v7225 = vlaneseq
        %v7226 = vshrl.u32 %v7225, 7
        %v7227 = vsub.s32 4, %v7226
        %v7228 = vrot.slane %v7025, %v7227
        %v7229 = vlaneseq
        %v7230 = vshrl.u32 %v7229, 7
        %v7231 = vsub.s32 4, %v7230
        %v7232 = vrot.slane %v7026, %v7231
        %v7233 = vlaneseq
        %v7234 = vshrl.u32 %v7233, 7
        %v7235 = vsub.s32 4, %v7234
        %v7236 = vrot.slane %v7027, %v7235
        %v7237 = vmul.f32 %v7219, %v7228
        %v7238 = vmul.f32 %v7220, %v7232
        %v7239 = vmul.f32 %v7221, %v7236
        %v7240 = vmul.f32 %v7222, %v7228
        %v7241 = vmul.f32 %v7223, %v7232
        %v7242 = vmul.f32 %v7224, %v7236
        %v7249 = vrot.slane %v7237, 4
        %v7250 = vrot.slane %v7240, 4
        %v7251 = vsel %vm5469, %v7249, %v7250
        %v7252 = vrot.slane %v7238, 4
        %v7253 = vrot.slane %v7241, 4
        %v7254 = vsel %vm5469, %v7252, %v7253
        %v7255 = vrot.slane %v7239, 4
        %v7256 = vrot.slane %v7242, 4
        %v7257 = vsel %vm5469, %v7255, %v7256
        %v7261 = vadd.f32 %v7209, %v7251
        %v7262 = vadd.f32 %v7210, %v7254
        %v7263 = vadd.f32 %v7211, %v7257
        %v7264 = vld [vmem:[#allocation14] sm:$0x1]
        %v7266 = vlaneseq
        %v7267 = vshrl.u32 %v7266, 7
        %v7268 = vsub.s32 0, %v7267
        %v7269 = vrot.slane %v7264, %v7268
        %v7271 = vadd.f32 %v7218, %v7269
        %v7272 = vld [vmem:[%s9] sm:$0x7]
        %v7274 = vlaneseq
        %v7275 = vshrl.u32 %v7274, 7
        %v7276 = vsub.s32 0, %v7275
        %v7277 = vrot.slane %v7272, %v7276
        %v7278 = vlaneseq
        %v7279 = vshrl.u32 %v7278, 7
        %v7280 = vsub.s32 1, %v7279
        %v7281 = vrot.slane %v7272, %v7280
        %v7282 = vlaneseq
        %v7283 = vshrl.u32 %v7282, 7
        %v7284 = vsub.s32 2, %v7283
        %v7285 = vrot.slane %v7272, %v7284
        %v7289 = vadd.f32 %v7261, %v7277
        %v7290 = vadd.f32 %v7262, %v7281
        %v7291 = vadd.f32 %v7263, %v7285
        %v7292 = vpack.c.bf16 %v7271, %v7271
        %v7293 = vld [vmem:[#allocation17] sm:$0xf]
        %v7294 = vld [vmem:[#allocation17 + $0x4] sm:$0xf]
        %v7295 = vld [vmem:[#allocation17 + $0x8] sm:$0xf]
        %v7296 = vld [vmem:[#allocation17 + $0xc] sm:$0xf]
        %v7297 = vld [vmem:[#allocation17 + $0x10] sm:$0xf]
        %v7298 = vld [vmem:[#allocation17 + $0x14] sm:$0xf]
        %v7299 = vld [vmem:[#allocation17 + $0x18] sm:$0xf]
        %v7300 = vld [vmem:[#allocation17 + $0x1c] sm:$0xf]
        %v7301 = vld [vmem:[#allocation17 + $0x20] sm:$0xf]
        %v7302 = vld [vmem:[#allocation17 + $0x24] sm:$0xf]
        %v7303 = vld [vmem:[#allocation17 + $0x28] sm:$0xf]
        %v7304 = vld [vmem:[#allocation17 + $0x2c] sm:$0xf]
        %v7305 = vld [vmem:[#allocation17 + $0x30] sm:$0xf]
        %v7306 = vld [vmem:[#allocation17 + $0x34] sm:$0xf]
        %v7307 = vld [vmem:[#allocation17 + $0x38] sm:$0xf]
        %v7308 = vld [vmem:[#allocation17 + $0x3c] sm:$0xf]
        %v7309 = vpack.c.bf16 %v7289, %v7289
        %v7310 = vpack.c.bf16 %v7290, %v7290
        %v7311 = vpack.c.bf16 %v7291, %v7291
        %v7312 = vld [vmem:[#allocation19] sm:$0xf]
        %v7313 = vld [vmem:[#allocation19 + $0x4] sm:$0xf]
        %v7314 = vld [vmem:[#allocation19 + $0x8] sm:$0xf]
        %v7315 = vld [vmem:[#allocation19 + $0xc] sm:$0xf]
        %v7316 = vld [vmem:[#allocation19 + $0x10] sm:$0xf]
        %v7317 = vld [vmem:[#allocation19 + $0x14] sm:$0xf]
        %v7318 = vld [vmem:[#allocation19 + $0x18] sm:$0xf]
        %v7319 = vld [vmem:[#allocation19 + $0x1c] sm:$0xf]
        %v7320 = vld [vmem:[#allocation19 + $0x20] sm:$0xf]
        %v7321 = vld [vmem:[#allocation19 + $0x24] sm:$0xf]
        %v7322 = vld [vmem:[#allocation19 + $0x28] sm:$0xf]
        %v7323 = vld [vmem:[#allocation19 + $0x2c] sm:$0xf]
        %v7324 = vld [vmem:[#allocation19 + $0x30] sm:$0xf]
        %v7325 = vld [vmem:[#allocation19 + $0x34] sm:$0xf]
        %v7326 = vld [vmem:[#allocation19 + $0x38] sm:$0xf]
        %v7327 = vld [vmem:[#allocation19 + $0x3c] sm:$0xf]
        %v7328 = vld [vmem:[#allocation19 + $0x40] sm:$0xf]
        %v7329 = vld [vmem:[#allocation19 + $0x44] sm:$0xf]
        %v7330 = vld [vmem:[#allocation19 + $0x48] sm:$0xf]
        %v7331 = vld [vmem:[#allocation19 + $0x4c] sm:$0xf]
        %v7332 = vld [vmem:[#allocation19 + $0x50] sm:$0xf]
        %v7333 = vld [vmem:[#allocation19 + $0x54] sm:$0xf]
        %v7334 = vld [vmem:[#allocation19 + $0x58] sm:$0xf]
        %v7335 = vld [vmem:[#allocation19 + $0x5c] sm:$0xf]
        %v7336 = vld [vmem:[#allocation19 + $0x60] sm:$0xf]
        %v7337 = vld [vmem:[#allocation19 + $0x64] sm:$0xf]
        %v7338 = vld [vmem:[#allocation19 + $0x68] sm:$0xf]
        %v7339 = vld [vmem:[#allocation19 + $0x6c] sm:$0xf]
        %v7340 = vld [vmem:[#allocation19 + $0x70] sm:$0xf]
        %v7341 = vld [vmem:[#allocation19 + $0x74] sm:$0xf]
        %v7342 = vld [vmem:[#allocation19 + $0x78] sm:$0xf]
        %v7343 = vld [vmem:[#allocation19 + $0x7c] sm:$0xf]
        %v7344 = vld [vmem:[#allocation19 + $0x80] sm:$0xf]
        %v7345 = vld [vmem:[#allocation19 + $0x84] sm:$0xf]
        %v7346 = vld [vmem:[#allocation19 + $0x88] sm:$0xf]
        %v7347 = vld [vmem:[#allocation19 + $0x8c] sm:$0xf]
        %v7348 = vld [vmem:[#allocation19 + $0x90] sm:$0xf]
        %v7349 = vld [vmem:[#allocation19 + $0x94] sm:$0x3]
        %v7388 = vunpack.c.l.b16 %v7312
        %v7389 = vunpack.c.l.b16 %v7313
        %v7390 = vunpack.c.l.b16 %v7314
        %v7391 = vunpack.c.l.b16 %v7315
        %v7392 = vunpack.c.l.b16 %v7316
        %v7393 = vunpack.c.l.b16 %v7317
        %v7394 = vunpack.c.l.b16 %v7318
        %v7395 = vunpack.c.l.b16 %v7319
        %v7396 = vunpack.c.l.b16 %v7320
        %v7397 = vunpack.c.l.b16 %v7321
        %v7398 = vunpack.c.l.b16 %v7322
        %v7399 = vunpack.c.l.b16 %v7323
        %v7400 = vunpack.c.l.b16 %v7324
        %v7401 = vunpack.c.l.b16 %v7325
        %v7402 = vunpack.c.l.b16 %v7326
        %v7403 = vunpack.c.l.b16 %v7327
        %v7404 = vunpack.c.l.b16 %v7328
        %v7405 = vunpack.c.l.b16 %v7329
        %v7406 = vunpack.c.l.b16 %v7330
        %v7407 = vunpack.c.l.b16 %v7331
        %v7408 = vunpack.c.l.b16 %v7332
        %v7409 = vunpack.c.l.b16 %v7333
        %v7410 = vunpack.c.l.b16 %v7334
        %v7411 = vunpack.c.l.b16 %v7335
        %v7412 = vunpack.c.l.b16 %v7336
        %v7413 = vunpack.c.l.b16 %v7337
        %v7414 = vunpack.c.l.b16 %v7338
        %v7415 = vunpack.c.l.b16 %v7339
        %v7416 = vunpack.c.l.b16 %v7340
        %v7417 = vunpack.c.l.b16 %v7341
        %v7418 = vunpack.c.l.b16 %v7342
        %v7419 = vunpack.c.l.b16 %v7343
        %v7420 = vunpack.c.l.b16 %v7344
        %v7421 = vunpack.c.l.b16 %v7345
        %v7422 = vunpack.c.l.b16 %v7346
        %v7423 = vunpack.c.l.b16 %v7347
        %v7424 = vunpack.c.l.b16 %v7348
        %v7425 = vunpack.c.l.b16 %v7349
        %v7426 = vpack.c.b16 %v7389, %v7388
        %v7427 = vpack.c.b16 %v7391, %v7390
        %v7428 = vpack.c.b16 %v7393, %v7392
        %v7429 = vpack.c.b16 %v7395, %v7394
        %v7430 = vpack.c.b16 %v7397, %v7396
        %v7431 = vpack.c.b16 %v7399, %v7398
        %v7432 = vpack.c.b16 %v7401, %v7400
        %v7433 = vpack.c.b16 %v7403, %v7402
        %v7434 = vpack.c.b16 %v7405, %v7404
        %v7435 = vpack.c.b16 %v7407, %v7406
        %v7436 = vpack.c.b16 %v7409, %v7408
        %v7437 = vpack.c.b16 %v7411, %v7410
        %v7438 = vpack.c.b16 %v7413, %v7412
        %v7439 = vpack.c.b16 %v7415, %v7414
        %v7440 = vpack.c.b16 %v7417, %v7416
        %v7441 = vpack.c.b16 %v7419, %v7418
        %v7442 = vpack.c.b16 %v7421, %v7420
        %v7443 = vpack.c.b16 %v7423, %v7422
        %v7444 = vpack.c.b16 %v7425, %v7424
        %vm7463 = vcmask 359424
        %v7465 = vsel %vm7463, %v7311, 0
        %v7468 = vsel %vm2891, %v7444, 0
        %7470 = vmatprep.subr.bf16.mxu0 0
        %7471 = vmatpush1.bf16.msra.mxu0 %v7433
        %7472 = vmatprep.subr.bf16.mxu0 0
        %7473 = vmatpush1.bf16.msra.mxu0 %v7432
        %7474 = vmatprep.subr.bf16.mxu0 0
        %7475 = vmatpush1.bf16.msra.mxu0 %v7431
        %7476 = vmatprep.subr.bf16.mxu0 0
        %7477 = vmatpush1.bf16.msra.mxu0 %v7430
        %7478 = vmatprep.subr.bf16.mxu0 0
        %7479 = vmatpush1.bf16.msra.mxu0 %v7429
        %7480 = vmatprep.subr.bf16.mxu0 0
        %7481 = vmatpush1.bf16.msra.mxu0 %v7428
        %7482 = vmatprep.subr.bf16.mxu0 0
        %7483 = vmatpush1.bf16.msra.mxu0 %v7427
        %7484 = vmatprep.subr.bf16.mxu0 0
        %7485 = vmatpush1.bf16.msra.mxu0 %v7426
        %7486 = vmatprep.subr.bf16.mxu0 0
        %7487 = vmatpush2.bf16.msra.mxu0 %v7441
        %7488 = vmatprep.subr.bf16.mxu0 0
        %7489 = vmatpush2.bf16.msra.mxu0 %v7440
        %7490 = vmatprep.subr.bf16.mxu0 0
        %7491 = vmatpush2.bf16.msra.mxu0 %v7439
        %7492 = vmatprep.subr.bf16.mxu0 0
        %7493 = vmatpush2.bf16.msra.mxu0 %v7438
        %7494 = vmatprep.subr.bf16.mxu0 0
        %7495 = vmatpush2.bf16.msra.mxu0 %v7437
        %7496 = vmatprep.subr.bf16.mxu0 0
        %7497 = vmatpush2.bf16.msra.mxu0 %v7436
        %7498 = vmatprep.subr.bf16.mxu0 0
        %7499 = vmatpush2.bf16.msra.mxu0 %v7435
        %7500 = vmatprep.subr.bf16.mxu0 0
        %7501 = vmatpush2.bf16.msra.mxu0 %v7434
        %7502 = vmatprep.mubr.bf16.mxu0 %v7310
        %7503 = vmatmul.mubr.bf16.gmra.mxu0 %v7309
        %v7504 = vpop.f32.mrf.mxu0
        %v7505 = vadd.f32 0.0, %v7504
        %v7506 = vpop.f32.mrf.mxu0
        %v7507 = vpop.f32.mrf.mxu0
        %v7508 = vpop.f32.mrf.mxu0
        %7509 = vdwg.mxu0
        %7510 = vmatprep.subr.bf16.mxu0 0
        %7511 = vmatpush1.bf16.msra.mxu0 0
        %7512 = vmatprep.subr.bf16.mxu0 0
        %7513 = vmatpush1.bf16.msra.mxu0 0
        %7514 = vmatprep.subr.bf16.mxu0 0
        %7515 = vmatpush1.bf16.msra.mxu0 0
        %7516 = vmatprep.subr.bf16.mxu0 0
        %7517 = vmatpush1.bf16.msra.mxu0 0
        %7518 = vmatprep.subr.bf16.mxu0 0
        %7519 = vmatpush1.bf16.msra.mxu0 0
        %7520 = vmatprep.subr.bf16.mxu0 0
        %7521 = vmatpush1.bf16.msra.mxu0 %v7468
        %7522 = vmatprep.subr.bf16.mxu0 0
        %7523 = vmatpush1.bf16.msra.mxu0 %v7443
        %7524 = vmatprep.subr.bf16.mxu0 0
        %7525 = vmatpush1.bf16.msra.mxu0 %v7442
        %7526 = vmatprep.subr.bf16.mxu0 0
        %7527 = vmatpush2.bf16.msra.mxu0 0
        %7528 = vmatprep.subr.bf16.mxu0 0
        %7529 = vmatpush2.bf16.msra.mxu0 0
        %7530 = vmatprep.subr.bf16.mxu0 0
        %7531 = vmatpush2.bf16.msra.mxu0 0
        %7532 = vmatprep.subr.bf16.mxu0 0
        %7533 = vmatpush2.bf16.msra.mxu0 0
        %7534 = vmatprep.subr.bf16.mxu0 0
        %7535 = vmatpush2.bf16.msra.mxu0 0
        %7536 = vmatprep.subr.bf16.mxu0 0
        %7537 = vmatpush2.bf16.msra.mxu0 0
        %7538 = vmatprep.subr.bf16.mxu0 0
        %7539 = vmatpush2.bf16.msra.mxu0 0
        %7540 = vmatprep.subr.bf16.mxu0 0
        %7541 = vmatpush2.bf16.msra.mxu0 0
        %7542 = vmatprep.mubr.bf16.mxu0 0
        %7543 = vmatmul.mubr.bf16.gmra.mxu0 %v7465
        %v7544 = vpop.f32.mrf.mxu0
        %v7545 = vadd.f32 %v7505, %v7544
        %v7546 = vpop.f32.mrf.mxu0
        %v7547 = vpop.f32.mrf.mxu0
        %v7548 = vpop.f32.mrf.mxu0
        %7549 = vdwg.mxu0
        %v7566 = vunpack.c.l.b16 %v7293
        %v7567 = vunpack.c.l.b16 %v7294
        %v7568 = vunpack.c.l.b16 %v7295
        %v7569 = vunpack.c.l.b16 %v7296
        %v7570 = vunpack.c.l.b16 %v7297
        %v7571 = vunpack.c.l.b16 %v7298
        %v7572 = vunpack.c.l.b16 %v7299
        %v7573 = vunpack.c.l.b16 %v7300
        %v7574 = vunpack.c.l.b16 %v7301
        %v7575 = vunpack.c.l.b16 %v7302
        %v7576 = vunpack.c.l.b16 %v7303
        %v7577 = vunpack.c.l.b16 %v7304
        %v7578 = vunpack.c.l.b16 %v7305
        %v7579 = vunpack.c.l.b16 %v7306
        %v7580 = vunpack.c.l.b16 %v7307
        %v7581 = vunpack.c.l.b16 %v7308
        %v7582 = vpack.c.b16 %v7567, %v7566
        %v7583 = vpack.c.b16 %v7569, %v7568
        %v7584 = vpack.c.b16 %v7571, %v7570
        %v7585 = vpack.c.b16 %v7573, %v7572
        %v7586 = vpack.c.b16 %v7575, %v7574
        %v7587 = vpack.c.b16 %v7577, %v7576
        %v7588 = vpack.c.b16 %v7579, %v7578
        %v7589 = vpack.c.b16 %v7581, %v7580
        %7598 = vmatprep.subr.bf16.mxu0 0
        %7599 = vmatpush1.bf16.msra.mxu0 %v7589
        %7600 = vmatprep.subr.bf16.mxu0 0
        %7601 = vmatpush1.bf16.msra.mxu0 %v7588
        %7602 = vmatprep.subr.bf16.mxu0 0
        %7603 = vmatpush1.bf16.msra.mxu0 %v7587
        %7604 = vmatprep.subr.bf16.mxu0 0
        %7605 = vmatpush1.bf16.msra.mxu0 %v7586
        %7606 = vmatprep.subr.bf16.mxu0 0
        %7607 = vmatpush1.bf16.msra.mxu0 %v7585
        %7608 = vmatprep.subr.bf16.mxu0 0
        %7609 = vmatpush1.bf16.msra.mxu0 %v7584
        %7610 = vmatprep.subr.bf16.mxu0 0
        %7611 = vmatpush1.bf16.msra.mxu0 %v7583
        %7612 = vmatprep.subr.bf16.mxu0 0
        %7613 = vmatpush1.bf16.msra.mxu0 %v7582
        %7614 = vmatprep.subr.bf16.mxu0 0
        %7615 = vmatpush2.bf16.msra.mxu0 0
        %7616 = vmatprep.subr.bf16.mxu0 0
        %7617 = vmatpush2.bf16.msra.mxu0 0
        %7618 = vmatprep.subr.bf16.mxu0 0
        %7619 = vmatpush2.bf16.msra.mxu0 0
        %7620 = vmatprep.subr.bf16.mxu0 0
        %7621 = vmatpush2.bf16.msra.mxu0 0
        %7622 = vmatprep.subr.bf16.mxu0 0
        %7623 = vmatpush2.bf16.msra.mxu0 0
        %7624 = vmatprep.subr.bf16.mxu0 0
        %7625 = vmatpush2.bf16.msra.mxu0 0
        %7626 = vmatprep.subr.bf16.mxu0 0
        %7627 = vmatpush2.bf16.msra.mxu0 0
        %7628 = vmatprep.subr.bf16.mxu0 0
        %7629 = vmatpush2.bf16.msra.mxu0 0
        %7630 = vmatprep.mubr.bf16.mxu0 0
        %7631 = vmatmul.mubr.bf16.gmra.mxu0 %v7292
        %v7632 = vpop.f32.mrf.mxu0
        %v7633 = vadd.f32 %v7545, %v7632
        %v7634 = vpop.f32.mrf.mxu0
        %v7635 = vpop.f32.mrf.mxu0
        %v7636 = vpop.f32.mrf.mxu0
        %7637 = vdwg.mxu0
        %v7638 = vld [vmem:[%s12] sm:$0x1]
        %v7640 = vlaneseq
        %v7641 = vshrl.u32 %v7640, 7
        %v7642 = vsub.s32 0, %v7641
        %v7643 = vrot.slane %v7638, %v7642
        %v7645 = vadd.f32 %v7633, %v7643
        %v7646 = vpack.c.bf16 %v7645, %v7645
        %v7647 = vld [vmem:[#allocation20] sm:$0xff]
        %v7648 = vld [vmem:[#allocation20 + $0x8] sm:$0xff]
        %v7649 = vld [vmem:[#allocation20 + $0x10] sm:$0xff]
        %v7650 = vld [vmem:[#allocation20 + $0x18] sm:$0xff]
        %v7651 = vld [vmem:[#allocation20 + $0x20] sm:$0xff]
        %v7652 = vld [vmem:[#allocation20 + $0x28] sm:$0xff]
        %v7653 = vld [vmem:[#allocation20 + $0x30] sm:$0xff]
        %v7654 = vld [vmem:[#allocation20 + $0x38] sm:$0xff]
        %v7655 = vld [vmem:[#allocation20 + $0x40] sm:$0xff]
        %v7656 = vld [vmem:[#allocation20 + $0x48] sm:$0xff]
        %v7657 = vld [vmem:[#allocation20 + $0x50] sm:$0xff]
        %v7658 = vld [vmem:[#allocation20 + $0x58] sm:$0xff]
        %v7659 = vld [vmem:[#allocation20 + $0x60] sm:$0xff]
        %v7660 = vld [vmem:[#allocation20 + $0x68] sm:$0xff]
        %v7661 = vld [vmem:[#allocation20 + $0x70] sm:$0xff]
        %v7662 = vld [vmem:[#allocation20 + $0x78] sm:$0xff]
        %v7663 = vld [vmem:[%s14] sm:$0x3]
        %v7665 = vlaneseq
        %v7666 = vshrl.u32 %v7665, 7
        %v7667 = vsub.s32 0, %v7666
        %v7668 = vrot.slane %v7663, %v7667
        %v7669 = vlaneseq
        %v7670 = vshrl.u32 %v7669, 7
        %v7671 = vsub.s32 1, %v7670
        %v7672 = vrot.slane %v7663, %v7671
        %v7691 = vunpack.c.l.b16 %v7647
        %v7692 = vunpack.c.h.b16 %v7647
        %v7693 = vunpack.c.l.b16 %v7648
        %v7694 = vunpack.c.h.b16 %v7648
        %v7695 = vunpack.c.l.b16 %v7649
        %v7696 = vunpack.c.h.b16 %v7649
        %v7697 = vunpack.c.l.b16 %v7650
        %v7698 = vunpack.c.h.b16 %v7650
        %v7699 = vunpack.c.l.b16 %v7651
        %v7700 = vunpack.c.h.b16 %v7651
        %v7701 = vunpack.c.l.b16 %v7652
        %v7702 = vunpack.c.h.b16 %v7652
        %v7703 = vunpack.c.l.b16 %v7653
        %v7704 = vunpack.c.h.b16 %v7653
        %v7705 = vunpack.c.l.b16 %v7654
        %v7706 = vunpack.c.h.b16 %v7654
        %v7707 = vunpack.c.l.b16 %v7655
        %v7708 = vunpack.c.h.b16 %v7655
        %v7709 = vunpack.c.l.b16 %v7656
        %v7710 = vunpack.c.h.b16 %v7656
        %v7711 = vunpack.c.l.b16 %v7657
        %v7712 = vunpack.c.h.b16 %v7657
        %v7713 = vunpack.c.l.b16 %v7658
        %v7714 = vunpack.c.h.b16 %v7658
        %v7715 = vunpack.c.l.b16 %v7659
        %v7716 = vunpack.c.h.b16 %v7659
        %v7717 = vunpack.c.l.b16 %v7660
        %v7718 = vunpack.c.h.b16 %v7660
        %v7719 = vunpack.c.l.b16 %v7661
        %v7720 = vunpack.c.h.b16 %v7661
        %v7721 = vunpack.c.l.b16 %v7662
        %v7722 = vunpack.c.h.b16 %v7662
        %v7723 = vpack.c.b16 %v7693, %v7691
        %v7724 = vpack.c.b16 %v7694, %v7692
        %v7725 = vpack.c.b16 %v7697, %v7695
        %v7726 = vpack.c.b16 %v7698, %v7696
        %v7727 = vpack.c.b16 %v7701, %v7699
        %v7728 = vpack.c.b16 %v7702, %v7700
        %v7729 = vpack.c.b16 %v7705, %v7703
        %v7730 = vpack.c.b16 %v7706, %v7704
        %v7731 = vpack.c.b16 %v7709, %v7707
        %v7732 = vpack.c.b16 %v7710, %v7708
        %v7733 = vpack.c.b16 %v7713, %v7711
        %v7734 = vpack.c.b16 %v7714, %v7712
        %v7735 = vpack.c.b16 %v7717, %v7715
        %v7736 = vpack.c.b16 %v7718, %v7716
        %v7737 = vpack.c.b16 %v7721, %v7719
        %v7738 = vpack.c.b16 %v7722, %v7720
        %7755 = vmatprep.subr.bf16.mxu0 %v7738
        %7756 = vmatpush1.bf16.msra.mxu0 %v7737
        %7757 = vmatprep.subr.bf16.mxu0 %v7736
        %7758 = vmatpush1.bf16.msra.mxu0 %v7735
        %7759 = vmatprep.subr.bf16.mxu0 %v7734
        %7760 = vmatpush1.bf16.msra.mxu0 %v7733
        %7761 = vmatprep.subr.bf16.mxu0 %v7732
        %7762 = vmatpush1.bf16.msra.mxu0 %v7731
        %7763 = vmatprep.subr.bf16.mxu0 %v7730
        %7764 = vmatpush1.bf16.msra.mxu0 %v7729
        %7765 = vmatprep.subr.bf16.mxu0 %v7728
        %7766 = vmatpush1.bf16.msra.mxu0 %v7727
        %7767 = vmatprep.subr.bf16.mxu0 %v7726
        %7768 = vmatpush1.bf16.msra.mxu0 %v7725
        %7769 = vmatprep.subr.bf16.mxu0 %v7724
        %7770 = vmatpush1.bf16.msra.mxu0 %v7723
        %7771 = vmatprep.subr.bf16.mxu0 0
        %7772 = vmatpush2.bf16.msra.mxu0 0
        %7773 = vmatprep.subr.bf16.mxu0 0
        %7774 = vmatpush2.bf16.msra.mxu0 0
        %7775 = vmatprep.subr.bf16.mxu0 0
        %7776 = vmatpush2.bf16.msra.mxu0 0
        %7777 = vmatprep.subr.bf16.mxu0 0
        %7778 = vmatpush2.bf16.msra.mxu0 0
        %7779 = vmatprep.subr.bf16.mxu0 0
        %7780 = vmatpush2.bf16.msra.mxu0 0
        %7781 = vmatprep.subr.bf16.mxu0 0
        %7782 = vmatpush2.bf16.msra.mxu0 0
        %7783 = vmatprep.subr.bf16.mxu0 0
        %7784 = vmatpush2.bf16.msra.mxu0 0
        %7785 = vmatprep.subr.bf16.mxu0 0
        %7786 = vmatpush2.bf16.msra.mxu0 0
        %7787 = vmatprep.mubr.bf16.mxu0 0
        %7788 = vmatmul.mubr.bf16.gmra.mxu0 %v7646
        %v7789 = vpop.f32.mrf.mxu0
        %v7790 = vadd.f32 %v7668, %v7789
        %v7791 = vpop.f32.mrf.mxu0
        %v7792 = vadd.f32 %v7672, %v7791
        %v7793 = vpop.f32.mrf.mxu0
        %v7794 = vpop.f32.mrf.mxu0
        %7795 = vdwg.mxu0
        %v7796 = vxor.u32 %v7790, 2147483648
        %v7797 = vmul.f32 %v7796, 1.442695
        %v7798 = vpow.pop %v7797
        %v7799 = vadd.f32 %v7798, 1.0
        %v7800 = vrcp.pop %v7799
        %v7801 = vmul.f32 1.0, %v7800
        %v7802 = vmax.f32 %v7792, 0.0
        %v7803 = vmul.f32 %v7801, %v7802
        %v7804 = vsub.f32 1.0, %v7801
        %v7805 = vmul.f32 %v7804, %v7645
        %v7806 = vadd.f32 %v7803, %v7805
        %v7807 = vpack.c.bf16 %v7806, %v7806
        %v7808 = vld [vmem:[#allocation22] sm:$0xff]
        %v7809 = vld [vmem:[#allocation22 + $0x8] sm:$0xff]
        %v7810 = vld [vmem:[#allocation22 + $0x10] sm:$0xff]
        %v7811 = vld [vmem:[#allocation22 + $0x18] sm:$0xff]
        %v7812 = vld [vmem:[#allocation22 + $0x20] sm:$0xff]
        %v7813 = vld [vmem:[#allocation22 + $0x28] sm:$0xff]
        %v7814 = vld [vmem:[#allocation22 + $0x30] sm:$0xff]
        %v7815 = vld [vmem:[#allocation22 + $0x38] sm:$0xff]
        %v7816 = vld [vmem:[#allocation22 + $0x40] sm:$0xff]
        %v7817 = vld [vmem:[#allocation22 + $0x48] sm:$0xff]
        %v7818 = vld [vmem:[#allocation22 + $0x50] sm:$0xff]
        %v7819 = vld [vmem:[#allocation22 + $0x58] sm:$0xff]
        %v7820 = vld [vmem:[#allocation22 + $0x60] sm:$0xff]
        %v7821 = vld [vmem:[#allocation22 + $0x68] sm:$0xff]
        %v7822 = vld [vmem:[#allocation22 + $0x70] sm:$0xff]
        %v7823 = vld [vmem:[#allocation22 + $0x78] sm:$0xff]
        %v7824 = vld [vmem:[%s16] sm:$0x3]
        %v7826 = vlaneseq
        %v7827 = vshrl.u32 %v7826, 7
        %v7828 = vsub.s32 0, %v7827
        %v7829 = vrot.slane %v7824, %v7828
        %v7830 = vlaneseq
        %v7831 = vshrl.u32 %v7830, 7
        %v7832 = vsub.s32 1, %v7831
        %v7833 = vrot.slane %v7824, %v7832
        %v7852 = vunpack.c.l.b16 %v7808
        %v7853 = vunpack.c.h.b16 %v7808
        %v7854 = vunpack.c.l.b16 %v7809
        %v7855 = vunpack.c.h.b16 %v7809
        %v7856 = vunpack.c.l.b16 %v7810
        %v7857 = vunpack.c.h.b16 %v7810
        %v7858 = vunpack.c.l.b16 %v7811
        %v7859 = vunpack.c.h.b16 %v7811
        %v7860 = vunpack.c.l.b16 %v7812
        %v7861 = vunpack.c.h.b16 %v7812
        %v7862 = vunpack.c.l.b16 %v7813
        %v7863 = vunpack.c.h.b16 %v7813
        %v7864 = vunpack.c.l.b16 %v7814
        %v7865 = vunpack.c.h.b16 %v7814
        %v7866 = vunpack.c.l.b16 %v7815
        %v7867 = vunpack.c.h.b16 %v7815
        %v7868 = vunpack.c.l.b16 %v7816
        %v7869 = vunpack.c.h.b16 %v7816
        %v7870 = vunpack.c.l.b16 %v7817
        %v7871 = vunpack.c.h.b16 %v7817
        %v7872 = vunpack.c.l.b16 %v7818
        %v7873 = vunpack.c.h.b16 %v7818
        %v7874 = vunpack.c.l.b16 %v7819
        %v7875 = vunpack.c.h.b16 %v7819
        %v7876 = vunpack.c.l.b16 %v7820
        %v7877 = vunpack.c.h.b16 %v7820
        %v7878 = vunpack.c.l.b16 %v7821
        %v7879 = vunpack.c.h.b16 %v7821
        %v7880 = vunpack.c.l.b16 %v7822
        %v7881 = vunpack.c.h.b16 %v7822
        %v7882 = vunpack.c.l.b16 %v7823
        %v7883 = vunpack.c.h.b16 %v7823
        %v7884 = vpack.c.b16 %v7854, %v7852
        %v7885 = vpack.c.b16 %v7855, %v7853
        %v7886 = vpack.c.b16 %v7858, %v7856
        %v7887 = vpack.c.b16 %v7859, %v7857
        %v7888 = vpack.c.b16 %v7862, %v7860
        %v7889 = vpack.c.b16 %v7863, %v7861
        %v7890 = vpack.c.b16 %v7866, %v7864
        %v7891 = vpack.c.b16 %v7867, %v7865
        %v7892 = vpack.c.b16 %v7870, %v7868
        %v7893 = vpack.c.b16 %v7871, %v7869
        %v7894 = vpack.c.b16 %v7874, %v7872
        %v7895 = vpack.c.b16 %v7875, %v7873
        %v7896 = vpack.c.b16 %v7878, %v7876
        %v7897 = vpack.c.b16 %v7879, %v7877
        %v7898 = vpack.c.b16 %v7882, %v7880
        %v7899 = vpack.c.b16 %v7883, %v7881
        %7916 = vmatprep.subr.bf16.mxu0 %v7899
        %7917 = vmatpush1.bf16.msra.mxu0 %v7898
        %7918 = vmatprep.subr.bf16.mxu0 %v7897
        %7919 = vmatpush1.bf16.msra.mxu0 %v7896
        %7920 = vmatprep.subr.bf16.mxu0 %v7895
        %7921 = vmatpush1.bf16.msra.mxu0 %v7894
        %7922 = vmatprep.subr.bf16.mxu0 %v7893
        %7923 = vmatpush1.bf16.msra.mxu0 %v7892
        %7924 = vmatprep.subr.bf16.mxu0 %v7891
        %7925 = vmatpush1.bf16.msra.mxu0 %v7890
        %7926 = vmatprep.subr.bf16.mxu0 %v7889
        %7927 = vmatpush1.bf16.msra.mxu0 %v7888
        %7928 = vmatprep.subr.bf16.mxu0 %v7887
        %7929 = vmatpush1.bf16.msra.mxu0 %v7886
        %7930 = vmatprep.subr.bf16.mxu0 %v7885
        %7931 = vmatpush1.bf16.msra.mxu0 %v7884
        %7932 = vmatprep.subr.bf16.mxu0 0
        %7933 = vmatpush2.bf16.msra.mxu0 0
        %7934 = vmatprep.subr.bf16.mxu0 0
        %7935 = vmatpush2.bf16.msra.mxu0 0
        %7936 = vmatprep.subr.bf16.mxu0 0
        %7937 = vmatpush2.bf16.msra.mxu0 0
        %7938 = vmatprep.subr.bf16.mxu0 0
        %7939 = vmatpush2.bf16.msra.mxu0 0
        %7940 = vmatprep.subr.bf16.mxu0 0
        %7941 = vmatpush2.bf16.msra.mxu0 0
        %7942 = vmatprep.subr.bf16.mxu0 0
        %7943 = vmatpush2.bf16.msra.mxu0 0
        %7944 = vmatprep.subr.bf16.mxu0 0
        %7945 = vmatpush2.bf16.msra.mxu0 0
        %7946 = vmatprep.subr.bf16.mxu0 0
        %7947 = vmatpush2.bf16.msra.mxu0 0
        %7948 = vmatprep.mubr.bf16.mxu0 0
        %7949 = vmatmul.mubr.bf16.gmra.mxu0 %v7807
        %v7950 = vpop.f32.mrf.mxu0
        %v7951 = vadd.f32 %v7829, %v7950
        %v7952 = vpop.f32.mrf.mxu0
        %v7953 = vadd.f32 %v7833, %v7952
        %v7954 = vpop.f32.mrf.mxu0
        %v7955 = vpop.f32.mrf.mxu0
        %7956 = vdwg.mxu0
        %v7957 = vxor.u32 %v7951, 2147483648
        %v7958 = vmul.f32 %v7957, 1.442695
        %v7959 = vpow.pop %v7958
        %v7960 = vadd.f32 %v7959, 1.0
        %v7961 = vrcp.pop %v7960
        %v7962 = vmul.f32 1.0, %v7961
        %v7963 = vmax.f32 %v7953, 0.0
        %v7964 = vmul.f32 %v7962, %v7963
        %v7965 = vsub.f32 1.0, %v7962
        %v7966 = vmul.f32 %v7965, %v7806
        %v7967 = vadd.f32 %v7964, %v7966
        %7968 = vst [vmem:[%s728] sm:$0xff] %v7967
        %s7969 = sand.u32 %s416, 1
        %s7970 = scalar_lea.sflag [#allocation7], %s7969
        %s7971 = sand.u32 %s416, 1
        %s7972 = smul.addr %s7971, 8
        %s7973 = scalar_lea.vmem [#allocation23], %s7972
        // Predicated region
        $region133: #{tpu_custom_call.1} parent=87 // pred_check
          %p7974 = pneg %p426
        $region134: #{tpu_custom_call.1} parent=87 // pred_check_branch
          %7976 = sbr.rel (%p7974) target = $region136
        $region135: #{tpu_custom_call.1} parent=87 // pred_region
          %s7978 = ssub.s32 128, 128
          %7979 = vsyncadd %s7970, %s7978
          %s7980 = smul.addr %s41, 128
          %s7981 = scalar_lea.hbm %s17, %s7980
          %s7983 = sshll.u32 %s7973, 4
          %s7984 = int_to_ptr.vmem [resolvable:$true] %s7983
          %7986 = dma.vmem_to_hbm [thread:$0]  %s7984, 128, %s7981, %s7970
        $region136: #{tpu_custom_call.1} parent=87 // pred_fallthru
          _
      $region88: #{tpu_custom_call.1} parent=5 // pred_fallthru
        _
      %p7987 = scmp.le.s32.totalorder 2, %s36
      // Predicated region
      $region137: #{tpu_custom_call.1} parent=5 // pred_check
        %p7988 = pneg %p7987
      $region138: #{tpu_custom_call.1} parent=5 // pred_check_branch
        %7990 = sbr.rel (%p7988) target = $region140
      $region139: #{tpu_custom_call.1} parent=5 // pred_region
        %s7991 = ssub.s32 %s36, 2
        // Predicated region
        $region141: #{tpu_custom_call.1} parent=139 // pred_check
          %p7992 = pneg %p432
        $region142: #{tpu_custom_call.1} parent=139 // pred_check_branch
          %7994 = sbr.rel (%p7992) target = $region144
        $region143: #{tpu_custom_call.1} parent=139 // pred_region
          %s7995 = sand.u32 %s417, 1
          %s7996 = scalar_lea.sflag [#allocation7], %s7995
          %s7997 = sand.u32 %s417, 1
          %s7998 = smul.addr %s7997, 8
          %s7999 = scalar_lea.vmem [#allocation23], %s7998
          %8000 = dma.done %s7996, 128
        $region144: #{tpu_custom_call.1} parent=139 // pred_fallthru
          _
      $region140: #{tpu_custom_call.1} parent=5 // pred_fallthru
        _
    $region6: #{tpu_custom_call.1} parent=1 // loop_footer
      %s40 = sadd.s32 1, %s36
    $region7: #{tpu_custom_call.1} parent=1 // loop_footer_branch
      %35 = sbr.rel target = $region3
    $region8: #{tpu_custom_call.1} parent=1 // loop_exit
      _
    %8001 = vsyncpa [#allocation6], 1
    %s8002 = scalar_lea.sflag [#allocation6], 1
    %8003 = vsyncpa %s8002, 1
    %8004 = vsyncpa [#allocation9], 1
    %s8005 = scalar_lea.sflag [#allocation9], 1
    %8006 = vsyncpa %s8005, 1
    %8007 = vsyncpa [#allocation12], 1
    %8008 = vsyncpa [#allocation15], 1
    %8009 = vsyncpa [#allocation18], 1
    %8010 = vsyncpa [#allocation21], 1
    %8011 = vsyncpa [#allocation7], 1
    %s8012 = scalar_lea.sflag [#allocation7], 1
    %8013 = vsyncpa %s8012, 1

</llo_original>
